<compile_context>
chip_gen: v6e
topology: v6e:2x2x1
jax: 0.10.0
libtpu: 0.0.40
codegen_flags: <defaults>
</compile_context>

<pallas_src>
import functools

import jax
import jax.numpy as jnp
from jax.experimental import pallas as pl
from jax.experimental.pallas import tpu as pltpu


def _round_up(x, m):
    return (x + m - 1) // m * m


def _mr_forward_kernel(m_ref, traj_ref, out_r_ref, out_i_ref, cos_ref, sin_ref,
                       *, H, W, cd_tile):
    """One (batch, k-tile, cd-tile) grid step.

    m_ref:    (2*cd_tile, N)  stacked [real; imag] coil-weighted image rows.
    traj_ref: (2, tk)         k-space trajectory tile (phases folded into K).
    out_*:    (cd_tile, tk)   real / imag k-space estimates.
    cos/sin:  (N, tk)         VMEM scratch: non-uniform DFT matrix, built once
                              per K tile (cd == 0) and reused across CD tiles.
    """
    tk = traj_ref.shape[-1]

    @pl.when(pl.program_id(2) == 0)
    def _build_dft_matrix():
        wx = traj_ref[0:1, :]                       # (1, tk)
        wy = traj_ref[1:2, :]                       # (1, tk)

        # Centered pixel coordinates, built in-kernel (no DMA, no 1-lane operands).
        hh = (jax.lax.broadcasted_iota(jnp.int32, (H, tk), 0).astype(jnp.float32)
              - float(H // 2))                      # (H, tk)
        ww = (jax.lax.broadcasted_iota(jnp.int32, (W, tk), 0).astype(jnp.float32)
              - float(W // 2))                      # (W, tk)

        # Separable phase: phase(h,w,k) = hh[h]*wx[k] + ww[w]*wy[k].
        # Transcendentals over only (H+W)*tk elements (EUP), then
        # angle-addition identities on the VPU for the full (N, tk) matrices.
        ph_h = hh * wx
        ph_w = ww * wy
        ch = jnp.cos(ph_h)
        sh = jnp.sin(ph_h)                          # (H, tk)
        cw = jnp.cos(ph_w)
        sw = jnp.sin(ph_w)                          # (W, tk)

        ch3 = ch[:, None, :]
        sh3 = sh[:, None, :]                        # (H, 1, tk)
        cw3 = cw[None, :, :]
        sw3 = sw[None, :, :]                        # (1, W, tk)
        cosm = (ch3 * cw3 - sh3 * sw3).reshape(H * W, tk)   # cos(a + b)
        sinm = (sh3 * cw3 + ch3 * sw3).reshape(H * W, tk)   # sin(a + b)
        cos_ref[...] = cosm.astype(cos_ref.dtype)
        sin_ref[...] = sinm.astype(sin_ref.dtype)

    # Two fat matmuls (rows = [real; imag]) instead of four thin ones.
    m = m_ref[...].astype(cos_ref.dtype)
    s1 = jnp.dot(m, cos_ref[...], preferred_element_type=jnp.float32)   # m @ cos
    s2 = jnp.dot(m, sin_ref[...], preferred_element_type=jnp.float32)   # m @ sin

    # kspace = m @ (cos - i*sin):
    out_r_ref[...] = s1[:cd_tile] + s2[cd_tile:]
    out_i_ref[...] = s1[cd_tile:] - s2[:cd_tile]


def _vmem_capacity_bytes():
    """Generation-aware VMEM capacity; conservative (v7x) fallback."""
    try:
        info = pltpu.get_tpu_info()
        cap = getattr(info, "vmem_capacity_bytes", None)
        if cap:
            return int(cap)
    except Exception:
        pass
    return 64 * 1024 * 1024


def _pick_tiles(CD, N, KT, dft_bytes):
    """Pick (cd_tile, CD_pad, tk, KT_pad, vmem_limit) from the true live set."""
    vmem_cap = _vmem_capacity_bytes()
    budget = vmem_cap // 3                    # conservative share of VMEM

    cd_tile = min(_round_up(CD, 8), 128)      # sublane-aligned m/out rows
    cd_pad = _round_up(CD, cd_tile)

    # Bytes that scale with tk:
    per_tk = (2 * N * dft_bytes               # cos/sin scratch
              + 3 * N * 4                     # angle-addition build temporaries
              + 2 * 2 * cd_tile * 4           # double-buffered (out_r, out_i)
              + 2 * 2 * cd_tile * 4)          # S1 / S2 matmul results
    fixed = 2 * (2 * cd_tile) * N * 4         # double-buffered stacked m tile

    avail = max(budget - fixed, per_tk * 128)
    tk = max(128, (avail // per_tk) // 128 * 128)
    tk = min(tk, _round_up(KT, 128))
    kt_pad = _round_up(KT, tk)

    vmem_limit = int(vmem_cap * 3 // 4)       # explicit, with physical headroom
    return cd_tile, cd_pad, tk, kt_pad, vmem_limit


@functools.partial(jax.jit, static_argnames=("num_phases", "use_bf16_dft"))
def mr_forward_model_static(image, csm, kspace_traj, *, num_phases=5,
                            use_bf16_dft=False):
    """image: (B, 1, D, H, W) complex64
       csm:   (B, CH, D, H, W) complex64  (fixed across phase, CSM_FixPh)
       kspace_traj: (B, PH, 2, K) float32 (omega in radians)
       returns kspace: (B, PH, CH, D, K) complex64
    """
    B, one, D, H, W = image.shape
    assert one == 1
    _, CH, _, _, _ = csm.shape
    _, PH, two, K = kspace_traj.shape
    assert two == 2 and PH == num_phases
    CD = CH * D
    KT = PH * K

    # Pad W to a multiple of 8 so the in-kernel (H, W, tk) -> (H*W, tk) reshape
    # is layout-preserving; padded pixels carry m == 0 so they contribute nothing.
    W_pad = _round_up(W, 8)
    N = H * W_pad

    dft_dtype = jnp.bfloat16 if use_bf16_dft else jnp.float32
    dft_bytes = 2 if use_bf16_dft else 4
    cd_tile, CD_pad, tk, KT_pad, vmem_limit = _pick_tiles(CD, N, KT, dft_bytes)
    num_cd = CD_pad // cd_tile
    num_kt = KT_pad // tk

    # ---- glue (phase-independent, done once) --------------------------------
    # S: m = image * csm. MVF with mvf=None just broadcasts over phase, so m is
    # shared by all phases and computed once per batch.
    m = (image * csm).reshape(B, CD, H, W)
    m_r = jnp.real(m).astype(jnp.float32)
    m_i = jnp.imag(m).astype(jnp.float32)
    pad_w = ((0, 0), (0, 0), (0, 0), (0, W_pad - W))
    pad_cd = ((0, 0), (0, CD_pad - CD), (0, 0))
    m_r = jnp.pad(jnp.pad(m_r, pad_w).reshape(B, CD, N), pad_cd)
    m_i = jnp.pad(jnp.pad(m_i, pad_w).reshape(B, CD, N), pad_cd)
    # Per-CD-tile [real; imag] stacking along the sublane axis: one fat matmul
    # operand per tile -> 2 matmuls instead of 4, one streamed input.
    m_r = m_r.reshape(B, num_cd, cd_tile, N)
    m_i = m_i.reshape(B, num_cd, cd_tile, N)
    m_stacked = jnp.concatenate([m_r, m_i], axis=2).reshape(B, 2 * CD_pad, N)

    # Fold the PH phases into the K axis (phase-major) and pad to the K tile.
    traj = jnp.transpose(kspace_traj, (0, 2, 1, 3)).reshape(B, 2, KT)
    traj = jnp.pad(traj.astype(jnp.float32), ((0, 0), (0, 0), (0, KT_pad - KT)))

    kernel = functools.partial(_mr_forward_kernel, H=H, W=W_pad, cd_tile=cd_tile)

    out_r, out_i = pl.pallas_call(
        kernel,
        out_shape=(jax.ShapeDtypeStruct((B, CD_pad, KT_pad), jnp.float32),
                   jax.ShapeDtypeStruct((B, CD_pad, KT_pad), jnp.float32)),
        grid_spec=pltpu.PrefetchScalarGridSpec(
            num_scalar_prefetch=0,
            grid=(B, num_kt, num_cd),
            in_specs=[
                # stacked m tile: depends on (b, cd) only.
                pl.BlockSpec((pl.Squeezed(), 2 * cd_tile, N),
                             lambda b, kt, cd: (b, cd, 0)),
                # trajectory tile: depends on (b, kt) only (fetched once per kt).
                pl.BlockSpec((pl.Squeezed(), 2, tk),
                             lambda b, kt, cd: (b, 0, kt)),
            ],
            out_specs=(
                pl.BlockSpec((pl.Squeezed(), cd_tile, tk),
                             lambda b, kt, cd: (b, cd, kt)),
                pl.BlockSpec((pl.Squeezed(), cd_tile, tk),
                             lambda b, kt, cd: (b, cd, kt)),
            ),
            scratch_shapes=[pltpu.VMEM((N, tk), dft_dtype),
                            pltpu.VMEM((N, tk), dft_dtype)],
        ),
        compiler_params=pltpu.CompilerParams(
            dimension_semantics=("parallel", "parallel", "arbitrary"),
            vmem_limit_bytes=vmem_limit),
    )(m_stacked, traj)

    kspace = (out_r[:, :CD, :KT] + 1j * out_i[:, :CD, :KT]).astype(jnp.complex64)
    kspace = kspace.reshape(B, CH, D, PH, K)
    return jnp.transpose(kspace, (0, 3, 1, 2, 4))             # (B, PH, CH, D, K)


def _reference(image, csm, kspace_traj):
    """Pure-JAX reference for the same math (sanity check)."""
    B, _, D, H, W = image.shape
    CH = csm.shape[1]
    PH, K = kspace_traj.shape[1], kspace_traj.shape[3]
    img_5ph = jnp.broadcast_to(image, (B, PH, D, H, W))             # MVF (mvf=None)
    img_mc = img_5ph[:, :, None] * csm[:, None]                     # CSM: (B,PH,CH,D,H,W)
    hh = jnp.arange(H) - H // 2
    ww = jnp.arange(W) - W // 2
    xh = jnp.repeat(hh, W).astype(jnp.float32)                      # (N,)
    xw = jnp.tile(ww, H).astype(jnp.float32)                        # (N,)
    phase = (jnp.einsum("bpk,n->bpnk", kspace_traj[:, :, 0], xh)
             + jnp.einsum("bpk,n->bpnk", kspace_traj[:, :, 1], xw))  # (B,PH,N,K)
    E = jnp.exp(-1j * phase).astype(jnp.complex64)
    img_flat = img_mc.reshape(B, PH, CH, D, H * W)
    return jnp.einsum("bpcdn,bpnk->bpcdk", img_flat, E)


if __name__ == "__main__":
    B, PH, CH, D, H, W, K = 2, 5, 4, 2, 16, 16, 128

    key = jax.random.PRNGKey(0)
    k1, k2, k3, k4, k5 = jax.random.split(key, 5)
    image = (jax.random.normal(k1, (B, 1, D, H, W), jnp.float32)
             + 1j * jax.random.normal(k2, (B, 1, D, H, W), jnp.float32)
             ).astype(jnp.complex64)
    csm = (jax.random.normal(k3, (B, CH, D, H, W), jnp.float32)
           + 1j * jax.random.normal(k4, (B, CH, D, H, W), jnp.float32)
           ).astype(jnp.complex64)
    kspace_traj = (jax.random.uniform(k5, (B, PH, 2, K), jnp.float32,
                                      minval=-1.0, maxval=1.0) * jnp.pi)

    kspace = mr_forward_model_static(image, csm, kspace_traj, num_phases=PH)
    kspace = jax.block_until_ready(kspace)
    assert kspace.shape == (B, PH, CH, D, K) and kspace.dtype == jnp.complex64

    ref = _reference(image, csm, kspace_traj)
    err = jnp.max(jnp.abs(kspace - ref)) / (jnp.max(jnp.abs(ref)) + 1e-8)
    assert float(err) < 1e-3, f"mismatch vs reference: rel err {float(err)}"

    print("KERNEL_OK")
</pallas_src>

<mosaic_0001>
module attributes {stable_mosaic.version = 11 : i64} {
  func.func @_mr_forward_kernel(%arg0: i32, %arg1: i32, %arg2: i32, %arg3: memref<1x16x256xf32, #tpu.memory_space<vmem>>, %arg4: memref<1x2x640xf32, #tpu.memory_space<vmem>>, %arg5: memref<1x8x640xf32, #tpu.memory_space<vmem>>, %arg6: memref<1x8x640xf32, #tpu.memory_space<vmem>>, %arg7: memref<256x640xf32, #tpu.memory_space<vmem>>, %arg8: memref<256x640xf32, #tpu.memory_space<vmem>>) attributes {dimension_semantics = [#tpu.dimension_semantics<parallel>, #tpu.dimension_semantics<parallel>, #tpu.dimension_semantics<arbitrary>], iteration_bounds = array<i64: 2, 1, 1>, scalar_prefetch = 0 : i64, scratch_operands = 2 : i64, tpu.core_type = #tpu.core_type<tc>, window_params = [{transform_indices = @transform_0, window_bounds = array<i64: 1, 16, 256>}, {transform_indices = @transform_1, window_bounds = array<i64: 1, 2, 640>}, {transform_indices = @transform_2, window_bounds = array<i64: 1, 8, 640>}, {transform_indices = @transform_3, window_bounds = array<i64: 1, 8, 640>}]} {
    %c0_i32 = arith.constant 0 : i32
    %0 = arith.cmpi eq, %arg2, %c0_i32 : i32
    %1 = arith.extui %0 : i1 to i32
    %c0_i32_0 = arith.constant 0 : i32
    %2 = arith.cmpi ne, %1, %c0_i32_0 : i32
    scf.if %2 {
      %c0_14 = arith.constant 0 : index
      %c0_15 = arith.constant 0 : index
      %c0_16 = arith.constant 0 : index
      %21 = vector.load %arg4[%c0_14, %c0_15, %c0_16] : memref<1x2x640xf32, #tpu.memory_space<vmem>>, vector<1x1x640xf32>
      %22 = vector.shape_cast %21 : vector<1x1x640xf32> to vector<1x640xf32>
      %c0_17 = arith.constant 0 : index
      %c1 = arith.constant 1 : index
      %c0_18 = arith.constant 0 : index
      %23 = vector.load %arg4[%c0_17, %c1, %c0_18] : memref<1x2x640xf32, #tpu.memory_space<vmem>>, vector<1x1x640xf32>
      %24 = vector.shape_cast %23 : vector<1x1x640xf32> to vector<1x640xf32>
      %25 = tpu.iota {dimensions = array<i32: 0>} : vector<16x640xi32>
      %26 = arith.sitofp %25 : vector<16x640xi32> to vector<16x640xf32>
      %cst_19 = arith.constant 8.000000e+00 : f32
      %27 = vector.broadcast %cst_19 : f32 to vector<16x640xf32>
      %28 = arith.subf %26, %27 : vector<16x640xf32>
      %29 = tpu.iota {dimensions = array<i32: 0>} : vector<16x640xi32>
      %30 = arith.sitofp %29 : vector<16x640xi32> to vector<16x640xf32>
      %cst_20 = arith.constant 8.000000e+00 : f32
      %31 = vector.broadcast %cst_20 : f32 to vector<16x640xf32>
      %32 = arith.subf %30, %31 : vector<16x640xf32>
      %33 = vector.broadcast %22 : vector<1x640xf32> to vector<16x640xf32>
      %34 = arith.mulf %28, %33 : vector<16x640xf32>
      %35 = vector.broadcast %24 : vector<1x640xf32> to vector<16x640xf32>
      %36 = arith.mulf %32, %35 : vector<16x640xf32>
      %37 = math.cos %34 : vector<16x640xf32>
      %38 = math.sin %34 : vector<16x640xf32>
      %39 = math.cos %36 : vector<16x640xf32>
      %40 = math.sin %36 : vector<16x640xf32>
      %41 = vector.shape_cast %37 : vector<16x640xf32> to vector<16x1x640xf32>
      %42 = vector.shape_cast %38 : vector<16x640xf32> to vector<16x1x640xf32>
      %43 = vector.shape_cast %39 : vector<16x640xf32> to vector<1x16x640xf32>
      %44 = vector.shape_cast %40 : vector<16x640xf32> to vector<1x16x640xf32>
      %45 = vector.broadcast %41 : vector<16x1x640xf32> to vector<16x16x640xf32>
      %46 = vector.broadcast %43 : vector<1x16x640xf32> to vector<16x16x640xf32>
      %47 = arith.mulf %45, %46 : vector<16x16x640xf32>
      %48 = vector.broadcast %42 : vector<16x1x640xf32> to vector<16x16x640xf32>
      %49 = vector.broadcast %44 : vector<1x16x640xf32> to vector<16x16x640xf32>
      %50 = arith.mulf %48, %49 : vector<16x16x640xf32>
      %51 = arith.subf %47, %50 : vector<16x16x640xf32>
      %52 = vector.shape_cast %51 : vector<16x16x640xf32> to vector<256x640xf32>
      %53 = vector.broadcast %42 : vector<16x1x640xf32> to vector<16x16x640xf32>
      %54 = vector.broadcast %43 : vector<1x16x640xf32> to vector<16x16x640xf32>
      %55 = arith.mulf %53, %54 : vector<16x16x640xf32>
      %56 = vector.broadcast %41 : vector<16x1x640xf32> to vector<16x16x640xf32>
      %57 = vector.broadcast %44 : vector<1x16x640xf32> to vector<16x16x640xf32>
      %58 = arith.mulf %56, %57 : vector<16x16x640xf32>
      %59 = arith.addf %55, %58 : vector<16x16x640xf32>
      %60 = vector.shape_cast %59 : vector<16x16x640xf32> to vector<256x640xf32>
      %c0_21 = arith.constant 0 : index
      %c0_22 = arith.constant 0 : index
      %61 = vector.load %arg7[%c0_21, %c0_22] : memref<256x640xf32, #tpu.memory_space<vmem>>, vector<256x640xf32>
      tpu.vector_store %arg7[%c0_21, %c0_22], %52 {strides = array<i32>} : memref<256x640xf32, #tpu.memory_space<vmem>>, vector<256x640xf32>,
      %c0_23 = arith.constant 0 : index
      %c0_24 = arith.constant 0 : index
      %62 = vector.load %arg8[%c0_23, %c0_24] : memref<256x640xf32, #tpu.memory_space<vmem>>, vector<256x640xf32>
      tpu.vector_store %arg8[%c0_23, %c0_24], %60 {strides = array<i32>} : memref<256x640xf32, #tpu.memory_space<vmem>>, vector<256x640xf32>,
    } else {
    }
    %c0 = arith.constant 0 : index
    %c0_1 = arith.constant 0 : index
    %c0_2 = arith.constant 0 : index
    %3 = vector.load %arg3[%c0, %c0_1, %c0_2] : memref<1x16x256xf32, #tpu.memory_space<vmem>>, vector<1x16x256xf32>
    %4 = vector.shape_cast %3 : vector<1x16x256xf32> to vector<16x256xf32>
    %c0_3 = arith.constant 0 : index
    %c0_4 = arith.constant 0 : index
    %5 = vector.load %arg7[%c0_3, %c0_4] : memref<256x640xf32, #tpu.memory_space<vmem>>, vector<256x640xf32>
    %cst = arith.constant dense<0.000000e+00> : vector<16x640xf32>
    %6 = tpu.matmul %4, %5, %cst {dimension_numbers = #tpu.dot_dimension_numbers<[1], [0], [0], [1], [0, 0, 1, 1], [], []>} : vector<16x256xf32>, vector<256x640xf32>, vector<16x640xf32> -> vector<16x640xf32>
    %c0_5 = arith.constant 0 : index
    %c0_6 = arith.constant 0 : index
    %7 = vector.load %arg8[%c0_5, %c0_6] : memref<256x640xf32, #tpu.memory_space<vmem>>, vector<256x640xf32>
    %cst_7 = arith.constant dense<0.000000e+00> : vector<16x640xf32>
    %8 = tpu.matmul %4, %7, %cst_7 {dimension_numbers = #tpu.dot_dimension_numbers<[1], [0], [0], [1], [0, 0, 1, 1], [], []>} : vector<16x256xf32>, vector<256x640xf32>, vector<16x640xf32> -> vector<16x640xf32>
    %9 = vector.extract_strided_slice %6 {offsets = [0, 0], sizes = [8, 640], strides = [1, 1]} : vector<16x640xf32> to vector<8x640xf32>
    %10 = vector.extract_strided_slice %8 {offsets = [8, 0], sizes = [8, 640], strides = [1, 1]} : vector<16x640xf32> to vector<8x640xf32>
    %11 = arith.addf %9, %10 : vector<8x640xf32>
    %c0_8 = arith.constant 0 : index
    %c0_9 = arith.constant 0 : index
    %c0_10 = arith.constant 0 : index
    %12 = vector.load %arg5[%c0_8, %c0_9, %c0_10] : memref<1x8x640xf32, #tpu.memory_space<vmem>>, vector<1x8x640xf32>
    %13 = vector.shape_cast %12 : vector<1x8x640xf32> to vector<8x640xf32>
    %14 = vector.shape_cast %11 : vector<8x640xf32> to vector<1x8x640xf32>
    tpu.vector_store %arg5[%c0_8, %c0_9, %c0_10], %14 {strides = array<i32>} : memref<1x8x640xf32, #tpu.memory_space<vmem>>, vector<1x8x640xf32>,
    %15 = vector.extract_strided_slice %6 {offsets = [8, 0], sizes = [8, 640], strides = [1, 1]} : vector<16x640xf32> to vector<8x640xf32>
    %16 = vector.extract_strided_slice %8 {offsets = [0, 0], sizes = [8, 640], strides = [1, 1]} : vector<16x640xf32> to vector<8x640xf32>
    %17 = arith.subf %15, %16 : vector<8x640xf32>
    %c0_11 = arith.constant 0 : index
    %c0_12 = arith.constant 0 : index
    %c0_13 = arith.constant 0 : index
    %18 = vector.load %arg6[%c0_11, %c0_12, %c0_13] : memref<1x8x640xf32, #tpu.memory_space<vmem>>, vector<1x8x640xf32>
    %19 = vector.shape_cast %18 : vector<1x8x640xf32> to vector<8x640xf32>
    %20 = vector.shape_cast %17 : vector<8x640xf32> to vector<1x8x640xf32>
    tpu.vector_store %arg6[%c0_11, %c0_12, %c0_13], %20 {strides = array<i32>} : memref<1x8x640xf32, #tpu.memory_space<vmem>>, vector<1x8x640xf32>,
    return
  }
  func.func @transform_0(%arg0: i32, %arg1: i32, %arg2: i32) -> (i32, i32, i32) {
    %c0_i32 = arith.constant 0 : i32
    %c0_i32_0 = arith.constant 0 : i32
    return %arg0, %arg2, %c0_i32 : i32, i32, i32
  }
  func.func @transform_1(%arg0: i32, %arg1: i32, %arg2: i32) -> (i32, i32, i32) {
    %c0_i32 = arith.constant 0 : i32
    %c0_i32_0 = arith.constant 0 : i32
    return %arg0, %c0_i32, %arg1 : i32, i32, i32
  }
  func.func @transform_2(%arg0: i32, %arg1: i32, %arg2: i32) -> (i32, i32, i32) {
    %c0_i32 = arith.constant 0 : i32
    return %arg0, %arg2, %arg1 : i32, i32, i32
  }
  func.func @transform_3(%arg0: i32, %arg1: i32, %arg2: i32) -> (i32, i32, i32) {
    %c0_i32 = arith.constant 0 : i32
    return %arg0, %arg2, %arg1 : i32, i32, i32
  }
}

</mosaic_0001>

<llo_original>
// kernel: custom-call.3
$region0: #{custom-call.3}
  %s0 = inlined_call_operand.hbm [shape: c64[2,4,2,16,16], index: 0, kind: input, shape index: {}]
  %s1 = inlined_call_operand.vmem [shape: f32[2,4,2,16,16], index: 1, kind: output, shape index: {}]
  %s2 = scalar_lea.hbm %s0, 4096
  $region1: #{custom-call.3} parent=0
    #allocation0 [shape = 's32[1]{0}', space=sflag, size = 0x4, scoped, tag = 'scoped memory for custom-call.3']
    %3 = vsyncpa [#allocation0], 0
    %s4 = sshll.u32 %s1, 4
    %s5 = int_to_ptr.vmem [resolvable:$true] %s4
    %7 = dma.hbm_to_vmem [thread:$0]  %s2, 4096, %s5, [#allocation0]
    %8 = dma.done [#allocation0], 4096
    %9 = vsyncpa [#allocation0], 1

// kernel: custom-call.2
$region0: #{custom-call.2}
  %s0 = inlined_call_operand.hbm [shape: c64[2,4,2,16,16], index: 0, kind: input, shape index: {}]
  %s1 = inlined_call_operand.vmem [shape: f32[2,4,2,16,16], index: 1, kind: output, shape index: {}]
  $region1: #{custom-call.2} parent=0
    #allocation0 [shape = 's32[1]{0}', space=sflag, size = 0x4, scoped, tag = 'scoped memory for custom-call.2']
    %2 = vsyncpa [#allocation0], 0
    %s3 = sshll.u32 %s1, 4
    %s4 = int_to_ptr.vmem [resolvable:$true] %s3
    %6 = dma.hbm_to_vmem [thread:$0]  %s0, 4096, %s4, [#allocation0]
    %7 = dma.done [#allocation0], 4096
    %8 = vsyncpa [#allocation0], 1

// kernel: custom-call
$region0: #{custom-call}
  %s0 = inlined_call_operand.hbm [shape: c64[2,1,2,16,16], index: 0, kind: input, shape index: {}]
  %s1 = inlined_call_operand.vmem [shape: f32[2,1,2,16,16], index: 1, kind: output, shape index: {}]
  $region1: #{custom-call} parent=0
    #allocation0 [shape = 's32[1]{0}', space=sflag, size = 0x4, scoped, tag = 'scoped memory for custom-call']
    %2 = vsyncpa [#allocation0], 0
    %s3 = sshll.u32 %s1, 4
    %s4 = int_to_ptr.vmem [resolvable:$true] %s3
    %6 = dma.hbm_to_vmem [thread:$0]  %s0, 1024, %s4, [#allocation0]
    %7 = dma.done [#allocation0], 1024
    %8 = vsyncpa [#allocation0], 1

// kernel: custom-call.1
$region0: #{custom-call.1}
  %s0 = inlined_call_operand.hbm [shape: c64[2,1,2,16,16], index: 0, kind: input, shape index: {}]
  %s1 = inlined_call_operand.vmem [shape: f32[2,1,2,16,16], index: 1, kind: output, shape index: {}]
  %s2 = scalar_lea.hbm %s0, 1024
  $region1: #{custom-call.1} parent=0
    #allocation0 [shape = 's32[1]{0}', space=sflag, size = 0x4, scoped, tag = 'scoped memory for custom-call.1']
    %3 = vsyncpa [#allocation0], 0
    %s4 = sshll.u32 %s1, 4
    %s5 = int_to_ptr.vmem [resolvable:$true] %s4
    %7 = dma.hbm_to_vmem [thread:$0]  %s2, 1024, %s5, [#allocation0]
    %8 = dma.done [#allocation0], 1024
    %9 = vsyncpa [#allocation0], 1

// kernel: custom-call.4
$region0: #{custom-call.4}
  %s0 = inlined_call_operand.vmem [shape: f32[2,5,4,2,128], index: 0, kind: input, shape index: {}]
  %s1 = inlined_call_operand.vmem [shape: f32[2,5,4,2,128], index: 1, kind: input, shape index: {}]
  %s2 = inlined_call_operand.vmem [shape: c64[2,5,4,2,128], index: 2, kind: output, shape index: {}]
  %s4 = scalar_lea.vmem %s2, 128
  %v5 = vld [vmem:[%s0] sm:$0xff]
  %6 = vst [vmem:[%s2] sm:$0xff] %v5
  %s7 = scalar_lea.vmem %s2, 8
  %s8 = scalar_lea.vmem %s0, 8
  %v9 = vld [vmem:[%s8] sm:$0xff]
  %10 = vst [vmem:[%s7] sm:$0xff] %v9
  %s11 = scalar_lea.vmem %s2, 16
  %s12 = scalar_lea.vmem %s0, 16
  %v13 = vld [vmem:[%s12] sm:$0xff]
  %14 = vst [vmem:[%s11] sm:$0xff] %v13
  %s15 = scalar_lea.vmem %s2, 24
  %s16 = scalar_lea.vmem %s0, 24
  %v17 = vld [vmem:[%s16] sm:$0xff]
  %18 = vst [vmem:[%s15] sm:$0xff] %v17
  %s19 = scalar_lea.vmem %s2, 32
  %s20 = scalar_lea.vmem %s0, 32
  %v21 = vld [vmem:[%s20] sm:$0xff]
  %22 = vst [vmem:[%s19] sm:$0xff] %v21
  %s23 = scalar_lea.vmem %s2, 40
  %s24 = scalar_lea.vmem %s0, 40
  %v25 = vld [vmem:[%s24] sm:$0xff]
  %26 = vst [vmem:[%s23] sm:$0xff] %v25
  %s27 = scalar_lea.vmem %s2, 48
  %s28 = scalar_lea.vmem %s0, 48
  %v29 = vld [vmem:[%s28] sm:$0xff]
  %30 = vst [vmem:[%s27] sm:$0xff] %v29
  %s31 = scalar_lea.vmem %s2, 56
  %s32 = scalar_lea.vmem %s0, 56
  %v33 = vld [vmem:[%s32] sm:$0xff]
  %34 = vst [vmem:[%s31] sm:$0xff] %v33
  %s35 = scalar_lea.vmem %s2, 64
  %s36 = scalar_lea.vmem %s0, 64
  %v37 = vld [vmem:[%s36] sm:$0xff]
  %38 = vst [vmem:[%s35] sm:$0xff] %v37
  %s39 = scalar_lea.vmem %s2, 72
  %s40 = scalar_lea.vmem %s0, 72
  %v41 = vld [vmem:[%s40] sm:$0xff]
  %42 = vst [vmem:[%s39] sm:$0xff] %v41
  %s43 = scalar_lea.vmem %s2, 80
  %s44 = scalar_lea.vmem %s0, 80
  %v45 = vld [vmem:[%s44] sm:$0xff]
  %46 = vst [vmem:[%s43] sm:$0xff] %v45
  %s47 = scalar_lea.vmem %s2, 88
  %s48 = scalar_lea.vmem %s0, 88
  %v49 = vld [vmem:[%s48] sm:$0xff]
  %50 = vst [vmem:[%s47] sm:$0xff] %v49
  %s51 = scalar_lea.vmem %s2, 96
  %s52 = scalar_lea.vmem %s0, 96
  %v53 = vld [vmem:[%s52] sm:$0xff]
  %54 = vst [vmem:[%s51] sm:$0xff] %v53
  %s55 = scalar_lea.vmem %s2, 104
  %s56 = scalar_lea.vmem %s0, 104
  %v57 = vld [vmem:[%s56] sm:$0xff]
  %58 = vst [vmem:[%s55] sm:$0xff] %v57
  %s59 = scalar_lea.vmem %s2, 112
  %s60 = scalar_lea.vmem %s0, 112
  %v61 = vld [vmem:[%s60] sm:$0xff]
  %62 = vst [vmem:[%s59] sm:$0xff] %v61
  %s63 = scalar_lea.vmem %s2, 120
  %s64 = scalar_lea.vmem %s0, 120
  %v65 = vld [vmem:[%s64] sm:$0xff]
  %66 = vst [vmem:[%s63] sm:$0xff] %v65
  %v67 = vld [vmem:[%s1] sm:$0xff]
  %68 = vst [vmem:[%s4] sm:$0xff] %v67
  %s69 = scalar_lea.vmem %s4, 8
  %s70 = scalar_lea.vmem %s1, 8
  %v71 = vld [vmem:[%s70] sm:$0xff]
  %72 = vst [vmem:[%s69] sm:$0xff] %v71
  %s73 = scalar_lea.vmem %s4, 16
  %s74 = scalar_lea.vmem %s1, 16
  %v75 = vld [vmem:[%s74] sm:$0xff]
  %76 = vst [vmem:[%s73] sm:$0xff] %v75
  %s77 = scalar_lea.vmem %s4, 24
  %s78 = scalar_lea.vmem %s1, 24
  %v79 = vld [vmem:[%s78] sm:$0xff]
  %80 = vst [vmem:[%s77] sm:$0xff] %v79
  %s81 = scalar_lea.vmem %s4, 32
  %s82 = scalar_lea.vmem %s1, 32
  %v83 = vld [vmem:[%s82] sm:$0xff]
  %84 = vst [vmem:[%s81] sm:$0xff] %v83
  %s85 = scalar_lea.vmem %s4, 40
  %s86 = scalar_lea.vmem %s1, 40
  %v87 = vld [vmem:[%s86] sm:$0xff]
  %88 = vst [vmem:[%s85] sm:$0xff] %v87
  %s89 = scalar_lea.vmem %s4, 48
  %s90 = scalar_lea.vmem %s1, 48
  %v91 = vld [vmem:[%s90] sm:$0xff]
  %92 = vst [vmem:[%s89] sm:$0xff] %v91
  %s93 = scalar_lea.vmem %s4, 56
  %s94 = scalar_lea.vmem %s1, 56
  %v95 = vld [vmem:[%s94] sm:$0xff]
  %96 = vst [vmem:[%s93] sm:$0xff] %v95
  %s97 = scalar_lea.vmem %s4, 64
  %s98 = scalar_lea.vmem %s1, 64
  %v99 = vld [vmem:[%s98] sm:$0xff]
  %100 = vst [vmem:[%s97] sm:$0xff] %v99
  %s101 = scalar_lea.vmem %s4, 72
  %s102 = scalar_lea.vmem %s1, 72
  %v103 = vld [vmem:[%s102] sm:$0xff]
  %104 = vst [vmem:[%s101] sm:$0xff] %v103
  %s105 = scalar_lea.vmem %s4, 80
  %s106 = scalar_lea.vmem %s1, 80
  %v107 = vld [vmem:[%s106] sm:$0xff]
  %108 = vst [vmem:[%s105] sm:$0xff] %v107
  %s109 = scalar_lea.vmem %s4, 88
  %s110 = scalar_lea.vmem %s1, 88
  %v111 = vld [vmem:[%s110] sm:$0xff]
  %112 = vst [vmem:[%s109] sm:$0xff] %v111
  %s113 = scalar_lea.vmem %s4, 96
  %s114 = scalar_lea.vmem %s1, 96
  %v115 = vld [vmem:[%s114] sm:$0xff]
  %116 = vst [vmem:[%s113] sm:$0xff] %v115
  %s117 = scalar_lea.vmem %s4, 104
  %s118 = scalar_lea.vmem %s1, 104
  %v119 = vld [vmem:[%s118] sm:$0xff]
  %120 = vst [vmem:[%s117] sm:$0xff] %v119
  %s121 = scalar_lea.vmem %s4, 112
  %s122 = scalar_lea.vmem %s1, 112
  %v123 = vld [vmem:[%s122] sm:$0xff]
  %124 = vst [vmem:[%s121] sm:$0xff] %v123
  %s125 = scalar_lea.vmem %s4, 120
  %s126 = scalar_lea.vmem %s1, 120
  %v127 = vld [vmem:[%s126] sm:$0xff]
  %128 = vst [vmem:[%s125] sm:$0xff] %v127

// kernel: mr_forward_model_static.1
$region0: #{mr_forward_model_static.1}
  #allocation0 [shape = 'u32[]', space=smem, size = 0x4, offset = 0x4, fixed_abs, tag = 'smem constant byte address 0x4 - core index']
  #allocation1 [shape = 'u32[144,128]{1,0:T(1,128)}', space=vmem, size = 0x12000, scoped, tag = 'internal scratch']
  #allocation2 [shape = 'f32[256,640]{1,0:T(8,128)}', space=vmem, size = 0xa0000, scoped, tag = 'scratch operand']
  #allocation3 [shape = 'f32[256,640]{1,0:T(8,128)}', space=vmem, size = 0xa0000, scoped, tag = 'scratch operand']
  %s0 = inlined_call_operand.vmem [shape: f32[2,16,256], index: 0, kind: input, shape index: {}]
  %s1 = inlined_call_operand.vmem [shape: f32[2,2,640], index: 1, kind: input, shape index: {}]
  %s2 = inlined_call_operand.vmem [shape: f32[2,8,640], index: 2, kind: output, shape index: {0}]
  %s3 = inlined_call_operand.vmem [shape: f32[2,8,640], index: 3, kind: output, shape index: {1}]
  %4 = xla_tuple %s2, %s3
  %s5 = sld [smem:[#allocation0]]
  $region53: #{mr_forward_model_static.1} parent=0
    _
  %s7 = ssub.s32 1, %s5
  %s8 = scalar_select 0, %s7, %s5
  loop: start=0, step=1, limit=4
  $region2: #{mr_forward_model_static.1} parent=0 // loop_pre_header
    _
  $region3: #{mr_forward_model_static.1} parent=0 // loop_header
    %s10 = sphi 0, %s14
    %p11 = scmp.ge.s32.totalorder %s10, 4
    %s17 = sphi 0, %s36
    %s18 = sphi 0, %s32
    %s19 = sphi 0, %s28
    %s20 = sphi 0, %s17
    %s21 = sphi 0, %s18
    %s22 = sphi 0, %s19
    %s23 = sphi 0, %s20
    %s24 = sphi 0, %s21
    %s25 = sphi 0, %s22
    %s41 = sphi 0, %s43
    %s44 = sphi 0, %s41
    %s45 = sphi 0, %s44
    %s61 = sphi 0, %s45
    %s69 = sphi 0, %s71
    %s72 = sphi 0, %s69
    %s73 = sphi 0, %s72
    %s89 = sphi 0, %s73
    %s99 = sphi 0, %s101
    %s102 = sphi 0, %s99
    %s103 = sphi 0, %s102
    %s119 = sphi 0, %s103
    %s129 = sphi 0, %s131
    %s132 = sphi 0, %s129
    %s133 = sphi 0, %s132
    %s149 = sphi 0, %s133
  $region4: #{mr_forward_model_static.1} parent=0 // loop_header_branch
    %13 = sbr.rel (%p11) target = $region8
  $region5: #{mr_forward_model_static.1} parent=0 // loop_body
    %s15 = ssub.s32 %s10, 1
    %s16 = ssub.s32 %s10, 2
    %s26 = sadd.s32 1, %s19
    %p27 = scmp.ge.s32.totalorder %s26, 1
    %s28 = scalar_select %p27, 0, %s26
    %s29 = sadd.s32 1, %s18
    %s30 = scalar_select %p27, %s29, %s18
    %p31 = scmp.ge.s32.totalorder %s30, 1
    %s32 = scalar_select %p31, 0, %s30
    %s33 = sadd.s32 1, %s17
    %s34 = scalar_select %p31, %s33, %s17
    %p35 = scmp.ge.s32.totalorder %s34, 2
    %s36 = scalar_select %p35, 0, %s34
    %s37 = ssub.s32 %s17, %s36
    %s38 = ssub.s32 %s19, %s28
    %s39 = sor.u32 %s37, %s38
    %p40 = scmp.eq.s32.totalorder %s39, 0
    %s42 = sadd.s32 %s41, 1
    %s43 = scalar_select %p40, %s41, %s42
    %p46 = pneg %p40
    %p47 = scmp.eq.s32.totalorder %s10, 1
    %p48 = por %p46, %p47
    %p49 = scmp.ne.s32.totalorder %s41, %s44
    %p50 = scmp.eq.s32.totalorder %s10, 0
    %p51 = por %p49, %p50
    %p52 = scmp.ne.s32.totalorder %s41, %s44
    %p53 = scmp.eq.s32.totalorder %s15, 1
    %p54 = por %p52, %p53
    %p55 = scmp.ne.s32.totalorder %s44, %s45
    %p56 = scmp.eq.s32.totalorder %s15, 0
    %p57 = por %p55, %p56
    %p58 = scmp.ne.s32.totalorder %s44, %s45
    %p59 = scmp.eq.s32.totalorder %s16, 1
    %p60 = por %p58, %p59
    %p62 = scmp.ne.s32.totalorder %s45, %s61
    %p63 = scmp.eq.s32.totalorder %s16, 0
    %p64 = por %p62, %p63
    %s65 = ssub.s32 %s17, %s36
    %s66 = ssub.s32 %s18, %s32
    %s67 = sor.u32 %s65, %s66
    %p68 = scmp.eq.s32.totalorder %s67, 0
    %s70 = sadd.s32 %s69, 1
    %s71 = scalar_select %p68, %s69, %s70
    %p74 = pneg %p68
    %p75 = scmp.eq.s32.totalorder %s10, 1
    %p76 = por %p74, %p75
    %p77 = scmp.ne.s32.totalorder %s69, %s72
    %p78 = scmp.eq.s32.totalorder %s10, 0
    %p79 = por %p77, %p78
    %p80 = scmp.ne.s32.totalorder %s69, %s72
    %p81 = scmp.eq.s32.totalorder %s15, 1
    %p82 = por %p80, %p81
    %p83 = scmp.ne.s32.totalorder %s72, %s73
    %p84 = scmp.eq.s32.totalorder %s15, 0
    %p85 = por %p83, %p84
    %p86 = scmp.ne.s32.totalorder %s72, %s73
    %p87 = scmp.eq.s32.totalorder %s16, 1
    %p88 = por %p86, %p87
    %p90 = scmp.ne.s32.totalorder %s73, %s89
    %p91 = scmp.eq.s32.totalorder %s16, 0
    %p92 = por %p90, %p91
    %s93 = ssub.s32 %s17, %s36
    %s94 = ssub.s32 %s19, %s28
    %s95 = sor.u32 %s93, %s94
    %s96 = ssub.s32 %s18, %s32
    %s97 = sor.u32 %s95, %s96
    %p98 = scmp.eq.s32.totalorder %s97, 0
    %s100 = sadd.s32 %s99, 1
    %s101 = scalar_select %p98, %s99, %s100
    %p104 = pneg %p98
    %p105 = scmp.eq.s32.totalorder %s10, 1
    %p106 = por %p104, %p105
    %p107 = scmp.ne.s32.totalorder %s99, %s102
    %p108 = scmp.eq.s32.totalorder %s10, 0
    %p109 = por %p107, %p108
    %p110 = scmp.ne.s32.totalorder %s99, %s102
    %p111 = scmp.eq.s32.totalorder %s15, 1
    %p112 = por %p110, %p111
    %p113 = scmp.ne.s32.totalorder %s102, %s103
    %p114 = scmp.eq.s32.totalorder %s15, 0
    %p115 = por %p113, %p114
    %p116 = scmp.ne.s32.totalorder %s102, %s103
    %p117 = scmp.eq.s32.totalorder %s16, 1
    %p118 = por %p116, %p117
    %p120 = scmp.ne.s32.totalorder %s103, %s119
    %p121 = scmp.eq.s32.totalorder %s16, 0
    %p122 = por %p120, %p121
    %s123 = ssub.s32 %s17, %s36
    %s124 = ssub.s32 %s19, %s28
    %s125 = sor.u32 %s123, %s124
    %s126 = ssub.s32 %s18, %s32
    %s127 = sor.u32 %s125, %s126
    %p128 = scmp.eq.s32.totalorder %s127, 0
    %s130 = sadd.s32 %s129, 1
    %s131 = scalar_select %p128, %s129, %s130
    %p134 = pneg %p128
    %p135 = scmp.eq.s32.totalorder %s10, 1
    %p136 = por %p134, %p135
    %p137 = scmp.ne.s32.totalorder %s129, %s132
    %p138 = scmp.eq.s32.totalorder %s10, 0
    %p139 = por %p137, %p138
    %p140 = scmp.ne.s32.totalorder %s129, %s132
    %p141 = scmp.eq.s32.totalorder %s15, 1
    %p142 = por %p140, %p141
    %p143 = scmp.ne.s32.totalorder %s132, %s133
    %p144 = scmp.eq.s32.totalorder %s15, 0
    %p145 = por %p143, %p144
    %p146 = scmp.ne.s32.totalorder %s132, %s133
    %p147 = scmp.eq.s32.totalorder %s16, 1
    %p148 = por %p146, %p147
    %p150 = scmp.ne.s32.totalorder %s133, %s149
    %p151 = scmp.eq.s32.totalorder %s16, 0
    %p152 = por %p150, %p151
    %p153 = scmp.le.s32.totalorder 1, %s10
    %p154 = scmp.lt.s32.totalorder %s10, 3
    %p155 = pnand %p153, %p154
    %p156 = pneg %p155
    // Predicated region
    $region9: #{mr_forward_model_static.1} parent=5 // pred_check
      _
    $region10: #{mr_forward_model_static.1} parent=5 // pred_check_branch
      %158 = sbr.rel (%p155) target = $region12
    $region11: #{mr_forward_model_static.1} parent=5 // pred_region
      %s159 = ssub.s32 %s10, 1
    $region12: #{mr_forward_model_static.1} parent=5 // pred_fallthru
      _
    %p160 = scmp.lt.s32.totalorder %s10, 2
    // Predicated region
    $region13: #{mr_forward_model_static.1} parent=5 // pred_check
      %p161 = pneg %p160
    $region14: #{mr_forward_model_static.1} parent=5 // pred_check_branch
      %163 = sbr.rel (%p161) target = $region16
    $region15: #{mr_forward_model_static.1} parent=5 // pred_region
      // Predicated region
      $region17: #{mr_forward_model_static.1} parent=15 // pred_check
        %p164 = pneg %p51
      $region18: #{mr_forward_model_static.1} parent=15 // pred_check_branch
        %166 = sbr.rel (%p164) target = $region20
      $region19: #{mr_forward_model_static.1} parent=15 // pred_region
        %s167 = smul.u32 2, %s19
        %p168 = scmp.lt.s32.totalorder %s17, 1
        %s169 = scalar_select %p168, %s17, 1
        %p170 = scmp.lt.s32.totalorder %s167, 1
        %s171 = scalar_select %p170, %s167, 1
        %s172 = smul.addr %s171, 2
        %s173 = smul.addr %s169, 4
        %s174 = sadd.s32 %s172, %s173
        %s175 = smul.addr %s174, 8
        %s176 = scalar_lea.vmem %s0, %s175
        %s177 = smul.u32 2, %s19
      $region20: #{mr_forward_model_static.1} parent=15 // pred_fallthru
        _
      // Predicated region
      $region21: #{mr_forward_model_static.1} parent=15 // pred_check
        %p178 = pneg %p79
      $region22: #{mr_forward_model_static.1} parent=15 // pred_check_branch
        %180 = sbr.rel (%p178) target = $region24
      $region23: #{mr_forward_model_static.1} parent=15 // pred_region
        %s181 = smul.u32 5, %s18
        %p182 = scmp.lt.s32.totalorder %s17, 1
        %s183 = scalar_select %p182, %s17, 1
        %p184 = scmp.lt.s32.totalorder %s181, 4
        %s185 = scalar_select %p184, %s181, 4
        %s186 = smul.addr %s183, 5
        %s187 = sadd.s32 %s185, %s186
        %s188 = smul.addr %s187, 2
        %s189 = scalar_lea.vmem %s1, %s188
        %s190 = smul.u32 5, %s18
      $region24: #{mr_forward_model_static.1} parent=15 // pred_fallthru
        _
    $region16: #{mr_forward_model_static.1} parent=5 // pred_fallthru
      _
    %p191 = scmp.le.s32.totalorder 1, %s10
    %p192 = scmp.lt.s32.totalorder %s10, 3
    %p193 = pnand %p191, %p192
    %p194 = pneg %p193
    // Predicated region
    $region25: #{mr_forward_model_static.1} parent=5 // pred_check
      _
    $region26: #{mr_forward_model_static.1} parent=5 // pred_check_branch
      %196 = sbr.rel (%p193) target = $region28
    $region27: #{mr_forward_model_static.1} parent=5 // pred_region
      %s197 = ssub.s32 %s10, 1
      %s198 = smul.u32 2, %s22
      %p199 = scmp.lt.s32.totalorder %s20, 1
      %s200 = scalar_select %p199, %s20, 1
      %p201 = scmp.lt.s32.totalorder %s198, 1
      %s202 = scalar_select %p201, %s198, 1
      %s203 = smul.addr %s202, 2
      %s204 = smul.addr %s200, 4
      %s205 = sadd.s32 %s203, %s204
      %s206 = smul.addr %s205, 8
      %s207 = scalar_lea.vmem %s0, %s206
      %p208 = pneg %p57
      %p209 = pneg %p54
      %s210 = smul.u32 5, %s21
      %p211 = scmp.lt.s32.totalorder %s20, 1
      %s212 = scalar_select %p211, %s20, 1
      %p213 = scmp.lt.s32.totalorder %s210, 4
      %s214 = scalar_select %p213, %s210, 4
      %s215 = smul.addr %s212, 5
      %s216 = sadd.s32 %s214, %s215
      %s217 = smul.addr %s216, 2
      %s218 = scalar_lea.vmem %s1, %s217
      %p219 = pneg %p85
      %p220 = pneg %p82
      %p221 = pneg %p115
      %p222 = pneg %p112
      %s223 = smul.u32 5, %s21
      %p224 = scmp.lt.s32.totalorder %s20, 1
      %s225 = scalar_select %p224, %s20, 1
      %p226 = scmp.lt.s32.totalorder %s22, 0
      %s227 = scalar_select %p226, %s22, 0
      %p228 = scmp.lt.s32.totalorder %s223, 4
      %s229 = scalar_select %p228, %s223, 4
      %s230 = smul.addr %s227, 5
      %s231 = sadd.s32 %s229, %s230
      %s232 = smul.addr %s225, 5
      %s233 = sadd.s32 %s231, %s232
      %s234 = smul.addr %s233, 8
      %s235 = scalar_lea.vmem %s2, %s234
      %p236 = pneg %p145
      %p237 = pneg %p142
      %s238 = smul.u32 5, %s21
      %p239 = scmp.lt.s32.totalorder %s20, 1
      %s240 = scalar_select %p239, %s20, 1
      %p241 = scmp.lt.s32.totalorder %s22, 0
      %s242 = scalar_select %p241, %s22, 0
      %p243 = scmp.lt.s32.totalorder %s238, 4
      %s244 = scalar_select %p243, %s238, 4
      %s245 = smul.addr %s242, 5
      %s246 = sadd.s32 %s244, %s245
      %s247 = smul.addr %s240, 5
      %s248 = sadd.s32 %s246, %s247
      %s249 = smul.addr %s248, 8
      %s250 = scalar_lea.vmem %s3, %s249
      %s251 = smul.u32 2, %s22
      %p252 = scmp.lt.s32.totalorder %s20, 1
      %s253 = scalar_select %p252, %s20, 1
      %p254 = scmp.lt.s32.totalorder %s251, 1
      %s255 = scalar_select %p254, %s251, 1
      %s256 = smul.addr %s255, 2
      %s257 = smul.addr %s253, 4
      %s258 = sadd.s32 %s256, %s257
      %s259 = smul.addr %s258, 8
      %s260 = scalar_lea.vmem %s0, %s259
      %s261 = smul.u32 2, %s22
      %s262 = smul.u32 5, %s21
      %p263 = scmp.lt.s32.totalorder %s20, 1
      %s264 = scalar_select %p263, %s20, 1
      %p265 = scmp.lt.s32.totalorder %s262, 4
      %s266 = scalar_select %p265, %s262, 4
      %s267 = smul.addr %s264, 5
      %s268 = sadd.s32 %s266, %s267
      %s269 = smul.addr %s268, 2
      %s270 = scalar_lea.vmem %s1, %s269
      %s271 = smul.u32 5, %s21
      %s272 = smul.u32 5, %s21
      %p273 = scmp.lt.s32.totalorder %s20, 1
      %s274 = scalar_select %p273, %s20, 1
      %p275 = scmp.lt.s32.totalorder %s22, 0
      %s276 = scalar_select %p275, %s22, 0
      %p277 = scmp.lt.s32.totalorder %s272, 4
      %s278 = scalar_select %p277, %s272, 4
      %s279 = smul.addr %s276, 5
      %s280 = sadd.s32 %s278, %s279
      %s281 = smul.addr %s274, 5
      %s282 = sadd.s32 %s280, %s281
      %s283 = smul.addr %s282, 8
      %s284 = scalar_lea.vmem %s2, %s283
      %s285 = smul.u32 5, %s21
      %s286 = smul.u32 5, %s21
      %p287 = scmp.lt.s32.totalorder %s20, 1
      %s288 = scalar_select %p287, %s20, 1
      %p289 = scmp.lt.s32.totalorder %s22, 0
      %s290 = scalar_select %p289, %s22, 0
      %p291 = scmp.lt.s32.totalorder %s286, 4
      %s292 = scalar_select %p291, %s286, 4
      %s293 = smul.addr %s290, 5
      %s294 = sadd.s32 %s292, %s293
      %s295 = smul.addr %s288, 5
      %s296 = sadd.s32 %s294, %s295
      %s297 = smul.addr %s296, 8
      %s298 = scalar_lea.vmem %s3, %s297
      %s299 = smul.u32 5, %s21
      %p300 = scmp.eq.s32.totalorder %s22, 0
      // Predicated region
      $region29: #{mr_forward_model_static.1} parent=27 // pred_check
        %p301 = pneg %p300
      $region30: #{mr_forward_model_static.1} parent=27 // pred_check_branch
        %303 = sbr.rel (%p301) target = $region32
      $region31: #{mr_forward_model_static.1} parent=27 // pred_region
        %v304 = vld [vmem:[%s270] ss:$2 sm:$0x1f]
        %s305 = scalar_lea.vmem %s270, 1
        %v306 = vld [vmem:[%s305] ss:$2 sm:$0x1f]
        %v307 = vlaneseq
        %v308 = vshrl.u32 %v307, 7
        %v309 = vadd.s32 %v308, 8
        %v310 = vcvt.s32.f32 %v308
        %v311 = vcvt.s32.f32 %v309
        %v312 = vsub.f32 %v310, 8.0
        %v313 = vsub.f32 %v311, 8.0
        %v315 = vlaneseq
        %v316 = vshrl.u32 %v315, 7
        %v317 = vsub.s32 0, %v316
        %v318 = vrot.slane %v304, %v317
        %v319 = vlaneseq
        %v320 = vshrl.u32 %v319, 7
        %v321 = vsub.s32 1, %v320
        %v322 = vrot.slane %v304, %v321
        %v323 = vlaneseq
        %v324 = vshrl.u32 %v323, 7
        %v325 = vsub.s32 2, %v324
        %v326 = vrot.slane %v304, %v325
        %v327 = vlaneseq
        %v328 = vshrl.u32 %v327, 7
        %v329 = vsub.s32 3, %v328
        %v330 = vrot.slane %v304, %v329
        %v331 = vlaneseq
        %v332 = vshrl.u32 %v331, 7
        %v333 = vsub.s32 4, %v332
        %v334 = vrot.slane %v304, %v333
        %v340 = vmul.f32 %v312, %v318
        %v341 = vmul.f32 %v312, %v322
        %v342 = vmul.f32 %v312, %v326
        %v343 = vmul.f32 %v312, %v330
        %v344 = vmul.f32 %v312, %v334
        %v345 = vmul.f32 %v313, %v318
        %v346 = vmul.f32 %v313, %v322
        %v347 = vmul.f32 %v313, %v326
        %v348 = vmul.f32 %v313, %v330
        %v349 = vmul.f32 %v313, %v334
        %v351 = vlaneseq
        %v352 = vshrl.u32 %v351, 7
        %v353 = vsub.s32 0, %v352
        %v354 = vrot.slane %v306, %v353
        %v355 = vlaneseq
        %v356 = vshrl.u32 %v355, 7
        %v357 = vsub.s32 1, %v356
        %v358 = vrot.slane %v306, %v357
        %v359 = vlaneseq
        %v360 = vshrl.u32 %v359, 7
        %v361 = vsub.s32 2, %v360
        %v362 = vrot.slane %v306, %v361
        %v363 = vlaneseq
        %v364 = vshrl.u32 %v363, 7
        %v365 = vsub.s32 3, %v364
        %v366 = vrot.slane %v306, %v365
        %v367 = vlaneseq
        %v368 = vshrl.u32 %v367, 7
        %v369 = vsub.s32 4, %v368
        %v370 = vrot.slane %v306, %v369
        %v376 = vmul.f32 %v312, %v354
        %v377 = vmul.f32 %v312, %v358
        %v378 = vmul.f32 %v312, %v362
        %v379 = vmul.f32 %v312, %v366
        %v380 = vmul.f32 %v312, %v370
        %v381 = vmul.f32 %v313, %v354
        %v382 = vmul.f32 %v313, %v358
        %v383 = vmul.f32 %v313, %v362
        %v384 = vmul.f32 %v313, %v366
        %v385 = vmul.f32 %v313, %v370
        %v386 = vand.u32 2147483647, %v340
        %vm387 = vcmp.le.f32.partialorder %v386, 0.7853982
        %vm388 = vcmp.lt.s32.totalorder %v340, 0
        %v389 = vand.u32 %v340, 2139095040
        %v390 = vshrl.u32 %v389, 23
        %v391 = vsub.s32 %v390, 127
        %v392 = vand.u32 2147483647, %v340
        %v393 = vand.u32 %v392, 8388607
        %v394 = vor.u32 %v393, 8388608
        %v395 = vsub.s32 0, %v394
        %v396 = vadd.s32 %v391, 1
        %vm397 = vcmp.gt.s32.totalorder %v396, 0
        %v398 = vsel %vm397, %v396, 0
        %v399 = vshrl.u32 %v398, 5
        %v400 = vand.u32 %v398, 31
        %v401 = vsub.s32 32, %v400
        %v402 = vshrl.u32 683565275, %v401
        %v403 = vshll.u32 683565275, %v400
        %v404 = vshrl.u32 2475754826, %v401
        %v405 = vor.u32 %v403, %v404
        %v406 = vshll.u32 2475754826, %v400
        %v407 = vshrl.u32 2131351028, %v401
        %v408 = vor.u32 %v406, %v407
        %v409 = vshll.u32 2131351028, %v400
        %v410 = vshrl.u32 2102212464, %v401
        %v411 = vor.u32 %v409, %v410
        %v412 = vshll.u32 2102212464, %v400
        %v413 = vshrl.u32 920167782, %v401
        %v414 = vor.u32 %v412, %v413
        %v415 = vshll.u32 920167782, %v400
        %v416 = vshrl.u32 1326507024, %v401
        %v417 = vor.u32 %v415, %v416
        %vm418 = vcmp.lt.s32.totalorder %v399, 1
        %vm419 = vcmp.lt.s32.totalorder %v399, 2
        %vm420 = vcmp.lt.s32.totalorder %v399, 3
        %vm421 = vcmp.lt.s32.totalorder %v399, 4
        %v422 = vsel %vm418, %v402, %v405
        %v423 = vsel %vm421, %v411, 2102212464
        %v424 = vsel %vm420, %v408, %v423
        %v425 = vsel %vm419, %v422, %v424
        %v426 = vsel %vm418, %v405, %v408
        %v427 = vsel %vm421, %v414, 920167782
        %v428 = vsel %vm420, %v411, %v427
        %v429 = vsel %vm419, %v426, %v428
        %v430 = vsel %vm418, %v408, %v411
        %v431 = vsel %vm421, %v417, 1326507024
        %v432 = vsel %vm420, %v414, %v431
        %v433 = vsel %vm419, %v430, %v432
        %v434 = vshll.u32 %v394, 8
        %v435 = vmul.u32.u64.compose %v434, %v433
        %v436 = vextract.low.u32 %v435
        %v437 = vextract.high.u32 %v435
        %v438 = vmul.u32.u64.compose %v434, %v429
        %v439 = vextract.low.u32 %v438
        %v440 = vextract.high.u32 %v438
        %v441 = vmul.u32 %v434, %v425
        %v442 = vadd.s32 %v437, %v439
        %vm443 = vc.u32 %v437, %v439
        %v444 = vadd.s32 %v440, 1
        %v445 = vsel %vm443, %v444, %v440
        %v446 = vadd.s32 %v441, %v445
        %v447 = vadd.s32 %v446, 536870912
        %v448 = vshrl.u32 %v447, 30
        %v449 = vshll.u32 %v448, 30
        %v450 = vsub.s32 %v446, %v449
        %vm451 = vcmp.lt.s32.totalorder %v450, 0
        %v452 = vsub.s32 0, %v450
        %v453 = vsel %vm451, %v452, %v450
        %v454 = vclz %v453
        %v455 = vsub.s32 %v454, 2
        %vm456 = vcmp.gt.s32.totalorder 0, %v455
        %v457 = vsel %vm456, 0, %v455
        %v458 = vsub.s32 32, %v457
        %v459 = vshll.u32 %v450, %v457
        %v460 = vshrl.u32 %v442, %v458
        %v461 = vor.u32 %v459, %v460
        %v462 = vsub.s32 4294967266, %v457
        %v463 = vadd.s32 %v462, 127
        %v464 = vshll.u32 %v463, 23
        %v465 = vor.u32 4788187, %v464
        %v466 = vand.u32 2147483647, %v465
        %v468 = vcvt.s32.f32 %v461
        %v469 = vmul.f32 %v468, %v466
        %v470 = vxor.u32 %v469, 2147483648
        %v471 = vsel %vm388, %v470, %v469
        %v472 = vsub.s32 4, %v448
        %v473 = vsel %vm388, %v472, %v448
        %v474 = vsel %vm387, %v340, %v471
        %v475 = vsel %vm387, 0, %v473
        %v476 = vcosq.f32.pop %v474
        %v477 = vsinq.f32.pop %v474
        %vm478 = vweird.f32 %v340
        %v479 = vand.u32 %v475, 3
        %vm480 = vcmp.lt.s32.totalorder %v479, 2
        %vm481 = vcmp.eq.s32.totalorder %v479, 0
        %v482 = vxor.u32 %v477, 2147483648
        %v483 = vsel %vm481, %v476, %v482
        %vm484 = vcmp.eq.s32.totalorder %v479, 2
        %v485 = vxor.u32 %v476, 2147483648
        %v486 = vsel %vm484, %v485, %v477
        %v487 = vsel %vm480, %v483, %v486
        %v488 = vsel %vm478, nan, %v487
        %v489 = vand.u32 2147483647, %v341
        %vm490 = vcmp.le.f32.partialorder %v489, 0.7853982
        %vm491 = vcmp.lt.s32.totalorder %v341, 0
        %v492 = vand.u32 %v341, 2139095040
        %v493 = vshrl.u32 %v492, 23
        %v494 = vsub.s32 %v493, 127
        %v495 = vand.u32 2147483647, %v341
        %v496 = vand.u32 %v495, 8388607
        %v497 = vor.u32 %v496, 8388608
        %v498 = vsub.s32 0, %v497
        %v499 = vadd.s32 %v494, 1
        %vm500 = vcmp.gt.s32.totalorder %v499, 0
        %v501 = vsel %vm500, %v499, 0
        %v502 = vshrl.u32 %v501, 5
        %v503 = vand.u32 %v501, 31
        %v504 = vsub.s32 32, %v503
        %v505 = vshrl.u32 683565275, %v504
        %v506 = vshll.u32 683565275, %v503
        %v507 = vshrl.u32 2475754826, %v504
        %v508 = vor.u32 %v506, %v507
        %v509 = vshll.u32 2475754826, %v503
        %v510 = vshrl.u32 2131351028, %v504
        %v511 = vor.u32 %v509, %v510
        %v512 = vshll.u32 2131351028, %v503
        %v513 = vshrl.u32 2102212464, %v504
        %v514 = vor.u32 %v512, %v513
        %v515 = vshll.u32 2102212464, %v503
        %v516 = vshrl.u32 920167782, %v504
        %v517 = vor.u32 %v515, %v516
        %v518 = vshll.u32 920167782, %v503
        %v519 = vshrl.u32 1326507024, %v504
        %v520 = vor.u32 %v518, %v519
        %vm521 = vcmp.lt.s32.totalorder %v502, 1
        %vm522 = vcmp.lt.s32.totalorder %v502, 2
        %vm523 = vcmp.lt.s32.totalorder %v502, 3
        %vm524 = vcmp.lt.s32.totalorder %v502, 4
        %v525 = vsel %vm521, %v505, %v508
        %v526 = vsel %vm524, %v514, 2102212464
        %v527 = vsel %vm523, %v511, %v526
        %v528 = vsel %vm522, %v525, %v527
        %v529 = vsel %vm521, %v508, %v511
        %v530 = vsel %vm524, %v517, 920167782
        %v531 = vsel %vm523, %v514, %v530
        %v532 = vsel %vm522, %v529, %v531
        %v533 = vsel %vm521, %v511, %v514
        %v534 = vsel %vm524, %v520, 1326507024
        %v535 = vsel %vm523, %v517, %v534
        %v536 = vsel %vm522, %v533, %v535
        %v537 = vshll.u32 %v497, 8
        %v538 = vmul.u32.u64.compose %v537, %v536
        %v539 = vextract.low.u32 %v538
        %v540 = vextract.high.u32 %v538
        %v541 = vmul.u32.u64.compose %v537, %v532
        %v542 = vextract.low.u32 %v541
        %v543 = vextract.high.u32 %v541
        %v544 = vmul.u32 %v537, %v528
        %v545 = vadd.s32 %v540, %v542
        %vm546 = vc.u32 %v540, %v542
        %v547 = vadd.s32 %v543, 1
        %v548 = vsel %vm546, %v547, %v543
        %v549 = vadd.s32 %v544, %v548
        %v550 = vadd.s32 %v549, 536870912
        %v551 = vshrl.u32 %v550, 30
        %v552 = vshll.u32 %v551, 30
        %v553 = vsub.s32 %v549, %v552
        %vm554 = vcmp.lt.s32.totalorder %v553, 0
        %v555 = vsub.s32 0, %v553
        %v556 = vsel %vm554, %v555, %v553
        %v557 = vclz %v556
        %v558 = vsub.s32 %v557, 2
        %vm559 = vcmp.gt.s32.totalorder 0, %v558
        %v560 = vsel %vm559, 0, %v558
        %v561 = vsub.s32 32, %v560
        %v562 = vshll.u32 %v553, %v560
        %v563 = vshrl.u32 %v545, %v561
        %v564 = vor.u32 %v562, %v563
        %v565 = vsub.s32 4294967266, %v560
        %v566 = vadd.s32 %v565, 127
        %v567 = vshll.u32 %v566, 23
        %v568 = vor.u32 4788187, %v567
        %v569 = vand.u32 2147483647, %v568
        %v571 = vcvt.s32.f32 %v564
        %v572 = vmul.f32 %v571, %v569
        %v573 = vxor.u32 %v572, 2147483648
        %v574 = vsel %vm491, %v573, %v572
        %v575 = vsub.s32 4, %v551
        %v576 = vsel %vm491, %v575, %v551
        %v577 = vsel %vm490, %v341, %v574
        %v578 = vsel %vm490, 0, %v576
        %v579 = vcosq.f32.pop %v577
        %v580 = vsinq.f32.pop %v577
        %vm581 = vweird.f32 %v341
        %v582 = vand.u32 %v578, 3
        %vm583 = vcmp.lt.s32.totalorder %v582, 2
        %vm584 = vcmp.eq.s32.totalorder %v582, 0
        %v585 = vxor.u32 %v580, 2147483648
        %v586 = vsel %vm584, %v579, %v585
        %vm587 = vcmp.eq.s32.totalorder %v582, 2
        %v588 = vxor.u32 %v579, 2147483648
        %v589 = vsel %vm587, %v588, %v580
        %v590 = vsel %vm583, %v586, %v589
        %v591 = vsel %vm581, nan, %v590
        %v592 = vand.u32 2147483647, %v342
        %vm593 = vcmp.le.f32.partialorder %v592, 0.7853982
        %vm594 = vcmp.lt.s32.totalorder %v342, 0
        %v595 = vand.u32 %v342, 2139095040
        %v596 = vshrl.u32 %v595, 23
        %v597 = vsub.s32 %v596, 127
        %v598 = vand.u32 2147483647, %v342
        %v599 = vand.u32 %v598, 8388607
        %v600 = vor.u32 %v599, 8388608
        %v601 = vsub.s32 0, %v600
        %v602 = vadd.s32 %v597, 1
        %vm603 = vcmp.gt.s32.totalorder %v602, 0
        %v604 = vsel %vm603, %v602, 0
        %v605 = vshrl.u32 %v604, 5
        %v606 = vand.u32 %v604, 31
        %v607 = vsub.s32 32, %v606
        %v608 = vshrl.u32 683565275, %v607
        %v609 = vshll.u32 683565275, %v606
        %v610 = vshrl.u32 2475754826, %v607
        %v611 = vor.u32 %v609, %v610
        %v612 = vshll.u32 2475754826, %v606
        %v613 = vshrl.u32 2131351028, %v607
        %v614 = vor.u32 %v612, %v613
        %v615 = vshll.u32 2131351028, %v606
        %v616 = vshrl.u32 2102212464, %v607
        %v617 = vor.u32 %v615, %v616
        %v618 = vshll.u32 2102212464, %v606
        %v619 = vshrl.u32 920167782, %v607
        %v620 = vor.u32 %v618, %v619
        %v621 = vshll.u32 920167782, %v606
        %v622 = vshrl.u32 1326507024, %v607
        %v623 = vor.u32 %v621, %v622
        %vm624 = vcmp.lt.s32.totalorder %v605, 1
        %vm625 = vcmp.lt.s32.totalorder %v605, 2
        %vm626 = vcmp.lt.s32.totalorder %v605, 3
        %vm627 = vcmp.lt.s32.totalorder %v605, 4
        %v628 = vsel %vm624, %v608, %v611
        %v629 = vsel %vm627, %v617, 2102212464
        %v630 = vsel %vm626, %v614, %v629
        %v631 = vsel %vm625, %v628, %v630
        %v632 = vsel %vm624, %v611, %v614
        %v633 = vsel %vm627, %v620, 920167782
        %v634 = vsel %vm626, %v617, %v633
        %v635 = vsel %vm625, %v632, %v634
        %v636 = vsel %vm624, %v614, %v617
        %v637 = vsel %vm627, %v623, 1326507024
        %v638 = vsel %vm626, %v620, %v637
        %v639 = vsel %vm625, %v636, %v638
        %v640 = vshll.u32 %v600, 8
        %v641 = vmul.u32.u64.compose %v640, %v639
        %v642 = vextract.low.u32 %v641
        %v643 = vextract.high.u32 %v641
        %v644 = vmul.u32.u64.compose %v640, %v635
        %v645 = vextract.low.u32 %v644
        %v646 = vextract.high.u32 %v644
        %v647 = vmul.u32 %v640, %v631
        %v648 = vadd.s32 %v643, %v645
        %vm649 = vc.u32 %v643, %v645
        %v650 = vadd.s32 %v646, 1
        %v651 = vsel %vm649, %v650, %v646
        %v652 = vadd.s32 %v647, %v651
        %v653 = vadd.s32 %v652, 536870912
        %v654 = vshrl.u32 %v653, 30
        %v655 = vshll.u32 %v654, 30
        %v656 = vsub.s32 %v652, %v655
        %vm657 = vcmp.lt.s32.totalorder %v656, 0
        %v658 = vsub.s32 0, %v656
        %v659 = vsel %vm657, %v658, %v656
        %v660 = vclz %v659
        %v661 = vsub.s32 %v660, 2
        %vm662 = vcmp.gt.s32.totalorder 0, %v661
        %v663 = vsel %vm662, 0, %v661
        %v664 = vsub.s32 32, %v663
        %v665 = vshll.u32 %v656, %v663
        %v666 = vshrl.u32 %v648, %v664
        %v667 = vor.u32 %v665, %v666
        %v668 = vsub.s32 4294967266, %v663
        %v669 = vadd.s32 %v668, 127
        %v670 = vshll.u32 %v669, 23
        %v671 = vor.u32 4788187, %v670
        %v672 = vand.u32 2147483647, %v671
        %v674 = vcvt.s32.f32 %v667
        %v675 = vmul.f32 %v674, %v672
        %v676 = vxor.u32 %v675, 2147483648
        %v677 = vsel %vm594, %v676, %v675
        %v678 = vsub.s32 4, %v654
        %v679 = vsel %vm594, %v678, %v654
        %v680 = vsel %vm593, %v342, %v677
        %v681 = vsel %vm593, 0, %v679
        %v682 = vcosq.f32.pop %v680
        %v683 = vsinq.f32.pop %v680
        %vm684 = vweird.f32 %v342
        %v685 = vand.u32 %v681, 3
        %vm686 = vcmp.lt.s32.totalorder %v685, 2
        %vm687 = vcmp.eq.s32.totalorder %v685, 0
        %v688 = vxor.u32 %v683, 2147483648
        %v689 = vsel %vm687, %v682, %v688
        %vm690 = vcmp.eq.s32.totalorder %v685, 2
        %v691 = vxor.u32 %v682, 2147483648
        %v692 = vsel %vm690, %v691, %v683
        %v693 = vsel %vm686, %v689, %v692
        %v694 = vsel %vm684, nan, %v693
        %v695 = vand.u32 2147483647, %v343
        %vm696 = vcmp.le.f32.partialorder %v695, 0.7853982
        %vm697 = vcmp.lt.s32.totalorder %v343, 0
        %v698 = vand.u32 %v343, 2139095040
        %v699 = vshrl.u32 %v698, 23
        %v700 = vsub.s32 %v699, 127
        %v701 = vand.u32 2147483647, %v343
        %v702 = vand.u32 %v701, 8388607
        %v703 = vor.u32 %v702, 8388608
        %v704 = vsub.s32 0, %v703
        %v705 = vadd.s32 %v700, 1
        %vm706 = vcmp.gt.s32.totalorder %v705, 0
        %v707 = vsel %vm706, %v705, 0
        %v708 = vshrl.u32 %v707, 5
        %v709 = vand.u32 %v707, 31
        %v710 = vsub.s32 32, %v709
        %v711 = vshrl.u32 683565275, %v710
        %v712 = vshll.u32 683565275, %v709
        %v713 = vshrl.u32 2475754826, %v710
        %v714 = vor.u32 %v712, %v713
        %v715 = vshll.u32 2475754826, %v709
        %v716 = vshrl.u32 2131351028, %v710
        %v717 = vor.u32 %v715, %v716
        %v718 = vshll.u32 2131351028, %v709
        %v719 = vshrl.u32 2102212464, %v710
        %v720 = vor.u32 %v718, %v719
        %v721 = vshll.u32 2102212464, %v709
        %v722 = vshrl.u32 920167782, %v710
        %v723 = vor.u32 %v721, %v722
        %v724 = vshll.u32 920167782, %v709
        %v725 = vshrl.u32 1326507024, %v710
        %v726 = vor.u32 %v724, %v725
        %vm727 = vcmp.lt.s32.totalorder %v708, 1
        %vm728 = vcmp.lt.s32.totalorder %v708, 2
        %vm729 = vcmp.lt.s32.totalorder %v708, 3
        %vm730 = vcmp.lt.s32.totalorder %v708, 4
        %v731 = vsel %vm727, %v711, %v714
        %v732 = vsel %vm730, %v720, 2102212464
        %v733 = vsel %vm729, %v717, %v732
        %v734 = vsel %vm728, %v731, %v733
        %v735 = vsel %vm727, %v714, %v717
        %v736 = vsel %vm730, %v723, 920167782
        %v737 = vsel %vm729, %v720, %v736
        %v738 = vsel %vm728, %v735, %v737
        %v739 = vsel %vm727, %v717, %v720
        %v740 = vsel %vm730, %v726, 1326507024
        %v741 = vsel %vm729, %v723, %v740
        %v742 = vsel %vm728, %v739, %v741
        %v743 = vshll.u32 %v703, 8
        %v744 = vmul.u32.u64.compose %v743, %v742
        %v745 = vextract.low.u32 %v744
        %v746 = vextract.high.u32 %v744
        %v747 = vmul.u32.u64.compose %v743, %v738
        %v748 = vextract.low.u32 %v747
        %v749 = vextract.high.u32 %v747
        %v750 = vmul.u32 %v743, %v734
        %v751 = vadd.s32 %v746, %v748
        %vm752 = vc.u32 %v746, %v748
        %v753 = vadd.s32 %v749, 1
        %v754 = vsel %vm752, %v753, %v749
        %v755 = vadd.s32 %v750, %v754
        %v756 = vadd.s32 %v755, 536870912
        %v757 = vshrl.u32 %v756, 30
        %v758 = vshll.u32 %v757, 30
        %v759 = vsub.s32 %v755, %v758
        %vm760 = vcmp.lt.s32.totalorder %v759, 0
        %v761 = vsub.s32 0, %v759
        %v762 = vsel %vm760, %v761, %v759
        %v763 = vclz %v762
        %v764 = vsub.s32 %v763, 2
        %vm765 = vcmp.gt.s32.totalorder 0, %v764
        %v766 = vsel %vm765, 0, %v764
        %v767 = vsub.s32 32, %v766
        %v768 = vshll.u32 %v759, %v766
        %v769 = vshrl.u32 %v751, %v767
        %v770 = vor.u32 %v768, %v769
        %v771 = vsub.s32 4294967266, %v766
        %v772 = vadd.s32 %v771, 127
        %v773 = vshll.u32 %v772, 23
        %v774 = vor.u32 4788187, %v773
        %v775 = vand.u32 2147483647, %v774
        %v777 = vcvt.s32.f32 %v770
        %v778 = vmul.f32 %v777, %v775
        %v779 = vxor.u32 %v778, 2147483648
        %v780 = vsel %vm697, %v779, %v778
        %v781 = vsub.s32 4, %v757
        %v782 = vsel %vm697, %v781, %v757
        %v783 = vsel %vm696, %v343, %v780
        %v784 = vsel %vm696, 0, %v782
        %v785 = vcosq.f32.pop %v783
        %v786 = vsinq.f32.pop %v783
        %vm787 = vweird.f32 %v343
        %v788 = vand.u32 %v784, 3
        %vm789 = vcmp.lt.s32.totalorder %v788, 2
        %vm790 = vcmp.eq.s32.totalorder %v788, 0
        %v791 = vxor.u32 %v786, 2147483648
        %v792 = vsel %vm790, %v785, %v791
        %vm793 = vcmp.eq.s32.totalorder %v788, 2
        %v794 = vxor.u32 %v785, 2147483648
        %v795 = vsel %vm793, %v794, %v786
        %v796 = vsel %vm789, %v792, %v795
        %v797 = vsel %vm787, nan, %v796
        %v798 = vand.u32 2147483647, %v344
        %vm799 = vcmp.le.f32.partialorder %v798, 0.7853982
        %vm800 = vcmp.lt.s32.totalorder %v344, 0
        %v801 = vand.u32 %v344, 2139095040
        %v802 = vshrl.u32 %v801, 23
        %v803 = vsub.s32 %v802, 127
        %v804 = vand.u32 2147483647, %v344
        %v805 = vand.u32 %v804, 8388607
        %v806 = vor.u32 %v805, 8388608
        %v807 = vsub.s32 0, %v806
        %v808 = vadd.s32 %v803, 1
        %vm809 = vcmp.gt.s32.totalorder %v808, 0
        %v810 = vsel %vm809, %v808, 0
        %v811 = vshrl.u32 %v810, 5
        %v812 = vand.u32 %v810, 31
        %v813 = vsub.s32 32, %v812
        %v814 = vshrl.u32 683565275, %v813
        %v815 = vshll.u32 683565275, %v812
        %v816 = vshrl.u32 2475754826, %v813
        %v817 = vor.u32 %v815, %v816
        %v818 = vshll.u32 2475754826, %v812
        %v819 = vshrl.u32 2131351028, %v813
        %v820 = vor.u32 %v818, %v819
        %v821 = vshll.u32 2131351028, %v812
        %v822 = vshrl.u32 2102212464, %v813
        %v823 = vor.u32 %v821, %v822
        %v824 = vshll.u32 2102212464, %v812
        %v825 = vshrl.u32 920167782, %v813
        %v826 = vor.u32 %v824, %v825
        %v827 = vshll.u32 920167782, %v812
        %v828 = vshrl.u32 1326507024, %v813
        %v829 = vor.u32 %v827, %v828
        %vm830 = vcmp.lt.s32.totalorder %v811, 1
        %vm831 = vcmp.lt.s32.totalorder %v811, 2
        %vm832 = vcmp.lt.s32.totalorder %v811, 3
        %vm833 = vcmp.lt.s32.totalorder %v811, 4
        %v834 = vsel %vm830, %v814, %v817
        %v835 = vsel %vm833, %v823, 2102212464
        %v836 = vsel %vm832, %v820, %v835
        %v837 = vsel %vm831, %v834, %v836
        %v838 = vsel %vm830, %v817, %v820
        %v839 = vsel %vm833, %v826, 920167782
        %v840 = vsel %vm832, %v823, %v839
        %v841 = vsel %vm831, %v838, %v840
        %v842 = vsel %vm830, %v820, %v823
        %v843 = vsel %vm833, %v829, 1326507024
        %v844 = vsel %vm832, %v826, %v843
        %v845 = vsel %vm831, %v842, %v844
        %v846 = vshll.u32 %v806, 8
        %v847 = vmul.u32.u64.compose %v846, %v845
        %v848 = vextract.low.u32 %v847
        %v849 = vextract.high.u32 %v847
        %v850 = vmul.u32.u64.compose %v846, %v841
        %v851 = vextract.low.u32 %v850
        %v852 = vextract.high.u32 %v850
        %v853 = vmul.u32 %v846, %v837
        %v854 = vadd.s32 %v849, %v851
        %vm855 = vc.u32 %v849, %v851
        %v856 = vadd.s32 %v852, 1
        %v857 = vsel %vm855, %v856, %v852
        %v858 = vadd.s32 %v853, %v857
        %v859 = vadd.s32 %v858, 536870912
        %v860 = vshrl.u32 %v859, 30
        %v861 = vshll.u32 %v860, 30
        %v862 = vsub.s32 %v858, %v861
        %vm863 = vcmp.lt.s32.totalorder %v862, 0
        %v864 = vsub.s32 0, %v862
        %v865 = vsel %vm863, %v864, %v862
        %v866 = vclz %v865
        %v867 = vsub.s32 %v866, 2
        %vm868 = vcmp.gt.s32.totalorder 0, %v867
        %v869 = vsel %vm868, 0, %v867
        %v870 = vsub.s32 32, %v869
        %v871 = vshll.u32 %v862, %v869
        %v872 = vshrl.u32 %v854, %v870
        %v873 = vor.u32 %v871, %v872
        %v874 = vsub.s32 4294967266, %v869
        %v875 = vadd.s32 %v874, 127
        %v876 = vshll.u32 %v875, 23
        %v877 = vor.u32 4788187, %v876
        %v878 = vand.u32 2147483647, %v877
        %v880 = vcvt.s32.f32 %v873
        %v881 = vmul.f32 %v880, %v878
        %v882 = vxor.u32 %v881, 2147483648
        %v883 = vsel %vm800, %v882, %v881
        %v884 = vsub.s32 4, %v860
        %v885 = vsel %vm800, %v884, %v860
        %v886 = vsel %vm799, %v344, %v883
        %v887 = vsel %vm799, 0, %v885
        %v888 = vcosq.f32.pop %v886
        %v889 = vsinq.f32.pop %v886
        %vm890 = vweird.f32 %v344
        %v891 = vand.u32 %v887, 3
        %vm892 = vcmp.lt.s32.totalorder %v891, 2
        %vm893 = vcmp.eq.s32.totalorder %v891, 0
        %v894 = vxor.u32 %v889, 2147483648
        %v895 = vsel %vm893, %v888, %v894
        %vm896 = vcmp.eq.s32.totalorder %v891, 2
        %v897 = vxor.u32 %v888, 2147483648
        %v898 = vsel %vm896, %v897, %v889
        %v899 = vsel %vm892, %v895, %v898
        %v900 = vsel %vm890, nan, %v899
        %v901 = vand.u32 2147483647, %v345
        %vm902 = vcmp.le.f32.partialorder %v901, 0.7853982
        %vm903 = vcmp.lt.s32.totalorder %v345, 0
        %v904 = vand.u32 %v345, 2139095040
        %v905 = vshrl.u32 %v904, 23
        %v906 = vsub.s32 %v905, 127
        %v907 = vand.u32 2147483647, %v345
        %v908 = vand.u32 %v907, 8388607
        %v909 = vor.u32 %v908, 8388608
        %v910 = vsub.s32 0, %v909
        %v911 = vadd.s32 %v906, 1
        %vm912 = vcmp.gt.s32.totalorder %v911, 0
        %v913 = vsel %vm912, %v911, 0
        %v914 = vshrl.u32 %v913, 5
        %v915 = vand.u32 %v913, 31
        %v916 = vsub.s32 32, %v915
        %v917 = vshrl.u32 683565275, %v916
        %v918 = vshll.u32 683565275, %v915
        %v919 = vshrl.u32 2475754826, %v916
        %v920 = vor.u32 %v918, %v919
        %v921 = vshll.u32 2475754826, %v915
        %v922 = vshrl.u32 2131351028, %v916
        %v923 = vor.u32 %v921, %v922
        %v924 = vshll.u32 2131351028, %v915
        %v925 = vshrl.u32 2102212464, %v916
        %v926 = vor.u32 %v924, %v925
        %v927 = vshll.u32 2102212464, %v915
        %v928 = vshrl.u32 920167782, %v916
        %v929 = vor.u32 %v927, %v928
        %v930 = vshll.u32 920167782, %v915
        %v931 = vshrl.u32 1326507024, %v916
        %v932 = vor.u32 %v930, %v931
        %vm933 = vcmp.lt.s32.totalorder %v914, 1
        %vm934 = vcmp.lt.s32.totalorder %v914, 2
        %vm935 = vcmp.lt.s32.totalorder %v914, 3
        %vm936 = vcmp.lt.s32.totalorder %v914, 4
        %v937 = vsel %vm933, %v917, %v920
        %v938 = vsel %vm936, %v926, 2102212464
        %v939 = vsel %vm935, %v923, %v938
        %v940 = vsel %vm934, %v937, %v939
        %v941 = vsel %vm933, %v920, %v923
        %v942 = vsel %vm936, %v929, 920167782
        %v943 = vsel %vm935, %v926, %v942
        %v944 = vsel %vm934, %v941, %v943
        %v945 = vsel %vm933, %v923, %v926
        %v946 = vsel %vm936, %v932, 1326507024
        %v947 = vsel %vm935, %v929, %v946
        %v948 = vsel %vm934, %v945, %v947
        %v949 = vshll.u32 %v909, 8
        %v950 = vmul.u32.u64.compose %v949, %v948
        %v951 = vextract.low.u32 %v950
        %v952 = vextract.high.u32 %v950
        %v953 = vmul.u32.u64.compose %v949, %v944
        %v954 = vextract.low.u32 %v953
        %v955 = vextract.high.u32 %v953
        %v956 = vmul.u32 %v949, %v940
        %v957 = vadd.s32 %v952, %v954
        %vm958 = vc.u32 %v952, %v954
        %v959 = vadd.s32 %v955, 1
        %v960 = vsel %vm958, %v959, %v955
        %v961 = vadd.s32 %v956, %v960
        %v962 = vadd.s32 %v961, 536870912
        %v963 = vshrl.u32 %v962, 30
        %v964 = vshll.u32 %v963, 30
        %v965 = vsub.s32 %v961, %v964
        %vm966 = vcmp.lt.s32.totalorder %v965, 0
        %v967 = vsub.s32 0, %v965
        %v968 = vsel %vm966, %v967, %v965
        %v969 = vclz %v968
        %v970 = vsub.s32 %v969, 2
        %vm971 = vcmp.gt.s32.totalorder 0, %v970
        %v972 = vsel %vm971, 0, %v970
        %v973 = vsub.s32 32, %v972
        %v974 = vshll.u32 %v965, %v972
        %v975 = vshrl.u32 %v957, %v973
        %v976 = vor.u32 %v974, %v975
        %v977 = vsub.s32 4294967266, %v972
        %v978 = vadd.s32 %v977, 127
        %v979 = vshll.u32 %v978, 23
        %v980 = vor.u32 4788187, %v979
        %v981 = vand.u32 2147483647, %v980
        %v983 = vcvt.s32.f32 %v976
        %v984 = vmul.f32 %v983, %v981
        %v985 = vxor.u32 %v984, 2147483648
        %v986 = vsel %vm903, %v985, %v984
        %v987 = vsub.s32 4, %v963
        %v988 = vsel %vm903, %v987, %v963
        %v989 = vsel %vm902, %v345, %v986
        %v990 = vsel %vm902, 0, %v988
        %v991 = vcosq.f32.pop %v989
        %v992 = vsinq.f32.pop %v989
        %vm993 = vweird.f32 %v345
        %v994 = vand.u32 %v990, 3
        %vm995 = vcmp.lt.s32.totalorder %v994, 2
        %vm996 = vcmp.eq.s32.totalorder %v994, 0
        %v997 = vxor.u32 %v992, 2147483648
        %v998 = vsel %vm996, %v991, %v997
        %vm999 = vcmp.eq.s32.totalorder %v994, 2
        %v1000 = vxor.u32 %v991, 2147483648
        %v1001 = vsel %vm999, %v1000, %v992
        %v1002 = vsel %vm995, %v998, %v1001
        %v1003 = vsel %vm993, nan, %v1002
        %v1004 = vand.u32 2147483647, %v346
        %vm1005 = vcmp.le.f32.partialorder %v1004, 0.7853982
        %vm1006 = vcmp.lt.s32.totalorder %v346, 0
        %v1007 = vand.u32 %v346, 2139095040
        %v1008 = vshrl.u32 %v1007, 23
        %v1009 = vsub.s32 %v1008, 127
        %v1010 = vand.u32 2147483647, %v346
        %v1011 = vand.u32 %v1010, 8388607
        %v1012 = vor.u32 %v1011, 8388608
        %v1013 = vsub.s32 0, %v1012
        %v1014 = vadd.s32 %v1009, 1
        %vm1015 = vcmp.gt.s32.totalorder %v1014, 0
        %v1016 = vsel %vm1015, %v1014, 0
        %v1017 = vshrl.u32 %v1016, 5
        %v1018 = vand.u32 %v1016, 31
        %v1019 = vsub.s32 32, %v1018
        %v1020 = vshrl.u32 683565275, %v1019
        %v1021 = vshll.u32 683565275, %v1018
        %v1022 = vshrl.u32 2475754826, %v1019
        %v1023 = vor.u32 %v1021, %v1022
        %v1024 = vshll.u32 2475754826, %v1018
        %v1025 = vshrl.u32 2131351028, %v1019
        %v1026 = vor.u32 %v1024, %v1025
        %v1027 = vshll.u32 2131351028, %v1018
        %v1028 = vshrl.u32 2102212464, %v1019
        %v1029 = vor.u32 %v1027, %v1028
        %v1030 = vshll.u32 2102212464, %v1018
        %v1031 = vshrl.u32 920167782, %v1019
        %v1032 = vor.u32 %v1030, %v1031
        %v1033 = vshll.u32 920167782, %v1018
        %v1034 = vshrl.u32 1326507024, %v1019
        %v1035 = vor.u32 %v1033, %v1034
        %vm1036 = vcmp.lt.s32.totalorder %v1017, 1
        %vm1037 = vcmp.lt.s32.totalorder %v1017, 2
        %vm1038 = vcmp.lt.s32.totalorder %v1017, 3
        %vm1039 = vcmp.lt.s32.totalorder %v1017, 4
        %v1040 = vsel %vm1036, %v1020, %v1023
        %v1041 = vsel %vm1039, %v1029, 2102212464
        %v1042 = vsel %vm1038, %v1026, %v1041
        %v1043 = vsel %vm1037, %v1040, %v1042
        %v1044 = vsel %vm1036, %v1023, %v1026
        %v1045 = vsel %vm1039, %v1032, 920167782
        %v1046 = vsel %vm1038, %v1029, %v1045
        %v1047 = vsel %vm1037, %v1044, %v1046
        %v1048 = vsel %vm1036, %v1026, %v1029
        %v1049 = vsel %vm1039, %v1035, 1326507024
        %v1050 = vsel %vm1038, %v1032, %v1049
        %v1051 = vsel %vm1037, %v1048, %v1050
        %v1052 = vshll.u32 %v1012, 8
        %v1053 = vmul.u32.u64.compose %v1052, %v1051
        %v1054 = vextract.low.u32 %v1053
        %v1055 = vextract.high.u32 %v1053
        %v1056 = vmul.u32.u64.compose %v1052, %v1047
        %v1057 = vextract.low.u32 %v1056
        %v1058 = vextract.high.u32 %v1056
        %v1059 = vmul.u32 %v1052, %v1043
        %v1060 = vadd.s32 %v1055, %v1057
        %vm1061 = vc.u32 %v1055, %v1057
        %v1062 = vadd.s32 %v1058, 1
        %v1063 = vsel %vm1061, %v1062, %v1058
        %v1064 = vadd.s32 %v1059, %v1063
        %v1065 = vadd.s32 %v1064, 536870912
        %v1066 = vshrl.u32 %v1065, 30
        %v1067 = vshll.u32 %v1066, 30
        %v1068 = vsub.s32 %v1064, %v1067
        %vm1069 = vcmp.lt.s32.totalorder %v1068, 0
        %v1070 = vsub.s32 0, %v1068
        %v1071 = vsel %vm1069, %v1070, %v1068
        %v1072 = vclz %v1071
        %v1073 = vsub.s32 %v1072, 2
        %vm1074 = vcmp.gt.s32.totalorder 0, %v1073
        %v1075 = vsel %vm1074, 0, %v1073
        %v1076 = vsub.s32 32, %v1075
        %v1077 = vshll.u32 %v1068, %v1075
        %v1078 = vshrl.u32 %v1060, %v1076
        %v1079 = vor.u32 %v1077, %v1078
        %v1080 = vsub.s32 4294967266, %v1075
        %v1081 = vadd.s32 %v1080, 127
        %v1082 = vshll.u32 %v1081, 23
        %v1083 = vor.u32 4788187, %v1082
        %v1084 = vand.u32 2147483647, %v1083
        %v1086 = vcvt.s32.f32 %v1079
        %v1087 = vmul.f32 %v1086, %v1084
        %v1088 = vxor.u32 %v1087, 2147483648
        %v1089 = vsel %vm1006, %v1088, %v1087
        %v1090 = vsub.s32 4, %v1066
        %v1091 = vsel %vm1006, %v1090, %v1066
        %v1092 = vsel %vm1005, %v346, %v1089
        %v1093 = vsel %vm1005, 0, %v1091
        %v1094 = vcosq.f32.pop %v1092
        %v1095 = vsinq.f32.pop %v1092
        %vm1096 = vweird.f32 %v346
        %v1097 = vand.u32 %v1093, 3
        %vm1098 = vcmp.lt.s32.totalorder %v1097, 2
        %vm1099 = vcmp.eq.s32.totalorder %v1097, 0
        %v1100 = vxor.u32 %v1095, 2147483648
        %v1101 = vsel %vm1099, %v1094, %v1100
        %vm1102 = vcmp.eq.s32.totalorder %v1097, 2
        %v1103 = vxor.u32 %v1094, 2147483648
        %v1104 = vsel %vm1102, %v1103, %v1095
        %v1105 = vsel %vm1098, %v1101, %v1104
        %v1106 = vsel %vm1096, nan, %v1105
        %v1107 = vand.u32 2147483647, %v347
        %vm1108 = vcmp.le.f32.partialorder %v1107, 0.7853982
        %vm1109 = vcmp.lt.s32.totalorder %v347, 0
        %v1110 = vand.u32 %v347, 2139095040
        %v1111 = vshrl.u32 %v1110, 23
        %v1112 = vsub.s32 %v1111, 127
        %v1113 = vand.u32 2147483647, %v347
        %v1114 = vand.u32 %v1113, 8388607
        %v1115 = vor.u32 %v1114, 8388608
        %v1116 = vsub.s32 0, %v1115
        %v1117 = vadd.s32 %v1112, 1
        %vm1118 = vcmp.gt.s32.totalorder %v1117, 0
        %v1119 = vsel %vm1118, %v1117, 0
        %v1120 = vshrl.u32 %v1119, 5
        %v1121 = vand.u32 %v1119, 31
        %v1122 = vsub.s32 32, %v1121
        %v1123 = vshrl.u32 683565275, %v1122
        %v1124 = vshll.u32 683565275, %v1121
        %v1125 = vshrl.u32 2475754826, %v1122
        %v1126 = vor.u32 %v1124, %v1125
        %v1127 = vshll.u32 2475754826, %v1121
        %v1128 = vshrl.u32 2131351028, %v1122
        %v1129 = vor.u32 %v1127, %v1128
        %v1130 = vshll.u32 2131351028, %v1121
        %v1131 = vshrl.u32 2102212464, %v1122
        %v1132 = vor.u32 %v1130, %v1131
        %v1133 = vshll.u32 2102212464, %v1121
        %v1134 = vshrl.u32 920167782, %v1122
        %v1135 = vor.u32 %v1133, %v1134
        %v1136 = vshll.u32 920167782, %v1121
        %v1137 = vshrl.u32 1326507024, %v1122
        %v1138 = vor.u32 %v1136, %v1137
        %vm1139 = vcmp.lt.s32.totalorder %v1120, 1
        %vm1140 = vcmp.lt.s32.totalorder %v1120, 2
        %vm1141 = vcmp.lt.s32.totalorder %v1120, 3
        %vm1142 = vcmp.lt.s32.totalorder %v1120, 4
        %v1143 = vsel %vm1139, %v1123, %v1126
        %v1144 = vsel %vm1142, %v1132, 2102212464
        %v1145 = vsel %vm1141, %v1129, %v1144
        %v1146 = vsel %vm1140, %v1143, %v1145
        %v1147 = vsel %vm1139, %v1126, %v1129
        %v1148 = vsel %vm1142, %v1135, 920167782
        %v1149 = vsel %vm1141, %v1132, %v1148
        %v1150 = vsel %vm1140, %v1147, %v1149
        %v1151 = vsel %vm1139, %v1129, %v1132
        %v1152 = vsel %vm1142, %v1138, 1326507024
        %v1153 = vsel %vm1141, %v1135, %v1152
        %v1154 = vsel %vm1140, %v1151, %v1153
        %v1155 = vshll.u32 %v1115, 8
        %v1156 = vmul.u32.u64.compose %v1155, %v1154
        %v1157 = vextract.low.u32 %v1156
        %v1158 = vextract.high.u32 %v1156
        %v1159 = vmul.u32.u64.compose %v1155, %v1150
        %v1160 = vextract.low.u32 %v1159
        %v1161 = vextract.high.u32 %v1159
        %v1162 = vmul.u32 %v1155, %v1146
        %v1163 = vadd.s32 %v1158, %v1160
        %vm1164 = vc.u32 %v1158, %v1160
        %v1165 = vadd.s32 %v1161, 1
        %v1166 = vsel %vm1164, %v1165, %v1161
        %v1167 = vadd.s32 %v1162, %v1166
        %v1168 = vadd.s32 %v1167, 536870912
        %v1169 = vshrl.u32 %v1168, 30
        %v1170 = vshll.u32 %v1169, 30
        %v1171 = vsub.s32 %v1167, %v1170
        %vm1172 = vcmp.lt.s32.totalorder %v1171, 0
        %v1173 = vsub.s32 0, %v1171
        %v1174 = vsel %vm1172, %v1173, %v1171
        %v1175 = vclz %v1174
        %v1176 = vsub.s32 %v1175, 2
        %vm1177 = vcmp.gt.s32.totalorder 0, %v1176
        %v1178 = vsel %vm1177, 0, %v1176
        %v1179 = vsub.s32 32, %v1178
        %v1180 = vshll.u32 %v1171, %v1178
        %v1181 = vshrl.u32 %v1163, %v1179
        %v1182 = vor.u32 %v1180, %v1181
        %v1183 = vsub.s32 4294967266, %v1178
        %v1184 = vadd.s32 %v1183, 127
        %v1185 = vshll.u32 %v1184, 23
        %v1186 = vor.u32 4788187, %v1185
        %v1187 = vand.u32 2147483647, %v1186
        %v1189 = vcvt.s32.f32 %v1182
        %v1190 = vmul.f32 %v1189, %v1187
        %v1191 = vxor.u32 %v1190, 2147483648
        %v1192 = vsel %vm1109, %v1191, %v1190
        %v1193 = vsub.s32 4, %v1169
        %v1194 = vsel %vm1109, %v1193, %v1169
        %v1195 = vsel %vm1108, %v347, %v1192
        %v1196 = vsel %vm1108, 0, %v1194
        %v1197 = vcosq.f32.pop %v1195
        %v1198 = vsinq.f32.pop %v1195
        %vm1199 = vweird.f32 %v347
        %v1200 = vand.u32 %v1196, 3
        %vm1201 = vcmp.lt.s32.totalorder %v1200, 2
        %vm1202 = vcmp.eq.s32.totalorder %v1200, 0
        %v1203 = vxor.u32 %v1198, 2147483648
        %v1204 = vsel %vm1202, %v1197, %v1203
        %vm1205 = vcmp.eq.s32.totalorder %v1200, 2
        %v1206 = vxor.u32 %v1197, 2147483648
        %v1207 = vsel %vm1205, %v1206, %v1198
        %v1208 = vsel %vm1201, %v1204, %v1207
        %v1209 = vsel %vm1199, nan, %v1208
        %v1210 = vand.u32 2147483647, %v348
        %vm1211 = vcmp.le.f32.partialorder %v1210, 0.7853982
        %vm1212 = vcmp.lt.s32.totalorder %v348, 0
        %v1213 = vand.u32 %v348, 2139095040
        %v1214 = vshrl.u32 %v1213, 23
        %v1215 = vsub.s32 %v1214, 127
        %v1216 = vand.u32 2147483647, %v348
        %v1217 = vand.u32 %v1216, 8388607
        %v1218 = vor.u32 %v1217, 8388608
        %v1219 = vsub.s32 0, %v1218
        %v1220 = vadd.s32 %v1215, 1
        %vm1221 = vcmp.gt.s32.totalorder %v1220, 0
        %v1222 = vsel %vm1221, %v1220, 0
        %v1223 = vshrl.u32 %v1222, 5
        %v1224 = vand.u32 %v1222, 31
        %v1225 = vsub.s32 32, %v1224
        %v1226 = vshrl.u32 683565275, %v1225
        %v1227 = vshll.u32 683565275, %v1224
        %v1228 = vshrl.u32 2475754826, %v1225
        %v1229 = vor.u32 %v1227, %v1228
        %v1230 = vshll.u32 2475754826, %v1224
        %v1231 = vshrl.u32 2131351028, %v1225
        %v1232 = vor.u32 %v1230, %v1231
        %v1233 = vshll.u32 2131351028, %v1224
        %v1234 = vshrl.u32 2102212464, %v1225
        %v1235 = vor.u32 %v1233, %v1234
        %v1236 = vshll.u32 2102212464, %v1224
        %v1237 = vshrl.u32 920167782, %v1225
        %v1238 = vor.u32 %v1236, %v1237
        %v1239 = vshll.u32 920167782, %v1224
        %v1240 = vshrl.u32 1326507024, %v1225
        %v1241 = vor.u32 %v1239, %v1240
        %vm1242 = vcmp.lt.s32.totalorder %v1223, 1
        %vm1243 = vcmp.lt.s32.totalorder %v1223, 2
        %vm1244 = vcmp.lt.s32.totalorder %v1223, 3
        %vm1245 = vcmp.lt.s32.totalorder %v1223, 4
        %v1246 = vsel %vm1242, %v1226, %v1229
        %v1247 = vsel %vm1245, %v1235, 2102212464
        %v1248 = vsel %vm1244, %v1232, %v1247
        %v1249 = vsel %vm1243, %v1246, %v1248
        %v1250 = vsel %vm1242, %v1229, %v1232
        %v1251 = vsel %vm1245, %v1238, 920167782
        %v1252 = vsel %vm1244, %v1235, %v1251
        %v1253 = vsel %vm1243, %v1250, %v1252
        %v1254 = vsel %vm1242, %v1232, %v1235
        %v1255 = vsel %vm1245, %v1241, 1326507024
        %v1256 = vsel %vm1244, %v1238, %v1255
        %v1257 = vsel %vm1243, %v1254, %v1256
        %v1258 = vshll.u32 %v1218, 8
        %v1259 = vmul.u32.u64.compose %v1258, %v1257
        %v1260 = vextract.low.u32 %v1259
        %v1261 = vextract.high.u32 %v1259
        %v1262 = vmul.u32.u64.compose %v1258, %v1253
        %v1263 = vextract.low.u32 %v1262
        %v1264 = vextract.high.u32 %v1262
        %v1265 = vmul.u32 %v1258, %v1249
        %v1266 = vadd.s32 %v1261, %v1263
        %vm1267 = vc.u32 %v1261, %v1263
        %v1268 = vadd.s32 %v1264, 1
        %v1269 = vsel %vm1267, %v1268, %v1264
        %v1270 = vadd.s32 %v1265, %v1269
        %v1271 = vadd.s32 %v1270, 536870912
        %v1272 = vshrl.u32 %v1271, 30
        %v1273 = vshll.u32 %v1272, 30
        %v1274 = vsub.s32 %v1270, %v1273
        %vm1275 = vcmp.lt.s32.totalorder %v1274, 0
        %v1276 = vsub.s32 0, %v1274
        %v1277 = vsel %vm1275, %v1276, %v1274
        %v1278 = vclz %v1277
        %v1279 = vsub.s32 %v1278, 2
        %vm1280 = vcmp.gt.s32.totalorder 0, %v1279
        %v1281 = vsel %vm1280, 0, %v1279
        %v1282 = vsub.s32 32, %v1281
        %v1283 = vshll.u32 %v1274, %v1281
        %v1284 = vshrl.u32 %v1266, %v1282
        %v1285 = vor.u32 %v1283, %v1284
        %v1286 = vsub.s32 4294967266, %v1281
        %v1287 = vadd.s32 %v1286, 127
        %v1288 = vshll.u32 %v1287, 23
        %v1289 = vor.u32 4788187, %v1288
        %v1290 = vand.u32 2147483647, %v1289
        %v1292 = vcvt.s32.f32 %v1285
        %v1293 = vmul.f32 %v1292, %v1290
        %v1294 = vxor.u32 %v1293, 2147483648
        %v1295 = vsel %vm1212, %v1294, %v1293
        %v1296 = vsub.s32 4, %v1272
        %v1297 = vsel %vm1212, %v1296, %v1272
        %v1298 = vsel %vm1211, %v348, %v1295
        %v1299 = vsel %vm1211, 0, %v1297
        %v1300 = vcosq.f32.pop %v1298
        %v1301 = vsinq.f32.pop %v1298
        %vm1302 = vweird.f32 %v348
        %v1303 = vand.u32 %v1299, 3
        %vm1304 = vcmp.lt.s32.totalorder %v1303, 2
        %vm1305 = vcmp.eq.s32.totalorder %v1303, 0
        %v1306 = vxor.u32 %v1301, 2147483648
        %v1307 = vsel %vm1305, %v1300, %v1306
        %vm1308 = vcmp.eq.s32.totalorder %v1303, 2
        %v1309 = vxor.u32 %v1300, 2147483648
        %v1310 = vsel %vm1308, %v1309, %v1301
        %v1311 = vsel %vm1304, %v1307, %v1310
        %v1312 = vsel %vm1302, nan, %v1311
        %v1313 = vand.u32 2147483647, %v349
        %vm1314 = vcmp.le.f32.partialorder %v1313, 0.7853982
        %vm1315 = vcmp.lt.s32.totalorder %v349, 0
        %v1316 = vand.u32 %v349, 2139095040
        %v1317 = vshrl.u32 %v1316, 23
        %v1318 = vsub.s32 %v1317, 127
        %v1319 = vand.u32 2147483647, %v349
        %v1320 = vand.u32 %v1319, 8388607
        %v1321 = vor.u32 %v1320, 8388608
        %v1322 = vsub.s32 0, %v1321
        %v1323 = vadd.s32 %v1318, 1
        %vm1324 = vcmp.gt.s32.totalorder %v1323, 0
        %v1325 = vsel %vm1324, %v1323, 0
        %v1326 = vshrl.u32 %v1325, 5
        %v1327 = vand.u32 %v1325, 31
        %v1328 = vsub.s32 32, %v1327
        %v1329 = vshrl.u32 683565275, %v1328
        %v1330 = vshll.u32 683565275, %v1327
        %v1331 = vshrl.u32 2475754826, %v1328
        %v1332 = vor.u32 %v1330, %v1331
        %v1333 = vshll.u32 2475754826, %v1327
        %v1334 = vshrl.u32 2131351028, %v1328
        %v1335 = vor.u32 %v1333, %v1334
        %v1336 = vshll.u32 2131351028, %v1327
        %v1337 = vshrl.u32 2102212464, %v1328
        %v1338 = vor.u32 %v1336, %v1337
        %v1339 = vshll.u32 2102212464, %v1327
        %v1340 = vshrl.u32 920167782, %v1328
        %v1341 = vor.u32 %v1339, %v1340
        %v1342 = vshll.u32 920167782, %v1327
        %v1343 = vshrl.u32 1326507024, %v1328
        %v1344 = vor.u32 %v1342, %v1343
        %vm1345 = vcmp.lt.s32.totalorder %v1326, 1
        %vm1346 = vcmp.lt.s32.totalorder %v1326, 2
        %vm1347 = vcmp.lt.s32.totalorder %v1326, 3
        %vm1348 = vcmp.lt.s32.totalorder %v1326, 4
        %v1349 = vsel %vm1345, %v1329, %v1332
        %v1350 = vsel %vm1348, %v1338, 2102212464
        %v1351 = vsel %vm1347, %v1335, %v1350
        %v1352 = vsel %vm1346, %v1349, %v1351
        %v1353 = vsel %vm1345, %v1332, %v1335
        %v1354 = vsel %vm1348, %v1341, 920167782
        %v1355 = vsel %vm1347, %v1338, %v1354
        %v1356 = vsel %vm1346, %v1353, %v1355
        %v1357 = vsel %vm1345, %v1335, %v1338
        %v1358 = vsel %vm1348, %v1344, 1326507024
        %v1359 = vsel %vm1347, %v1341, %v1358
        %v1360 = vsel %vm1346, %v1357, %v1359
        %v1361 = vshll.u32 %v1321, 8
        %v1362 = vmul.u32.u64.compose %v1361, %v1360
        %v1363 = vextract.low.u32 %v1362
        %v1364 = vextract.high.u32 %v1362
        %v1365 = vmul.u32.u64.compose %v1361, %v1356
        %v1366 = vextract.low.u32 %v1365
        %v1367 = vextract.high.u32 %v1365
        %v1368 = vmul.u32 %v1361, %v1352
        %v1369 = vadd.s32 %v1364, %v1366
        %vm1370 = vc.u32 %v1364, %v1366
        %v1371 = vadd.s32 %v1367, 1
        %v1372 = vsel %vm1370, %v1371, %v1367
        %v1373 = vadd.s32 %v1368, %v1372
        %v1374 = vadd.s32 %v1373, 536870912
        %v1375 = vshrl.u32 %v1374, 30
        %v1376 = vshll.u32 %v1375, 30
        %v1377 = vsub.s32 %v1373, %v1376
        %vm1378 = vcmp.lt.s32.totalorder %v1377, 0
        %v1379 = vsub.s32 0, %v1377
        %v1380 = vsel %vm1378, %v1379, %v1377
        %v1381 = vclz %v1380
        %v1382 = vsub.s32 %v1381, 2
        %vm1383 = vcmp.gt.s32.totalorder 0, %v1382
        %v1384 = vsel %vm1383, 0, %v1382
        %v1385 = vsub.s32 32, %v1384
        %v1386 = vshll.u32 %v1377, %v1384
        %v1387 = vshrl.u32 %v1369, %v1385
        %v1388 = vor.u32 %v1386, %v1387
        %v1389 = vsub.s32 4294967266, %v1384
        %v1390 = vadd.s32 %v1389, 127
        %v1391 = vshll.u32 %v1390, 23
        %v1392 = vor.u32 4788187, %v1391
        %v1393 = vand.u32 2147483647, %v1392
        %v1395 = vcvt.s32.f32 %v1388
        %v1396 = vmul.f32 %v1395, %v1393
        %v1397 = vxor.u32 %v1396, 2147483648
        %v1398 = vsel %vm1315, %v1397, %v1396
        %v1399 = vsub.s32 4, %v1375
        %v1400 = vsel %vm1315, %v1399, %v1375
        %v1401 = vsel %vm1314, %v349, %v1398
        %v1402 = vsel %vm1314, 0, %v1400
        %v1403 = vcosq.f32.pop %v1401
        %v1404 = vsinq.f32.pop %v1401
        %vm1405 = vweird.f32 %v349
        %v1406 = vand.u32 %v1402, 3
        %vm1407 = vcmp.lt.s32.totalorder %v1406, 2
        %vm1408 = vcmp.eq.s32.totalorder %v1406, 0
        %v1409 = vxor.u32 %v1404, 2147483648
        %v1410 = vsel %vm1408, %v1403, %v1409
        %vm1411 = vcmp.eq.s32.totalorder %v1406, 2
        %v1412 = vxor.u32 %v1403, 2147483648
        %v1413 = vsel %vm1411, %v1412, %v1404
        %v1414 = vsel %vm1407, %v1410, %v1413
        %v1415 = vsel %vm1405, nan, %v1414
        %v1416 = vand.u32 2147483647, %v340
        %vm1417 = vcmp.le.f32.partialorder %v1416, 0.7853982
        %vm1418 = vcmp.lt.s32.totalorder %v340, 0
        %v1419 = vand.u32 %v340, 2139095040
        %v1420 = vshrl.u32 %v1419, 23
        %v1421 = vsub.s32 %v1420, 127
        %v1422 = vand.u32 2147483647, %v340
        %v1423 = vand.u32 %v1422, 8388607
        %v1424 = vor.u32 %v1423, 8388608
        %v1425 = vsub.s32 0, %v1424
        %v1426 = vadd.s32 %v1421, 1
        %vm1427 = vcmp.gt.s32.totalorder %v1426, 0
        %v1428 = vsel %vm1427, %v1426, 0
        %v1429 = vshrl.u32 %v1428, 5
        %v1430 = vand.u32 %v1428, 31
        %v1431 = vsub.s32 32, %v1430
        %v1432 = vshrl.u32 683565275, %v1431
        %v1433 = vshll.u32 683565275, %v1430
        %v1434 = vshrl.u32 2475754826, %v1431
        %v1435 = vor.u32 %v1433, %v1434
        %v1436 = vshll.u32 2475754826, %v1430
        %v1437 = vshrl.u32 2131351028, %v1431
        %v1438 = vor.u32 %v1436, %v1437
        %v1439 = vshll.u32 2131351028, %v1430
        %v1440 = vshrl.u32 2102212464, %v1431
        %v1441 = vor.u32 %v1439, %v1440
        %v1442 = vshll.u32 2102212464, %v1430
        %v1443 = vshrl.u32 920167782, %v1431
        %v1444 = vor.u32 %v1442, %v1443
        %v1445 = vshll.u32 920167782, %v1430
        %v1446 = vshrl.u32 1326507024, %v1431
        %v1447 = vor.u32 %v1445, %v1446
        %vm1448 = vcmp.lt.s32.totalorder %v1429, 1
        %vm1449 = vcmp.lt.s32.totalorder %v1429, 2
        %vm1450 = vcmp.lt.s32.totalorder %v1429, 3
        %vm1451 = vcmp.lt.s32.totalorder %v1429, 4
        %v1452 = vsel %vm1448, %v1432, %v1435
        %v1453 = vsel %vm1451, %v1441, 2102212464
        %v1454 = vsel %vm1450, %v1438, %v1453
        %v1455 = vsel %vm1449, %v1452, %v1454
        %v1456 = vsel %vm1448, %v1435, %v1438
        %v1457 = vsel %vm1451, %v1444, 920167782
        %v1458 = vsel %vm1450, %v1441, %v1457
        %v1459 = vsel %vm1449, %v1456, %v1458
        %v1460 = vsel %vm1448, %v1438, %v1441
        %v1461 = vsel %vm1451, %v1447, 1326507024
        %v1462 = vsel %vm1450, %v1444, %v1461
        %v1463 = vsel %vm1449, %v1460, %v1462
        %v1464 = vshll.u32 %v1424, 8
        %v1465 = vmul.u32.u64.compose %v1464, %v1463
        %v1466 = vextract.low.u32 %v1465
        %v1467 = vextract.high.u32 %v1465
        %v1468 = vmul.u32.u64.compose %v1464, %v1459
        %v1469 = vextract.low.u32 %v1468
        %v1470 = vextract.high.u32 %v1468
        %v1471 = vmul.u32 %v1464, %v1455
        %v1472 = vadd.s32 %v1467, %v1469
        %vm1473 = vc.u32 %v1467, %v1469
        %v1474 = vadd.s32 %v1470, 1
        %v1475 = vsel %vm1473, %v1474, %v1470
        %v1476 = vadd.s32 %v1471, %v1475
        %v1477 = vadd.s32 %v1476, 536870912
        %v1478 = vshrl.u32 %v1477, 30
        %v1479 = vshll.u32 %v1478, 30
        %v1480 = vsub.s32 %v1476, %v1479
        %vm1481 = vcmp.lt.s32.totalorder %v1480, 0
        %v1482 = vsub.s32 0, %v1480
        %v1483 = vsel %vm1481, %v1482, %v1480
        %v1484 = vclz %v1483
        %v1485 = vsub.s32 %v1484, 2
        %vm1486 = vcmp.gt.s32.totalorder 0, %v1485
        %v1487 = vsel %vm1486, 0, %v1485
        %v1488 = vsub.s32 32, %v1487
        %v1489 = vshll.u32 %v1480, %v1487
        %v1490 = vshrl.u32 %v1472, %v1488
        %v1491 = vor.u32 %v1489, %v1490
        %v1492 = vsub.s32 4294967266, %v1487
        %v1493 = vadd.s32 %v1492, 127
        %v1494 = vshll.u32 %v1493, 23
        %v1495 = vor.u32 4788187, %v1494
        %v1496 = vand.u32 2147483647, %v1495
        %v1498 = vcvt.s32.f32 %v1491
        %v1499 = vmul.f32 %v1498, %v1496
        %v1500 = vxor.u32 %v1499, 2147483648
        %v1501 = vsel %vm1418, %v1500, %v1499
        %v1502 = vsub.s32 4, %v1478
        %v1503 = vsel %vm1418, %v1502, %v1478
        %v1504 = vsel %vm1417, %v340, %v1501
        %v1505 = vsel %vm1417, 0, %v1503
        %v1506 = vcosq.f32.pop %v1504
        %v1507 = vsinq.f32.pop %v1504
        %vm1508 = vweird.f32 %v340
        %v1509 = vadd.s32 %v1505, 3
        %v1510 = vand.u32 %v1509, 3
        %vm1511 = vcmp.lt.s32.totalorder %v1510, 2
        %vm1512 = vcmp.eq.s32.totalorder %v1510, 0
        %v1513 = vxor.u32 %v1507, 2147483648
        %v1514 = vsel %vm1512, %v1506, %v1513
        %vm1515 = vcmp.eq.s32.totalorder %v1510, 2
        %v1516 = vxor.u32 %v1506, 2147483648
        %v1517 = vsel %vm1515, %v1516, %v1507
        %v1518 = vsel %vm1511, %v1514, %v1517
        %v1519 = vsel %vm1508, nan, %v1518
        %v1520 = vand.u32 2147483647, %v341
        %vm1521 = vcmp.le.f32.partialorder %v1520, 0.7853982
        %vm1522 = vcmp.lt.s32.totalorder %v341, 0
        %v1523 = vand.u32 %v341, 2139095040
        %v1524 = vshrl.u32 %v1523, 23
        %v1525 = vsub.s32 %v1524, 127
        %v1526 = vand.u32 2147483647, %v341
        %v1527 = vand.u32 %v1526, 8388607
        %v1528 = vor.u32 %v1527, 8388608
        %v1529 = vsub.s32 0, %v1528
        %v1530 = vadd.s32 %v1525, 1
        %vm1531 = vcmp.gt.s32.totalorder %v1530, 0
        %v1532 = vsel %vm1531, %v1530, 0
        %v1533 = vshrl.u32 %v1532, 5
        %v1534 = vand.u32 %v1532, 31
        %v1535 = vsub.s32 32, %v1534
        %v1536 = vshrl.u32 683565275, %v1535
        %v1537 = vshll.u32 683565275, %v1534
        %v1538 = vshrl.u32 2475754826, %v1535
        %v1539 = vor.u32 %v1537, %v1538
        %v1540 = vshll.u32 2475754826, %v1534
        %v1541 = vshrl.u32 2131351028, %v1535
        %v1542 = vor.u32 %v1540, %v1541
        %v1543 = vshll.u32 2131351028, %v1534
        %v1544 = vshrl.u32 2102212464, %v1535
        %v1545 = vor.u32 %v1543, %v1544
        %v1546 = vshll.u32 2102212464, %v1534
        %v1547 = vshrl.u32 920167782, %v1535
        %v1548 = vor.u32 %v1546, %v1547
        %v1549 = vshll.u32 920167782, %v1534
        %v1550 = vshrl.u32 1326507024, %v1535
        %v1551 = vor.u32 %v1549, %v1550
        %vm1552 = vcmp.lt.s32.totalorder %v1533, 1
        %vm1553 = vcmp.lt.s32.totalorder %v1533, 2
        %vm1554 = vcmp.lt.s32.totalorder %v1533, 3
        %vm1555 = vcmp.lt.s32.totalorder %v1533, 4
        %v1556 = vsel %vm1552, %v1536, %v1539
        %v1557 = vsel %vm1555, %v1545, 2102212464
        %v1558 = vsel %vm1554, %v1542, %v1557
        %v1559 = vsel %vm1553, %v1556, %v1558
        %v1560 = vsel %vm1552, %v1539, %v1542
        %v1561 = vsel %vm1555, %v1548, 920167782
        %v1562 = vsel %vm1554, %v1545, %v1561
        %v1563 = vsel %vm1553, %v1560, %v1562
        %v1564 = vsel %vm1552, %v1542, %v1545
        %v1565 = vsel %vm1555, %v1551, 1326507024
        %v1566 = vsel %vm1554, %v1548, %v1565
        %v1567 = vsel %vm1553, %v1564, %v1566
        %v1568 = vshll.u32 %v1528, 8
        %v1569 = vmul.u32.u64.compose %v1568, %v1567
        %v1570 = vextract.low.u32 %v1569
        %v1571 = vextract.high.u32 %v1569
        %v1572 = vmul.u32.u64.compose %v1568, %v1563
        %v1573 = vextract.low.u32 %v1572
        %v1574 = vextract.high.u32 %v1572
        %v1575 = vmul.u32 %v1568, %v1559
        %v1576 = vadd.s32 %v1571, %v1573
        %vm1577 = vc.u32 %v1571, %v1573
        %v1578 = vadd.s32 %v1574, 1
        %v1579 = vsel %vm1577, %v1578, %v1574
        %v1580 = vadd.s32 %v1575, %v1579
        %v1581 = vadd.s32 %v1580, 536870912
        %v1582 = vshrl.u32 %v1581, 30
        %v1583 = vshll.u32 %v1582, 30
        %v1584 = vsub.s32 %v1580, %v1583
        %vm1585 = vcmp.lt.s32.totalorder %v1584, 0
        %v1586 = vsub.s32 0, %v1584
        %v1587 = vsel %vm1585, %v1586, %v1584
        %v1588 = vclz %v1587
        %v1589 = vsub.s32 %v1588, 2
        %vm1590 = vcmp.gt.s32.totalorder 0, %v1589
        %v1591 = vsel %vm1590, 0, %v1589
        %v1592 = vsub.s32 32, %v1591
        %v1593 = vshll.u32 %v1584, %v1591
        %v1594 = vshrl.u32 %v1576, %v1592
        %v1595 = vor.u32 %v1593, %v1594
        %v1596 = vsub.s32 4294967266, %v1591
        %v1597 = vadd.s32 %v1596, 127
        %v1598 = vshll.u32 %v1597, 23
        %v1599 = vor.u32 4788187, %v1598
        %v1600 = vand.u32 2147483647, %v1599
        %v1602 = vcvt.s32.f32 %v1595
        %v1603 = vmul.f32 %v1602, %v1600
        %v1604 = vxor.u32 %v1603, 2147483648
        %v1605 = vsel %vm1522, %v1604, %v1603
        %v1606 = vsub.s32 4, %v1582
        %v1607 = vsel %vm1522, %v1606, %v1582
        %v1608 = vsel %vm1521, %v341, %v1605
        %v1609 = vsel %vm1521, 0, %v1607
        %v1610 = vcosq.f32.pop %v1608
        %v1611 = vsinq.f32.pop %v1608
        %vm1612 = vweird.f32 %v341
        %v1613 = vadd.s32 %v1609, 3
        %v1614 = vand.u32 %v1613, 3
        %vm1615 = vcmp.lt.s32.totalorder %v1614, 2
        %vm1616 = vcmp.eq.s32.totalorder %v1614, 0
        %v1617 = vxor.u32 %v1611, 2147483648
        %v1618 = vsel %vm1616, %v1610, %v1617
        %vm1619 = vcmp.eq.s32.totalorder %v1614, 2
        %v1620 = vxor.u32 %v1610, 2147483648
        %v1621 = vsel %vm1619, %v1620, %v1611
        %v1622 = vsel %vm1615, %v1618, %v1621
        %v1623 = vsel %vm1612, nan, %v1622
        %v1624 = vand.u32 2147483647, %v342
        %vm1625 = vcmp.le.f32.partialorder %v1624, 0.7853982
        %vm1626 = vcmp.lt.s32.totalorder %v342, 0
        %v1627 = vand.u32 %v342, 2139095040
        %v1628 = vshrl.u32 %v1627, 23
        %v1629 = vsub.s32 %v1628, 127
        %v1630 = vand.u32 2147483647, %v342
        %v1631 = vand.u32 %v1630, 8388607
        %v1632 = vor.u32 %v1631, 8388608
        %v1633 = vsub.s32 0, %v1632
        %v1634 = vadd.s32 %v1629, 1
        %vm1635 = vcmp.gt.s32.totalorder %v1634, 0
        %v1636 = vsel %vm1635, %v1634, 0
        %v1637 = vshrl.u32 %v1636, 5
        %v1638 = vand.u32 %v1636, 31
        %v1639 = vsub.s32 32, %v1638
        %v1640 = vshrl.u32 683565275, %v1639
        %v1641 = vshll.u32 683565275, %v1638
        %v1642 = vshrl.u32 2475754826, %v1639
        %v1643 = vor.u32 %v1641, %v1642
        %v1644 = vshll.u32 2475754826, %v1638
        %v1645 = vshrl.u32 2131351028, %v1639
        %v1646 = vor.u32 %v1644, %v1645
        %v1647 = vshll.u32 2131351028, %v1638
        %v1648 = vshrl.u32 2102212464, %v1639
        %v1649 = vor.u32 %v1647, %v1648
        %v1650 = vshll.u32 2102212464, %v1638
        %v1651 = vshrl.u32 920167782, %v1639
        %v1652 = vor.u32 %v1650, %v1651
        %v1653 = vshll.u32 920167782, %v1638
        %v1654 = vshrl.u32 1326507024, %v1639
        %v1655 = vor.u32 %v1653, %v1654
        %vm1656 = vcmp.lt.s32.totalorder %v1637, 1
        %vm1657 = vcmp.lt.s32.totalorder %v1637, 2
        %vm1658 = vcmp.lt.s32.totalorder %v1637, 3
        %vm1659 = vcmp.lt.s32.totalorder %v1637, 4
        %v1660 = vsel %vm1656, %v1640, %v1643
        %v1661 = vsel %vm1659, %v1649, 2102212464
        %v1662 = vsel %vm1658, %v1646, %v1661
        %v1663 = vsel %vm1657, %v1660, %v1662
        %v1664 = vsel %vm1656, %v1643, %v1646
        %v1665 = vsel %vm1659, %v1652, 920167782
        %v1666 = vsel %vm1658, %v1649, %v1665
        %v1667 = vsel %vm1657, %v1664, %v1666
        %v1668 = vsel %vm1656, %v1646, %v1649
        %v1669 = vsel %vm1659, %v1655, 1326507024
        %v1670 = vsel %vm1658, %v1652, %v1669
        %v1671 = vsel %vm1657, %v1668, %v1670
        %v1672 = vshll.u32 %v1632, 8
        %v1673 = vmul.u32.u64.compose %v1672, %v1671
        %v1674 = vextract.low.u32 %v1673
        %v1675 = vextract.high.u32 %v1673
        %v1676 = vmul.u32.u64.compose %v1672, %v1667
        %v1677 = vextract.low.u32 %v1676
        %v1678 = vextract.high.u32 %v1676
        %v1679 = vmul.u32 %v1672, %v1663
        %v1680 = vadd.s32 %v1675, %v1677
        %vm1681 = vc.u32 %v1675, %v1677
        %v1682 = vadd.s32 %v1678, 1
        %v1683 = vsel %vm1681, %v1682, %v1678
        %v1684 = vadd.s32 %v1679, %v1683
        %v1685 = vadd.s32 %v1684, 536870912
        %v1686 = vshrl.u32 %v1685, 30
        %v1687 = vshll.u32 %v1686, 30
        %v1688 = vsub.s32 %v1684, %v1687
        %vm1689 = vcmp.lt.s32.totalorder %v1688, 0
        %v1690 = vsub.s32 0, %v1688
        %v1691 = vsel %vm1689, %v1690, %v1688
        %v1692 = vclz %v1691
        %v1693 = vsub.s32 %v1692, 2
        %vm1694 = vcmp.gt.s32.totalorder 0, %v1693
        %v1695 = vsel %vm1694, 0, %v1693
        %v1696 = vsub.s32 32, %v1695
        %v1697 = vshll.u32 %v1688, %v1695
        %v1698 = vshrl.u32 %v1680, %v1696
        %v1699 = vor.u32 %v1697, %v1698
        %v1700 = vsub.s32 4294967266, %v1695
        %v1701 = vadd.s32 %v1700, 127
        %v1702 = vshll.u32 %v1701, 23
        %v1703 = vor.u32 4788187, %v1702
        %v1704 = vand.u32 2147483647, %v1703
        %v1706 = vcvt.s32.f32 %v1699
        %v1707 = vmul.f32 %v1706, %v1704
        %v1708 = vxor.u32 %v1707, 2147483648
        %v1709 = vsel %vm1626, %v1708, %v1707
        %v1710 = vsub.s32 4, %v1686
        %v1711 = vsel %vm1626, %v1710, %v1686
        %v1712 = vsel %vm1625, %v342, %v1709
        %v1713 = vsel %vm1625, 0, %v1711
        %v1714 = vcosq.f32.pop %v1712
        %v1715 = vsinq.f32.pop %v1712
        %vm1716 = vweird.f32 %v342
        %v1717 = vadd.s32 %v1713, 3
        %v1718 = vand.u32 %v1717, 3
        %vm1719 = vcmp.lt.s32.totalorder %v1718, 2
        %vm1720 = vcmp.eq.s32.totalorder %v1718, 0
        %v1721 = vxor.u32 %v1715, 2147483648
        %v1722 = vsel %vm1720, %v1714, %v1721
        %vm1723 = vcmp.eq.s32.totalorder %v1718, 2
        %v1724 = vxor.u32 %v1714, 2147483648
        %v1725 = vsel %vm1723, %v1724, %v1715
        %v1726 = vsel %vm1719, %v1722, %v1725
        %v1727 = vsel %vm1716, nan, %v1726
        %v1728 = vand.u32 2147483647, %v343
        %vm1729 = vcmp.le.f32.partialorder %v1728, 0.7853982
        %vm1730 = vcmp.lt.s32.totalorder %v343, 0
        %v1731 = vand.u32 %v343, 2139095040
        %v1732 = vshrl.u32 %v1731, 23
        %v1733 = vsub.s32 %v1732, 127
        %v1734 = vand.u32 2147483647, %v343
        %v1735 = vand.u32 %v1734, 8388607
        %v1736 = vor.u32 %v1735, 8388608
        %v1737 = vsub.s32 0, %v1736
        %v1738 = vadd.s32 %v1733, 1
        %vm1739 = vcmp.gt.s32.totalorder %v1738, 0
        %v1740 = vsel %vm1739, %v1738, 0
        %v1741 = vshrl.u32 %v1740, 5
        %v1742 = vand.u32 %v1740, 31
        %v1743 = vsub.s32 32, %v1742
        %v1744 = vshrl.u32 683565275, %v1743
        %v1745 = vshll.u32 683565275, %v1742
        %v1746 = vshrl.u32 2475754826, %v1743
        %v1747 = vor.u32 %v1745, %v1746
        %v1748 = vshll.u32 2475754826, %v1742
        %v1749 = vshrl.u32 2131351028, %v1743
        %v1750 = vor.u32 %v1748, %v1749
        %v1751 = vshll.u32 2131351028, %v1742
        %v1752 = vshrl.u32 2102212464, %v1743
        %v1753 = vor.u32 %v1751, %v1752
        %v1754 = vshll.u32 2102212464, %v1742
        %v1755 = vshrl.u32 920167782, %v1743
        %v1756 = vor.u32 %v1754, %v1755
        %v1757 = vshll.u32 920167782, %v1742
        %v1758 = vshrl.u32 1326507024, %v1743
        %v1759 = vor.u32 %v1757, %v1758
        %vm1760 = vcmp.lt.s32.totalorder %v1741, 1
        %vm1761 = vcmp.lt.s32.totalorder %v1741, 2
        %vm1762 = vcmp.lt.s32.totalorder %v1741, 3
        %vm1763 = vcmp.lt.s32.totalorder %v1741, 4
        %v1764 = vsel %vm1760, %v1744, %v1747
        %v1765 = vsel %vm1763, %v1753, 2102212464
        %v1766 = vsel %vm1762, %v1750, %v1765
        %v1767 = vsel %vm1761, %v1764, %v1766
        %v1768 = vsel %vm1760, %v1747, %v1750
        %v1769 = vsel %vm1763, %v1756, 920167782
        %v1770 = vsel %vm1762, %v1753, %v1769
        %v1771 = vsel %vm1761, %v1768, %v1770
        %v1772 = vsel %vm1760, %v1750, %v1753
        %v1773 = vsel %vm1763, %v1759, 1326507024
        %v1774 = vsel %vm1762, %v1756, %v1773
        %v1775 = vsel %vm1761, %v1772, %v1774
        %v1776 = vshll.u32 %v1736, 8
        %v1777 = vmul.u32.u64.compose %v1776, %v1775
        %v1778 = vextract.low.u32 %v1777
        %v1779 = vextract.high.u32 %v1777
        %v1780 = vmul.u32.u64.compose %v1776, %v1771
        %v1781 = vextract.low.u32 %v1780
        %v1782 = vextract.high.u32 %v1780
        %v1783 = vmul.u32 %v1776, %v1767
        %v1784 = vadd.s32 %v1779, %v1781
        %vm1785 = vc.u32 %v1779, %v1781
        %v1786 = vadd.s32 %v1782, 1
        %v1787 = vsel %vm1785, %v1786, %v1782
        %v1788 = vadd.s32 %v1783, %v1787
        %v1789 = vadd.s32 %v1788, 536870912
        %v1790 = vshrl.u32 %v1789, 30
        %v1791 = vshll.u32 %v1790, 30
        %v1792 = vsub.s32 %v1788, %v1791
        %vm1793 = vcmp.lt.s32.totalorder %v1792, 0
        %v1794 = vsub.s32 0, %v1792
        %v1795 = vsel %vm1793, %v1794, %v1792
        %v1796 = vclz %v1795
        %v1797 = vsub.s32 %v1796, 2
        %vm1798 = vcmp.gt.s32.totalorder 0, %v1797
        %v1799 = vsel %vm1798, 0, %v1797
        %v1800 = vsub.s32 32, %v1799
        %v1801 = vshll.u32 %v1792, %v1799
        %v1802 = vshrl.u32 %v1784, %v1800
        %v1803 = vor.u32 %v1801, %v1802
        %v1804 = vsub.s32 4294967266, %v1799
        %v1805 = vadd.s32 %v1804, 127
        %v1806 = vshll.u32 %v1805, 23
        %v1807 = vor.u32 4788187, %v1806
        %v1808 = vand.u32 2147483647, %v1807
        %v1810 = vcvt.s32.f32 %v1803
        %v1811 = vmul.f32 %v1810, %v1808
        %v1812 = vxor.u32 %v1811, 2147483648
        %v1813 = vsel %vm1730, %v1812, %v1811
        %v1814 = vsub.s32 4, %v1790
        %v1815 = vsel %vm1730, %v1814, %v1790
        %v1816 = vsel %vm1729, %v343, %v1813
        %v1817 = vsel %vm1729, 0, %v1815
        %v1818 = vcosq.f32.pop %v1816
        %v1819 = vsinq.f32.pop %v1816
        %vm1820 = vweird.f32 %v343
        %v1821 = vadd.s32 %v1817, 3
        %v1822 = vand.u32 %v1821, 3
        %vm1823 = vcmp.lt.s32.totalorder %v1822, 2
        %vm1824 = vcmp.eq.s32.totalorder %v1822, 0
        %v1825 = vxor.u32 %v1819, 2147483648
        %v1826 = vsel %vm1824, %v1818, %v1825
        %vm1827 = vcmp.eq.s32.totalorder %v1822, 2
        %v1828 = vxor.u32 %v1818, 2147483648
        %v1829 = vsel %vm1827, %v1828, %v1819
        %v1830 = vsel %vm1823, %v1826, %v1829
        %v1831 = vsel %vm1820, nan, %v1830
        %v1832 = vand.u32 2147483647, %v344
        %vm1833 = vcmp.le.f32.partialorder %v1832, 0.7853982
        %vm1834 = vcmp.lt.s32.totalorder %v344, 0
        %v1835 = vand.u32 %v344, 2139095040
        %v1836 = vshrl.u32 %v1835, 23
        %v1837 = vsub.s32 %v1836, 127
        %v1838 = vand.u32 2147483647, %v344
        %v1839 = vand.u32 %v1838, 8388607
        %v1840 = vor.u32 %v1839, 8388608
        %v1841 = vsub.s32 0, %v1840
        %v1842 = vadd.s32 %v1837, 1
        %vm1843 = vcmp.gt.s32.totalorder %v1842, 0
        %v1844 = vsel %vm1843, %v1842, 0
        %v1845 = vshrl.u32 %v1844, 5
        %v1846 = vand.u32 %v1844, 31
        %v1847 = vsub.s32 32, %v1846
        %v1848 = vshrl.u32 683565275, %v1847
        %v1849 = vshll.u32 683565275, %v1846
        %v1850 = vshrl.u32 2475754826, %v1847
        %v1851 = vor.u32 %v1849, %v1850
        %v1852 = vshll.u32 2475754826, %v1846
        %v1853 = vshrl.u32 2131351028, %v1847
        %v1854 = vor.u32 %v1852, %v1853
        %v1855 = vshll.u32 2131351028, %v1846
        %v1856 = vshrl.u32 2102212464, %v1847
        %v1857 = vor.u32 %v1855, %v1856
        %v1858 = vshll.u32 2102212464, %v1846
        %v1859 = vshrl.u32 920167782, %v1847
        %v1860 = vor.u32 %v1858, %v1859
        %v1861 = vshll.u32 920167782, %v1846
        %v1862 = vshrl.u32 1326507024, %v1847
        %v1863 = vor.u32 %v1861, %v1862
        %vm1864 = vcmp.lt.s32.totalorder %v1845, 1
        %vm1865 = vcmp.lt.s32.totalorder %v1845, 2
        %vm1866 = vcmp.lt.s32.totalorder %v1845, 3
        %vm1867 = vcmp.lt.s32.totalorder %v1845, 4
        %v1868 = vsel %vm1864, %v1848, %v1851
        %v1869 = vsel %vm1867, %v1857, 2102212464
        %v1870 = vsel %vm1866, %v1854, %v1869
        %v1871 = vsel %vm1865, %v1868, %v1870
        %v1872 = vsel %vm1864, %v1851, %v1854
        %v1873 = vsel %vm1867, %v1860, 920167782
        %v1874 = vsel %vm1866, %v1857, %v1873
        %v1875 = vsel %vm1865, %v1872, %v1874
        %v1876 = vsel %vm1864, %v1854, %v1857
        %v1877 = vsel %vm1867, %v1863, 1326507024
        %v1878 = vsel %vm1866, %v1860, %v1877
        %v1879 = vsel %vm1865, %v1876, %v1878
        %v1880 = vshll.u32 %v1840, 8
        %v1881 = vmul.u32.u64.compose %v1880, %v1879
        %v1882 = vextract.low.u32 %v1881
        %v1883 = vextract.high.u32 %v1881
        %v1884 = vmul.u32.u64.compose %v1880, %v1875
        %v1885 = vextract.low.u32 %v1884
        %v1886 = vextract.high.u32 %v1884
        %v1887 = vmul.u32 %v1880, %v1871
        %v1888 = vadd.s32 %v1883, %v1885
        %vm1889 = vc.u32 %v1883, %v1885
        %v1890 = vadd.s32 %v1886, 1
        %v1891 = vsel %vm1889, %v1890, %v1886
        %v1892 = vadd.s32 %v1887, %v1891
        %v1893 = vadd.s32 %v1892, 536870912
        %v1894 = vshrl.u32 %v1893, 30
        %v1895 = vshll.u32 %v1894, 30
        %v1896 = vsub.s32 %v1892, %v1895
        %vm1897 = vcmp.lt.s32.totalorder %v1896, 0
        %v1898 = vsub.s32 0, %v1896
        %v1899 = vsel %vm1897, %v1898, %v1896
        %v1900 = vclz %v1899
        %v1901 = vsub.s32 %v1900, 2
        %vm1902 = vcmp.gt.s32.totalorder 0, %v1901
        %v1903 = vsel %vm1902, 0, %v1901
        %v1904 = vsub.s32 32, %v1903
        %v1905 = vshll.u32 %v1896, %v1903
        %v1906 = vshrl.u32 %v1888, %v1904
        %v1907 = vor.u32 %v1905, %v1906
        %v1908 = vsub.s32 4294967266, %v1903
        %v1909 = vadd.s32 %v1908, 127
        %v1910 = vshll.u32 %v1909, 23
        %v1911 = vor.u32 4788187, %v1910
        %v1912 = vand.u32 2147483647, %v1911
        %v1914 = vcvt.s32.f32 %v1907
        %v1915 = vmul.f32 %v1914, %v1912
        %v1916 = vxor.u32 %v1915, 2147483648
        %v1917 = vsel %vm1834, %v1916, %v1915
        %v1918 = vsub.s32 4, %v1894
        %v1919 = vsel %vm1834, %v1918, %v1894
        %v1920 = vsel %vm1833, %v344, %v1917
        %v1921 = vsel %vm1833, 0, %v1919
        %v1922 = vcosq.f32.pop %v1920
        %v1923 = vsinq.f32.pop %v1920
        %vm1924 = vweird.f32 %v344
        %v1925 = vadd.s32 %v1921, 3
        %v1926 = vand.u32 %v1925, 3
        %vm1927 = vcmp.lt.s32.totalorder %v1926, 2
        %vm1928 = vcmp.eq.s32.totalorder %v1926, 0
        %v1929 = vxor.u32 %v1923, 2147483648
        %v1930 = vsel %vm1928, %v1922, %v1929
        %vm1931 = vcmp.eq.s32.totalorder %v1926, 2
        %v1932 = vxor.u32 %v1922, 2147483648
        %v1933 = vsel %vm1931, %v1932, %v1923
        %v1934 = vsel %vm1927, %v1930, %v1933
        %v1935 = vsel %vm1924, nan, %v1934
        %v1936 = vand.u32 2147483647, %v345
        %vm1937 = vcmp.le.f32.partialorder %v1936, 0.7853982
        %vm1938 = vcmp.lt.s32.totalorder %v345, 0
        %v1939 = vand.u32 %v345, 2139095040
        %v1940 = vshrl.u32 %v1939, 23
        %v1941 = vsub.s32 %v1940, 127
        %v1942 = vand.u32 2147483647, %v345
        %v1943 = vand.u32 %v1942, 8388607
        %v1944 = vor.u32 %v1943, 8388608
        %v1945 = vsub.s32 0, %v1944
        %v1946 = vadd.s32 %v1941, 1
        %vm1947 = vcmp.gt.s32.totalorder %v1946, 0
        %v1948 = vsel %vm1947, %v1946, 0
        %v1949 = vshrl.u32 %v1948, 5
        %v1950 = vand.u32 %v1948, 31
        %v1951 = vsub.s32 32, %v1950
        %v1952 = vshrl.u32 683565275, %v1951
        %v1953 = vshll.u32 683565275, %v1950
        %v1954 = vshrl.u32 2475754826, %v1951
        %v1955 = vor.u32 %v1953, %v1954
        %v1956 = vshll.u32 2475754826, %v1950
        %v1957 = vshrl.u32 2131351028, %v1951
        %v1958 = vor.u32 %v1956, %v1957
        %v1959 = vshll.u32 2131351028, %v1950
        %v1960 = vshrl.u32 2102212464, %v1951
        %v1961 = vor.u32 %v1959, %v1960
        %v1962 = vshll.u32 2102212464, %v1950
        %v1963 = vshrl.u32 920167782, %v1951
        %v1964 = vor.u32 %v1962, %v1963
        %v1965 = vshll.u32 920167782, %v1950
        %v1966 = vshrl.u32 1326507024, %v1951
        %v1967 = vor.u32 %v1965, %v1966
        %vm1968 = vcmp.lt.s32.totalorder %v1949, 1
        %vm1969 = vcmp.lt.s32.totalorder %v1949, 2
        %vm1970 = vcmp.lt.s32.totalorder %v1949, 3
        %vm1971 = vcmp.lt.s32.totalorder %v1949, 4
        %v1972 = vsel %vm1968, %v1952, %v1955
        %v1973 = vsel %vm1971, %v1961, 2102212464
        %v1974 = vsel %vm1970, %v1958, %v1973
        %v1975 = vsel %vm1969, %v1972, %v1974
        %v1976 = vsel %vm1968, %v1955, %v1958
        %v1977 = vsel %vm1971, %v1964, 920167782
        %v1978 = vsel %vm1970, %v1961, %v1977
        %v1979 = vsel %vm1969, %v1976, %v1978
        %v1980 = vsel %vm1968, %v1958, %v1961
        %v1981 = vsel %vm1971, %v1967, 1326507024
        %v1982 = vsel %vm1970, %v1964, %v1981
        %v1983 = vsel %vm1969, %v1980, %v1982
        %v1984 = vshll.u32 %v1944, 8
        %v1985 = vmul.u32.u64.compose %v1984, %v1983
        %v1986 = vextract.low.u32 %v1985
        %v1987 = vextract.high.u32 %v1985
        %v1988 = vmul.u32.u64.compose %v1984, %v1979
        %v1989 = vextract.low.u32 %v1988
        %v1990 = vextract.high.u32 %v1988
        %v1991 = vmul.u32 %v1984, %v1975
        %v1992 = vadd.s32 %v1987, %v1989
        %vm1993 = vc.u32 %v1987, %v1989
        %v1994 = vadd.s32 %v1990, 1
        %v1995 = vsel %vm1993, %v1994, %v1990
        %v1996 = vadd.s32 %v1991, %v1995
        %v1997 = vadd.s32 %v1996, 536870912
        %v1998 = vshrl.u32 %v1997, 30
        %v1999 = vshll.u32 %v1998, 30
        %v2000 = vsub.s32 %v1996, %v1999
        %vm2001 = vcmp.lt.s32.totalorder %v2000, 0
        %v2002 = vsub.s32 0, %v2000
        %v2003 = vsel %vm2001, %v2002, %v2000
        %v2004 = vclz %v2003
        %v2005 = vsub.s32 %v2004, 2
        %vm2006 = vcmp.gt.s32.totalorder 0, %v2005
        %v2007 = vsel %vm2006, 0, %v2005
        %v2008 = vsub.s32 32, %v2007
        %v2009 = vshll.u32 %v2000, %v2007
        %v2010 = vshrl.u32 %v1992, %v2008
        %v2011 = vor.u32 %v2009, %v2010
        %v2012 = vsub.s32 4294967266, %v2007
        %v2013 = vadd.s32 %v2012, 127
        %v2014 = vshll.u32 %v2013, 23
        %v2015 = vor.u32 4788187, %v2014
        %v2016 = vand.u32 2147483647, %v2015
        %v2018 = vcvt.s32.f32 %v2011
        %v2019 = vmul.f32 %v2018, %v2016
        %v2020 = vxor.u32 %v2019, 2147483648
        %v2021 = vsel %vm1938, %v2020, %v2019
        %v2022 = vsub.s32 4, %v1998
        %v2023 = vsel %vm1938, %v2022, %v1998
        %v2024 = vsel %vm1937, %v345, %v2021
        %v2025 = vsel %vm1937, 0, %v2023
        %v2026 = vcosq.f32.pop %v2024
        %v2027 = vsinq.f32.pop %v2024
        %vm2028 = vweird.f32 %v345
        %v2029 = vadd.s32 %v2025, 3
        %v2030 = vand.u32 %v2029, 3
        %vm2031 = vcmp.lt.s32.totalorder %v2030, 2
        %vm2032 = vcmp.eq.s32.totalorder %v2030, 0
        %v2033 = vxor.u32 %v2027, 2147483648
        %v2034 = vsel %vm2032, %v2026, %v2033
        %vm2035 = vcmp.eq.s32.totalorder %v2030, 2
        %v2036 = vxor.u32 %v2026, 2147483648
        %v2037 = vsel %vm2035, %v2036, %v2027
        %v2038 = vsel %vm2031, %v2034, %v2037
        %v2039 = vsel %vm2028, nan, %v2038
        %v2040 = vand.u32 2147483647, %v346
        %vm2041 = vcmp.le.f32.partialorder %v2040, 0.7853982
        %vm2042 = vcmp.lt.s32.totalorder %v346, 0
        %v2043 = vand.u32 %v346, 2139095040
        %v2044 = vshrl.u32 %v2043, 23
        %v2045 = vsub.s32 %v2044, 127
        %v2046 = vand.u32 2147483647, %v346
        %v2047 = vand.u32 %v2046, 8388607
        %v2048 = vor.u32 %v2047, 8388608
        %v2049 = vsub.s32 0, %v2048
        %v2050 = vadd.s32 %v2045, 1
        %vm2051 = vcmp.gt.s32.totalorder %v2050, 0
        %v2052 = vsel %vm2051, %v2050, 0
        %v2053 = vshrl.u32 %v2052, 5
        %v2054 = vand.u32 %v2052, 31
        %v2055 = vsub.s32 32, %v2054
        %v2056 = vshrl.u32 683565275, %v2055
        %v2057 = vshll.u32 683565275, %v2054
        %v2058 = vshrl.u32 2475754826, %v2055
        %v2059 = vor.u32 %v2057, %v2058
        %v2060 = vshll.u32 2475754826, %v2054
        %v2061 = vshrl.u32 2131351028, %v2055
        %v2062 = vor.u32 %v2060, %v2061
        %v2063 = vshll.u32 2131351028, %v2054
        %v2064 = vshrl.u32 2102212464, %v2055
        %v2065 = vor.u32 %v2063, %v2064
        %v2066 = vshll.u32 2102212464, %v2054
        %v2067 = vshrl.u32 920167782, %v2055
        %v2068 = vor.u32 %v2066, %v2067
        %v2069 = vshll.u32 920167782, %v2054
        %v2070 = vshrl.u32 1326507024, %v2055
        %v2071 = vor.u32 %v2069, %v2070
        %vm2072 = vcmp.lt.s32.totalorder %v2053, 1
        %vm2073 = vcmp.lt.s32.totalorder %v2053, 2
        %vm2074 = vcmp.lt.s32.totalorder %v2053, 3
        %vm2075 = vcmp.lt.s32.totalorder %v2053, 4
        %v2076 = vsel %vm2072, %v2056, %v2059
        %v2077 = vsel %vm2075, %v2065, 2102212464
        %v2078 = vsel %vm2074, %v2062, %v2077
        %v2079 = vsel %vm2073, %v2076, %v2078
        %v2080 = vsel %vm2072, %v2059, %v2062
        %v2081 = vsel %vm2075, %v2068, 920167782
        %v2082 = vsel %vm2074, %v2065, %v2081
        %v2083 = vsel %vm2073, %v2080, %v2082
        %v2084 = vsel %vm2072, %v2062, %v2065
        %v2085 = vsel %vm2075, %v2071, 1326507024
        %v2086 = vsel %vm2074, %v2068, %v2085
        %v2087 = vsel %vm2073, %v2084, %v2086
        %v2088 = vshll.u32 %v2048, 8
        %v2089 = vmul.u32.u64.compose %v2088, %v2087
        %v2090 = vextract.low.u32 %v2089
        %v2091 = vextract.high.u32 %v2089
        %v2092 = vmul.u32.u64.compose %v2088, %v2083
        %v2093 = vextract.low.u32 %v2092
        %v2094 = vextract.high.u32 %v2092
        %v2095 = vmul.u32 %v2088, %v2079
        %v2096 = vadd.s32 %v2091, %v2093
        %vm2097 = vc.u32 %v2091, %v2093
        %v2098 = vadd.s32 %v2094, 1
        %v2099 = vsel %vm2097, %v2098, %v2094
        %v2100 = vadd.s32 %v2095, %v2099
        %v2101 = vadd.s32 %v2100, 536870912
        %v2102 = vshrl.u32 %v2101, 30
        %v2103 = vshll.u32 %v2102, 30
        %v2104 = vsub.s32 %v2100, %v2103
        %vm2105 = vcmp.lt.s32.totalorder %v2104, 0
        %v2106 = vsub.s32 0, %v2104
        %v2107 = vsel %vm2105, %v2106, %v2104
        %v2108 = vclz %v2107
        %v2109 = vsub.s32 %v2108, 2
        %vm2110 = vcmp.gt.s32.totalorder 0, %v2109
        %v2111 = vsel %vm2110, 0, %v2109
        %v2112 = vsub.s32 32, %v2111
        %v2113 = vshll.u32 %v2104, %v2111
        %v2114 = vshrl.u32 %v2096, %v2112
        %v2115 = vor.u32 %v2113, %v2114
        %v2116 = vsub.s32 4294967266, %v2111
        %v2117 = vadd.s32 %v2116, 127
        %v2118 = vshll.u32 %v2117, 23
        %v2119 = vor.u32 4788187, %v2118
        %v2120 = vand.u32 2147483647, %v2119
        %v2122 = vcvt.s32.f32 %v2115
        %v2123 = vmul.f32 %v2122, %v2120
        %v2124 = vxor.u32 %v2123, 2147483648
        %v2125 = vsel %vm2042, %v2124, %v2123
        %v2126 = vsub.s32 4, %v2102
        %v2127 = vsel %vm2042, %v2126, %v2102
        %v2128 = vsel %vm2041, %v346, %v2125
        %v2129 = vsel %vm2041, 0, %v2127
        %v2130 = vcosq.f32.pop %v2128
        %v2131 = vsinq.f32.pop %v2128
        %vm2132 = vweird.f32 %v346
        %v2133 = vadd.s32 %v2129, 3
        %v2134 = vand.u32 %v2133, 3
        %vm2135 = vcmp.lt.s32.totalorder %v2134, 2
        %vm2136 = vcmp.eq.s32.totalorder %v2134, 0
        %v2137 = vxor.u32 %v2131, 2147483648
        %v2138 = vsel %vm2136, %v2130, %v2137
        %vm2139 = vcmp.eq.s32.totalorder %v2134, 2
        %v2140 = vxor.u32 %v2130, 2147483648
        %v2141 = vsel %vm2139, %v2140, %v2131
        %v2142 = vsel %vm2135, %v2138, %v2141
        %v2143 = vsel %vm2132, nan, %v2142
        %v2144 = vand.u32 2147483647, %v347
        %vm2145 = vcmp.le.f32.partialorder %v2144, 0.7853982
        %vm2146 = vcmp.lt.s32.totalorder %v347, 0
        %v2147 = vand.u32 %v347, 2139095040
        %v2148 = vshrl.u32 %v2147, 23
        %v2149 = vsub.s32 %v2148, 127
        %v2150 = vand.u32 2147483647, %v347
        %v2151 = vand.u32 %v2150, 8388607
        %v2152 = vor.u32 %v2151, 8388608
        %v2153 = vsub.s32 0, %v2152
        %v2154 = vadd.s32 %v2149, 1
        %vm2155 = vcmp.gt.s32.totalorder %v2154, 0
        %v2156 = vsel %vm2155, %v2154, 0
        %v2157 = vshrl.u32 %v2156, 5
        %v2158 = vand.u32 %v2156, 31
        %v2159 = vsub.s32 32, %v2158
        %v2160 = vshrl.u32 683565275, %v2159
        %v2161 = vshll.u32 683565275, %v2158
        %v2162 = vshrl.u32 2475754826, %v2159
        %v2163 = vor.u32 %v2161, %v2162
        %v2164 = vshll.u32 2475754826, %v2158
        %v2165 = vshrl.u32 2131351028, %v2159
        %v2166 = vor.u32 %v2164, %v2165
        %v2167 = vshll.u32 2131351028, %v2158
        %v2168 = vshrl.u32 2102212464, %v2159
        %v2169 = vor.u32 %v2167, %v2168
        %v2170 = vshll.u32 2102212464, %v2158
        %v2171 = vshrl.u32 920167782, %v2159
        %v2172 = vor.u32 %v2170, %v2171
        %v2173 = vshll.u32 920167782, %v2158
        %v2174 = vshrl.u32 1326507024, %v2159
        %v2175 = vor.u32 %v2173, %v2174
        %vm2176 = vcmp.lt.s32.totalorder %v2157, 1
        %vm2177 = vcmp.lt.s32.totalorder %v2157, 2
        %vm2178 = vcmp.lt.s32.totalorder %v2157, 3
        %vm2179 = vcmp.lt.s32.totalorder %v2157, 4
        %v2180 = vsel %vm2176, %v2160, %v2163
        %v2181 = vsel %vm2179, %v2169, 2102212464
        %v2182 = vsel %vm2178, %v2166, %v2181
        %v2183 = vsel %vm2177, %v2180, %v2182
        %v2184 = vsel %vm2176, %v2163, %v2166
        %v2185 = vsel %vm2179, %v2172, 920167782
        %v2186 = vsel %vm2178, %v2169, %v2185
        %v2187 = vsel %vm2177, %v2184, %v2186
        %v2188 = vsel %vm2176, %v2166, %v2169
        %v2189 = vsel %vm2179, %v2175, 1326507024
        %v2190 = vsel %vm2178, %v2172, %v2189
        %v2191 = vsel %vm2177, %v2188, %v2190
        %v2192 = vshll.u32 %v2152, 8
        %v2193 = vmul.u32.u64.compose %v2192, %v2191
        %v2194 = vextract.low.u32 %v2193
        %v2195 = vextract.high.u32 %v2193
        %v2196 = vmul.u32.u64.compose %v2192, %v2187
        %v2197 = vextract.low.u32 %v2196
        %v2198 = vextract.high.u32 %v2196
        %v2199 = vmul.u32 %v2192, %v2183
        %v2200 = vadd.s32 %v2195, %v2197
        %vm2201 = vc.u32 %v2195, %v2197
        %v2202 = vadd.s32 %v2198, 1
        %v2203 = vsel %vm2201, %v2202, %v2198
        %v2204 = vadd.s32 %v2199, %v2203
        %v2205 = vadd.s32 %v2204, 536870912
        %v2206 = vshrl.u32 %v2205, 30
        %v2207 = vshll.u32 %v2206, 30
        %v2208 = vsub.s32 %v2204, %v2207
        %vm2209 = vcmp.lt.s32.totalorder %v2208, 0
        %v2210 = vsub.s32 0, %v2208
        %v2211 = vsel %vm2209, %v2210, %v2208
        %v2212 = vclz %v2211
        %v2213 = vsub.s32 %v2212, 2
        %vm2214 = vcmp.gt.s32.totalorder 0, %v2213
        %v2215 = vsel %vm2214, 0, %v2213
        %v2216 = vsub.s32 32, %v2215
        %v2217 = vshll.u32 %v2208, %v2215
        %v2218 = vshrl.u32 %v2200, %v2216
        %v2219 = vor.u32 %v2217, %v2218
        %v2220 = vsub.s32 4294967266, %v2215
        %v2221 = vadd.s32 %v2220, 127
        %v2222 = vshll.u32 %v2221, 23
        %v2223 = vor.u32 4788187, %v2222
        %v2224 = vand.u32 2147483647, %v2223
        %v2226 = vcvt.s32.f32 %v2219
        %v2227 = vmul.f32 %v2226, %v2224
        %v2228 = vxor.u32 %v2227, 2147483648
        %v2229 = vsel %vm2146, %v2228, %v2227
        %v2230 = vsub.s32 4, %v2206
        %v2231 = vsel %vm2146, %v2230, %v2206
        %v2232 = vsel %vm2145, %v347, %v2229
        %v2233 = vsel %vm2145, 0, %v2231
        %v2234 = vcosq.f32.pop %v2232
        %v2235 = vsinq.f32.pop %v2232
        %vm2236 = vweird.f32 %v347
        %v2237 = vadd.s32 %v2233, 3
        %v2238 = vand.u32 %v2237, 3
        %vm2239 = vcmp.lt.s32.totalorder %v2238, 2
        %vm2240 = vcmp.eq.s32.totalorder %v2238, 0
        %v2241 = vxor.u32 %v2235, 2147483648
        %v2242 = vsel %vm2240, %v2234, %v2241
        %vm2243 = vcmp.eq.s32.totalorder %v2238, 2
        %v2244 = vxor.u32 %v2234, 2147483648
        %v2245 = vsel %vm2243, %v2244, %v2235
        %v2246 = vsel %vm2239, %v2242, %v2245
        %v2247 = vsel %vm2236, nan, %v2246
        %v2248 = vand.u32 2147483647, %v348
        %vm2249 = vcmp.le.f32.partialorder %v2248, 0.7853982
        %vm2250 = vcmp.lt.s32.totalorder %v348, 0
        %v2251 = vand.u32 %v348, 2139095040
        %v2252 = vshrl.u32 %v2251, 23
        %v2253 = vsub.s32 %v2252, 127
        %v2254 = vand.u32 2147483647, %v348
        %v2255 = vand.u32 %v2254, 8388607
        %v2256 = vor.u32 %v2255, 8388608
        %v2257 = vsub.s32 0, %v2256
        %v2258 = vadd.s32 %v2253, 1
        %vm2259 = vcmp.gt.s32.totalorder %v2258, 0
        %v2260 = vsel %vm2259, %v2258, 0
        %v2261 = vshrl.u32 %v2260, 5
        %v2262 = vand.u32 %v2260, 31
        %v2263 = vsub.s32 32, %v2262
        %v2264 = vshrl.u32 683565275, %v2263
        %v2265 = vshll.u32 683565275, %v2262
        %v2266 = vshrl.u32 2475754826, %v2263
        %v2267 = vor.u32 %v2265, %v2266
        %v2268 = vshll.u32 2475754826, %v2262
        %v2269 = vshrl.u32 2131351028, %v2263
        %v2270 = vor.u32 %v2268, %v2269
        %v2271 = vshll.u32 2131351028, %v2262
        %v2272 = vshrl.u32 2102212464, %v2263
        %v2273 = vor.u32 %v2271, %v2272
        %v2274 = vshll.u32 2102212464, %v2262
        %v2275 = vshrl.u32 920167782, %v2263
        %v2276 = vor.u32 %v2274, %v2275
        %v2277 = vshll.u32 920167782, %v2262
        %v2278 = vshrl.u32 1326507024, %v2263
        %v2279 = vor.u32 %v2277, %v2278
        %vm2280 = vcmp.lt.s32.totalorder %v2261, 1
        %vm2281 = vcmp.lt.s32.totalorder %v2261, 2
        %vm2282 = vcmp.lt.s32.totalorder %v2261, 3
        %vm2283 = vcmp.lt.s32.totalorder %v2261, 4
        %v2284 = vsel %vm2280, %v2264, %v2267
        %v2285 = vsel %vm2283, %v2273, 2102212464
        %v2286 = vsel %vm2282, %v2270, %v2285
        %v2287 = vsel %vm2281, %v2284, %v2286
        %v2288 = vsel %vm2280, %v2267, %v2270
        %v2289 = vsel %vm2283, %v2276, 920167782
        %v2290 = vsel %vm2282, %v2273, %v2289
        %v2291 = vsel %vm2281, %v2288, %v2290
        %v2292 = vsel %vm2280, %v2270, %v2273
        %v2293 = vsel %vm2283, %v2279, 1326507024
        %v2294 = vsel %vm2282, %v2276, %v2293
        %v2295 = vsel %vm2281, %v2292, %v2294
        %v2296 = vshll.u32 %v2256, 8
        %v2297 = vmul.u32.u64.compose %v2296, %v2295
        %v2298 = vextract.low.u32 %v2297
        %v2299 = vextract.high.u32 %v2297
        %v2300 = vmul.u32.u64.compose %v2296, %v2291
        %v2301 = vextract.low.u32 %v2300
        %v2302 = vextract.high.u32 %v2300
        %v2303 = vmul.u32 %v2296, %v2287
        %v2304 = vadd.s32 %v2299, %v2301
        %vm2305 = vc.u32 %v2299, %v2301
        %v2306 = vadd.s32 %v2302, 1
        %v2307 = vsel %vm2305, %v2306, %v2302
        %v2308 = vadd.s32 %v2303, %v2307
        %v2309 = vadd.s32 %v2308, 536870912
        %v2310 = vshrl.u32 %v2309, 30
        %v2311 = vshll.u32 %v2310, 30
        %v2312 = vsub.s32 %v2308, %v2311
        %vm2313 = vcmp.lt.s32.totalorder %v2312, 0
        %v2314 = vsub.s32 0, %v2312
        %v2315 = vsel %vm2313, %v2314, %v2312
        %v2316 = vclz %v2315
        %v2317 = vsub.s32 %v2316, 2
        %vm2318 = vcmp.gt.s32.totalorder 0, %v2317
        %v2319 = vsel %vm2318, 0, %v2317
        %v2320 = vsub.s32 32, %v2319
        %v2321 = vshll.u32 %v2312, %v2319
        %v2322 = vshrl.u32 %v2304, %v2320
        %v2323 = vor.u32 %v2321, %v2322
        %v2324 = vsub.s32 4294967266, %v2319
        %v2325 = vadd.s32 %v2324, 127
        %v2326 = vshll.u32 %v2325, 23
        %v2327 = vor.u32 4788187, %v2326
        %v2328 = vand.u32 2147483647, %v2327
        %v2330 = vcvt.s32.f32 %v2323
        %v2331 = vmul.f32 %v2330, %v2328
        %v2332 = vxor.u32 %v2331, 2147483648
        %v2333 = vsel %vm2250, %v2332, %v2331
        %v2334 = vsub.s32 4, %v2310
        %v2335 = vsel %vm2250, %v2334, %v2310
        %v2336 = vsel %vm2249, %v348, %v2333
        %v2337 = vsel %vm2249, 0, %v2335
        %v2338 = vcosq.f32.pop %v2336
        %v2339 = vsinq.f32.pop %v2336
        %vm2340 = vweird.f32 %v348
        %v2341 = vadd.s32 %v2337, 3
        %v2342 = vand.u32 %v2341, 3
        %vm2343 = vcmp.lt.s32.totalorder %v2342, 2
        %vm2344 = vcmp.eq.s32.totalorder %v2342, 0
        %v2345 = vxor.u32 %v2339, 2147483648
        %v2346 = vsel %vm2344, %v2338, %v2345
        %vm2347 = vcmp.eq.s32.totalorder %v2342, 2
        %v2348 = vxor.u32 %v2338, 2147483648
        %v2349 = vsel %vm2347, %v2348, %v2339
        %v2350 = vsel %vm2343, %v2346, %v2349
        %v2351 = vsel %vm2340, nan, %v2350
        %v2352 = vand.u32 2147483647, %v349
        %vm2353 = vcmp.le.f32.partialorder %v2352, 0.7853982
        %vm2354 = vcmp.lt.s32.totalorder %v349, 0
        %v2355 = vand.u32 %v349, 2139095040
        %v2356 = vshrl.u32 %v2355, 23
        %v2357 = vsub.s32 %v2356, 127
        %v2358 = vand.u32 2147483647, %v349
        %v2359 = vand.u32 %v2358, 8388607
        %v2360 = vor.u32 %v2359, 8388608
        %v2361 = vsub.s32 0, %v2360
        %v2362 = vadd.s32 %v2357, 1
        %vm2363 = vcmp.gt.s32.totalorder %v2362, 0
        %v2364 = vsel %vm2363, %v2362, 0
        %v2365 = vshrl.u32 %v2364, 5
        %v2366 = vand.u32 %v2364, 31
        %v2367 = vsub.s32 32, %v2366
        %v2368 = vshrl.u32 683565275, %v2367
        %v2369 = vshll.u32 683565275, %v2366
        %v2370 = vshrl.u32 2475754826, %v2367
        %v2371 = vor.u32 %v2369, %v2370
        %v2372 = vshll.u32 2475754826, %v2366
        %v2373 = vshrl.u32 2131351028, %v2367
        %v2374 = vor.u32 %v2372, %v2373
        %v2375 = vshll.u32 2131351028, %v2366
        %v2376 = vshrl.u32 2102212464, %v2367
        %v2377 = vor.u32 %v2375, %v2376
        %v2378 = vshll.u32 2102212464, %v2366
        %v2379 = vshrl.u32 920167782, %v2367
        %v2380 = vor.u32 %v2378, %v2379
        %v2381 = vshll.u32 920167782, %v2366
        %v2382 = vshrl.u32 1326507024, %v2367
        %v2383 = vor.u32 %v2381, %v2382
        %vm2384 = vcmp.lt.s32.totalorder %v2365, 1
        %vm2385 = vcmp.lt.s32.totalorder %v2365, 2
        %vm2386 = vcmp.lt.s32.totalorder %v2365, 3
        %vm2387 = vcmp.lt.s32.totalorder %v2365, 4
        %v2388 = vsel %vm2384, %v2368, %v2371
        %v2389 = vsel %vm2387, %v2377, 2102212464
        %v2390 = vsel %vm2386, %v2374, %v2389
        %v2391 = vsel %vm2385, %v2388, %v2390
        %v2392 = vsel %vm2384, %v2371, %v2374
        %v2393 = vsel %vm2387, %v2380, 920167782
        %v2394 = vsel %vm2386, %v2377, %v2393
        %v2395 = vsel %vm2385, %v2392, %v2394
        %v2396 = vsel %vm2384, %v2374, %v2377
        %v2397 = vsel %vm2387, %v2383, 1326507024
        %v2398 = vsel %vm2386, %v2380, %v2397
        %v2399 = vsel %vm2385, %v2396, %v2398
        %v2400 = vshll.u32 %v2360, 8
        %v2401 = vmul.u32.u64.compose %v2400, %v2399
        %v2402 = vextract.low.u32 %v2401
        %v2403 = vextract.high.u32 %v2401
        %v2404 = vmul.u32.u64.compose %v2400, %v2395
        %v2405 = vextract.low.u32 %v2404
        %v2406 = vextract.high.u32 %v2404
        %v2407 = vmul.u32 %v2400, %v2391
        %v2408 = vadd.s32 %v2403, %v2405
        %vm2409 = vc.u32 %v2403, %v2405
        %v2410 = vadd.s32 %v2406, 1
        %v2411 = vsel %vm2409, %v2410, %v2406
        %v2412 = vadd.s32 %v2407, %v2411
        %v2413 = vadd.s32 %v2412, 536870912
        %v2414 = vshrl.u32 %v2413, 30
        %v2415 = vshll.u32 %v2414, 30
        %v2416 = vsub.s32 %v2412, %v2415
        %vm2417 = vcmp.lt.s32.totalorder %v2416, 0
        %v2418 = vsub.s32 0, %v2416
        %v2419 = vsel %vm2417, %v2418, %v2416
        %v2420 = vclz %v2419
        %v2421 = vsub.s32 %v2420, 2
        %vm2422 = vcmp.gt.s32.totalorder 0, %v2421
        %v2423 = vsel %vm2422, 0, %v2421
        %v2424 = vsub.s32 32, %v2423
        %v2425 = vshll.u32 %v2416, %v2423
        %v2426 = vshrl.u32 %v2408, %v2424
        %v2427 = vor.u32 %v2425, %v2426
        %v2428 = vsub.s32 4294967266, %v2423
        %v2429 = vadd.s32 %v2428, 127
        %v2430 = vshll.u32 %v2429, 23
        %v2431 = vor.u32 4788187, %v2430
        %v2432 = vand.u32 2147483647, %v2431
        %v2434 = vcvt.s32.f32 %v2427
        %v2435 = vmul.f32 %v2434, %v2432
        %v2436 = vxor.u32 %v2435, 2147483648
        %v2437 = vsel %vm2354, %v2436, %v2435
        %v2438 = vsub.s32 4, %v2414
        %v2439 = vsel %vm2354, %v2438, %v2414
        %v2440 = vsel %vm2353, %v349, %v2437
        %v2441 = vsel %vm2353, 0, %v2439
        %v2442 = vcosq.f32.pop %v2440
        %v2443 = vsinq.f32.pop %v2440
        %vm2444 = vweird.f32 %v349
        %v2445 = vadd.s32 %v2441, 3
        %v2446 = vand.u32 %v2445, 3
        %vm2447 = vcmp.lt.s32.totalorder %v2446, 2
        %vm2448 = vcmp.eq.s32.totalorder %v2446, 0
        %v2449 = vxor.u32 %v2443, 2147483648
        %v2450 = vsel %vm2448, %v2442, %v2449
        %vm2451 = vcmp.eq.s32.totalorder %v2446, 2
        %v2452 = vxor.u32 %v2442, 2147483648
        %v2453 = vsel %vm2451, %v2452, %v2443
        %v2454 = vsel %vm2447, %v2450, %v2453
        %v2455 = vsel %vm2444, nan, %v2454
        %v2456 = vand.u32 2147483647, %v376
        %vm2457 = vcmp.le.f32.partialorder %v2456, 0.7853982
        %vm2458 = vcmp.lt.s32.totalorder %v376, 0
        %v2459 = vand.u32 %v376, 2139095040
        %v2460 = vshrl.u32 %v2459, 23
        %v2461 = vsub.s32 %v2460, 127
        %v2462 = vand.u32 2147483647, %v376
        %v2463 = vand.u32 %v2462, 8388607
        %v2464 = vor.u32 %v2463, 8388608
        %v2465 = vsub.s32 0, %v2464
        %v2466 = vadd.s32 %v2461, 1
        %vm2467 = vcmp.gt.s32.totalorder %v2466, 0
        %v2468 = vsel %vm2467, %v2466, 0
        %v2469 = vshrl.u32 %v2468, 5
        %v2470 = vand.u32 %v2468, 31
        %v2471 = vsub.s32 32, %v2470
        %v2472 = vshrl.u32 683565275, %v2471
        %v2473 = vshll.u32 683565275, %v2470
        %v2474 = vshrl.u32 2475754826, %v2471
        %v2475 = vor.u32 %v2473, %v2474
        %v2476 = vshll.u32 2475754826, %v2470
        %v2477 = vshrl.u32 2131351028, %v2471
        %v2478 = vor.u32 %v2476, %v2477
        %v2479 = vshll.u32 2131351028, %v2470
        %v2480 = vshrl.u32 2102212464, %v2471
        %v2481 = vor.u32 %v2479, %v2480
        %v2482 = vshll.u32 2102212464, %v2470
        %v2483 = vshrl.u32 920167782, %v2471
        %v2484 = vor.u32 %v2482, %v2483
        %v2485 = vshll.u32 920167782, %v2470
        %v2486 = vshrl.u32 1326507024, %v2471
        %v2487 = vor.u32 %v2485, %v2486
        %vm2488 = vcmp.lt.s32.totalorder %v2469, 1
        %vm2489 = vcmp.lt.s32.totalorder %v2469, 2
        %vm2490 = vcmp.lt.s32.totalorder %v2469, 3
        %vm2491 = vcmp.lt.s32.totalorder %v2469, 4
        %v2492 = vsel %vm2488, %v2472, %v2475
        %v2493 = vsel %vm2491, %v2481, 2102212464
        %v2494 = vsel %vm2490, %v2478, %v2493
        %v2495 = vsel %vm2489, %v2492, %v2494
        %v2496 = vsel %vm2488, %v2475, %v2478
        %v2497 = vsel %vm2491, %v2484, 920167782
        %v2498 = vsel %vm2490, %v2481, %v2497
        %v2499 = vsel %vm2489, %v2496, %v2498
        %v2500 = vsel %vm2488, %v2478, %v2481
        %v2501 = vsel %vm2491, %v2487, 1326507024
        %v2502 = vsel %vm2490, %v2484, %v2501
        %v2503 = vsel %vm2489, %v2500, %v2502
        %v2504 = vshll.u32 %v2464, 8
        %v2505 = vmul.u32.u64.compose %v2504, %v2503
        %v2506 = vextract.low.u32 %v2505
        %v2507 = vextract.high.u32 %v2505
        %v2508 = vmul.u32.u64.compose %v2504, %v2499
        %v2509 = vextract.low.u32 %v2508
        %v2510 = vextract.high.u32 %v2508
        %v2511 = vmul.u32 %v2504, %v2495
        %v2512 = vadd.s32 %v2507, %v2509
        %vm2513 = vc.u32 %v2507, %v2509
        %v2514 = vadd.s32 %v2510, 1
        %v2515 = vsel %vm2513, %v2514, %v2510
        %v2516 = vadd.s32 %v2511, %v2515
        %v2517 = vadd.s32 %v2516, 536870912
        %v2518 = vshrl.u32 %v2517, 30
        %v2519 = vshll.u32 %v2518, 30
        %v2520 = vsub.s32 %v2516, %v2519
        %vm2521 = vcmp.lt.s32.totalorder %v2520, 0
        %v2522 = vsub.s32 0, %v2520
        %v2523 = vsel %vm2521, %v2522, %v2520
        %v2524 = vclz %v2523
        %v2525 = vsub.s32 %v2524, 2
        %vm2526 = vcmp.gt.s32.totalorder 0, %v2525
        %v2527 = vsel %vm2526, 0, %v2525
        %v2528 = vsub.s32 32, %v2527
        %v2529 = vshll.u32 %v2520, %v2527
        %v2530 = vshrl.u32 %v2512, %v2528
        %v2531 = vor.u32 %v2529, %v2530
        %v2532 = vsub.s32 4294967266, %v2527
        %v2533 = vadd.s32 %v2532, 127
        %v2534 = vshll.u32 %v2533, 23
        %v2535 = vor.u32 4788187, %v2534
        %v2536 = vand.u32 2147483647, %v2535
        %v2538 = vcvt.s32.f32 %v2531
        %v2539 = vmul.f32 %v2538, %v2536
        %v2540 = vxor.u32 %v2539, 2147483648
        %v2541 = vsel %vm2458, %v2540, %v2539
        %v2542 = vsub.s32 4, %v2518
        %v2543 = vsel %vm2458, %v2542, %v2518
        %v2544 = vsel %vm2457, %v376, %v2541
        %v2545 = vsel %vm2457, 0, %v2543
        %v2546 = vcosq.f32.pop %v2544
        %v2547 = vsinq.f32.pop %v2544
        %vm2548 = vweird.f32 %v376
        %v2549 = vand.u32 %v2545, 3
        %vm2550 = vcmp.lt.s32.totalorder %v2549, 2
        %vm2551 = vcmp.eq.s32.totalorder %v2549, 0
        %v2552 = vxor.u32 %v2547, 2147483648
        %v2553 = vsel %vm2551, %v2546, %v2552
        %vm2554 = vcmp.eq.s32.totalorder %v2549, 2
        %v2555 = vxor.u32 %v2546, 2147483648
        %v2556 = vsel %vm2554, %v2555, %v2547
        %v2557 = vsel %vm2550, %v2553, %v2556
        %v2558 = vsel %vm2548, nan, %v2557
        %v2559 = vand.u32 2147483647, %v377
        %vm2560 = vcmp.le.f32.partialorder %v2559, 0.7853982
        %vm2561 = vcmp.lt.s32.totalorder %v377, 0
        %v2562 = vand.u32 %v377, 2139095040
        %v2563 = vshrl.u32 %v2562, 23
        %v2564 = vsub.s32 %v2563, 127
        %v2565 = vand.u32 2147483647, %v377
        %v2566 = vand.u32 %v2565, 8388607
        %v2567 = vor.u32 %v2566, 8388608
        %v2568 = vsub.s32 0, %v2567
        %v2569 = vadd.s32 %v2564, 1
        %vm2570 = vcmp.gt.s32.totalorder %v2569, 0
        %v2571 = vsel %vm2570, %v2569, 0
        %v2572 = vshrl.u32 %v2571, 5
        %v2573 = vand.u32 %v2571, 31
        %v2574 = vsub.s32 32, %v2573
        %v2575 = vshrl.u32 683565275, %v2574
        %v2576 = vshll.u32 683565275, %v2573
        %v2577 = vshrl.u32 2475754826, %v2574
        %v2578 = vor.u32 %v2576, %v2577
        %v2579 = vshll.u32 2475754826, %v2573
        %v2580 = vshrl.u32 2131351028, %v2574
        %v2581 = vor.u32 %v2579, %v2580
        %v2582 = vshll.u32 2131351028, %v2573
        %v2583 = vshrl.u32 2102212464, %v2574
        %v2584 = vor.u32 %v2582, %v2583
        %v2585 = vshll.u32 2102212464, %v2573
        %v2586 = vshrl.u32 920167782, %v2574
        %v2587 = vor.u32 %v2585, %v2586
        %v2588 = vshll.u32 920167782, %v2573
        %v2589 = vshrl.u32 1326507024, %v2574
        %v2590 = vor.u32 %v2588, %v2589
        %vm2591 = vcmp.lt.s32.totalorder %v2572, 1
        %vm2592 = vcmp.lt.s32.totalorder %v2572, 2
        %vm2593 = vcmp.lt.s32.totalorder %v2572, 3
        %vm2594 = vcmp.lt.s32.totalorder %v2572, 4
        %v2595 = vsel %vm2591, %v2575, %v2578
        %v2596 = vsel %vm2594, %v2584, 2102212464
        %v2597 = vsel %vm2593, %v2581, %v2596
        %v2598 = vsel %vm2592, %v2595, %v2597
        %v2599 = vsel %vm2591, %v2578, %v2581
        %v2600 = vsel %vm2594, %v2587, 920167782
        %v2601 = vsel %vm2593, %v2584, %v2600
        %v2602 = vsel %vm2592, %v2599, %v2601
        %v2603 = vsel %vm2591, %v2581, %v2584
        %v2604 = vsel %vm2594, %v2590, 1326507024
        %v2605 = vsel %vm2593, %v2587, %v2604
        %v2606 = vsel %vm2592, %v2603, %v2605
        %v2607 = vshll.u32 %v2567, 8
        %v2608 = vmul.u32.u64.compose %v2607, %v2606
        %v2609 = vextract.low.u32 %v2608
        %v2610 = vextract.high.u32 %v2608
        %v2611 = vmul.u32.u64.compose %v2607, %v2602
        %v2612 = vextract.low.u32 %v2611
        %v2613 = vextract.high.u32 %v2611
        %v2614 = vmul.u32 %v2607, %v2598
        %v2615 = vadd.s32 %v2610, %v2612
        %vm2616 = vc.u32 %v2610, %v2612
        %v2617 = vadd.s32 %v2613, 1
        %v2618 = vsel %vm2616, %v2617, %v2613
        %v2619 = vadd.s32 %v2614, %v2618
        %v2620 = vadd.s32 %v2619, 536870912
        %v2621 = vshrl.u32 %v2620, 30
        %v2622 = vshll.u32 %v2621, 30
        %v2623 = vsub.s32 %v2619, %v2622
        %vm2624 = vcmp.lt.s32.totalorder %v2623, 0
        %v2625 = vsub.s32 0, %v2623
        %v2626 = vsel %vm2624, %v2625, %v2623
        %v2627 = vclz %v2626
        %v2628 = vsub.s32 %v2627, 2
        %vm2629 = vcmp.gt.s32.totalorder 0, %v2628
        %v2630 = vsel %vm2629, 0, %v2628
        %v2631 = vsub.s32 32, %v2630
        %v2632 = vshll.u32 %v2623, %v2630
        %v2633 = vshrl.u32 %v2615, %v2631
        %v2634 = vor.u32 %v2632, %v2633
        %v2635 = vsub.s32 4294967266, %v2630
        %v2636 = vadd.s32 %v2635, 127
        %v2637 = vshll.u32 %v2636, 23
        %v2638 = vor.u32 4788187, %v2637
        %v2639 = vand.u32 2147483647, %v2638
        %v2641 = vcvt.s32.f32 %v2634
        %v2642 = vmul.f32 %v2641, %v2639
        %v2643 = vxor.u32 %v2642, 2147483648
        %v2644 = vsel %vm2561, %v2643, %v2642
        %v2645 = vsub.s32 4, %v2621
        %v2646 = vsel %vm2561, %v2645, %v2621
        %v2647 = vsel %vm2560, %v377, %v2644
        %v2648 = vsel %vm2560, 0, %v2646
        %v2649 = vcosq.f32.pop %v2647
        %v2650 = vsinq.f32.pop %v2647
        %vm2651 = vweird.f32 %v377
        %v2652 = vand.u32 %v2648, 3
        %vm2653 = vcmp.lt.s32.totalorder %v2652, 2
        %vm2654 = vcmp.eq.s32.totalorder %v2652, 0
        %v2655 = vxor.u32 %v2650, 2147483648
        %v2656 = vsel %vm2654, %v2649, %v2655
        %vm2657 = vcmp.eq.s32.totalorder %v2652, 2
        %v2658 = vxor.u32 %v2649, 2147483648
        %v2659 = vsel %vm2657, %v2658, %v2650
        %v2660 = vsel %vm2653, %v2656, %v2659
        %v2661 = vsel %vm2651, nan, %v2660
        %v2662 = vand.u32 2147483647, %v378
        %vm2663 = vcmp.le.f32.partialorder %v2662, 0.7853982
        %vm2664 = vcmp.lt.s32.totalorder %v378, 0
        %v2665 = vand.u32 %v378, 2139095040
        %v2666 = vshrl.u32 %v2665, 23
        %v2667 = vsub.s32 %v2666, 127
        %v2668 = vand.u32 2147483647, %v378
        %v2669 = vand.u32 %v2668, 8388607
        %v2670 = vor.u32 %v2669, 8388608
        %v2671 = vsub.s32 0, %v2670
        %v2672 = vadd.s32 %v2667, 1
        %vm2673 = vcmp.gt.s32.totalorder %v2672, 0
        %v2674 = vsel %vm2673, %v2672, 0
        %v2675 = vshrl.u32 %v2674, 5
        %v2676 = vand.u32 %v2674, 31
        %v2677 = vsub.s32 32, %v2676
        %v2678 = vshrl.u32 683565275, %v2677
        %v2679 = vshll.u32 683565275, %v2676
        %v2680 = vshrl.u32 2475754826, %v2677
        %v2681 = vor.u32 %v2679, %v2680
        %v2682 = vshll.u32 2475754826, %v2676
        %v2683 = vshrl.u32 2131351028, %v2677
        %v2684 = vor.u32 %v2682, %v2683
        %v2685 = vshll.u32 2131351028, %v2676
        %v2686 = vshrl.u32 2102212464, %v2677
        %v2687 = vor.u32 %v2685, %v2686
        %v2688 = vshll.u32 2102212464, %v2676
        %v2689 = vshrl.u32 920167782, %v2677
        %v2690 = vor.u32 %v2688, %v2689
        %v2691 = vshll.u32 920167782, %v2676
        %v2692 = vshrl.u32 1326507024, %v2677
        %v2693 = vor.u32 %v2691, %v2692
        %vm2694 = vcmp.lt.s32.totalorder %v2675, 1
        %vm2695 = vcmp.lt.s32.totalorder %v2675, 2
        %vm2696 = vcmp.lt.s32.totalorder %v2675, 3
        %vm2697 = vcmp.lt.s32.totalorder %v2675, 4
        %v2698 = vsel %vm2694, %v2678, %v2681
        %v2699 = vsel %vm2697, %v2687, 2102212464
        %v2700 = vsel %vm2696, %v2684, %v2699
        %v2701 = vsel %vm2695, %v2698, %v2700
        %v2702 = vsel %vm2694, %v2681, %v2684
        %v2703 = vsel %vm2697, %v2690, 920167782
        %v2704 = vsel %vm2696, %v2687, %v2703
        %v2705 = vsel %vm2695, %v2702, %v2704
        %v2706 = vsel %vm2694, %v2684, %v2687
        %v2707 = vsel %vm2697, %v2693, 1326507024
        %v2708 = vsel %vm2696, %v2690, %v2707
        %v2709 = vsel %vm2695, %v2706, %v2708
        %v2710 = vshll.u32 %v2670, 8
        %v2711 = vmul.u32.u64.compose %v2710, %v2709
        %v2712 = vextract.low.u32 %v2711
        %v2713 = vextract.high.u32 %v2711
        %v2714 = vmul.u32.u64.compose %v2710, %v2705
        %v2715 = vextract.low.u32 %v2714
        %v2716 = vextract.high.u32 %v2714
        %v2717 = vmul.u32 %v2710, %v2701
        %v2718 = vadd.s32 %v2713, %v2715
        %vm2719 = vc.u32 %v2713, %v2715
        %v2720 = vadd.s32 %v2716, 1
        %v2721 = vsel %vm2719, %v2720, %v2716
        %v2722 = vadd.s32 %v2717, %v2721
        %v2723 = vadd.s32 %v2722, 536870912
        %v2724 = vshrl.u32 %v2723, 30
        %v2725 = vshll.u32 %v2724, 30
        %v2726 = vsub.s32 %v2722, %v2725
        %vm2727 = vcmp.lt.s32.totalorder %v2726, 0
        %v2728 = vsub.s32 0, %v2726
        %v2729 = vsel %vm2727, %v2728, %v2726
        %v2730 = vclz %v2729
        %v2731 = vsub.s32 %v2730, 2
        %vm2732 = vcmp.gt.s32.totalorder 0, %v2731
        %v2733 = vsel %vm2732, 0, %v2731
        %v2734 = vsub.s32 32, %v2733
        %v2735 = vshll.u32 %v2726, %v2733
        %v2736 = vshrl.u32 %v2718, %v2734
        %v2737 = vor.u32 %v2735, %v2736
        %v2738 = vsub.s32 4294967266, %v2733
        %v2739 = vadd.s32 %v2738, 127
        %v2740 = vshll.u32 %v2739, 23
        %v2741 = vor.u32 4788187, %v2740
        %v2742 = vand.u32 2147483647, %v2741
        %v2744 = vcvt.s32.f32 %v2737
        %v2745 = vmul.f32 %v2744, %v2742
        %v2746 = vxor.u32 %v2745, 2147483648
        %v2747 = vsel %vm2664, %v2746, %v2745
        %v2748 = vsub.s32 4, %v2724
        %v2749 = vsel %vm2664, %v2748, %v2724
        %v2750 = vsel %vm2663, %v378, %v2747
        %v2751 = vsel %vm2663, 0, %v2749
        %v2752 = vcosq.f32.pop %v2750
        %v2753 = vsinq.f32.pop %v2750
        %vm2754 = vweird.f32 %v378
        %v2755 = vand.u32 %v2751, 3
        %vm2756 = vcmp.lt.s32.totalorder %v2755, 2
        %vm2757 = vcmp.eq.s32.totalorder %v2755, 0
        %v2758 = vxor.u32 %v2753, 2147483648
        %v2759 = vsel %vm2757, %v2752, %v2758
        %vm2760 = vcmp.eq.s32.totalorder %v2755, 2
        %v2761 = vxor.u32 %v2752, 2147483648
        %v2762 = vsel %vm2760, %v2761, %v2753
        %v2763 = vsel %vm2756, %v2759, %v2762
        %v2764 = vsel %vm2754, nan, %v2763
        %v2765 = vand.u32 2147483647, %v379
        %vm2766 = vcmp.le.f32.partialorder %v2765, 0.7853982
        %vm2767 = vcmp.lt.s32.totalorder %v379, 0
        %v2768 = vand.u32 %v379, 2139095040
        %v2769 = vshrl.u32 %v2768, 23
        %v2770 = vsub.s32 %v2769, 127
        %v2771 = vand.u32 2147483647, %v379
        %v2772 = vand.u32 %v2771, 8388607
        %v2773 = vor.u32 %v2772, 8388608
        %v2774 = vsub.s32 0, %v2773
        %v2775 = vadd.s32 %v2770, 1
        %vm2776 = vcmp.gt.s32.totalorder %v2775, 0
        %v2777 = vsel %vm2776, %v2775, 0
        %v2778 = vshrl.u32 %v2777, 5
        %v2779 = vand.u32 %v2777, 31
        %v2780 = vsub.s32 32, %v2779
        %v2781 = vshrl.u32 683565275, %v2780
        %v2782 = vshll.u32 683565275, %v2779
        %v2783 = vshrl.u32 2475754826, %v2780
        %v2784 = vor.u32 %v2782, %v2783
        %v2785 = vshll.u32 2475754826, %v2779
        %v2786 = vshrl.u32 2131351028, %v2780
        %v2787 = vor.u32 %v2785, %v2786
        %v2788 = vshll.u32 2131351028, %v2779
        %v2789 = vshrl.u32 2102212464, %v2780
        %v2790 = vor.u32 %v2788, %v2789
        %v2791 = vshll.u32 2102212464, %v2779
        %v2792 = vshrl.u32 920167782, %v2780
        %v2793 = vor.u32 %v2791, %v2792
        %v2794 = vshll.u32 920167782, %v2779
        %v2795 = vshrl.u32 1326507024, %v2780
        %v2796 = vor.u32 %v2794, %v2795
        %vm2797 = vcmp.lt.s32.totalorder %v2778, 1
        %vm2798 = vcmp.lt.s32.totalorder %v2778, 2
        %vm2799 = vcmp.lt.s32.totalorder %v2778, 3
        %vm2800 = vcmp.lt.s32.totalorder %v2778, 4
        %v2801 = vsel %vm2797, %v2781, %v2784
        %v2802 = vsel %vm2800, %v2790, 2102212464
        %v2803 = vsel %vm2799, %v2787, %v2802
        %v2804 = vsel %vm2798, %v2801, %v2803
        %v2805 = vsel %vm2797, %v2784, %v2787
        %v2806 = vsel %vm2800, %v2793, 920167782
        %v2807 = vsel %vm2799, %v2790, %v2806
        %v2808 = vsel %vm2798, %v2805, %v2807
        %v2809 = vsel %vm2797, %v2787, %v2790
        %v2810 = vsel %vm2800, %v2796, 1326507024
        %v2811 = vsel %vm2799, %v2793, %v2810
        %v2812 = vsel %vm2798, %v2809, %v2811
        %v2813 = vshll.u32 %v2773, 8
        %v2814 = vmul.u32.u64.compose %v2813, %v2812
        %v2815 = vextract.low.u32 %v2814
        %v2816 = vextract.high.u32 %v2814
        %v2817 = vmul.u32.u64.compose %v2813, %v2808
        %v2818 = vextract.low.u32 %v2817
        %v2819 = vextract.high.u32 %v2817
        %v2820 = vmul.u32 %v2813, %v2804
        %v2821 = vadd.s32 %v2816, %v2818
        %vm2822 = vc.u32 %v2816, %v2818
        %v2823 = vadd.s32 %v2819, 1
        %v2824 = vsel %vm2822, %v2823, %v2819
        %v2825 = vadd.s32 %v2820, %v2824
        %v2826 = vadd.s32 %v2825, 536870912
        %v2827 = vshrl.u32 %v2826, 30
        %v2828 = vshll.u32 %v2827, 30
        %v2829 = vsub.s32 %v2825, %v2828
        %vm2830 = vcmp.lt.s32.totalorder %v2829, 0
        %v2831 = vsub.s32 0, %v2829
        %v2832 = vsel %vm2830, %v2831, %v2829
        %v2833 = vclz %v2832
        %v2834 = vsub.s32 %v2833, 2
        %vm2835 = vcmp.gt.s32.totalorder 0, %v2834
        %v2836 = vsel %vm2835, 0, %v2834
        %v2837 = vsub.s32 32, %v2836
        %v2838 = vshll.u32 %v2829, %v2836
        %v2839 = vshrl.u32 %v2821, %v2837
        %v2840 = vor.u32 %v2838, %v2839
        %v2841 = vsub.s32 4294967266, %v2836
        %v2842 = vadd.s32 %v2841, 127
        %v2843 = vshll.u32 %v2842, 23
        %v2844 = vor.u32 4788187, %v2843
        %v2845 = vand.u32 2147483647, %v2844
        %v2847 = vcvt.s32.f32 %v2840
        %v2848 = vmul.f32 %v2847, %v2845
        %v2849 = vxor.u32 %v2848, 2147483648
        %v2850 = vsel %vm2767, %v2849, %v2848
        %v2851 = vsub.s32 4, %v2827
        %v2852 = vsel %vm2767, %v2851, %v2827
        %v2853 = vsel %vm2766, %v379, %v2850
        %v2854 = vsel %vm2766, 0, %v2852
        %v2855 = vcosq.f32.pop %v2853
        %v2856 = vsinq.f32.pop %v2853
        %vm2857 = vweird.f32 %v379
        %v2858 = vand.u32 %v2854, 3
        %vm2859 = vcmp.lt.s32.totalorder %v2858, 2
        %vm2860 = vcmp.eq.s32.totalorder %v2858, 0
        %v2861 = vxor.u32 %v2856, 2147483648
        %v2862 = vsel %vm2860, %v2855, %v2861
        %vm2863 = vcmp.eq.s32.totalorder %v2858, 2
        %v2864 = vxor.u32 %v2855, 2147483648
        %v2865 = vsel %vm2863, %v2864, %v2856
        %v2866 = vsel %vm2859, %v2862, %v2865
        %v2867 = vsel %vm2857, nan, %v2866
        %v2868 = vand.u32 2147483647, %v380
        %vm2869 = vcmp.le.f32.partialorder %v2868, 0.7853982
        %vm2870 = vcmp.lt.s32.totalorder %v380, 0
        %v2871 = vand.u32 %v380, 2139095040
        %v2872 = vshrl.u32 %v2871, 23
        %v2873 = vsub.s32 %v2872, 127
        %v2874 = vand.u32 2147483647, %v380
        %v2875 = vand.u32 %v2874, 8388607
        %v2876 = vor.u32 %v2875, 8388608
        %v2877 = vsub.s32 0, %v2876
        %v2878 = vadd.s32 %v2873, 1
        %vm2879 = vcmp.gt.s32.totalorder %v2878, 0
        %v2880 = vsel %vm2879, %v2878, 0
        %v2881 = vshrl.u32 %v2880, 5
        %v2882 = vand.u32 %v2880, 31
        %v2883 = vsub.s32 32, %v2882
        %v2884 = vshrl.u32 683565275, %v2883
        %v2885 = vshll.u32 683565275, %v2882
        %v2886 = vshrl.u32 2475754826, %v2883
        %v2887 = vor.u32 %v2885, %v2886
        %v2888 = vshll.u32 2475754826, %v2882
        %v2889 = vshrl.u32 2131351028, %v2883
        %v2890 = vor.u32 %v2888, %v2889
        %v2891 = vshll.u32 2131351028, %v2882
        %v2892 = vshrl.u32 2102212464, %v2883
        %v2893 = vor.u32 %v2891, %v2892
        %v2894 = vshll.u32 2102212464, %v2882
        %v2895 = vshrl.u32 920167782, %v2883
        %v2896 = vor.u32 %v2894, %v2895
        %v2897 = vshll.u32 920167782, %v2882
        %v2898 = vshrl.u32 1326507024, %v2883
        %v2899 = vor.u32 %v2897, %v2898
        %vm2900 = vcmp.lt.s32.totalorder %v2881, 1
        %vm2901 = vcmp.lt.s32.totalorder %v2881, 2
        %vm2902 = vcmp.lt.s32.totalorder %v2881, 3
        %vm2903 = vcmp.lt.s32.totalorder %v2881, 4
        %v2904 = vsel %vm2900, %v2884, %v2887
        %v2905 = vsel %vm2903, %v2893, 2102212464
        %v2906 = vsel %vm2902, %v2890, %v2905
        %v2907 = vsel %vm2901, %v2904, %v2906
        %v2908 = vsel %vm2900, %v2887, %v2890
        %v2909 = vsel %vm2903, %v2896, 920167782
        %v2910 = vsel %vm2902, %v2893, %v2909
        %v2911 = vsel %vm2901, %v2908, %v2910
        %v2912 = vsel %vm2900, %v2890, %v2893
        %v2913 = vsel %vm2903, %v2899, 1326507024
        %v2914 = vsel %vm2902, %v2896, %v2913
        %v2915 = vsel %vm2901, %v2912, %v2914
        %v2916 = vshll.u32 %v2876, 8
        %v2917 = vmul.u32.u64.compose %v2916, %v2915
        %v2918 = vextract.low.u32 %v2917
        %v2919 = vextract.high.u32 %v2917
        %v2920 = vmul.u32.u64.compose %v2916, %v2911
        %v2921 = vextract.low.u32 %v2920
        %v2922 = vextract.high.u32 %v2920
        %v2923 = vmul.u32 %v2916, %v2907
        %v2924 = vadd.s32 %v2919, %v2921
        %vm2925 = vc.u32 %v2919, %v2921
        %v2926 = vadd.s32 %v2922, 1
        %v2927 = vsel %vm2925, %v2926, %v2922
        %v2928 = vadd.s32 %v2923, %v2927
        %v2929 = vadd.s32 %v2928, 536870912
        %v2930 = vshrl.u32 %v2929, 30
        %v2931 = vshll.u32 %v2930, 30
        %v2932 = vsub.s32 %v2928, %v2931
        %vm2933 = vcmp.lt.s32.totalorder %v2932, 0
        %v2934 = vsub.s32 0, %v2932
        %v2935 = vsel %vm2933, %v2934, %v2932
        %v2936 = vclz %v2935
        %v2937 = vsub.s32 %v2936, 2
        %vm2938 = vcmp.gt.s32.totalorder 0, %v2937
        %v2939 = vsel %vm2938, 0, %v2937
        %v2940 = vsub.s32 32, %v2939
        %v2941 = vshll.u32 %v2932, %v2939
        %v2942 = vshrl.u32 %v2924, %v2940
        %v2943 = vor.u32 %v2941, %v2942
        %v2944 = vsub.s32 4294967266, %v2939
        %v2945 = vadd.s32 %v2944, 127
        %v2946 = vshll.u32 %v2945, 23
        %v2947 = vor.u32 4788187, %v2946
        %v2948 = vand.u32 2147483647, %v2947
        %v2950 = vcvt.s32.f32 %v2943
        %v2951 = vmul.f32 %v2950, %v2948
        %v2952 = vxor.u32 %v2951, 2147483648
        %v2953 = vsel %vm2870, %v2952, %v2951
        %v2954 = vsub.s32 4, %v2930
        %v2955 = vsel %vm2870, %v2954, %v2930
        %v2956 = vsel %vm2869, %v380, %v2953
        %v2957 = vsel %vm2869, 0, %v2955
        %v2958 = vcosq.f32.pop %v2956
        %v2959 = vsinq.f32.pop %v2956
        %vm2960 = vweird.f32 %v380
        %v2961 = vand.u32 %v2957, 3
        %vm2962 = vcmp.lt.s32.totalorder %v2961, 2
        %vm2963 = vcmp.eq.s32.totalorder %v2961, 0
        %v2964 = vxor.u32 %v2959, 2147483648
        %v2965 = vsel %vm2963, %v2958, %v2964
        %vm2966 = vcmp.eq.s32.totalorder %v2961, 2
        %v2967 = vxor.u32 %v2958, 2147483648
        %v2968 = vsel %vm2966, %v2967, %v2959
        %v2969 = vsel %vm2962, %v2965, %v2968
        %v2970 = vsel %vm2960, nan, %v2969
        %v2971 = vand.u32 2147483647, %v381
        %vm2972 = vcmp.le.f32.partialorder %v2971, 0.7853982
        %vm2973 = vcmp.lt.s32.totalorder %v381, 0
        %v2974 = vand.u32 %v381, 2139095040
        %v2975 = vshrl.u32 %v2974, 23
        %v2976 = vsub.s32 %v2975, 127
        %v2977 = vand.u32 2147483647, %v381
        %v2978 = vand.u32 %v2977, 8388607
        %v2979 = vor.u32 %v2978, 8388608
        %v2980 = vsub.s32 0, %v2979
        %v2981 = vadd.s32 %v2976, 1
        %vm2982 = vcmp.gt.s32.totalorder %v2981, 0
        %v2983 = vsel %vm2982, %v2981, 0
        %v2984 = vshrl.u32 %v2983, 5
        %v2985 = vand.u32 %v2983, 31
        %v2986 = vsub.s32 32, %v2985
        %v2987 = vshrl.u32 683565275, %v2986
        %v2988 = vshll.u32 683565275, %v2985
        %v2989 = vshrl.u32 2475754826, %v2986
        %v2990 = vor.u32 %v2988, %v2989
        %v2991 = vshll.u32 2475754826, %v2985
        %v2992 = vshrl.u32 2131351028, %v2986
        %v2993 = vor.u32 %v2991, %v2992
        %v2994 = vshll.u32 2131351028, %v2985
        %v2995 = vshrl.u32 2102212464, %v2986
        %v2996 = vor.u32 %v2994, %v2995
        %v2997 = vshll.u32 2102212464, %v2985
        %v2998 = vshrl.u32 920167782, %v2986
        %v2999 = vor.u32 %v2997, %v2998
        %v3000 = vshll.u32 920167782, %v2985
        %v3001 = vshrl.u32 1326507024, %v2986
        %v3002 = vor.u32 %v3000, %v3001
        %vm3003 = vcmp.lt.s32.totalorder %v2984, 1
        %vm3004 = vcmp.lt.s32.totalorder %v2984, 2
        %vm3005 = vcmp.lt.s32.totalorder %v2984, 3
        %vm3006 = vcmp.lt.s32.totalorder %v2984, 4
        %v3007 = vsel %vm3003, %v2987, %v2990
        %v3008 = vsel %vm3006, %v2996, 2102212464
        %v3009 = vsel %vm3005, %v2993, %v3008
        %v3010 = vsel %vm3004, %v3007, %v3009
        %v3011 = vsel %vm3003, %v2990, %v2993
        %v3012 = vsel %vm3006, %v2999, 920167782
        %v3013 = vsel %vm3005, %v2996, %v3012
        %v3014 = vsel %vm3004, %v3011, %v3013
        %v3015 = vsel %vm3003, %v2993, %v2996
        %v3016 = vsel %vm3006, %v3002, 1326507024
        %v3017 = vsel %vm3005, %v2999, %v3016
        %v3018 = vsel %vm3004, %v3015, %v3017
        %v3019 = vshll.u32 %v2979, 8
        %v3020 = vmul.u32.u64.compose %v3019, %v3018
        %v3021 = vextract.low.u32 %v3020
        %v3022 = vextract.high.u32 %v3020
        %v3023 = vmul.u32.u64.compose %v3019, %v3014
        %v3024 = vextract.low.u32 %v3023
        %v3025 = vextract.high.u32 %v3023
        %v3026 = vmul.u32 %v3019, %v3010
        %v3027 = vadd.s32 %v3022, %v3024
        %vm3028 = vc.u32 %v3022, %v3024
        %v3029 = vadd.s32 %v3025, 1
        %v3030 = vsel %vm3028, %v3029, %v3025
        %v3031 = vadd.s32 %v3026, %v3030
        %v3032 = vadd.s32 %v3031, 536870912
        %v3033 = vshrl.u32 %v3032, 30
        %v3034 = vshll.u32 %v3033, 30
        %v3035 = vsub.s32 %v3031, %v3034
        %vm3036 = vcmp.lt.s32.totalorder %v3035, 0
        %v3037 = vsub.s32 0, %v3035
        %v3038 = vsel %vm3036, %v3037, %v3035
        %v3039 = vclz %v3038
        %v3040 = vsub.s32 %v3039, 2
        %vm3041 = vcmp.gt.s32.totalorder 0, %v3040
        %v3042 = vsel %vm3041, 0, %v3040
        %v3043 = vsub.s32 32, %v3042
        %v3044 = vshll.u32 %v3035, %v3042
        %v3045 = vshrl.u32 %v3027, %v3043
        %v3046 = vor.u32 %v3044, %v3045
        %v3047 = vsub.s32 4294967266, %v3042
        %v3048 = vadd.s32 %v3047, 127
        %v3049 = vshll.u32 %v3048, 23
        %v3050 = vor.u32 4788187, %v3049
        %v3051 = vand.u32 2147483647, %v3050
        %v3053 = vcvt.s32.f32 %v3046
        %v3054 = vmul.f32 %v3053, %v3051
        %v3055 = vxor.u32 %v3054, 2147483648
        %v3056 = vsel %vm2973, %v3055, %v3054
        %v3057 = vsub.s32 4, %v3033
        %v3058 = vsel %vm2973, %v3057, %v3033
        %v3059 = vsel %vm2972, %v381, %v3056
        %v3060 = vsel %vm2972, 0, %v3058
        %v3061 = vcosq.f32.pop %v3059
        %v3062 = vsinq.f32.pop %v3059
        %vm3063 = vweird.f32 %v381
        %v3064 = vand.u32 %v3060, 3
        %vm3065 = vcmp.lt.s32.totalorder %v3064, 2
        %vm3066 = vcmp.eq.s32.totalorder %v3064, 0
        %v3067 = vxor.u32 %v3062, 2147483648
        %v3068 = vsel %vm3066, %v3061, %v3067
        %vm3069 = vcmp.eq.s32.totalorder %v3064, 2
        %v3070 = vxor.u32 %v3061, 2147483648
        %v3071 = vsel %vm3069, %v3070, %v3062
        %v3072 = vsel %vm3065, %v3068, %v3071
        %v3073 = vsel %vm3063, nan, %v3072
        %v3074 = vand.u32 2147483647, %v382
        %vm3075 = vcmp.le.f32.partialorder %v3074, 0.7853982
        %vm3076 = vcmp.lt.s32.totalorder %v382, 0
        %v3077 = vand.u32 %v382, 2139095040
        %v3078 = vshrl.u32 %v3077, 23
        %v3079 = vsub.s32 %v3078, 127
        %v3080 = vand.u32 2147483647, %v382
        %v3081 = vand.u32 %v3080, 8388607
        %v3082 = vor.u32 %v3081, 8388608
        %v3083 = vsub.s32 0, %v3082
        %v3084 = vadd.s32 %v3079, 1
        %vm3085 = vcmp.gt.s32.totalorder %v3084, 0
        %v3086 = vsel %vm3085, %v3084, 0
        %v3087 = vshrl.u32 %v3086, 5
        %v3088 = vand.u32 %v3086, 31
        %v3089 = vsub.s32 32, %v3088
        %v3090 = vshrl.u32 683565275, %v3089
        %v3091 = vshll.u32 683565275, %v3088
        %v3092 = vshrl.u32 2475754826, %v3089
        %v3093 = vor.u32 %v3091, %v3092
        %v3094 = vshll.u32 2475754826, %v3088
        %v3095 = vshrl.u32 2131351028, %v3089
        %v3096 = vor.u32 %v3094, %v3095
        %v3097 = vshll.u32 2131351028, %v3088
        %v3098 = vshrl.u32 2102212464, %v3089
        %v3099 = vor.u32 %v3097, %v3098
        %v3100 = vshll.u32 2102212464, %v3088
        %v3101 = vshrl.u32 920167782, %v3089
        %v3102 = vor.u32 %v3100, %v3101
        %v3103 = vshll.u32 920167782, %v3088
        %v3104 = vshrl.u32 1326507024, %v3089
        %v3105 = vor.u32 %v3103, %v3104
        %vm3106 = vcmp.lt.s32.totalorder %v3087, 1
        %vm3107 = vcmp.lt.s32.totalorder %v3087, 2
        %vm3108 = vcmp.lt.s32.totalorder %v3087, 3
        %vm3109 = vcmp.lt.s32.totalorder %v3087, 4
        %v3110 = vsel %vm3106, %v3090, %v3093
        %v3111 = vsel %vm3109, %v3099, 2102212464
        %v3112 = vsel %vm3108, %v3096, %v3111
        %v3113 = vsel %vm3107, %v3110, %v3112
        %v3114 = vsel %vm3106, %v3093, %v3096
        %v3115 = vsel %vm3109, %v3102, 920167782
        %v3116 = vsel %vm3108, %v3099, %v3115
        %v3117 = vsel %vm3107, %v3114, %v3116
        %v3118 = vsel %vm3106, %v3096, %v3099
        %v3119 = vsel %vm3109, %v3105, 1326507024
        %v3120 = vsel %vm3108, %v3102, %v3119
        %v3121 = vsel %vm3107, %v3118, %v3120
        %v3122 = vshll.u32 %v3082, 8
        %v3123 = vmul.u32.u64.compose %v3122, %v3121
        %v3124 = vextract.low.u32 %v3123
        %v3125 = vextract.high.u32 %v3123
        %v3126 = vmul.u32.u64.compose %v3122, %v3117
        %v3127 = vextract.low.u32 %v3126
        %v3128 = vextract.high.u32 %v3126
        %v3129 = vmul.u32 %v3122, %v3113
        %v3130 = vadd.s32 %v3125, %v3127
        %vm3131 = vc.u32 %v3125, %v3127
        %v3132 = vadd.s32 %v3128, 1
        %v3133 = vsel %vm3131, %v3132, %v3128
        %v3134 = vadd.s32 %v3129, %v3133
        %v3135 = vadd.s32 %v3134, 536870912
        %v3136 = vshrl.u32 %v3135, 30
        %v3137 = vshll.u32 %v3136, 30
        %v3138 = vsub.s32 %v3134, %v3137
        %vm3139 = vcmp.lt.s32.totalorder %v3138, 0
        %v3140 = vsub.s32 0, %v3138
        %v3141 = vsel %vm3139, %v3140, %v3138
        %v3142 = vclz %v3141
        %v3143 = vsub.s32 %v3142, 2
        %vm3144 = vcmp.gt.s32.totalorder 0, %v3143
        %v3145 = vsel %vm3144, 0, %v3143
        %v3146 = vsub.s32 32, %v3145
        %v3147 = vshll.u32 %v3138, %v3145
        %v3148 = vshrl.u32 %v3130, %v3146
        %v3149 = vor.u32 %v3147, %v3148
        %v3150 = vsub.s32 4294967266, %v3145
        %v3151 = vadd.s32 %v3150, 127
        %v3152 = vshll.u32 %v3151, 23
        %v3153 = vor.u32 4788187, %v3152
        %v3154 = vand.u32 2147483647, %v3153
        %v3156 = vcvt.s32.f32 %v3149
        %v3157 = vmul.f32 %v3156, %v3154
        %v3158 = vxor.u32 %v3157, 2147483648
        %v3159 = vsel %vm3076, %v3158, %v3157
        %v3160 = vsub.s32 4, %v3136
        %v3161 = vsel %vm3076, %v3160, %v3136
        %v3162 = vsel %vm3075, %v382, %v3159
        %v3163 = vsel %vm3075, 0, %v3161
        %v3164 = vcosq.f32.pop %v3162
        %v3165 = vsinq.f32.pop %v3162
        %vm3166 = vweird.f32 %v382
        %v3167 = vand.u32 %v3163, 3
        %vm3168 = vcmp.lt.s32.totalorder %v3167, 2
        %vm3169 = vcmp.eq.s32.totalorder %v3167, 0
        %v3170 = vxor.u32 %v3165, 2147483648
        %v3171 = vsel %vm3169, %v3164, %v3170
        %vm3172 = vcmp.eq.s32.totalorder %v3167, 2
        %v3173 = vxor.u32 %v3164, 2147483648
        %v3174 = vsel %vm3172, %v3173, %v3165
        %v3175 = vsel %vm3168, %v3171, %v3174
        %v3176 = vsel %vm3166, nan, %v3175
        %v3177 = vand.u32 2147483647, %v383
        %vm3178 = vcmp.le.f32.partialorder %v3177, 0.7853982
        %vm3179 = vcmp.lt.s32.totalorder %v383, 0
        %v3180 = vand.u32 %v383, 2139095040
        %v3181 = vshrl.u32 %v3180, 23
        %v3182 = vsub.s32 %v3181, 127
        %v3183 = vand.u32 2147483647, %v383
        %v3184 = vand.u32 %v3183, 8388607
        %v3185 = vor.u32 %v3184, 8388608
        %v3186 = vsub.s32 0, %v3185
        %v3187 = vadd.s32 %v3182, 1
        %vm3188 = vcmp.gt.s32.totalorder %v3187, 0
        %v3189 = vsel %vm3188, %v3187, 0
        %v3190 = vshrl.u32 %v3189, 5
        %v3191 = vand.u32 %v3189, 31
        %v3192 = vsub.s32 32, %v3191
        %v3193 = vshrl.u32 683565275, %v3192
        %v3194 = vshll.u32 683565275, %v3191
        %v3195 = vshrl.u32 2475754826, %v3192
        %v3196 = vor.u32 %v3194, %v3195
        %v3197 = vshll.u32 2475754826, %v3191
        %v3198 = vshrl.u32 2131351028, %v3192
        %v3199 = vor.u32 %v3197, %v3198
        %v3200 = vshll.u32 2131351028, %v3191
        %v3201 = vshrl.u32 2102212464, %v3192
        %v3202 = vor.u32 %v3200, %v3201
        %v3203 = vshll.u32 2102212464, %v3191
        %v3204 = vshrl.u32 920167782, %v3192
        %v3205 = vor.u32 %v3203, %v3204
        %v3206 = vshll.u32 920167782, %v3191
        %v3207 = vshrl.u32 1326507024, %v3192
        %v3208 = vor.u32 %v3206, %v3207
        %vm3209 = vcmp.lt.s32.totalorder %v3190, 1
        %vm3210 = vcmp.lt.s32.totalorder %v3190, 2
        %vm3211 = vcmp.lt.s32.totalorder %v3190, 3
        %vm3212 = vcmp.lt.s32.totalorder %v3190, 4
        %v3213 = vsel %vm3209, %v3193, %v3196
        %v3214 = vsel %vm3212, %v3202, 2102212464
        %v3215 = vsel %vm3211, %v3199, %v3214
        %v3216 = vsel %vm3210, %v3213, %v3215
        %v3217 = vsel %vm3209, %v3196, %v3199
        %v3218 = vsel %vm3212, %v3205, 920167782
        %v3219 = vsel %vm3211, %v3202, %v3218
        %v3220 = vsel %vm3210, %v3217, %v3219
        %v3221 = vsel %vm3209, %v3199, %v3202
        %v3222 = vsel %vm3212, %v3208, 1326507024
        %v3223 = vsel %vm3211, %v3205, %v3222
        %v3224 = vsel %vm3210, %v3221, %v3223
        %v3225 = vshll.u32 %v3185, 8
        %v3226 = vmul.u32.u64.compose %v3225, %v3224
        %v3227 = vextract.low.u32 %v3226
        %v3228 = vextract.high.u32 %v3226
        %v3229 = vmul.u32.u64.compose %v3225, %v3220
        %v3230 = vextract.low.u32 %v3229
        %v3231 = vextract.high.u32 %v3229
        %v3232 = vmul.u32 %v3225, %v3216
        %v3233 = vadd.s32 %v3228, %v3230
        %vm3234 = vc.u32 %v3228, %v3230
        %v3235 = vadd.s32 %v3231, 1
        %v3236 = vsel %vm3234, %v3235, %v3231
        %v3237 = vadd.s32 %v3232, %v3236
        %v3238 = vadd.s32 %v3237, 536870912
        %v3239 = vshrl.u32 %v3238, 30
        %v3240 = vshll.u32 %v3239, 30
        %v3241 = vsub.s32 %v3237, %v3240
        %vm3242 = vcmp.lt.s32.totalorder %v3241, 0
        %v3243 = vsub.s32 0, %v3241
        %v3244 = vsel %vm3242, %v3243, %v3241
        %v3245 = vclz %v3244
        %v3246 = vsub.s32 %v3245, 2
        %vm3247 = vcmp.gt.s32.totalorder 0, %v3246
        %v3248 = vsel %vm3247, 0, %v3246
        %v3249 = vsub.s32 32, %v3248
        %v3250 = vshll.u32 %v3241, %v3248
        %v3251 = vshrl.u32 %v3233, %v3249
        %v3252 = vor.u32 %v3250, %v3251
        %v3253 = vsub.s32 4294967266, %v3248
        %v3254 = vadd.s32 %v3253, 127
        %v3255 = vshll.u32 %v3254, 23
        %v3256 = vor.u32 4788187, %v3255
        %v3257 = vand.u32 2147483647, %v3256
        %v3259 = vcvt.s32.f32 %v3252
        %v3260 = vmul.f32 %v3259, %v3257
        %v3261 = vxor.u32 %v3260, 2147483648
        %v3262 = vsel %vm3179, %v3261, %v3260
        %v3263 = vsub.s32 4, %v3239
        %v3264 = vsel %vm3179, %v3263, %v3239
        %v3265 = vsel %vm3178, %v383, %v3262
        %v3266 = vsel %vm3178, 0, %v3264
        %v3267 = vcosq.f32.pop %v3265
        %v3268 = vsinq.f32.pop %v3265
        %vm3269 = vweird.f32 %v383
        %v3270 = vand.u32 %v3266, 3
        %vm3271 = vcmp.lt.s32.totalorder %v3270, 2
        %vm3272 = vcmp.eq.s32.totalorder %v3270, 0
        %v3273 = vxor.u32 %v3268, 2147483648
        %v3274 = vsel %vm3272, %v3267, %v3273
        %vm3275 = vcmp.eq.s32.totalorder %v3270, 2
        %v3276 = vxor.u32 %v3267, 2147483648
        %v3277 = vsel %vm3275, %v3276, %v3268
        %v3278 = vsel %vm3271, %v3274, %v3277
        %v3279 = vsel %vm3269, nan, %v3278
        %v3280 = vand.u32 2147483647, %v384
        %vm3281 = vcmp.le.f32.partialorder %v3280, 0.7853982
        %vm3282 = vcmp.lt.s32.totalorder %v384, 0
        %v3283 = vand.u32 %v384, 2139095040
        %v3284 = vshrl.u32 %v3283, 23
        %v3285 = vsub.s32 %v3284, 127
        %v3286 = vand.u32 2147483647, %v384
        %v3287 = vand.u32 %v3286, 8388607
        %v3288 = vor.u32 %v3287, 8388608
        %v3289 = vsub.s32 0, %v3288
        %v3290 = vadd.s32 %v3285, 1
        %vm3291 = vcmp.gt.s32.totalorder %v3290, 0
        %v3292 = vsel %vm3291, %v3290, 0
        %v3293 = vshrl.u32 %v3292, 5
        %v3294 = vand.u32 %v3292, 31
        %v3295 = vsub.s32 32, %v3294
        %v3296 = vshrl.u32 683565275, %v3295
        %v3297 = vshll.u32 683565275, %v3294
        %v3298 = vshrl.u32 2475754826, %v3295
        %v3299 = vor.u32 %v3297, %v3298
        %v3300 = vshll.u32 2475754826, %v3294
        %v3301 = vshrl.u32 2131351028, %v3295
        %v3302 = vor.u32 %v3300, %v3301
        %v3303 = vshll.u32 2131351028, %v3294
        %v3304 = vshrl.u32 2102212464, %v3295
        %v3305 = vor.u32 %v3303, %v3304
        %v3306 = vshll.u32 2102212464, %v3294
        %v3307 = vshrl.u32 920167782, %v3295
        %v3308 = vor.u32 %v3306, %v3307
        %v3309 = vshll.u32 920167782, %v3294
        %v3310 = vshrl.u32 1326507024, %v3295
        %v3311 = vor.u32 %v3309, %v3310
        %vm3312 = vcmp.lt.s32.totalorder %v3293, 1
        %vm3313 = vcmp.lt.s32.totalorder %v3293, 2
        %vm3314 = vcmp.lt.s32.totalorder %v3293, 3
        %vm3315 = vcmp.lt.s32.totalorder %v3293, 4
        %v3316 = vsel %vm3312, %v3296, %v3299
        %v3317 = vsel %vm3315, %v3305, 2102212464
        %v3318 = vsel %vm3314, %v3302, %v3317
        %v3319 = vsel %vm3313, %v3316, %v3318
        %v3320 = vsel %vm3312, %v3299, %v3302
        %v3321 = vsel %vm3315, %v3308, 920167782
        %v3322 = vsel %vm3314, %v3305, %v3321
        %v3323 = vsel %vm3313, %v3320, %v3322
        %v3324 = vsel %vm3312, %v3302, %v3305
        %v3325 = vsel %vm3315, %v3311, 1326507024
        %v3326 = vsel %vm3314, %v3308, %v3325
        %v3327 = vsel %vm3313, %v3324, %v3326
        %v3328 = vshll.u32 %v3288, 8
        %v3329 = vmul.u32.u64.compose %v3328, %v3327
        %v3330 = vextract.low.u32 %v3329
        %v3331 = vextract.high.u32 %v3329
        %v3332 = vmul.u32.u64.compose %v3328, %v3323
        %v3333 = vextract.low.u32 %v3332
        %v3334 = vextract.high.u32 %v3332
        %v3335 = vmul.u32 %v3328, %v3319
        %v3336 = vadd.s32 %v3331, %v3333
        %vm3337 = vc.u32 %v3331, %v3333
        %v3338 = vadd.s32 %v3334, 1
        %v3339 = vsel %vm3337, %v3338, %v3334
        %v3340 = vadd.s32 %v3335, %v3339
        %v3341 = vadd.s32 %v3340, 536870912
        %v3342 = vshrl.u32 %v3341, 30
        %v3343 = vshll.u32 %v3342, 30
        %v3344 = vsub.s32 %v3340, %v3343
        %vm3345 = vcmp.lt.s32.totalorder %v3344, 0
        %v3346 = vsub.s32 0, %v3344
        %v3347 = vsel %vm3345, %v3346, %v3344
        %v3348 = vclz %v3347
        %v3349 = vsub.s32 %v3348, 2
        %vm3350 = vcmp.gt.s32.totalorder 0, %v3349
        %v3351 = vsel %vm3350, 0, %v3349
        %v3352 = vsub.s32 32, %v3351
        %v3353 = vshll.u32 %v3344, %v3351
        %v3354 = vshrl.u32 %v3336, %v3352
        %v3355 = vor.u32 %v3353, %v3354
        %v3356 = vsub.s32 4294967266, %v3351
        %v3357 = vadd.s32 %v3356, 127
        %v3358 = vshll.u32 %v3357, 23
        %v3359 = vor.u32 4788187, %v3358
        %v3360 = vand.u32 2147483647, %v3359
        %v3362 = vcvt.s32.f32 %v3355
        %v3363 = vmul.f32 %v3362, %v3360
        %v3364 = vxor.u32 %v3363, 2147483648
        %v3365 = vsel %vm3282, %v3364, %v3363
        %v3366 = vsub.s32 4, %v3342
        %v3367 = vsel %vm3282, %v3366, %v3342
        %v3368 = vsel %vm3281, %v384, %v3365
        %v3369 = vsel %vm3281, 0, %v3367
        %v3370 = vcosq.f32.pop %v3368
        %v3371 = vsinq.f32.pop %v3368
        %vm3372 = vweird.f32 %v384
        %v3373 = vand.u32 %v3369, 3
        %vm3374 = vcmp.lt.s32.totalorder %v3373, 2
        %vm3375 = vcmp.eq.s32.totalorder %v3373, 0
        %v3376 = vxor.u32 %v3371, 2147483648
        %v3377 = vsel %vm3375, %v3370, %v3376
        %vm3378 = vcmp.eq.s32.totalorder %v3373, 2
        %v3379 = vxor.u32 %v3370, 2147483648
        %v3380 = vsel %vm3378, %v3379, %v3371
        %v3381 = vsel %vm3374, %v3377, %v3380
        %v3382 = vsel %vm3372, nan, %v3381
        %v3383 = vand.u32 2147483647, %v385
        %vm3384 = vcmp.le.f32.partialorder %v3383, 0.7853982
        %vm3385 = vcmp.lt.s32.totalorder %v385, 0
        %v3386 = vand.u32 %v385, 2139095040
        %v3387 = vshrl.u32 %v3386, 23
        %v3388 = vsub.s32 %v3387, 127
        %v3389 = vand.u32 2147483647, %v385
        %v3390 = vand.u32 %v3389, 8388607
        %v3391 = vor.u32 %v3390, 8388608
        %v3392 = vsub.s32 0, %v3391
        %v3393 = vadd.s32 %v3388, 1
        %vm3394 = vcmp.gt.s32.totalorder %v3393, 0
        %v3395 = vsel %vm3394, %v3393, 0
        %v3396 = vshrl.u32 %v3395, 5
        %v3397 = vand.u32 %v3395, 31
        %v3398 = vsub.s32 32, %v3397
        %v3399 = vshrl.u32 683565275, %v3398
        %v3400 = vshll.u32 683565275, %v3397
        %v3401 = vshrl.u32 2475754826, %v3398
        %v3402 = vor.u32 %v3400, %v3401
        %v3403 = vshll.u32 2475754826, %v3397
        %v3404 = vshrl.u32 2131351028, %v3398
        %v3405 = vor.u32 %v3403, %v3404
        %v3406 = vshll.u32 2131351028, %v3397
        %v3407 = vshrl.u32 2102212464, %v3398
        %v3408 = vor.u32 %v3406, %v3407
        %v3409 = vshll.u32 2102212464, %v3397
        %v3410 = vshrl.u32 920167782, %v3398
        %v3411 = vor.u32 %v3409, %v3410
        %v3412 = vshll.u32 920167782, %v3397
        %v3413 = vshrl.u32 1326507024, %v3398
        %v3414 = vor.u32 %v3412, %v3413
        %vm3415 = vcmp.lt.s32.totalorder %v3396, 1
        %vm3416 = vcmp.lt.s32.totalorder %v3396, 2
        %vm3417 = vcmp.lt.s32.totalorder %v3396, 3
        %vm3418 = vcmp.lt.s32.totalorder %v3396, 4
        %v3419 = vsel %vm3415, %v3399, %v3402
        %v3420 = vsel %vm3418, %v3408, 2102212464
        %v3421 = vsel %vm3417, %v3405, %v3420
        %v3422 = vsel %vm3416, %v3419, %v3421
        %v3423 = vsel %vm3415, %v3402, %v3405
        %v3424 = vsel %vm3418, %v3411, 920167782
        %v3425 = vsel %vm3417, %v3408, %v3424
        %v3426 = vsel %vm3416, %v3423, %v3425
        %v3427 = vsel %vm3415, %v3405, %v3408
        %v3428 = vsel %vm3418, %v3414, 1326507024
        %v3429 = vsel %vm3417, %v3411, %v3428
        %v3430 = vsel %vm3416, %v3427, %v3429
        %v3431 = vshll.u32 %v3391, 8
        %v3432 = vmul.u32.u64.compose %v3431, %v3430
        %v3433 = vextract.low.u32 %v3432
        %v3434 = vextract.high.u32 %v3432
        %v3435 = vmul.u32.u64.compose %v3431, %v3426
        %v3436 = vextract.low.u32 %v3435
        %v3437 = vextract.high.u32 %v3435
        %v3438 = vmul.u32 %v3431, %v3422
        %v3439 = vadd.s32 %v3434, %v3436
        %vm3440 = vc.u32 %v3434, %v3436
        %v3441 = vadd.s32 %v3437, 1
        %v3442 = vsel %vm3440, %v3441, %v3437
        %v3443 = vadd.s32 %v3438, %v3442
        %v3444 = vadd.s32 %v3443, 536870912
        %v3445 = vshrl.u32 %v3444, 30
        %v3446 = vshll.u32 %v3445, 30
        %v3447 = vsub.s32 %v3443, %v3446
        %vm3448 = vcmp.lt.s32.totalorder %v3447, 0
        %v3449 = vsub.s32 0, %v3447
        %v3450 = vsel %vm3448, %v3449, %v3447
        %v3451 = vclz %v3450
        %v3452 = vsub.s32 %v3451, 2
        %vm3453 = vcmp.gt.s32.totalorder 0, %v3452
        %v3454 = vsel %vm3453, 0, %v3452
        %v3455 = vsub.s32 32, %v3454
        %v3456 = vshll.u32 %v3447, %v3454
        %v3457 = vshrl.u32 %v3439, %v3455
        %v3458 = vor.u32 %v3456, %v3457
        %v3459 = vsub.s32 4294967266, %v3454
        %v3460 = vadd.s32 %v3459, 127
        %v3461 = vshll.u32 %v3460, 23
        %v3462 = vor.u32 4788187, %v3461
        %v3463 = vand.u32 2147483647, %v3462
        %v3465 = vcvt.s32.f32 %v3458
        %v3466 = vmul.f32 %v3465, %v3463
        %v3467 = vxor.u32 %v3466, 2147483648
        %v3468 = vsel %vm3385, %v3467, %v3466
        %v3469 = vsub.s32 4, %v3445
        %v3470 = vsel %vm3385, %v3469, %v3445
        %v3471 = vsel %vm3384, %v385, %v3468
        %v3472 = vsel %vm3384, 0, %v3470
        %v3473 = vcosq.f32.pop %v3471
        %v3474 = vsinq.f32.pop %v3471
        %vm3475 = vweird.f32 %v385
        %v3476 = vand.u32 %v3472, 3
        %vm3477 = vcmp.lt.s32.totalorder %v3476, 2
        %vm3478 = vcmp.eq.s32.totalorder %v3476, 0
        %v3479 = vxor.u32 %v3474, 2147483648
        %v3480 = vsel %vm3478, %v3473, %v3479
        %vm3481 = vcmp.eq.s32.totalorder %v3476, 2
        %v3482 = vxor.u32 %v3473, 2147483648
        %v3483 = vsel %vm3481, %v3482, %v3474
        %v3484 = vsel %vm3477, %v3480, %v3483
        %v3485 = vsel %vm3475, nan, %v3484
        %v3486 = vand.u32 2147483647, %v376
        %vm3487 = vcmp.le.f32.partialorder %v3486, 0.7853982
        %vm3488 = vcmp.lt.s32.totalorder %v376, 0
        %v3489 = vand.u32 %v376, 2139095040
        %v3490 = vshrl.u32 %v3489, 23
        %v3491 = vsub.s32 %v3490, 127
        %v3492 = vand.u32 2147483647, %v376
        %v3493 = vand.u32 %v3492, 8388607
        %v3494 = vor.u32 %v3493, 8388608
        %v3495 = vsub.s32 0, %v3494
        %v3496 = vadd.s32 %v3491, 1
        %vm3497 = vcmp.gt.s32.totalorder %v3496, 0
        %v3498 = vsel %vm3497, %v3496, 0
        %v3499 = vshrl.u32 %v3498, 5
        %v3500 = vand.u32 %v3498, 31
        %v3501 = vsub.s32 32, %v3500
        %v3502 = vshrl.u32 683565275, %v3501
        %v3503 = vshll.u32 683565275, %v3500
        %v3504 = vshrl.u32 2475754826, %v3501
        %v3505 = vor.u32 %v3503, %v3504
        %v3506 = vshll.u32 2475754826, %v3500
        %v3507 = vshrl.u32 2131351028, %v3501
        %v3508 = vor.u32 %v3506, %v3507
        %v3509 = vshll.u32 2131351028, %v3500
        %v3510 = vshrl.u32 2102212464, %v3501
        %v3511 = vor.u32 %v3509, %v3510
        %v3512 = vshll.u32 2102212464, %v3500
        %v3513 = vshrl.u32 920167782, %v3501
        %v3514 = vor.u32 %v3512, %v3513
        %v3515 = vshll.u32 920167782, %v3500
        %v3516 = vshrl.u32 1326507024, %v3501
        %v3517 = vor.u32 %v3515, %v3516
        %vm3518 = vcmp.lt.s32.totalorder %v3499, 1
        %vm3519 = vcmp.lt.s32.totalorder %v3499, 2
        %vm3520 = vcmp.lt.s32.totalorder %v3499, 3
        %vm3521 = vcmp.lt.s32.totalorder %v3499, 4
        %v3522 = vsel %vm3518, %v3502, %v3505
        %v3523 = vsel %vm3521, %v3511, 2102212464
        %v3524 = vsel %vm3520, %v3508, %v3523
        %v3525 = vsel %vm3519, %v3522, %v3524
        %v3526 = vsel %vm3518, %v3505, %v3508
        %v3527 = vsel %vm3521, %v3514, 920167782
        %v3528 = vsel %vm3520, %v3511, %v3527
        %v3529 = vsel %vm3519, %v3526, %v3528
        %v3530 = vsel %vm3518, %v3508, %v3511
        %v3531 = vsel %vm3521, %v3517, 1326507024
        %v3532 = vsel %vm3520, %v3514, %v3531
        %v3533 = vsel %vm3519, %v3530, %v3532
        %v3534 = vshll.u32 %v3494, 8
        %v3535 = vmul.u32.u64.compose %v3534, %v3533
        %v3536 = vextract.low.u32 %v3535
        %v3537 = vextract.high.u32 %v3535
        %v3538 = vmul.u32.u64.compose %v3534, %v3529
        %v3539 = vextract.low.u32 %v3538
        %v3540 = vextract.high.u32 %v3538
        %v3541 = vmul.u32 %v3534, %v3525
        %v3542 = vadd.s32 %v3537, %v3539
        %vm3543 = vc.u32 %v3537, %v3539
        %v3544 = vadd.s32 %v3540, 1
        %v3545 = vsel %vm3543, %v3544, %v3540
        %v3546 = vadd.s32 %v3541, %v3545
        %v3547 = vadd.s32 %v3546, 536870912
        %v3548 = vshrl.u32 %v3547, 30
        %v3549 = vshll.u32 %v3548, 30
        %v3550 = vsub.s32 %v3546, %v3549
        %vm3551 = vcmp.lt.s32.totalorder %v3550, 0
        %v3552 = vsub.s32 0, %v3550
        %v3553 = vsel %vm3551, %v3552, %v3550
        %v3554 = vclz %v3553
        %v3555 = vsub.s32 %v3554, 2
        %vm3556 = vcmp.gt.s32.totalorder 0, %v3555
        %v3557 = vsel %vm3556, 0, %v3555
        %v3558 = vsub.s32 32, %v3557
        %v3559 = vshll.u32 %v3550, %v3557
        %v3560 = vshrl.u32 %v3542, %v3558
        %v3561 = vor.u32 %v3559, %v3560
        %v3562 = vsub.s32 4294967266, %v3557
        %v3563 = vadd.s32 %v3562, 127
        %v3564 = vshll.u32 %v3563, 23
        %v3565 = vor.u32 4788187, %v3564
        %v3566 = vand.u32 2147483647, %v3565
        %v3568 = vcvt.s32.f32 %v3561
        %v3569 = vmul.f32 %v3568, %v3566
        %v3570 = vxor.u32 %v3569, 2147483648
        %v3571 = vsel %vm3488, %v3570, %v3569
        %v3572 = vsub.s32 4, %v3548
        %v3573 = vsel %vm3488, %v3572, %v3548
        %v3574 = vsel %vm3487, %v376, %v3571
        %v3575 = vsel %vm3487, 0, %v3573
        %v3576 = vcosq.f32.pop %v3574
        %v3577 = vsinq.f32.pop %v3574
        %vm3578 = vweird.f32 %v376
        %v3579 = vadd.s32 %v3575, 3
        %v3580 = vand.u32 %v3579, 3
        %vm3581 = vcmp.lt.s32.totalorder %v3580, 2
        %vm3582 = vcmp.eq.s32.totalorder %v3580, 0
        %v3583 = vxor.u32 %v3577, 2147483648
        %v3584 = vsel %vm3582, %v3576, %v3583
        %vm3585 = vcmp.eq.s32.totalorder %v3580, 2
        %v3586 = vxor.u32 %v3576, 2147483648
        %v3587 = vsel %vm3585, %v3586, %v3577
        %v3588 = vsel %vm3581, %v3584, %v3587
        %v3589 = vsel %vm3578, nan, %v3588
        %v3590 = vand.u32 2147483647, %v377
        %vm3591 = vcmp.le.f32.partialorder %v3590, 0.7853982
        %vm3592 = vcmp.lt.s32.totalorder %v377, 0
        %v3593 = vand.u32 %v377, 2139095040
        %v3594 = vshrl.u32 %v3593, 23
        %v3595 = vsub.s32 %v3594, 127
        %v3596 = vand.u32 2147483647, %v377
        %v3597 = vand.u32 %v3596, 8388607
        %v3598 = vor.u32 %v3597, 8388608
        %v3599 = vsub.s32 0, %v3598
        %v3600 = vadd.s32 %v3595, 1
        %vm3601 = vcmp.gt.s32.totalorder %v3600, 0
        %v3602 = vsel %vm3601, %v3600, 0
        %v3603 = vshrl.u32 %v3602, 5
        %v3604 = vand.u32 %v3602, 31
        %v3605 = vsub.s32 32, %v3604
        %v3606 = vshrl.u32 683565275, %v3605
        %v3607 = vshll.u32 683565275, %v3604
        %v3608 = vshrl.u32 2475754826, %v3605
        %v3609 = vor.u32 %v3607, %v3608
        %v3610 = vshll.u32 2475754826, %v3604
        %v3611 = vshrl.u32 2131351028, %v3605
        %v3612 = vor.u32 %v3610, %v3611
        %v3613 = vshll.u32 2131351028, %v3604
        %v3614 = vshrl.u32 2102212464, %v3605
        %v3615 = vor.u32 %v3613, %v3614
        %v3616 = vshll.u32 2102212464, %v3604
        %v3617 = vshrl.u32 920167782, %v3605
        %v3618 = vor.u32 %v3616, %v3617
        %v3619 = vshll.u32 920167782, %v3604
        %v3620 = vshrl.u32 1326507024, %v3605
        %v3621 = vor.u32 %v3619, %v3620
        %vm3622 = vcmp.lt.s32.totalorder %v3603, 1
        %vm3623 = vcmp.lt.s32.totalorder %v3603, 2
        %vm3624 = vcmp.lt.s32.totalorder %v3603, 3
        %vm3625 = vcmp.lt.s32.totalorder %v3603, 4
        %v3626 = vsel %vm3622, %v3606, %v3609
        %v3627 = vsel %vm3625, %v3615, 2102212464
        %v3628 = vsel %vm3624, %v3612, %v3627
        %v3629 = vsel %vm3623, %v3626, %v3628
        %v3630 = vsel %vm3622, %v3609, %v3612
        %v3631 = vsel %vm3625, %v3618, 920167782
        %v3632 = vsel %vm3624, %v3615, %v3631
        %v3633 = vsel %vm3623, %v3630, %v3632
        %v3634 = vsel %vm3622, %v3612, %v3615
        %v3635 = vsel %vm3625, %v3621, 1326507024
        %v3636 = vsel %vm3624, %v3618, %v3635
        %v3637 = vsel %vm3623, %v3634, %v3636
        %v3638 = vshll.u32 %v3598, 8
        %v3639 = vmul.u32.u64.compose %v3638, %v3637
        %v3640 = vextract.low.u32 %v3639
        %v3641 = vextract.high.u32 %v3639
        %v3642 = vmul.u32.u64.compose %v3638, %v3633
        %v3643 = vextract.low.u32 %v3642
        %v3644 = vextract.high.u32 %v3642
        %v3645 = vmul.u32 %v3638, %v3629
        %v3646 = vadd.s32 %v3641, %v3643
        %vm3647 = vc.u32 %v3641, %v3643
        %v3648 = vadd.s32 %v3644, 1
        %v3649 = vsel %vm3647, %v3648, %v3644
        %v3650 = vadd.s32 %v3645, %v3649
        %v3651 = vadd.s32 %v3650, 536870912
        %v3652 = vshrl.u32 %v3651, 30
        %v3653 = vshll.u32 %v3652, 30
        %v3654 = vsub.s32 %v3650, %v3653
        %vm3655 = vcmp.lt.s32.totalorder %v3654, 0
        %v3656 = vsub.s32 0, %v3654
        %v3657 = vsel %vm3655, %v3656, %v3654
        %v3658 = vclz %v3657
        %v3659 = vsub.s32 %v3658, 2
        %vm3660 = vcmp.gt.s32.totalorder 0, %v3659
        %v3661 = vsel %vm3660, 0, %v3659
        %v3662 = vsub.s32 32, %v3661
        %v3663 = vshll.u32 %v3654, %v3661
        %v3664 = vshrl.u32 %v3646, %v3662
        %v3665 = vor.u32 %v3663, %v3664
        %v3666 = vsub.s32 4294967266, %v3661
        %v3667 = vadd.s32 %v3666, 127
        %v3668 = vshll.u32 %v3667, 23
        %v3669 = vor.u32 4788187, %v3668
        %v3670 = vand.u32 2147483647, %v3669
        %v3672 = vcvt.s32.f32 %v3665
        %v3673 = vmul.f32 %v3672, %v3670
        %v3674 = vxor.u32 %v3673, 2147483648
        %v3675 = vsel %vm3592, %v3674, %v3673
        %v3676 = vsub.s32 4, %v3652
        %v3677 = vsel %vm3592, %v3676, %v3652
        %v3678 = vsel %vm3591, %v377, %v3675
        %v3679 = vsel %vm3591, 0, %v3677
        %v3680 = vcosq.f32.pop %v3678
        %v3681 = vsinq.f32.pop %v3678
        %vm3682 = vweird.f32 %v377
        %v3683 = vadd.s32 %v3679, 3
        %v3684 = vand.u32 %v3683, 3
        %vm3685 = vcmp.lt.s32.totalorder %v3684, 2
        %vm3686 = vcmp.eq.s32.totalorder %v3684, 0
        %v3687 = vxor.u32 %v3681, 2147483648
        %v3688 = vsel %vm3686, %v3680, %v3687
        %vm3689 = vcmp.eq.s32.totalorder %v3684, 2
        %v3690 = vxor.u32 %v3680, 2147483648
        %v3691 = vsel %vm3689, %v3690, %v3681
        %v3692 = vsel %vm3685, %v3688, %v3691
        %v3693 = vsel %vm3682, nan, %v3692
        %v3694 = vand.u32 2147483647, %v378
        %vm3695 = vcmp.le.f32.partialorder %v3694, 0.7853982
        %vm3696 = vcmp.lt.s32.totalorder %v378, 0
        %v3697 = vand.u32 %v378, 2139095040
        %v3698 = vshrl.u32 %v3697, 23
        %v3699 = vsub.s32 %v3698, 127
        %v3700 = vand.u32 2147483647, %v378
        %v3701 = vand.u32 %v3700, 8388607
        %v3702 = vor.u32 %v3701, 8388608
        %v3703 = vsub.s32 0, %v3702
        %v3704 = vadd.s32 %v3699, 1
        %vm3705 = vcmp.gt.s32.totalorder %v3704, 0
        %v3706 = vsel %vm3705, %v3704, 0
        %v3707 = vshrl.u32 %v3706, 5
        %v3708 = vand.u32 %v3706, 31
        %v3709 = vsub.s32 32, %v3708
        %v3710 = vshrl.u32 683565275, %v3709
        %v3711 = vshll.u32 683565275, %v3708
        %v3712 = vshrl.u32 2475754826, %v3709
        %v3713 = vor.u32 %v3711, %v3712
        %v3714 = vshll.u32 2475754826, %v3708
        %v3715 = vshrl.u32 2131351028, %v3709
        %v3716 = vor.u32 %v3714, %v3715
        %v3717 = vshll.u32 2131351028, %v3708
        %v3718 = vshrl.u32 2102212464, %v3709
        %v3719 = vor.u32 %v3717, %v3718
        %v3720 = vshll.u32 2102212464, %v3708
        %v3721 = vshrl.u32 920167782, %v3709
        %v3722 = vor.u32 %v3720, %v3721
        %v3723 = vshll.u32 920167782, %v3708
        %v3724 = vshrl.u32 1326507024, %v3709
        %v3725 = vor.u32 %v3723, %v3724
        %vm3726 = vcmp.lt.s32.totalorder %v3707, 1
        %vm3727 = vcmp.lt.s32.totalorder %v3707, 2
        %vm3728 = vcmp.lt.s32.totalorder %v3707, 3
        %vm3729 = vcmp.lt.s32.totalorder %v3707, 4
        %v3730 = vsel %vm3726, %v3710, %v3713
        %v3731 = vsel %vm3729, %v3719, 2102212464
        %v3732 = vsel %vm3728, %v3716, %v3731
        %v3733 = vsel %vm3727, %v3730, %v3732
        %v3734 = vsel %vm3726, %v3713, %v3716
        %v3735 = vsel %vm3729, %v3722, 920167782
        %v3736 = vsel %vm3728, %v3719, %v3735
        %v3737 = vsel %vm3727, %v3734, %v3736
        %v3738 = vsel %vm3726, %v3716, %v3719
        %v3739 = vsel %vm3729, %v3725, 1326507024
        %v3740 = vsel %vm3728, %v3722, %v3739
        %v3741 = vsel %vm3727, %v3738, %v3740
        %v3742 = vshll.u32 %v3702, 8
        %v3743 = vmul.u32.u64.compose %v3742, %v3741
        %v3744 = vextract.low.u32 %v3743
        %v3745 = vextract.high.u32 %v3743
        %v3746 = vmul.u32.u64.compose %v3742, %v3737
        %v3747 = vextract.low.u32 %v3746
        %v3748 = vextract.high.u32 %v3746
        %v3749 = vmul.u32 %v3742, %v3733
        %v3750 = vadd.s32 %v3745, %v3747
        %vm3751 = vc.u32 %v3745, %v3747
        %v3752 = vadd.s32 %v3748, 1
        %v3753 = vsel %vm3751, %v3752, %v3748
        %v3754 = vadd.s32 %v3749, %v3753
        %v3755 = vadd.s32 %v3754, 536870912
        %v3756 = vshrl.u32 %v3755, 30
        %v3757 = vshll.u32 %v3756, 30
        %v3758 = vsub.s32 %v3754, %v3757
        %vm3759 = vcmp.lt.s32.totalorder %v3758, 0
        %v3760 = vsub.s32 0, %v3758
        %v3761 = vsel %vm3759, %v3760, %v3758
        %v3762 = vclz %v3761
        %v3763 = vsub.s32 %v3762, 2
        %vm3764 = vcmp.gt.s32.totalorder 0, %v3763
        %v3765 = vsel %vm3764, 0, %v3763
        %v3766 = vsub.s32 32, %v3765
        %v3767 = vshll.u32 %v3758, %v3765
        %v3768 = vshrl.u32 %v3750, %v3766
        %v3769 = vor.u32 %v3767, %v3768
        %v3770 = vsub.s32 4294967266, %v3765
        %v3771 = vadd.s32 %v3770, 127
        %v3772 = vshll.u32 %v3771, 23
        %v3773 = vor.u32 4788187, %v3772
        %v3774 = vand.u32 2147483647, %v3773
        %v3776 = vcvt.s32.f32 %v3769
        %v3777 = vmul.f32 %v3776, %v3774
        %v3778 = vxor.u32 %v3777, 2147483648
        %v3779 = vsel %vm3696, %v3778, %v3777
        %v3780 = vsub.s32 4, %v3756
        %v3781 = vsel %vm3696, %v3780, %v3756
        %v3782 = vsel %vm3695, %v378, %v3779
        %v3783 = vsel %vm3695, 0, %v3781
        %v3784 = vcosq.f32.pop %v3782
        %v3785 = vsinq.f32.pop %v3782
        %vm3786 = vweird.f32 %v378
        %v3787 = vadd.s32 %v3783, 3
        %v3788 = vand.u32 %v3787, 3
        %vm3789 = vcmp.lt.s32.totalorder %v3788, 2
        %vm3790 = vcmp.eq.s32.totalorder %v3788, 0
        %v3791 = vxor.u32 %v3785, 2147483648
        %v3792 = vsel %vm3790, %v3784, %v3791
        %vm3793 = vcmp.eq.s32.totalorder %v3788, 2
        %v3794 = vxor.u32 %v3784, 2147483648
        %v3795 = vsel %vm3793, %v3794, %v3785
        %v3796 = vsel %vm3789, %v3792, %v3795
        %v3797 = vsel %vm3786, nan, %v3796
        %v3798 = vand.u32 2147483647, %v379
        %vm3799 = vcmp.le.f32.partialorder %v3798, 0.7853982
        %vm3800 = vcmp.lt.s32.totalorder %v379, 0
        %v3801 = vand.u32 %v379, 2139095040
        %v3802 = vshrl.u32 %v3801, 23
        %v3803 = vsub.s32 %v3802, 127
        %v3804 = vand.u32 2147483647, %v379
        %v3805 = vand.u32 %v3804, 8388607
        %v3806 = vor.u32 %v3805, 8388608
        %v3807 = vsub.s32 0, %v3806
        %v3808 = vadd.s32 %v3803, 1
        %vm3809 = vcmp.gt.s32.totalorder %v3808, 0
        %v3810 = vsel %vm3809, %v3808, 0
        %v3811 = vshrl.u32 %v3810, 5
        %v3812 = vand.u32 %v3810, 31
        %v3813 = vsub.s32 32, %v3812
        %v3814 = vshrl.u32 683565275, %v3813
        %v3815 = vshll.u32 683565275, %v3812
        %v3816 = vshrl.u32 2475754826, %v3813
        %v3817 = vor.u32 %v3815, %v3816
        %v3818 = vshll.u32 2475754826, %v3812
        %v3819 = vshrl.u32 2131351028, %v3813
        %v3820 = vor.u32 %v3818, %v3819
        %v3821 = vshll.u32 2131351028, %v3812
        %v3822 = vshrl.u32 2102212464, %v3813
        %v3823 = vor.u32 %v3821, %v3822
        %v3824 = vshll.u32 2102212464, %v3812
        %v3825 = vshrl.u32 920167782, %v3813
        %v3826 = vor.u32 %v3824, %v3825
        %v3827 = vshll.u32 920167782, %v3812
        %v3828 = vshrl.u32 1326507024, %v3813
        %v3829 = vor.u32 %v3827, %v3828
        %vm3830 = vcmp.lt.s32.totalorder %v3811, 1
        %vm3831 = vcmp.lt.s32.totalorder %v3811, 2
        %vm3832 = vcmp.lt.s32.totalorder %v3811, 3
        %vm3833 = vcmp.lt.s32.totalorder %v3811, 4
        %v3834 = vsel %vm3830, %v3814, %v3817
        %v3835 = vsel %vm3833, %v3823, 2102212464
        %v3836 = vsel %vm3832, %v3820, %v3835
        %v3837 = vsel %vm3831, %v3834, %v3836
        %v3838 = vsel %vm3830, %v3817, %v3820
        %v3839 = vsel %vm3833, %v3826, 920167782
        %v3840 = vsel %vm3832, %v3823, %v3839
        %v3841 = vsel %vm3831, %v3838, %v3840
        %v3842 = vsel %vm3830, %v3820, %v3823
        %v3843 = vsel %vm3833, %v3829, 1326507024
        %v3844 = vsel %vm3832, %v3826, %v3843
        %v3845 = vsel %vm3831, %v3842, %v3844
        %v3846 = vshll.u32 %v3806, 8
        %v3847 = vmul.u32.u64.compose %v3846, %v3845
        %v3848 = vextract.low.u32 %v3847
        %v3849 = vextract.high.u32 %v3847
        %v3850 = vmul.u32.u64.compose %v3846, %v3841
        %v3851 = vextract.low.u32 %v3850
        %v3852 = vextract.high.u32 %v3850
        %v3853 = vmul.u32 %v3846, %v3837
        %v3854 = vadd.s32 %v3849, %v3851
        %vm3855 = vc.u32 %v3849, %v3851
        %v3856 = vadd.s32 %v3852, 1
        %v3857 = vsel %vm3855, %v3856, %v3852
        %v3858 = vadd.s32 %v3853, %v3857
        %v3859 = vadd.s32 %v3858, 536870912
        %v3860 = vshrl.u32 %v3859, 30
        %v3861 = vshll.u32 %v3860, 30
        %v3862 = vsub.s32 %v3858, %v3861
        %vm3863 = vcmp.lt.s32.totalorder %v3862, 0
        %v3864 = vsub.s32 0, %v3862
        %v3865 = vsel %vm3863, %v3864, %v3862
        %v3866 = vclz %v3865
        %v3867 = vsub.s32 %v3866, 2
        %vm3868 = vcmp.gt.s32.totalorder 0, %v3867
        %v3869 = vsel %vm3868, 0, %v3867
        %v3870 = vsub.s32 32, %v3869
        %v3871 = vshll.u32 %v3862, %v3869
        %v3872 = vshrl.u32 %v3854, %v3870
        %v3873 = vor.u32 %v3871, %v3872
        %v3874 = vsub.s32 4294967266, %v3869
        %v3875 = vadd.s32 %v3874, 127
        %v3876 = vshll.u32 %v3875, 23
        %v3877 = vor.u32 4788187, %v3876
        %v3878 = vand.u32 2147483647, %v3877
        %v3880 = vcvt.s32.f32 %v3873
        %v3881 = vmul.f32 %v3880, %v3878
        %v3882 = vxor.u32 %v3881, 2147483648
        %v3883 = vsel %vm3800, %v3882, %v3881
        %v3884 = vsub.s32 4, %v3860
        %v3885 = vsel %vm3800, %v3884, %v3860
        %v3886 = vsel %vm3799, %v379, %v3883
        %v3887 = vsel %vm3799, 0, %v3885
        %v3888 = vcosq.f32.pop %v3886
        %v3889 = vsinq.f32.pop %v3886
        %vm3890 = vweird.f32 %v379
        %v3891 = vadd.s32 %v3887, 3
        %v3892 = vand.u32 %v3891, 3
        %vm3893 = vcmp.lt.s32.totalorder %v3892, 2
        %vm3894 = vcmp.eq.s32.totalorder %v3892, 0
        %v3895 = vxor.u32 %v3889, 2147483648
        %v3896 = vsel %vm3894, %v3888, %v3895
        %vm3897 = vcmp.eq.s32.totalorder %v3892, 2
        %v3898 = vxor.u32 %v3888, 2147483648
        %v3899 = vsel %vm3897, %v3898, %v3889
        %v3900 = vsel %vm3893, %v3896, %v3899
        %v3901 = vsel %vm3890, nan, %v3900
        %v3902 = vand.u32 2147483647, %v380
        %vm3903 = vcmp.le.f32.partialorder %v3902, 0.7853982
        %vm3904 = vcmp.lt.s32.totalorder %v380, 0
        %v3905 = vand.u32 %v380, 2139095040
        %v3906 = vshrl.u32 %v3905, 23
        %v3907 = vsub.s32 %v3906, 127
        %v3908 = vand.u32 2147483647, %v380
        %v3909 = vand.u32 %v3908, 8388607
        %v3910 = vor.u32 %v3909, 8388608
        %v3911 = vsub.s32 0, %v3910
        %v3912 = vadd.s32 %v3907, 1
        %vm3913 = vcmp.gt.s32.totalorder %v3912, 0
        %v3914 = vsel %vm3913, %v3912, 0
        %v3915 = vshrl.u32 %v3914, 5
        %v3916 = vand.u32 %v3914, 31
        %v3917 = vsub.s32 32, %v3916
        %v3918 = vshrl.u32 683565275, %v3917
        %v3919 = vshll.u32 683565275, %v3916
        %v3920 = vshrl.u32 2475754826, %v3917
        %v3921 = vor.u32 %v3919, %v3920
        %v3922 = vshll.u32 2475754826, %v3916
        %v3923 = vshrl.u32 2131351028, %v3917
        %v3924 = vor.u32 %v3922, %v3923
        %v3925 = vshll.u32 2131351028, %v3916
        %v3926 = vshrl.u32 2102212464, %v3917
        %v3927 = vor.u32 %v3925, %v3926
        %v3928 = vshll.u32 2102212464, %v3916
        %v3929 = vshrl.u32 920167782, %v3917
        %v3930 = vor.u32 %v3928, %v3929
        %v3931 = vshll.u32 920167782, %v3916
        %v3932 = vshrl.u32 1326507024, %v3917
        %v3933 = vor.u32 %v3931, %v3932
        %vm3934 = vcmp.lt.s32.totalorder %v3915, 1
        %vm3935 = vcmp.lt.s32.totalorder %v3915, 2
        %vm3936 = vcmp.lt.s32.totalorder %v3915, 3
        %vm3937 = vcmp.lt.s32.totalorder %v3915, 4
        %v3938 = vsel %vm3934, %v3918, %v3921
        %v3939 = vsel %vm3937, %v3927, 2102212464
        %v3940 = vsel %vm3936, %v3924, %v3939
        %v3941 = vsel %vm3935, %v3938, %v3940
        %v3942 = vsel %vm3934, %v3921, %v3924
        %v3943 = vsel %vm3937, %v3930, 920167782
        %v3944 = vsel %vm3936, %v3927, %v3943
        %v3945 = vsel %vm3935, %v3942, %v3944
        %v3946 = vsel %vm3934, %v3924, %v3927
        %v3947 = vsel %vm3937, %v3933, 1326507024
        %v3948 = vsel %vm3936, %v3930, %v3947
        %v3949 = vsel %vm3935, %v3946, %v3948
        %v3950 = vshll.u32 %v3910, 8
        %v3951 = vmul.u32.u64.compose %v3950, %v3949
        %v3952 = vextract.low.u32 %v3951
        %v3953 = vextract.high.u32 %v3951
        %v3954 = vmul.u32.u64.compose %v3950, %v3945
        %v3955 = vextract.low.u32 %v3954
        %v3956 = vextract.high.u32 %v3954
        %v3957 = vmul.u32 %v3950, %v3941
        %v3958 = vadd.s32 %v3953, %v3955
        %vm3959 = vc.u32 %v3953, %v3955
        %v3960 = vadd.s32 %v3956, 1
        %v3961 = vsel %vm3959, %v3960, %v3956
        %v3962 = vadd.s32 %v3957, %v3961
        %v3963 = vadd.s32 %v3962, 536870912
        %v3964 = vshrl.u32 %v3963, 30
        %v3965 = vshll.u32 %v3964, 30
        %v3966 = vsub.s32 %v3962, %v3965
        %vm3967 = vcmp.lt.s32.totalorder %v3966, 0
        %v3968 = vsub.s32 0, %v3966
        %v3969 = vsel %vm3967, %v3968, %v3966
        %v3970 = vclz %v3969
        %v3971 = vsub.s32 %v3970, 2
        %vm3972 = vcmp.gt.s32.totalorder 0, %v3971
        %v3973 = vsel %vm3972, 0, %v3971
        %v3974 = vsub.s32 32, %v3973
        %v3975 = vshll.u32 %v3966, %v3973
        %v3976 = vshrl.u32 %v3958, %v3974
        %v3977 = vor.u32 %v3975, %v3976
        %v3978 = vsub.s32 4294967266, %v3973
        %v3979 = vadd.s32 %v3978, 127
        %v3980 = vshll.u32 %v3979, 23
        %v3981 = vor.u32 4788187, %v3980
        %v3982 = vand.u32 2147483647, %v3981
        %v3984 = vcvt.s32.f32 %v3977
        %v3985 = vmul.f32 %v3984, %v3982
        %v3986 = vxor.u32 %v3985, 2147483648
        %v3987 = vsel %vm3904, %v3986, %v3985
        %v3988 = vsub.s32 4, %v3964
        %v3989 = vsel %vm3904, %v3988, %v3964
        %v3990 = vsel %vm3903, %v380, %v3987
        %v3991 = vsel %vm3903, 0, %v3989
        %v3992 = vcosq.f32.pop %v3990
        %v3993 = vsinq.f32.pop %v3990
        %vm3994 = vweird.f32 %v380
        %v3995 = vadd.s32 %v3991, 3
        %v3996 = vand.u32 %v3995, 3
        %vm3997 = vcmp.lt.s32.totalorder %v3996, 2
        %vm3998 = vcmp.eq.s32.totalorder %v3996, 0
        %v3999 = vxor.u32 %v3993, 2147483648
        %v4000 = vsel %vm3998, %v3992, %v3999
        %vm4001 = vcmp.eq.s32.totalorder %v3996, 2
        %v4002 = vxor.u32 %v3992, 2147483648
        %v4003 = vsel %vm4001, %v4002, %v3993
        %v4004 = vsel %vm3997, %v4000, %v4003
        %v4005 = vsel %vm3994, nan, %v4004
        %v4006 = vand.u32 2147483647, %v381
        %vm4007 = vcmp.le.f32.partialorder %v4006, 0.7853982
        %vm4008 = vcmp.lt.s32.totalorder %v381, 0
        %v4009 = vand.u32 %v381, 2139095040
        %v4010 = vshrl.u32 %v4009, 23
        %v4011 = vsub.s32 %v4010, 127
        %v4012 = vand.u32 2147483647, %v381
        %v4013 = vand.u32 %v4012, 8388607
        %v4014 = vor.u32 %v4013, 8388608
        %v4015 = vsub.s32 0, %v4014
        %v4016 = vadd.s32 %v4011, 1
        %vm4017 = vcmp.gt.s32.totalorder %v4016, 0
        %v4018 = vsel %vm4017, %v4016, 0
        %v4019 = vshrl.u32 %v4018, 5
        %v4020 = vand.u32 %v4018, 31
        %v4021 = vsub.s32 32, %v4020
        %v4022 = vshrl.u32 683565275, %v4021
        %v4023 = vshll.u32 683565275, %v4020
        %v4024 = vshrl.u32 2475754826, %v4021
        %v4025 = vor.u32 %v4023, %v4024
        %v4026 = vshll.u32 2475754826, %v4020
        %v4027 = vshrl.u32 2131351028, %v4021
        %v4028 = vor.u32 %v4026, %v4027
        %v4029 = vshll.u32 2131351028, %v4020
        %v4030 = vshrl.u32 2102212464, %v4021
        %v4031 = vor.u32 %v4029, %v4030
        %v4032 = vshll.u32 2102212464, %v4020
        %v4033 = vshrl.u32 920167782, %v4021
        %v4034 = vor.u32 %v4032, %v4033
        %v4035 = vshll.u32 920167782, %v4020
        %v4036 = vshrl.u32 1326507024, %v4021
        %v4037 = vor.u32 %v4035, %v4036
        %vm4038 = vcmp.lt.s32.totalorder %v4019, 1
        %vm4039 = vcmp.lt.s32.totalorder %v4019, 2
        %vm4040 = vcmp.lt.s32.totalorder %v4019, 3
        %vm4041 = vcmp.lt.s32.totalorder %v4019, 4
        %v4042 = vsel %vm4038, %v4022, %v4025
        %v4043 = vsel %vm4041, %v4031, 2102212464
        %v4044 = vsel %vm4040, %v4028, %v4043
        %v4045 = vsel %vm4039, %v4042, %v4044
        %v4046 = vsel %vm4038, %v4025, %v4028
        %v4047 = vsel %vm4041, %v4034, 920167782
        %v4048 = vsel %vm4040, %v4031, %v4047
        %v4049 = vsel %vm4039, %v4046, %v4048
        %v4050 = vsel %vm4038, %v4028, %v4031
        %v4051 = vsel %vm4041, %v4037, 1326507024
        %v4052 = vsel %vm4040, %v4034, %v4051
        %v4053 = vsel %vm4039, %v4050, %v4052
        %v4054 = vshll.u32 %v4014, 8
        %v4055 = vmul.u32.u64.compose %v4054, %v4053
        %v4056 = vextract.low.u32 %v4055
        %v4057 = vextract.high.u32 %v4055
        %v4058 = vmul.u32.u64.compose %v4054, %v4049
        %v4059 = vextract.low.u32 %v4058
        %v4060 = vextract.high.u32 %v4058
        %v4061 = vmul.u32 %v4054, %v4045
        %v4062 = vadd.s32 %v4057, %v4059
        %vm4063 = vc.u32 %v4057, %v4059
        %v4064 = vadd.s32 %v4060, 1
        %v4065 = vsel %vm4063, %v4064, %v4060
        %v4066 = vadd.s32 %v4061, %v4065
        %v4067 = vadd.s32 %v4066, 536870912
        %v4068 = vshrl.u32 %v4067, 30
        %v4069 = vshll.u32 %v4068, 30
        %v4070 = vsub.s32 %v4066, %v4069
        %vm4071 = vcmp.lt.s32.totalorder %v4070, 0
        %v4072 = vsub.s32 0, %v4070
        %v4073 = vsel %vm4071, %v4072, %v4070
        %v4074 = vclz %v4073
        %v4075 = vsub.s32 %v4074, 2
        %vm4076 = vcmp.gt.s32.totalorder 0, %v4075
        %v4077 = vsel %vm4076, 0, %v4075
        %v4078 = vsub.s32 32, %v4077
        %v4079 = vshll.u32 %v4070, %v4077
        %v4080 = vshrl.u32 %v4062, %v4078
        %v4081 = vor.u32 %v4079, %v4080
        %v4082 = vsub.s32 4294967266, %v4077
        %v4083 = vadd.s32 %v4082, 127
        %v4084 = vshll.u32 %v4083, 23
        %v4085 = vor.u32 4788187, %v4084
        %v4086 = vand.u32 2147483647, %v4085
        %v4088 = vcvt.s32.f32 %v4081
        %v4089 = vmul.f32 %v4088, %v4086
        %v4090 = vxor.u32 %v4089, 2147483648
        %v4091 = vsel %vm4008, %v4090, %v4089
        %v4092 = vsub.s32 4, %v4068
        %v4093 = vsel %vm4008, %v4092, %v4068
        %v4094 = vsel %vm4007, %v381, %v4091
        %v4095 = vsel %vm4007, 0, %v4093
        %v4096 = vcosq.f32.pop %v4094
        %v4097 = vsinq.f32.pop %v4094
        %vm4098 = vweird.f32 %v381
        %v4099 = vadd.s32 %v4095, 3
        %v4100 = vand.u32 %v4099, 3
        %vm4101 = vcmp.lt.s32.totalorder %v4100, 2
        %vm4102 = vcmp.eq.s32.totalorder %v4100, 0
        %v4103 = vxor.u32 %v4097, 2147483648
        %v4104 = vsel %vm4102, %v4096, %v4103
        %vm4105 = vcmp.eq.s32.totalorder %v4100, 2
        %v4106 = vxor.u32 %v4096, 2147483648
        %v4107 = vsel %vm4105, %v4106, %v4097
        %v4108 = vsel %vm4101, %v4104, %v4107
        %v4109 = vsel %vm4098, nan, %v4108
        %v4110 = vand.u32 2147483647, %v382
        %vm4111 = vcmp.le.f32.partialorder %v4110, 0.7853982
        %vm4112 = vcmp.lt.s32.totalorder %v382, 0
        %v4113 = vand.u32 %v382, 2139095040
        %v4114 = vshrl.u32 %v4113, 23
        %v4115 = vsub.s32 %v4114, 127
        %v4116 = vand.u32 2147483647, %v382
        %v4117 = vand.u32 %v4116, 8388607
        %v4118 = vor.u32 %v4117, 8388608
        %v4119 = vsub.s32 0, %v4118
        %v4120 = vadd.s32 %v4115, 1
        %vm4121 = vcmp.gt.s32.totalorder %v4120, 0
        %v4122 = vsel %vm4121, %v4120, 0
        %v4123 = vshrl.u32 %v4122, 5
        %v4124 = vand.u32 %v4122, 31
        %v4125 = vsub.s32 32, %v4124
        %v4126 = vshrl.u32 683565275, %v4125
        %v4127 = vshll.u32 683565275, %v4124
        %v4128 = vshrl.u32 2475754826, %v4125
        %v4129 = vor.u32 %v4127, %v4128
        %v4130 = vshll.u32 2475754826, %v4124
        %v4131 = vshrl.u32 2131351028, %v4125
        %v4132 = vor.u32 %v4130, %v4131
        %v4133 = vshll.u32 2131351028, %v4124
        %v4134 = vshrl.u32 2102212464, %v4125
        %v4135 = vor.u32 %v4133, %v4134
        %v4136 = vshll.u32 2102212464, %v4124
        %v4137 = vshrl.u32 920167782, %v4125
        %v4138 = vor.u32 %v4136, %v4137
        %v4139 = vshll.u32 920167782, %v4124
        %v4140 = vshrl.u32 1326507024, %v4125
        %v4141 = vor.u32 %v4139, %v4140
        %vm4142 = vcmp.lt.s32.totalorder %v4123, 1
        %vm4143 = vcmp.lt.s32.totalorder %v4123, 2
        %vm4144 = vcmp.lt.s32.totalorder %v4123, 3
        %vm4145 = vcmp.lt.s32.totalorder %v4123, 4
        %v4146 = vsel %vm4142, %v4126, %v4129
        %v4147 = vsel %vm4145, %v4135, 2102212464
        %v4148 = vsel %vm4144, %v4132, %v4147
        %v4149 = vsel %vm4143, %v4146, %v4148
        %v4150 = vsel %vm4142, %v4129, %v4132
        %v4151 = vsel %vm4145, %v4138, 920167782
        %v4152 = vsel %vm4144, %v4135, %v4151
        %v4153 = vsel %vm4143, %v4150, %v4152
        %v4154 = vsel %vm4142, %v4132, %v4135
        %v4155 = vsel %vm4145, %v4141, 1326507024
        %v4156 = vsel %vm4144, %v4138, %v4155
        %v4157 = vsel %vm4143, %v4154, %v4156
        %v4158 = vshll.u32 %v4118, 8
        %v4159 = vmul.u32.u64.compose %v4158, %v4157
        %v4160 = vextract.low.u32 %v4159
        %v4161 = vextract.high.u32 %v4159
        %v4162 = vmul.u32.u64.compose %v4158, %v4153
        %v4163 = vextract.low.u32 %v4162
        %v4164 = vextract.high.u32 %v4162
        %v4165 = vmul.u32 %v4158, %v4149
        %v4166 = vadd.s32 %v4161, %v4163
        %vm4167 = vc.u32 %v4161, %v4163
        %v4168 = vadd.s32 %v4164, 1
        %v4169 = vsel %vm4167, %v4168, %v4164
        %v4170 = vadd.s32 %v4165, %v4169
        %v4171 = vadd.s32 %v4170, 536870912
        %v4172 = vshrl.u32 %v4171, 30
        %v4173 = vshll.u32 %v4172, 30
        %v4174 = vsub.s32 %v4170, %v4173
        %vm4175 = vcmp.lt.s32.totalorder %v4174, 0
        %v4176 = vsub.s32 0, %v4174
        %v4177 = vsel %vm4175, %v4176, %v4174
        %v4178 = vclz %v4177
        %v4179 = vsub.s32 %v4178, 2
        %vm4180 = vcmp.gt.s32.totalorder 0, %v4179
        %v4181 = vsel %vm4180, 0, %v4179
        %v4182 = vsub.s32 32, %v4181
        %v4183 = vshll.u32 %v4174, %v4181
        %v4184 = vshrl.u32 %v4166, %v4182
        %v4185 = vor.u32 %v4183, %v4184
        %v4186 = vsub.s32 4294967266, %v4181
        %v4187 = vadd.s32 %v4186, 127
        %v4188 = vshll.u32 %v4187, 23
        %v4189 = vor.u32 4788187, %v4188
        %v4190 = vand.u32 2147483647, %v4189
        %v4192 = vcvt.s32.f32 %v4185
        %v4193 = vmul.f32 %v4192, %v4190
        %v4194 = vxor.u32 %v4193, 2147483648
        %v4195 = vsel %vm4112, %v4194, %v4193
        %v4196 = vsub.s32 4, %v4172
        %v4197 = vsel %vm4112, %v4196, %v4172
        %v4198 = vsel %vm4111, %v382, %v4195
        %v4199 = vsel %vm4111, 0, %v4197
        %v4200 = vcosq.f32.pop %v4198
        %v4201 = vsinq.f32.pop %v4198
        %vm4202 = vweird.f32 %v382
        %v4203 = vadd.s32 %v4199, 3
        %v4204 = vand.u32 %v4203, 3
        %vm4205 = vcmp.lt.s32.totalorder %v4204, 2
        %vm4206 = vcmp.eq.s32.totalorder %v4204, 0
        %v4207 = vxor.u32 %v4201, 2147483648
        %v4208 = vsel %vm4206, %v4200, %v4207
        %vm4209 = vcmp.eq.s32.totalorder %v4204, 2
        %v4210 = vxor.u32 %v4200, 2147483648
        %v4211 = vsel %vm4209, %v4210, %v4201
        %v4212 = vsel %vm4205, %v4208, %v4211
        %v4213 = vsel %vm4202, nan, %v4212
        %v4214 = vand.u32 2147483647, %v383
        %vm4215 = vcmp.le.f32.partialorder %v4214, 0.7853982
        %vm4216 = vcmp.lt.s32.totalorder %v383, 0
        %v4217 = vand.u32 %v383, 2139095040
        %v4218 = vshrl.u32 %v4217, 23
        %v4219 = vsub.s32 %v4218, 127
        %v4220 = vand.u32 2147483647, %v383
        %v4221 = vand.u32 %v4220, 8388607
        %v4222 = vor.u32 %v4221, 8388608
        %v4223 = vsub.s32 0, %v4222
        %v4224 = vadd.s32 %v4219, 1
        %vm4225 = vcmp.gt.s32.totalorder %v4224, 0
        %v4226 = vsel %vm4225, %v4224, 0
        %v4227 = vshrl.u32 %v4226, 5
        %v4228 = vand.u32 %v4226, 31
        %v4229 = vsub.s32 32, %v4228
        %v4230 = vshrl.u32 683565275, %v4229
        %v4231 = vshll.u32 683565275, %v4228
        %v4232 = vshrl.u32 2475754826, %v4229
        %v4233 = vor.u32 %v4231, %v4232
        %v4234 = vshll.u32 2475754826, %v4228
        %v4235 = vshrl.u32 2131351028, %v4229
        %v4236 = vor.u32 %v4234, %v4235
        %v4237 = vshll.u32 2131351028, %v4228
        %v4238 = vshrl.u32 2102212464, %v4229
        %v4239 = vor.u32 %v4237, %v4238
        %v4240 = vshll.u32 2102212464, %v4228
        %v4241 = vshrl.u32 920167782, %v4229
        %v4242 = vor.u32 %v4240, %v4241
        %v4243 = vshll.u32 920167782, %v4228
        %v4244 = vshrl.u32 1326507024, %v4229
        %v4245 = vor.u32 %v4243, %v4244
        %vm4246 = vcmp.lt.s32.totalorder %v4227, 1
        %vm4247 = vcmp.lt.s32.totalorder %v4227, 2
        %vm4248 = vcmp.lt.s32.totalorder %v4227, 3
        %vm4249 = vcmp.lt.s32.totalorder %v4227, 4
        %v4250 = vsel %vm4246, %v4230, %v4233
        %v4251 = vsel %vm4249, %v4239, 2102212464
        %v4252 = vsel %vm4248, %v4236, %v4251
        %v4253 = vsel %vm4247, %v4250, %v4252
        %v4254 = vsel %vm4246, %v4233, %v4236
        %v4255 = vsel %vm4249, %v4242, 920167782
        %v4256 = vsel %vm4248, %v4239, %v4255
        %v4257 = vsel %vm4247, %v4254, %v4256
        %v4258 = vsel %vm4246, %v4236, %v4239
        %v4259 = vsel %vm4249, %v4245, 1326507024
        %v4260 = vsel %vm4248, %v4242, %v4259
        %v4261 = vsel %vm4247, %v4258, %v4260
        %v4262 = vshll.u32 %v4222, 8
        %v4263 = vmul.u32.u64.compose %v4262, %v4261
        %v4264 = vextract.low.u32 %v4263
        %v4265 = vextract.high.u32 %v4263
        %v4266 = vmul.u32.u64.compose %v4262, %v4257
        %v4267 = vextract.low.u32 %v4266
        %v4268 = vextract.high.u32 %v4266
        %v4269 = vmul.u32 %v4262, %v4253
        %v4270 = vadd.s32 %v4265, %v4267
        %vm4271 = vc.u32 %v4265, %v4267
        %v4272 = vadd.s32 %v4268, 1
        %v4273 = vsel %vm4271, %v4272, %v4268
        %v4274 = vadd.s32 %v4269, %v4273
        %v4275 = vadd.s32 %v4274, 536870912
        %v4276 = vshrl.u32 %v4275, 30
        %v4277 = vshll.u32 %v4276, 30
        %v4278 = vsub.s32 %v4274, %v4277
        %vm4279 = vcmp.lt.s32.totalorder %v4278, 0
        %v4280 = vsub.s32 0, %v4278
        %v4281 = vsel %vm4279, %v4280, %v4278
        %v4282 = vclz %v4281
        %v4283 = vsub.s32 %v4282, 2
        %vm4284 = vcmp.gt.s32.totalorder 0, %v4283
        %v4285 = vsel %vm4284, 0, %v4283
        %v4286 = vsub.s32 32, %v4285
        %v4287 = vshll.u32 %v4278, %v4285
        %v4288 = vshrl.u32 %v4270, %v4286
        %v4289 = vor.u32 %v4287, %v4288
        %v4290 = vsub.s32 4294967266, %v4285
        %v4291 = vadd.s32 %v4290, 127
        %v4292 = vshll.u32 %v4291, 23
        %v4293 = vor.u32 4788187, %v4292
        %v4294 = vand.u32 2147483647, %v4293
        %v4296 = vcvt.s32.f32 %v4289
        %v4297 = vmul.f32 %v4296, %v4294
        %v4298 = vxor.u32 %v4297, 2147483648
        %v4299 = vsel %vm4216, %v4298, %v4297
        %v4300 = vsub.s32 4, %v4276
        %v4301 = vsel %vm4216, %v4300, %v4276
        %v4302 = vsel %vm4215, %v383, %v4299
        %v4303 = vsel %vm4215, 0, %v4301
        %v4304 = vcosq.f32.pop %v4302
        %v4305 = vsinq.f32.pop %v4302
        %vm4306 = vweird.f32 %v383
        %v4307 = vadd.s32 %v4303, 3
        %v4308 = vand.u32 %v4307, 3
        %vm4309 = vcmp.lt.s32.totalorder %v4308, 2
        %vm4310 = vcmp.eq.s32.totalorder %v4308, 0
        %v4311 = vxor.u32 %v4305, 2147483648
        %v4312 = vsel %vm4310, %v4304, %v4311
        %vm4313 = vcmp.eq.s32.totalorder %v4308, 2
        %v4314 = vxor.u32 %v4304, 2147483648
        %v4315 = vsel %vm4313, %v4314, %v4305
        %v4316 = vsel %vm4309, %v4312, %v4315
        %v4317 = vsel %vm4306, nan, %v4316
        %v4318 = vand.u32 2147483647, %v384
        %vm4319 = vcmp.le.f32.partialorder %v4318, 0.7853982
        %vm4320 = vcmp.lt.s32.totalorder %v384, 0
        %v4321 = vand.u32 %v384, 2139095040
        %v4322 = vshrl.u32 %v4321, 23
        %v4323 = vsub.s32 %v4322, 127
        %v4324 = vand.u32 2147483647, %v384
        %v4325 = vand.u32 %v4324, 8388607
        %v4326 = vor.u32 %v4325, 8388608
        %v4327 = vsub.s32 0, %v4326
        %v4328 = vadd.s32 %v4323, 1
        %vm4329 = vcmp.gt.s32.totalorder %v4328, 0
        %v4330 = vsel %vm4329, %v4328, 0
        %v4331 = vshrl.u32 %v4330, 5
        %v4332 = vand.u32 %v4330, 31
        %v4333 = vsub.s32 32, %v4332
        %v4334 = vshrl.u32 683565275, %v4333
        %v4335 = vshll.u32 683565275, %v4332
        %v4336 = vshrl.u32 2475754826, %v4333
        %v4337 = vor.u32 %v4335, %v4336
        %v4338 = vshll.u32 2475754826, %v4332
        %v4339 = vshrl.u32 2131351028, %v4333
        %v4340 = vor.u32 %v4338, %v4339
        %v4341 = vshll.u32 2131351028, %v4332
        %v4342 = vshrl.u32 2102212464, %v4333
        %v4343 = vor.u32 %v4341, %v4342
        %v4344 = vshll.u32 2102212464, %v4332
        %v4345 = vshrl.u32 920167782, %v4333
        %v4346 = vor.u32 %v4344, %v4345
        %v4347 = vshll.u32 920167782, %v4332
        %v4348 = vshrl.u32 1326507024, %v4333
        %v4349 = vor.u32 %v4347, %v4348
        %vm4350 = vcmp.lt.s32.totalorder %v4331, 1
        %vm4351 = vcmp.lt.s32.totalorder %v4331, 2
        %vm4352 = vcmp.lt.s32.totalorder %v4331, 3
        %vm4353 = vcmp.lt.s32.totalorder %v4331, 4
        %v4354 = vsel %vm4350, %v4334, %v4337
        %v4355 = vsel %vm4353, %v4343, 2102212464
        %v4356 = vsel %vm4352, %v4340, %v4355
        %v4357 = vsel %vm4351, %v4354, %v4356
        %v4358 = vsel %vm4350, %v4337, %v4340
        %v4359 = vsel %vm4353, %v4346, 920167782
        %v4360 = vsel %vm4352, %v4343, %v4359
        %v4361 = vsel %vm4351, %v4358, %v4360
        %v4362 = vsel %vm4350, %v4340, %v4343
        %v4363 = vsel %vm4353, %v4349, 1326507024
        %v4364 = vsel %vm4352, %v4346, %v4363
        %v4365 = vsel %vm4351, %v4362, %v4364
        %v4366 = vshll.u32 %v4326, 8
        %v4367 = vmul.u32.u64.compose %v4366, %v4365
        %v4368 = vextract.low.u32 %v4367
        %v4369 = vextract.high.u32 %v4367
        %v4370 = vmul.u32.u64.compose %v4366, %v4361
        %v4371 = vextract.low.u32 %v4370
        %v4372 = vextract.high.u32 %v4370
        %v4373 = vmul.u32 %v4366, %v4357
        %v4374 = vadd.s32 %v4369, %v4371
        %vm4375 = vc.u32 %v4369, %v4371
        %v4376 = vadd.s32 %v4372, 1
        %v4377 = vsel %vm4375, %v4376, %v4372
        %v4378 = vadd.s32 %v4373, %v4377
        %v4379 = vadd.s32 %v4378, 536870912
        %v4380 = vshrl.u32 %v4379, 30
        %v4381 = vshll.u32 %v4380, 30
        %v4382 = vsub.s32 %v4378, %v4381
        %vm4383 = vcmp.lt.s32.totalorder %v4382, 0
        %v4384 = vsub.s32 0, %v4382
        %v4385 = vsel %vm4383, %v4384, %v4382
        %v4386 = vclz %v4385
        %v4387 = vsub.s32 %v4386, 2
        %vm4388 = vcmp.gt.s32.totalorder 0, %v4387
        %v4389 = vsel %vm4388, 0, %v4387
        %v4390 = vsub.s32 32, %v4389
        %v4391 = vshll.u32 %v4382, %v4389
        %v4392 = vshrl.u32 %v4374, %v4390
        %v4393 = vor.u32 %v4391, %v4392
        %v4394 = vsub.s32 4294967266, %v4389
        %v4395 = vadd.s32 %v4394, 127
        %v4396 = vshll.u32 %v4395, 23
        %v4397 = vor.u32 4788187, %v4396
        %v4398 = vand.u32 2147483647, %v4397
        %v4400 = vcvt.s32.f32 %v4393
        %v4401 = vmul.f32 %v4400, %v4398
        %v4402 = vxor.u32 %v4401, 2147483648
        %v4403 = vsel %vm4320, %v4402, %v4401
        %v4404 = vsub.s32 4, %v4380
        %v4405 = vsel %vm4320, %v4404, %v4380
        %v4406 = vsel %vm4319, %v384, %v4403
        %v4407 = vsel %vm4319, 0, %v4405
        %v4408 = vcosq.f32.pop %v4406
        %v4409 = vsinq.f32.pop %v4406
        %vm4410 = vweird.f32 %v384
        %v4411 = vadd.s32 %v4407, 3
        %v4412 = vand.u32 %v4411, 3
        %vm4413 = vcmp.lt.s32.totalorder %v4412, 2
        %vm4414 = vcmp.eq.s32.totalorder %v4412, 0
        %v4415 = vxor.u32 %v4409, 2147483648
        %v4416 = vsel %vm4414, %v4408, %v4415
        %vm4417 = vcmp.eq.s32.totalorder %v4412, 2
        %v4418 = vxor.u32 %v4408, 2147483648
        %v4419 = vsel %vm4417, %v4418, %v4409
        %v4420 = vsel %vm4413, %v4416, %v4419
        %v4421 = vsel %vm4410, nan, %v4420
        %v4422 = vand.u32 2147483647, %v385
        %vm4423 = vcmp.le.f32.partialorder %v4422, 0.7853982
        %vm4424 = vcmp.lt.s32.totalorder %v385, 0
        %v4425 = vand.u32 %v385, 2139095040
        %v4426 = vshrl.u32 %v4425, 23
        %v4427 = vsub.s32 %v4426, 127
        %v4428 = vand.u32 2147483647, %v385
        %v4429 = vand.u32 %v4428, 8388607
        %v4430 = vor.u32 %v4429, 8388608
        %v4431 = vsub.s32 0, %v4430
        %v4432 = vadd.s32 %v4427, 1
        %vm4433 = vcmp.gt.s32.totalorder %v4432, 0
        %v4434 = vsel %vm4433, %v4432, 0
        %v4435 = vshrl.u32 %v4434, 5
        %v4436 = vand.u32 %v4434, 31
        %v4437 = vsub.s32 32, %v4436
        %v4438 = vshrl.u32 683565275, %v4437
        %v4439 = vshll.u32 683565275, %v4436
        %v4440 = vshrl.u32 2475754826, %v4437
        %v4441 = vor.u32 %v4439, %v4440
        %v4442 = vshll.u32 2475754826, %v4436
        %v4443 = vshrl.u32 2131351028, %v4437
        %v4444 = vor.u32 %v4442, %v4443
        %v4445 = vshll.u32 2131351028, %v4436
        %v4446 = vshrl.u32 2102212464, %v4437
        %v4447 = vor.u32 %v4445, %v4446
        %v4448 = vshll.u32 2102212464, %v4436
        %v4449 = vshrl.u32 920167782, %v4437
        %v4450 = vor.u32 %v4448, %v4449
        %v4451 = vshll.u32 920167782, %v4436
        %v4452 = vshrl.u32 1326507024, %v4437
        %v4453 = vor.u32 %v4451, %v4452
        %vm4454 = vcmp.lt.s32.totalorder %v4435, 1
        %vm4455 = vcmp.lt.s32.totalorder %v4435, 2
        %vm4456 = vcmp.lt.s32.totalorder %v4435, 3
        %vm4457 = vcmp.lt.s32.totalorder %v4435, 4
        %v4458 = vsel %vm4454, %v4438, %v4441
        %v4459 = vsel %vm4457, %v4447, 2102212464
        %v4460 = vsel %vm4456, %v4444, %v4459
        %v4461 = vsel %vm4455, %v4458, %v4460
        %v4462 = vsel %vm4454, %v4441, %v4444
        %v4463 = vsel %vm4457, %v4450, 920167782
        %v4464 = vsel %vm4456, %v4447, %v4463
        %v4465 = vsel %vm4455, %v4462, %v4464
        %v4466 = vsel %vm4454, %v4444, %v4447
        %v4467 = vsel %vm4457, %v4453, 1326507024
        %v4468 = vsel %vm4456, %v4450, %v4467
        %v4469 = vsel %vm4455, %v4466, %v4468
        %v4470 = vshll.u32 %v4430, 8
        %v4471 = vmul.u32.u64.compose %v4470, %v4469
        %v4472 = vextract.low.u32 %v4471
        %v4473 = vextract.high.u32 %v4471
        %v4474 = vmul.u32.u64.compose %v4470, %v4465
        %v4475 = vextract.low.u32 %v4474
        %v4476 = vextract.high.u32 %v4474
        %v4477 = vmul.u32 %v4470, %v4461
        %v4478 = vadd.s32 %v4473, %v4475
        %vm4479 = vc.u32 %v4473, %v4475
        %v4480 = vadd.s32 %v4476, 1
        %v4481 = vsel %vm4479, %v4480, %v4476
        %v4482 = vadd.s32 %v4477, %v4481
        %v4483 = vadd.s32 %v4482, 536870912
        %v4484 = vshrl.u32 %v4483, 30
        %v4485 = vshll.u32 %v4484, 30
        %v4486 = vsub.s32 %v4482, %v4485
        %vm4487 = vcmp.lt.s32.totalorder %v4486, 0
        %v4488 = vsub.s32 0, %v4486
        %v4489 = vsel %vm4487, %v4488, %v4486
        %v4490 = vclz %v4489
        %v4491 = vsub.s32 %v4490, 2
        %vm4492 = vcmp.gt.s32.totalorder 0, %v4491
        %v4493 = vsel %vm4492, 0, %v4491
        %v4494 = vsub.s32 32, %v4493
        %v4495 = vshll.u32 %v4486, %v4493
        %v4496 = vshrl.u32 %v4478, %v4494
        %v4497 = vor.u32 %v4495, %v4496
        %v4498 = vsub.s32 4294967266, %v4493
        %v4499 = vadd.s32 %v4498, 127
        %v4500 = vshll.u32 %v4499, 23
        %v4501 = vor.u32 4788187, %v4500
        %v4502 = vand.u32 2147483647, %v4501
        %v4504 = vcvt.s32.f32 %v4497
        %v4505 = vmul.f32 %v4504, %v4502
        %v4506 = vxor.u32 %v4505, 2147483648
        %v4507 = vsel %vm4424, %v4506, %v4505
        %v4508 = vsub.s32 4, %v4484
        %v4509 = vsel %vm4424, %v4508, %v4484
        %v4510 = vsel %vm4423, %v385, %v4507
        %v4511 = vsel %vm4423, 0, %v4509
        %v4512 = vcosq.f32.pop %v4510
        %v4513 = vsinq.f32.pop %v4510
        %vm4514 = vweird.f32 %v385
        %v4515 = vadd.s32 %v4511, 3
        %v4516 = vand.u32 %v4515, 3
        %vm4517 = vcmp.lt.s32.totalorder %v4516, 2
        %vm4518 = vcmp.eq.s32.totalorder %v4516, 0
        %v4519 = vxor.u32 %v4513, 2147483648
        %v4520 = vsel %vm4518, %v4512, %v4519
        %vm4521 = vcmp.eq.s32.totalorder %v4516, 2
        %v4522 = vxor.u32 %v4512, 2147483648
        %v4523 = vsel %vm4521, %v4522, %v4513
        %v4524 = vsel %vm4517, %v4520, %v4523
        %v4525 = vsel %vm4514, nan, %v4524
        %v4536 = vcombine.low %v488, %v591
        %v4537 = vcombine.high %v488, %v591
        %v4538 = vcombine.low %v694, %v797
        %v4539 = vcombine.high %v694, %v797
        %v4540 = vcombine.high %v900, %v900
        %v4542 = vunpack.c.l.s4 1966171168
        %v4543 = vunpack.c.0.s8 %v4542
        %v4544 = vlaneseq
        %v4545 = vshrl.u32 %v4544, 7
        %v4546 = vsub.s32 %v4543, %v4545
        %v4547 = vrot.slane %v4536, %v4546
        %v4549 = vunpack.c.l.s4 1966171168
        %v4550 = vunpack.c.0.s8 %v4549
        %v4551 = vlaneseq
        %v4552 = vshrl.u32 %v4551, 7
        %v4553 = vsub.s32 %v4550, %v4552
        %v4554 = vrot.slane %v4537, %v4553
        %v4556 = vunpack.c.l.s4 1966171168
        %v4557 = vunpack.c.0.s8 %v4556
        %v4558 = vlaneseq
        %v4559 = vshrl.u32 %v4558, 7
        %v4560 = vsub.s32 %v4557, %v4559
        %v4561 = vrot.slane %v4538, %v4560
        %v4563 = vunpack.c.l.s4 1966171168
        %v4564 = vunpack.c.0.s8 %v4563
        %v4565 = vlaneseq
        %v4566 = vshrl.u32 %v4565, 7
        %v4567 = vsub.s32 %v4564, %v4566
        %v4568 = vrot.slane %v4539, %v4567
        %v4570 = vunpack.c.l.s4 1966171168
        %v4571 = vunpack.c.0.s8 %v4570
        %v4572 = vlaneseq
        %v4573 = vshrl.u32 %v4572, 7
        %v4574 = vsub.s32 %v4571, %v4573
        %v4575 = vrot.slane %v900, %v4574
        %v4577 = vunpack.c.l.s4 1966171168
        %v4578 = vunpack.c.0.s8 %v4577
        %v4579 = vlaneseq
        %v4580 = vshrl.u32 %v4579, 7
        %v4581 = vsub.s32 %v4578, %v4580
        %v4582 = vrot.slane %v4540, %v4581
        %v4583 = vcombine.low %v4547, %v4561
        %v4584 = vcombine.high %v4547, %v4561
        %v4585 = vcombine.low %v4554, %v4568
        %v4586 = vcombine.high %v4554, %v4568
        %v4587 = vcombine.high %v4575, %v4575
        %v4588 = vcombine.high %v4582, %v4582
        %v4590 = vunpack.c.l.s4 1966171168
        %v4591 = vunpack.c.0.s8 %v4590
        %v4592 = vlaneseq
        %v4593 = vshrl.u32 %v4592, 7
        %v4594 = vsub.s32 %v4591, %v4593
        %v4595 = vrot.slane %v4583, %v4594
        %v4597 = vunpack.c.l.s4 1966171168
        %v4598 = vunpack.c.0.s8 %v4597
        %v4599 = vlaneseq
        %v4600 = vshrl.u32 %v4599, 7
        %v4601 = vsub.s32 %v4598, %v4600
        %v4602 = vrot.slane %v4585, %v4601
        %v4604 = vunpack.c.l.s4 1966171168
        %v4605 = vunpack.c.0.s8 %v4604
        %v4606 = vlaneseq
        %v4607 = vshrl.u32 %v4606, 7
        %v4608 = vsub.s32 %v4605, %v4607
        %v4609 = vrot.slane %v4584, %v4608
        %v4611 = vunpack.c.l.s4 1966171168
        %v4612 = vunpack.c.0.s8 %v4611
        %v4613 = vlaneseq
        %v4614 = vshrl.u32 %v4613, 7
        %v4615 = vsub.s32 %v4612, %v4614
        %v4616 = vrot.slane %v4586, %v4615
        %v4618 = vunpack.c.l.s4 1966171168
        %v4619 = vunpack.c.0.s8 %v4618
        %v4620 = vlaneseq
        %v4621 = vshrl.u32 %v4620, 7
        %v4622 = vsub.s32 %v4619, %v4621
        %v4623 = vrot.slane %v4575, %v4622
        %v4625 = vunpack.c.l.s4 1966171168
        %v4626 = vunpack.c.0.s8 %v4625
        %v4627 = vlaneseq
        %v4628 = vshrl.u32 %v4627, 7
        %v4629 = vsub.s32 %v4626, %v4628
        %v4630 = vrot.slane %v4582, %v4629
        %v4632 = vunpack.c.l.s4 1966171168
        %v4633 = vunpack.c.0.s8 %v4632
        %v4634 = vlaneseq
        %v4635 = vshrl.u32 %v4634, 7
        %v4636 = vsub.s32 %v4633, %v4635
        %v4637 = vrot.slane %v4587, %v4636
        %v4639 = vunpack.c.l.s4 1966171168
        %v4640 = vunpack.c.0.s8 %v4639
        %v4641 = vlaneseq
        %v4642 = vshrl.u32 %v4641, 7
        %v4643 = vsub.s32 %v4640, %v4642
        %v4644 = vrot.slane %v4588, %v4643
        %v4645 = vcombine.low %v4595, %v4623
        %v4646 = vcombine.high %v4595, %v4623
        %v4647 = vcombine.low %v4602, %v4630
        %v4648 = vcombine.high %v4602, %v4630
        %v4649 = vcombine.low %v4609, %v4637
        %v4650 = vcombine.high %v4609, %v4637
        %v4651 = vcombine.low %v4616, %v4644
        %v4652 = vcombine.high %v4616, %v4644
        %v4653 = vcombine.low %v1003, %v1106
        %v4654 = vcombine.high %v1003, %v1106
        %v4655 = vcombine.low %v1209, %v1312
        %v4656 = vcombine.high %v1209, %v1312
        %v4657 = vcombine.high %v1415, %v1415
        %v4659 = vunpack.c.l.s4 1966171168
        %v4660 = vunpack.c.0.s8 %v4659
        %v4661 = vlaneseq
        %v4662 = vshrl.u32 %v4661, 7
        %v4663 = vsub.s32 %v4660, %v4662
        %v4664 = vrot.slane %v4653, %v4663
        %v4666 = vunpack.c.l.s4 1966171168
        %v4667 = vunpack.c.0.s8 %v4666
        %v4668 = vlaneseq
        %v4669 = vshrl.u32 %v4668, 7
        %v4670 = vsub.s32 %v4667, %v4669
        %v4671 = vrot.slane %v4654, %v4670
        %v4673 = vunpack.c.l.s4 1966171168
        %v4674 = vunpack.c.0.s8 %v4673
        %v4675 = vlaneseq
        %v4676 = vshrl.u32 %v4675, 7
        %v4677 = vsub.s32 %v4674, %v4676
        %v4678 = vrot.slane %v4655, %v4677
        %v4680 = vunpack.c.l.s4 1966171168
        %v4681 = vunpack.c.0.s8 %v4680
        %v4682 = vlaneseq
        %v4683 = vshrl.u32 %v4682, 7
        %v4684 = vsub.s32 %v4681, %v4683
        %v4685 = vrot.slane %v4656, %v4684
        %v4687 = vunpack.c.l.s4 1966171168
        %v4688 = vunpack.c.0.s8 %v4687
        %v4689 = vlaneseq
        %v4690 = vshrl.u32 %v4689, 7
        %v4691 = vsub.s32 %v4688, %v4690
        %v4692 = vrot.slane %v1415, %v4691
        %v4694 = vunpack.c.l.s4 1966171168
        %v4695 = vunpack.c.0.s8 %v4694
        %v4696 = vlaneseq
        %v4697 = vshrl.u32 %v4696, 7
        %v4698 = vsub.s32 %v4695, %v4697
        %v4699 = vrot.slane %v4657, %v4698
        %v4700 = vcombine.low %v4664, %v4678
        %v4701 = vcombine.high %v4664, %v4678
        %v4702 = vcombine.low %v4671, %v4685
        %v4703 = vcombine.high %v4671, %v4685
        %v4704 = vcombine.high %v4692, %v4692
        %v4705 = vcombine.high %v4699, %v4699
        %v4707 = vunpack.c.l.s4 1966171168
        %v4708 = vunpack.c.0.s8 %v4707
        %v4709 = vlaneseq
        %v4710 = vshrl.u32 %v4709, 7
        %v4711 = vsub.s32 %v4708, %v4710
        %v4712 = vrot.slane %v4700, %v4711
        %v4714 = vunpack.c.l.s4 1966171168
        %v4715 = vunpack.c.0.s8 %v4714
        %v4716 = vlaneseq
        %v4717 = vshrl.u32 %v4716, 7
        %v4718 = vsub.s32 %v4715, %v4717
        %v4719 = vrot.slane %v4702, %v4718
        %v4721 = vunpack.c.l.s4 1966171168
        %v4722 = vunpack.c.0.s8 %v4721
        %v4723 = vlaneseq
        %v4724 = vshrl.u32 %v4723, 7
        %v4725 = vsub.s32 %v4722, %v4724
        %v4726 = vrot.slane %v4701, %v4725
        %v4728 = vunpack.c.l.s4 1966171168
        %v4729 = vunpack.c.0.s8 %v4728
        %v4730 = vlaneseq
        %v4731 = vshrl.u32 %v4730, 7
        %v4732 = vsub.s32 %v4729, %v4731
        %v4733 = vrot.slane %v4703, %v4732
        %v4735 = vunpack.c.l.s4 1966171168
        %v4736 = vunpack.c.0.s8 %v4735
        %v4737 = vlaneseq
        %v4738 = vshrl.u32 %v4737, 7
        %v4739 = vsub.s32 %v4736, %v4738
        %v4740 = vrot.slane %v4692, %v4739
        %v4742 = vunpack.c.l.s4 1966171168
        %v4743 = vunpack.c.0.s8 %v4742
        %v4744 = vlaneseq
        %v4745 = vshrl.u32 %v4744, 7
        %v4746 = vsub.s32 %v4743, %v4745
        %v4747 = vrot.slane %v4699, %v4746
        %v4749 = vunpack.c.l.s4 1966171168
        %v4750 = vunpack.c.0.s8 %v4749
        %v4751 = vlaneseq
        %v4752 = vshrl.u32 %v4751, 7
        %v4753 = vsub.s32 %v4750, %v4752
        %v4754 = vrot.slane %v4704, %v4753
        %v4756 = vunpack.c.l.s4 1966171168
        %v4757 = vunpack.c.0.s8 %v4756
        %v4758 = vlaneseq
        %v4759 = vshrl.u32 %v4758, 7
        %v4760 = vsub.s32 %v4757, %v4759
        %v4761 = vrot.slane %v4705, %v4760
        %v4762 = vcombine.low %v4712, %v4740
        %v4763 = vcombine.high %v4712, %v4740
        %v4764 = vcombine.low %v4719, %v4747
        %v4765 = vcombine.high %v4719, %v4747
        %v4766 = vcombine.low %v4726, %v4754
        %v4767 = vcombine.high %v4726, %v4754
        %v4768 = vcombine.low %v4733, %v4761
        %v4769 = vcombine.high %v4733, %v4761
        %v4780 = vcombine.low %v1519, %v1623
        %v4781 = vcombine.high %v1519, %v1623
        %v4782 = vcombine.low %v1727, %v1831
        %v4783 = vcombine.high %v1727, %v1831
        %v4784 = vcombine.high %v1935, %v1935
        %v4786 = vunpack.c.l.s4 1966171168
        %v4787 = vunpack.c.0.s8 %v4786
        %v4788 = vlaneseq
        %v4789 = vshrl.u32 %v4788, 7
        %v4790 = vsub.s32 %v4787, %v4789
        %v4791 = vrot.slane %v4780, %v4790
        %v4793 = vunpack.c.l.s4 1966171168
        %v4794 = vunpack.c.0.s8 %v4793
        %v4795 = vlaneseq
        %v4796 = vshrl.u32 %v4795, 7
        %v4797 = vsub.s32 %v4794, %v4796
        %v4798 = vrot.slane %v4781, %v4797
        %v4800 = vunpack.c.l.s4 1966171168
        %v4801 = vunpack.c.0.s8 %v4800
        %v4802 = vlaneseq
        %v4803 = vshrl.u32 %v4802, 7
        %v4804 = vsub.s32 %v4801, %v4803
        %v4805 = vrot.slane %v4782, %v4804
        %v4807 = vunpack.c.l.s4 1966171168
        %v4808 = vunpack.c.0.s8 %v4807
        %v4809 = vlaneseq
        %v4810 = vshrl.u32 %v4809, 7
        %v4811 = vsub.s32 %v4808, %v4810
        %v4812 = vrot.slane %v4783, %v4811
        %v4814 = vunpack.c.l.s4 1966171168
        %v4815 = vunpack.c.0.s8 %v4814
        %v4816 = vlaneseq
        %v4817 = vshrl.u32 %v4816, 7
        %v4818 = vsub.s32 %v4815, %v4817
        %v4819 = vrot.slane %v1935, %v4818
        %v4821 = vunpack.c.l.s4 1966171168
        %v4822 = vunpack.c.0.s8 %v4821
        %v4823 = vlaneseq
        %v4824 = vshrl.u32 %v4823, 7
        %v4825 = vsub.s32 %v4822, %v4824
        %v4826 = vrot.slane %v4784, %v4825
        %v4827 = vcombine.low %v4791, %v4805
        %v4828 = vcombine.high %v4791, %v4805
        %v4829 = vcombine.low %v4798, %v4812
        %v4830 = vcombine.high %v4798, %v4812
        %v4831 = vcombine.high %v4819, %v4819
        %v4832 = vcombine.high %v4826, %v4826
        %v4834 = vunpack.c.l.s4 1966171168
        %v4835 = vunpack.c.0.s8 %v4834
        %v4836 = vlaneseq
        %v4837 = vshrl.u32 %v4836, 7
        %v4838 = vsub.s32 %v4835, %v4837
        %v4839 = vrot.slane %v4827, %v4838
        %v4841 = vunpack.c.l.s4 1966171168
        %v4842 = vunpack.c.0.s8 %v4841
        %v4843 = vlaneseq
        %v4844 = vshrl.u32 %v4843, 7
        %v4845 = vsub.s32 %v4842, %v4844
        %v4846 = vrot.slane %v4829, %v4845
        %v4848 = vunpack.c.l.s4 1966171168
        %v4849 = vunpack.c.0.s8 %v4848
        %v4850 = vlaneseq
        %v4851 = vshrl.u32 %v4850, 7
        %v4852 = vsub.s32 %v4849, %v4851
        %v4853 = vrot.slane %v4828, %v4852
        %v4855 = vunpack.c.l.s4 1966171168
        %v4856 = vunpack.c.0.s8 %v4855
        %v4857 = vlaneseq
        %v4858 = vshrl.u32 %v4857, 7
        %v4859 = vsub.s32 %v4856, %v4858
        %v4860 = vrot.slane %v4830, %v4859
        %v4862 = vunpack.c.l.s4 1966171168
        %v4863 = vunpack.c.0.s8 %v4862
        %v4864 = vlaneseq
        %v4865 = vshrl.u32 %v4864, 7
        %v4866 = vsub.s32 %v4863, %v4865
        %v4867 = vrot.slane %v4819, %v4866
        %v4869 = vunpack.c.l.s4 1966171168
        %v4870 = vunpack.c.0.s8 %v4869
        %v4871 = vlaneseq
        %v4872 = vshrl.u32 %v4871, 7
        %v4873 = vsub.s32 %v4870, %v4872
        %v4874 = vrot.slane %v4826, %v4873
        %v4876 = vunpack.c.l.s4 1966171168
        %v4877 = vunpack.c.0.s8 %v4876
        %v4878 = vlaneseq
        %v4879 = vshrl.u32 %v4878, 7
        %v4880 = vsub.s32 %v4877, %v4879
        %v4881 = vrot.slane %v4831, %v4880
        %v4883 = vunpack.c.l.s4 1966171168
        %v4884 = vunpack.c.0.s8 %v4883
        %v4885 = vlaneseq
        %v4886 = vshrl.u32 %v4885, 7
        %v4887 = vsub.s32 %v4884, %v4886
        %v4888 = vrot.slane %v4832, %v4887
        %v4889 = vcombine.low %v4839, %v4867
        %v4890 = vcombine.high %v4839, %v4867
        %v4891 = vcombine.low %v4846, %v4874
        %v4892 = vcombine.high %v4846, %v4874
        %v4893 = vcombine.low %v4853, %v4881
        %v4894 = vcombine.high %v4853, %v4881
        %v4895 = vcombine.low %v4860, %v4888
        %v4896 = vcombine.high %v4860, %v4888
        %v4897 = vcombine.low %v2039, %v2143
        %v4898 = vcombine.high %v2039, %v2143
        %v4899 = vcombine.low %v2247, %v2351
        %v4900 = vcombine.high %v2247, %v2351
        %v4901 = vcombine.high %v2455, %v2455
        %v4903 = vunpack.c.l.s4 1966171168
        %v4904 = vunpack.c.0.s8 %v4903
        %v4905 = vlaneseq
        %v4906 = vshrl.u32 %v4905, 7
        %v4907 = vsub.s32 %v4904, %v4906
        %v4908 = vrot.slane %v4897, %v4907
        %v4910 = vunpack.c.l.s4 1966171168
        %v4911 = vunpack.c.0.s8 %v4910
        %v4912 = vlaneseq
        %v4913 = vshrl.u32 %v4912, 7
        %v4914 = vsub.s32 %v4911, %v4913
        %v4915 = vrot.slane %v4898, %v4914
        %v4917 = vunpack.c.l.s4 1966171168
        %v4918 = vunpack.c.0.s8 %v4917
        %v4919 = vlaneseq
        %v4920 = vshrl.u32 %v4919, 7
        %v4921 = vsub.s32 %v4918, %v4920
        %v4922 = vrot.slane %v4899, %v4921
        %v4924 = vunpack.c.l.s4 1966171168
        %v4925 = vunpack.c.0.s8 %v4924
        %v4926 = vlaneseq
        %v4927 = vshrl.u32 %v4926, 7
        %v4928 = vsub.s32 %v4925, %v4927
        %v4929 = vrot.slane %v4900, %v4928
        %v4931 = vunpack.c.l.s4 1966171168
        %v4932 = vunpack.c.0.s8 %v4931
        %v4933 = vlaneseq
        %v4934 = vshrl.u32 %v4933, 7
        %v4935 = vsub.s32 %v4932, %v4934
        %v4936 = vrot.slane %v2455, %v4935
        %v4938 = vunpack.c.l.s4 1966171168
        %v4939 = vunpack.c.0.s8 %v4938
        %v4940 = vlaneseq
        %v4941 = vshrl.u32 %v4940, 7
        %v4942 = vsub.s32 %v4939, %v4941
        %v4943 = vrot.slane %v4901, %v4942
        %v4944 = vcombine.low %v4908, %v4922
        %v4945 = vcombine.high %v4908, %v4922
        %v4946 = vcombine.low %v4915, %v4929
        %v4947 = vcombine.high %v4915, %v4929
        %v4948 = vcombine.high %v4936, %v4936
        %v4949 = vcombine.high %v4943, %v4943
        %v4951 = vunpack.c.l.s4 1966171168
        %v4952 = vunpack.c.0.s8 %v4951
        %v4953 = vlaneseq
        %v4954 = vshrl.u32 %v4953, 7
        %v4955 = vsub.s32 %v4952, %v4954
        %v4956 = vrot.slane %v4944, %v4955
        %v4958 = vunpack.c.l.s4 1966171168
        %v4959 = vunpack.c.0.s8 %v4958
        %v4960 = vlaneseq
        %v4961 = vshrl.u32 %v4960, 7
        %v4962 = vsub.s32 %v4959, %v4961
        %v4963 = vrot.slane %v4946, %v4962
        %v4965 = vunpack.c.l.s4 1966171168
        %v4966 = vunpack.c.0.s8 %v4965
        %v4967 = vlaneseq
        %v4968 = vshrl.u32 %v4967, 7
        %v4969 = vsub.s32 %v4966, %v4968
        %v4970 = vrot.slane %v4945, %v4969
        %v4972 = vunpack.c.l.s4 1966171168
        %v4973 = vunpack.c.0.s8 %v4972
        %v4974 = vlaneseq
        %v4975 = vshrl.u32 %v4974, 7
        %v4976 = vsub.s32 %v4973, %v4975
        %v4977 = vrot.slane %v4947, %v4976
        %v4979 = vunpack.c.l.s4 1966171168
        %v4980 = vunpack.c.0.s8 %v4979
        %v4981 = vlaneseq
        %v4982 = vshrl.u32 %v4981, 7
        %v4983 = vsub.s32 %v4980, %v4982
        %v4984 = vrot.slane %v4936, %v4983
        %v4986 = vunpack.c.l.s4 1966171168
        %v4987 = vunpack.c.0.s8 %v4986
        %v4988 = vlaneseq
        %v4989 = vshrl.u32 %v4988, 7
        %v4990 = vsub.s32 %v4987, %v4989
        %v4991 = vrot.slane %v4943, %v4990
        %v4993 = vunpack.c.l.s4 1966171168
        %v4994 = vunpack.c.0.s8 %v4993
        %v4995 = vlaneseq
        %v4996 = vshrl.u32 %v4995, 7
        %v4997 = vsub.s32 %v4994, %v4996
        %v4998 = vrot.slane %v4948, %v4997
        %v5000 = vunpack.c.l.s4 1966171168
        %v5001 = vunpack.c.0.s8 %v5000
        %v5002 = vlaneseq
        %v5003 = vshrl.u32 %v5002, 7
        %v5004 = vsub.s32 %v5001, %v5003
        %v5005 = vrot.slane %v4949, %v5004
        %v5006 = vcombine.low %v4956, %v4984
        %v5007 = vcombine.high %v4956, %v4984
        %v5008 = vcombine.low %v4963, %v4991
        %v5009 = vcombine.high %v4963, %v4991
        %v5010 = vcombine.low %v4970, %v4998
        %v5011 = vcombine.high %v4970, %v4998
        %v5012 = vcombine.low %v4977, %v5005
        %v5013 = vcombine.high %v4977, %v5005
        %v5014 = vlaneseq
        %v5015 = vshrl.u32 %v5014, 7
        %v5016 = vsub.s32 0, %v5015
        %v5017 = vrot.slane %v4645, %v5016
        %v5018 = vlaneseq
        %v5019 = vshrl.u32 %v5018, 7
        %v5020 = vsub.s32 1, %v5019
        %v5021 = vrot.slane %v4645, %v5020
        %v5022 = vlaneseq
        %v5023 = vshrl.u32 %v5022, 7
        %v5024 = vsub.s32 2, %v5023
        %v5025 = vrot.slane %v4645, %v5024
        %v5026 = vlaneseq
        %v5027 = vshrl.u32 %v5026, 7
        %v5028 = vsub.s32 3, %v5027
        %v5029 = vrot.slane %v4645, %v5028
        %v5030 = vlaneseq
        %v5031 = vshrl.u32 %v5030, 7
        %v5032 = vsub.s32 4, %v5031
        %v5033 = vrot.slane %v4645, %v5032
        %v5034 = vlaneseq
        %v5035 = vshrl.u32 %v5034, 7
        %v5036 = vsub.s32 0, %v5035
        %v5037 = vrot.slane %v4649, %v5036
        %v5038 = vlaneseq
        %v5039 = vshrl.u32 %v5038, 7
        %v5040 = vsub.s32 1, %v5039
        %v5041 = vrot.slane %v4649, %v5040
        %v5042 = vlaneseq
        %v5043 = vshrl.u32 %v5042, 7
        %v5044 = vsub.s32 2, %v5043
        %v5045 = vrot.slane %v4649, %v5044
        %v5046 = vlaneseq
        %v5047 = vshrl.u32 %v5046, 7
        %v5048 = vsub.s32 3, %v5047
        %v5049 = vrot.slane %v4649, %v5048
        %v5050 = vlaneseq
        %v5051 = vshrl.u32 %v5050, 7
        %v5052 = vsub.s32 4, %v5051
        %v5053 = vrot.slane %v4649, %v5052
        %v5054 = vlaneseq
        %v5055 = vshrl.u32 %v5054, 7
        %v5056 = vsub.s32 0, %v5055
        %v5057 = vrot.slane %v4646, %v5056
        %v5058 = vlaneseq
        %v5059 = vshrl.u32 %v5058, 7
        %v5060 = vsub.s32 1, %v5059
        %v5061 = vrot.slane %v4646, %v5060
        %v5062 = vlaneseq
        %v5063 = vshrl.u32 %v5062, 7
        %v5064 = vsub.s32 2, %v5063
        %v5065 = vrot.slane %v4646, %v5064
        %v5066 = vlaneseq
        %v5067 = vshrl.u32 %v5066, 7
        %v5068 = vsub.s32 3, %v5067
        %v5069 = vrot.slane %v4646, %v5068
        %v5070 = vlaneseq
        %v5071 = vshrl.u32 %v5070, 7
        %v5072 = vsub.s32 4, %v5071
        %v5073 = vrot.slane %v4646, %v5072
        %v5074 = vlaneseq
        %v5075 = vshrl.u32 %v5074, 7
        %v5076 = vsub.s32 0, %v5075
        %v5077 = vrot.slane %v4650, %v5076
        %v5078 = vlaneseq
        %v5079 = vshrl.u32 %v5078, 7
        %v5080 = vsub.s32 1, %v5079
        %v5081 = vrot.slane %v4650, %v5080
        %v5082 = vlaneseq
        %v5083 = vshrl.u32 %v5082, 7
        %v5084 = vsub.s32 2, %v5083
        %v5085 = vrot.slane %v4650, %v5084
        %v5086 = vlaneseq
        %v5087 = vshrl.u32 %v5086, 7
        %v5088 = vsub.s32 3, %v5087
        %v5089 = vrot.slane %v4650, %v5088
        %v5090 = vlaneseq
        %v5091 = vshrl.u32 %v5090, 7
        %v5092 = vsub.s32 4, %v5091
        %v5093 = vrot.slane %v4650, %v5092
        %v5094 = vlaneseq
        %v5095 = vshrl.u32 %v5094, 7
        %v5096 = vsub.s32 0, %v5095
        %v5097 = vrot.slane %v4647, %v5096
        %v5098 = vlaneseq
        %v5099 = vshrl.u32 %v5098, 7
        %v5100 = vsub.s32 1, %v5099
        %v5101 = vrot.slane %v4647, %v5100
        %v5102 = vlaneseq
        %v5103 = vshrl.u32 %v5102, 7
        %v5104 = vsub.s32 2, %v5103
        %v5105 = vrot.slane %v4647, %v5104
        %v5106 = vlaneseq
        %v5107 = vshrl.u32 %v5106, 7
        %v5108 = vsub.s32 3, %v5107
        %v5109 = vrot.slane %v4647, %v5108
        %v5110 = vlaneseq
        %v5111 = vshrl.u32 %v5110, 7
        %v5112 = vsub.s32 4, %v5111
        %v5113 = vrot.slane %v4647, %v5112
        %v5114 = vlaneseq
        %v5115 = vshrl.u32 %v5114, 7
        %v5116 = vsub.s32 0, %v5115
        %v5117 = vrot.slane %v4651, %v5116
        %v5118 = vlaneseq
        %v5119 = vshrl.u32 %v5118, 7
        %v5120 = vsub.s32 1, %v5119
        %v5121 = vrot.slane %v4651, %v5120
        %v5122 = vlaneseq
        %v5123 = vshrl.u32 %v5122, 7
        %v5124 = vsub.s32 2, %v5123
        %v5125 = vrot.slane %v4651, %v5124
        %v5126 = vlaneseq
        %v5127 = vshrl.u32 %v5126, 7
        %v5128 = vsub.s32 3, %v5127
        %v5129 = vrot.slane %v4651, %v5128
        %v5130 = vlaneseq
        %v5131 = vshrl.u32 %v5130, 7
        %v5132 = vsub.s32 4, %v5131
        %v5133 = vrot.slane %v4651, %v5132
        %v5134 = vlaneseq
        %v5135 = vshrl.u32 %v5134, 7
        %v5136 = vsub.s32 0, %v5135
        %v5137 = vrot.slane %v4648, %v5136
        %v5138 = vlaneseq
        %v5139 = vshrl.u32 %v5138, 7
        %v5140 = vsub.s32 1, %v5139
        %v5141 = vrot.slane %v4648, %v5140
        %v5142 = vlaneseq
        %v5143 = vshrl.u32 %v5142, 7
        %v5144 = vsub.s32 2, %v5143
        %v5145 = vrot.slane %v4648, %v5144
        %v5146 = vlaneseq
        %v5147 = vshrl.u32 %v5146, 7
        %v5148 = vsub.s32 3, %v5147
        %v5149 = vrot.slane %v4648, %v5148
        %v5150 = vlaneseq
        %v5151 = vshrl.u32 %v5150, 7
        %v5152 = vsub.s32 4, %v5151
        %v5153 = vrot.slane %v4648, %v5152
        %v5154 = vlaneseq
        %v5155 = vshrl.u32 %v5154, 7
        %v5156 = vsub.s32 0, %v5155
        %v5157 = vrot.slane %v4652, %v5156
        %v5158 = vlaneseq
        %v5159 = vshrl.u32 %v5158, 7
        %v5160 = vsub.s32 1, %v5159
        %v5161 = vrot.slane %v4652, %v5160
        %v5162 = vlaneseq
        %v5163 = vshrl.u32 %v5162, 7
        %v5164 = vsub.s32 2, %v5163
        %v5165 = vrot.slane %v4652, %v5164
        %v5166 = vlaneseq
        %v5167 = vshrl.u32 %v5166, 7
        %v5168 = vsub.s32 3, %v5167
        %v5169 = vrot.slane %v4652, %v5168
        %v5170 = vlaneseq
        %v5171 = vshrl.u32 %v5170, 7
        %v5172 = vsub.s32 4, %v5171
        %v5173 = vrot.slane %v4652, %v5172
        %v5174 = vlaneseq
        %v5175 = vshrl.u32 %v5174, 7
        %v5176 = vsub.s32 0, %v5175
        %v5177 = vrot.slane %v4762, %v5176
        %v5178 = vlaneseq
        %v5179 = vshrl.u32 %v5178, 7
        %v5180 = vsub.s32 1, %v5179
        %v5181 = vrot.slane %v4762, %v5180
        %v5182 = vlaneseq
        %v5183 = vshrl.u32 %v5182, 7
        %v5184 = vsub.s32 2, %v5183
        %v5185 = vrot.slane %v4762, %v5184
        %v5186 = vlaneseq
        %v5187 = vshrl.u32 %v5186, 7
        %v5188 = vsub.s32 3, %v5187
        %v5189 = vrot.slane %v4762, %v5188
        %v5190 = vlaneseq
        %v5191 = vshrl.u32 %v5190, 7
        %v5192 = vsub.s32 4, %v5191
        %v5193 = vrot.slane %v4762, %v5192
        %v5194 = vlaneseq
        %v5195 = vshrl.u32 %v5194, 7
        %v5196 = vsub.s32 0, %v5195
        %v5197 = vrot.slane %v4766, %v5196
        %v5198 = vlaneseq
        %v5199 = vshrl.u32 %v5198, 7
        %v5200 = vsub.s32 1, %v5199
        %v5201 = vrot.slane %v4766, %v5200
        %v5202 = vlaneseq
        %v5203 = vshrl.u32 %v5202, 7
        %v5204 = vsub.s32 2, %v5203
        %v5205 = vrot.slane %v4766, %v5204
        %v5206 = vlaneseq
        %v5207 = vshrl.u32 %v5206, 7
        %v5208 = vsub.s32 3, %v5207
        %v5209 = vrot.slane %v4766, %v5208
        %v5210 = vlaneseq
        %v5211 = vshrl.u32 %v5210, 7
        %v5212 = vsub.s32 4, %v5211
        %v5213 = vrot.slane %v4766, %v5212
        %v5214 = vlaneseq
        %v5215 = vshrl.u32 %v5214, 7
        %v5216 = vsub.s32 0, %v5215
        %v5217 = vrot.slane %v4763, %v5216
        %v5218 = vlaneseq
        %v5219 = vshrl.u32 %v5218, 7
        %v5220 = vsub.s32 1, %v5219
        %v5221 = vrot.slane %v4763, %v5220
        %v5222 = vlaneseq
        %v5223 = vshrl.u32 %v5222, 7
        %v5224 = vsub.s32 2, %v5223
        %v5225 = vrot.slane %v4763, %v5224
        %v5226 = vlaneseq
        %v5227 = vshrl.u32 %v5226, 7
        %v5228 = vsub.s32 3, %v5227
        %v5229 = vrot.slane %v4763, %v5228
        %v5230 = vlaneseq
        %v5231 = vshrl.u32 %v5230, 7
        %v5232 = vsub.s32 4, %v5231
        %v5233 = vrot.slane %v4763, %v5232
        %v5234 = vlaneseq
        %v5235 = vshrl.u32 %v5234, 7
        %v5236 = vsub.s32 0, %v5235
        %v5237 = vrot.slane %v4767, %v5236
        %v5238 = vlaneseq
        %v5239 = vshrl.u32 %v5238, 7
        %v5240 = vsub.s32 1, %v5239
        %v5241 = vrot.slane %v4767, %v5240
        %v5242 = vlaneseq
        %v5243 = vshrl.u32 %v5242, 7
        %v5244 = vsub.s32 2, %v5243
        %v5245 = vrot.slane %v4767, %v5244
        %v5246 = vlaneseq
        %v5247 = vshrl.u32 %v5246, 7
        %v5248 = vsub.s32 3, %v5247
        %v5249 = vrot.slane %v4767, %v5248
        %v5250 = vlaneseq
        %v5251 = vshrl.u32 %v5250, 7
        %v5252 = vsub.s32 4, %v5251
        %v5253 = vrot.slane %v4767, %v5252
        %v5254 = vlaneseq
        %v5255 = vshrl.u32 %v5254, 7
        %v5256 = vsub.s32 0, %v5255
        %v5257 = vrot.slane %v4764, %v5256
        %v5258 = vlaneseq
        %v5259 = vshrl.u32 %v5258, 7
        %v5260 = vsub.s32 1, %v5259
        %v5261 = vrot.slane %v4764, %v5260
        %v5262 = vlaneseq
        %v5263 = vshrl.u32 %v5262, 7
        %v5264 = vsub.s32 2, %v5263
        %v5265 = vrot.slane %v4764, %v5264
        %v5266 = vlaneseq
        %v5267 = vshrl.u32 %v5266, 7
        %v5268 = vsub.s32 3, %v5267
        %v5269 = vrot.slane %v4764, %v5268
        %v5270 = vlaneseq
        %v5271 = vshrl.u32 %v5270, 7
        %v5272 = vsub.s32 4, %v5271
        %v5273 = vrot.slane %v4764, %v5272
        %v5274 = vlaneseq
        %v5275 = vshrl.u32 %v5274, 7
        %v5276 = vsub.s32 0, %v5275
        %v5277 = vrot.slane %v4768, %v5276
        %v5278 = vlaneseq
        %v5279 = vshrl.u32 %v5278, 7
        %v5280 = vsub.s32 1, %v5279
        %v5281 = vrot.slane %v4768, %v5280
        %v5282 = vlaneseq
        %v5283 = vshrl.u32 %v5282, 7
        %v5284 = vsub.s32 2, %v5283
        %v5285 = vrot.slane %v4768, %v5284
        %v5286 = vlaneseq
        %v5287 = vshrl.u32 %v5286, 7
        %v5288 = vsub.s32 3, %v5287
        %v5289 = vrot.slane %v4768, %v5288
        %v5290 = vlaneseq
        %v5291 = vshrl.u32 %v5290, 7
        %v5292 = vsub.s32 4, %v5291
        %v5293 = vrot.slane %v4768, %v5292
        %v5294 = vlaneseq
        %v5295 = vshrl.u32 %v5294, 7
        %v5296 = vsub.s32 0, %v5295
        %v5297 = vrot.slane %v4765, %v5296
        %v5298 = vlaneseq
        %v5299 = vshrl.u32 %v5298, 7
        %v5300 = vsub.s32 1, %v5299
        %v5301 = vrot.slane %v4765, %v5300
        %v5302 = vlaneseq
        %v5303 = vshrl.u32 %v5302, 7
        %v5304 = vsub.s32 2, %v5303
        %v5305 = vrot.slane %v4765, %v5304
        %v5306 = vlaneseq
        %v5307 = vshrl.u32 %v5306, 7
        %v5308 = vsub.s32 3, %v5307
        %v5309 = vrot.slane %v4765, %v5308
        %v5310 = vlaneseq
        %v5311 = vshrl.u32 %v5310, 7
        %v5312 = vsub.s32 4, %v5311
        %v5313 = vrot.slane %v4765, %v5312
        %v5314 = vlaneseq
        %v5315 = vshrl.u32 %v5314, 7
        %v5316 = vsub.s32 0, %v5315
        %v5317 = vrot.slane %v4769, %v5316
        %v5318 = vlaneseq
        %v5319 = vshrl.u32 %v5318, 7
        %v5320 = vsub.s32 1, %v5319
        %v5321 = vrot.slane %v4769, %v5320
        %v5322 = vlaneseq
        %v5323 = vshrl.u32 %v5322, 7
        %v5324 = vsub.s32 2, %v5323
        %v5325 = vrot.slane %v4769, %v5324
        %v5326 = vlaneseq
        %v5327 = vshrl.u32 %v5326, 7
        %v5328 = vsub.s32 3, %v5327
        %v5329 = vrot.slane %v4769, %v5328
        %v5330 = vlaneseq
        %v5331 = vshrl.u32 %v5330, 7
        %v5332 = vsub.s32 4, %v5331
        %v5333 = vrot.slane %v4769, %v5332
        %v5414 = vmul.f32 %v5017, %v2558
        %v5415 = vmul.f32 %v5021, %v2661
        %v5416 = vmul.f32 %v5025, %v2764
        %v5417 = vmul.f32 %v5029, %v2867
        %v5418 = vmul.f32 %v5033, %v2970
        %v5419 = vmul.f32 %v5017, %v3073
        %v5420 = vmul.f32 %v5021, %v3176
        %v5421 = vmul.f32 %v5025, %v3279
        %v5422 = vmul.f32 %v5029, %v3382
        %v5423 = vmul.f32 %v5033, %v3485
        %v5424 = vmul.f32 %v5037, %v2558
        %v5425 = vmul.f32 %v5041, %v2661
        %v5426 = vmul.f32 %v5045, %v2764
        %v5427 = vmul.f32 %v5049, %v2867
        %v5428 = vmul.f32 %v5053, %v2970
        %v5429 = vmul.f32 %v5037, %v3073
        %v5430 = vmul.f32 %v5041, %v3176
        %v5431 = vmul.f32 %v5045, %v3279
        %v5432 = vmul.f32 %v5049, %v3382
        %v5433 = vmul.f32 %v5053, %v3485
        %v5434 = vmul.f32 %v5057, %v2558
        %v5435 = vmul.f32 %v5061, %v2661
        %v5436 = vmul.f32 %v5065, %v2764
        %v5437 = vmul.f32 %v5069, %v2867
        %v5438 = vmul.f32 %v5073, %v2970
        %v5439 = vmul.f32 %v5057, %v3073
        %v5440 = vmul.f32 %v5061, %v3176
        %v5441 = vmul.f32 %v5065, %v3279
        %v5442 = vmul.f32 %v5069, %v3382
        %v5443 = vmul.f32 %v5073, %v3485
        %v5444 = vmul.f32 %v5077, %v2558
        %v5445 = vmul.f32 %v5081, %v2661
        %v5446 = vmul.f32 %v5085, %v2764
        %v5447 = vmul.f32 %v5089, %v2867
        %v5448 = vmul.f32 %v5093, %v2970
        %v5449 = vmul.f32 %v5077, %v3073
        %v5450 = vmul.f32 %v5081, %v3176
        %v5451 = vmul.f32 %v5085, %v3279
        %v5452 = vmul.f32 %v5089, %v3382
        %v5453 = vmul.f32 %v5093, %v3485
        %v5454 = vmul.f32 %v5097, %v2558
        %v5455 = vmul.f32 %v5101, %v2661
        %v5456 = vmul.f32 %v5105, %v2764
        %v5457 = vmul.f32 %v5109, %v2867
        %v5458 = vmul.f32 %v5113, %v2970
        %v5459 = vmul.f32 %v5097, %v3073
        %v5460 = vmul.f32 %v5101, %v3176
        %v5461 = vmul.f32 %v5105, %v3279
        %v5462 = vmul.f32 %v5109, %v3382
        %v5463 = vmul.f32 %v5113, %v3485
        %v5464 = vmul.f32 %v5117, %v2558
        %v5465 = vmul.f32 %v5121, %v2661
        %v5466 = vmul.f32 %v5125, %v2764
        %v5467 = vmul.f32 %v5129, %v2867
        %v5468 = vmul.f32 %v5133, %v2970
        %v5469 = vmul.f32 %v5117, %v3073
        %v5470 = vmul.f32 %v5121, %v3176
        %v5471 = vmul.f32 %v5125, %v3279
        %v5472 = vmul.f32 %v5129, %v3382
        %v5473 = vmul.f32 %v5133, %v3485
        %v5474 = vmul.f32 %v5137, %v2558
        %v5475 = vmul.f32 %v5141, %v2661
        %v5476 = vmul.f32 %v5145, %v2764
        %v5477 = vmul.f32 %v5149, %v2867
        %v5478 = vmul.f32 %v5153, %v2970
        %v5479 = vmul.f32 %v5137, %v3073
        %v5480 = vmul.f32 %v5141, %v3176
        %v5481 = vmul.f32 %v5145, %v3279
        %v5482 = vmul.f32 %v5149, %v3382
        %v5483 = vmul.f32 %v5153, %v3485
        %v5484 = vmul.f32 %v5157, %v2558
        %v5485 = vmul.f32 %v5161, %v2661
        %v5486 = vmul.f32 %v5165, %v2764
        %v5487 = vmul.f32 %v5169, %v2867
        %v5488 = vmul.f32 %v5173, %v2970
        %v5489 = vmul.f32 %v5157, %v3073
        %v5490 = vmul.f32 %v5161, %v3176
        %v5491 = vmul.f32 %v5165, %v3279
        %v5492 = vmul.f32 %v5169, %v3382
        %v5493 = vmul.f32 %v5173, %v3485
        %v5494 = vmul.f32 %v5177, %v2558
        %v5495 = vmul.f32 %v5181, %v2661
        %v5496 = vmul.f32 %v5185, %v2764
        %v5497 = vmul.f32 %v5189, %v2867
        %v5498 = vmul.f32 %v5193, %v2970
        %v5499 = vmul.f32 %v5177, %v3073
        %v5500 = vmul.f32 %v5181, %v3176
        %v5501 = vmul.f32 %v5185, %v3279
        %v5502 = vmul.f32 %v5189, %v3382
        %v5503 = vmul.f32 %v5193, %v3485
        %v5504 = vmul.f32 %v5197, %v2558
        %v5505 = vmul.f32 %v5201, %v2661
        %v5506 = vmul.f32 %v5205, %v2764
        %v5507 = vmul.f32 %v5209, %v2867
        %v5508 = vmul.f32 %v5213, %v2970
        %v5509 = vmul.f32 %v5197, %v3073
        %v5510 = vmul.f32 %v5201, %v3176
        %v5511 = vmul.f32 %v5205, %v3279
        %v5512 = vmul.f32 %v5209, %v3382
        %v5513 = vmul.f32 %v5213, %v3485
        %v5514 = vmul.f32 %v5217, %v2558
        %v5515 = vmul.f32 %v5221, %v2661
        %v5516 = vmul.f32 %v5225, %v2764
        %v5517 = vmul.f32 %v5229, %v2867
        %v5518 = vmul.f32 %v5233, %v2970
        %v5519 = vmul.f32 %v5217, %v3073
        %v5520 = vmul.f32 %v5221, %v3176
        %v5521 = vmul.f32 %v5225, %v3279
        %v5522 = vmul.f32 %v5229, %v3382
        %v5523 = vmul.f32 %v5233, %v3485
        %v5524 = vmul.f32 %v5237, %v2558
        %v5525 = vmul.f32 %v5241, %v2661
        %v5526 = vmul.f32 %v5245, %v2764
        %v5527 = vmul.f32 %v5249, %v2867
        %v5528 = vmul.f32 %v5253, %v2970
        %v5529 = vmul.f32 %v5237, %v3073
        %v5530 = vmul.f32 %v5241, %v3176
        %v5531 = vmul.f32 %v5245, %v3279
        %v5532 = vmul.f32 %v5249, %v3382
        %v5533 = vmul.f32 %v5253, %v3485
        %v5534 = vmul.f32 %v5257, %v2558
        %v5535 = vmul.f32 %v5261, %v2661
        %v5536 = vmul.f32 %v5265, %v2764
        %v5537 = vmul.f32 %v5269, %v2867
        %v5538 = vmul.f32 %v5273, %v2970
        %v5539 = vmul.f32 %v5257, %v3073
        %v5540 = vmul.f32 %v5261, %v3176
        %v5541 = vmul.f32 %v5265, %v3279
        %v5542 = vmul.f32 %v5269, %v3382
        %v5543 = vmul.f32 %v5273, %v3485
        %v5544 = vmul.f32 %v5277, %v2558
        %v5545 = vmul.f32 %v5281, %v2661
        %v5546 = vmul.f32 %v5285, %v2764
        %v5547 = vmul.f32 %v5289, %v2867
        %v5548 = vmul.f32 %v5293, %v2970
        %v5549 = vmul.f32 %v5277, %v3073
        %v5550 = vmul.f32 %v5281, %v3176
        %v5551 = vmul.f32 %v5285, %v3279
        %v5552 = vmul.f32 %v5289, %v3382
        %v5553 = vmul.f32 %v5293, %v3485
        %v5554 = vmul.f32 %v5297, %v2558
        %v5555 = vmul.f32 %v5301, %v2661
        %v5556 = vmul.f32 %v5305, %v2764
        %v5557 = vmul.f32 %v5309, %v2867
        %v5558 = vmul.f32 %v5313, %v2970
        %v5559 = vmul.f32 %v5297, %v3073
        %v5560 = vmul.f32 %v5301, %v3176
        %v5561 = vmul.f32 %v5305, %v3279
        %v5562 = vmul.f32 %v5309, %v3382
        %v5563 = vmul.f32 %v5313, %v3485
        %v5564 = vmul.f32 %v5317, %v2558
        %v5565 = vmul.f32 %v5321, %v2661
        %v5566 = vmul.f32 %v5325, %v2764
        %v5567 = vmul.f32 %v5329, %v2867
        %v5568 = vmul.f32 %v5333, %v2970
        %v5569 = vmul.f32 %v5317, %v3073
        %v5570 = vmul.f32 %v5321, %v3176
        %v5571 = vmul.f32 %v5325, %v3279
        %v5572 = vmul.f32 %v5329, %v3382
        %v5573 = vmul.f32 %v5333, %v3485
        %v5574 = vlaneseq
        %v5575 = vshrl.u32 %v5574, 7
        %v5576 = vsub.s32 0, %v5575
        %v5577 = vrot.slane %v4889, %v5576
        %v5578 = vlaneseq
        %v5579 = vshrl.u32 %v5578, 7
        %v5580 = vsub.s32 1, %v5579
        %v5581 = vrot.slane %v4889, %v5580
        %v5582 = vlaneseq
        %v5583 = vshrl.u32 %v5582, 7
        %v5584 = vsub.s32 2, %v5583
        %v5585 = vrot.slane %v4889, %v5584
        %v5586 = vlaneseq
        %v5587 = vshrl.u32 %v5586, 7
        %v5588 = vsub.s32 3, %v5587
        %v5589 = vrot.slane %v4889, %v5588
        %v5590 = vlaneseq
        %v5591 = vshrl.u32 %v5590, 7
        %v5592 = vsub.s32 4, %v5591
        %v5593 = vrot.slane %v4889, %v5592
        %v5594 = vlaneseq
        %v5595 = vshrl.u32 %v5594, 7
        %v5596 = vsub.s32 0, %v5595
        %v5597 = vrot.slane %v4893, %v5596
        %v5598 = vlaneseq
        %v5599 = vshrl.u32 %v5598, 7
        %v5600 = vsub.s32 1, %v5599
        %v5601 = vrot.slane %v4893, %v5600
        %v5602 = vlaneseq
        %v5603 = vshrl.u32 %v5602, 7
        %v5604 = vsub.s32 2, %v5603
        %v5605 = vrot.slane %v4893, %v5604
        %v5606 = vlaneseq
        %v5607 = vshrl.u32 %v5606, 7
        %v5608 = vsub.s32 3, %v5607
        %v5609 = vrot.slane %v4893, %v5608
        %v5610 = vlaneseq
        %v5611 = vshrl.u32 %v5610, 7
        %v5612 = vsub.s32 4, %v5611
        %v5613 = vrot.slane %v4893, %v5612
        %v5614 = vlaneseq
        %v5615 = vshrl.u32 %v5614, 7
        %v5616 = vsub.s32 0, %v5615
        %v5617 = vrot.slane %v4890, %v5616
        %v5618 = vlaneseq
        %v5619 = vshrl.u32 %v5618, 7
        %v5620 = vsub.s32 1, %v5619
        %v5621 = vrot.slane %v4890, %v5620
        %v5622 = vlaneseq
        %v5623 = vshrl.u32 %v5622, 7
        %v5624 = vsub.s32 2, %v5623
        %v5625 = vrot.slane %v4890, %v5624
        %v5626 = vlaneseq
        %v5627 = vshrl.u32 %v5626, 7
        %v5628 = vsub.s32 3, %v5627
        %v5629 = vrot.slane %v4890, %v5628
        %v5630 = vlaneseq
        %v5631 = vshrl.u32 %v5630, 7
        %v5632 = vsub.s32 4, %v5631
        %v5633 = vrot.slane %v4890, %v5632
        %v5634 = vlaneseq
        %v5635 = vshrl.u32 %v5634, 7
        %v5636 = vsub.s32 0, %v5635
        %v5637 = vrot.slane %v4894, %v5636
        %v5638 = vlaneseq
        %v5639 = vshrl.u32 %v5638, 7
        %v5640 = vsub.s32 1, %v5639
        %v5641 = vrot.slane %v4894, %v5640
        %v5642 = vlaneseq
        %v5643 = vshrl.u32 %v5642, 7
        %v5644 = vsub.s32 2, %v5643
        %v5645 = vrot.slane %v4894, %v5644
        %v5646 = vlaneseq
        %v5647 = vshrl.u32 %v5646, 7
        %v5648 = vsub.s32 3, %v5647
        %v5649 = vrot.slane %v4894, %v5648
        %v5650 = vlaneseq
        %v5651 = vshrl.u32 %v5650, 7
        %v5652 = vsub.s32 4, %v5651
        %v5653 = vrot.slane %v4894, %v5652
        %v5654 = vlaneseq
        %v5655 = vshrl.u32 %v5654, 7
        %v5656 = vsub.s32 0, %v5655
        %v5657 = vrot.slane %v4891, %v5656
        %v5658 = vlaneseq
        %v5659 = vshrl.u32 %v5658, 7
        %v5660 = vsub.s32 1, %v5659
        %v5661 = vrot.slane %v4891, %v5660
        %v5662 = vlaneseq
        %v5663 = vshrl.u32 %v5662, 7
        %v5664 = vsub.s32 2, %v5663
        %v5665 = vrot.slane %v4891, %v5664
        %v5666 = vlaneseq
        %v5667 = vshrl.u32 %v5666, 7
        %v5668 = vsub.s32 3, %v5667
        %v5669 = vrot.slane %v4891, %v5668
        %v5670 = vlaneseq
        %v5671 = vshrl.u32 %v5670, 7
        %v5672 = vsub.s32 4, %v5671
        %v5673 = vrot.slane %v4891, %v5672
        %v5674 = vlaneseq
        %v5675 = vshrl.u32 %v5674, 7
        %v5676 = vsub.s32 0, %v5675
        %v5677 = vrot.slane %v4895, %v5676
        %v5678 = vlaneseq
        %v5679 = vshrl.u32 %v5678, 7
        %v5680 = vsub.s32 1, %v5679
        %v5681 = vrot.slane %v4895, %v5680
        %v5682 = vlaneseq
        %v5683 = vshrl.u32 %v5682, 7
        %v5684 = vsub.s32 2, %v5683
        %v5685 = vrot.slane %v4895, %v5684
        %v5686 = vlaneseq
        %v5687 = vshrl.u32 %v5686, 7
        %v5688 = vsub.s32 3, %v5687
        %v5689 = vrot.slane %v4895, %v5688
        %v5690 = vlaneseq
        %v5691 = vshrl.u32 %v5690, 7
        %v5692 = vsub.s32 4, %v5691
        %v5693 = vrot.slane %v4895, %v5692
        %v5694 = vlaneseq
        %v5695 = vshrl.u32 %v5694, 7
        %v5696 = vsub.s32 0, %v5695
        %v5697 = vrot.slane %v4892, %v5696
        %v5698 = vlaneseq
        %v5699 = vshrl.u32 %v5698, 7
        %v5700 = vsub.s32 1, %v5699
        %v5701 = vrot.slane %v4892, %v5700
        %v5702 = vlaneseq
        %v5703 = vshrl.u32 %v5702, 7
        %v5704 = vsub.s32 2, %v5703
        %v5705 = vrot.slane %v4892, %v5704
        %v5706 = vlaneseq
        %v5707 = vshrl.u32 %v5706, 7
        %v5708 = vsub.s32 3, %v5707
        %v5709 = vrot.slane %v4892, %v5708
        %v5710 = vlaneseq
        %v5711 = vshrl.u32 %v5710, 7
        %v5712 = vsub.s32 4, %v5711
        %v5713 = vrot.slane %v4892, %v5712
        %v5714 = vlaneseq
        %v5715 = vshrl.u32 %v5714, 7
        %v5716 = vsub.s32 0, %v5715
        %v5717 = vrot.slane %v4896, %v5716
        %v5718 = vlaneseq
        %v5719 = vshrl.u32 %v5718, 7
        %v5720 = vsub.s32 1, %v5719
        %v5721 = vrot.slane %v4896, %v5720
        %v5722 = vlaneseq
        %v5723 = vshrl.u32 %v5722, 7
        %v5724 = vsub.s32 2, %v5723
        %v5725 = vrot.slane %v4896, %v5724
        %v5726 = vlaneseq
        %v5727 = vshrl.u32 %v5726, 7
        %v5728 = vsub.s32 3, %v5727
        %v5729 = vrot.slane %v4896, %v5728
        %v5730 = vlaneseq
        %v5731 = vshrl.u32 %v5730, 7
        %v5732 = vsub.s32 4, %v5731
        %v5733 = vrot.slane %v4896, %v5732
        %v5734 = vlaneseq
        %v5735 = vshrl.u32 %v5734, 7
        %v5736 = vsub.s32 0, %v5735
        %v5737 = vrot.slane %v5006, %v5736
        %v5738 = vlaneseq
        %v5739 = vshrl.u32 %v5738, 7
        %v5740 = vsub.s32 1, %v5739
        %v5741 = vrot.slane %v5006, %v5740
        %v5742 = vlaneseq
        %v5743 = vshrl.u32 %v5742, 7
        %v5744 = vsub.s32 2, %v5743
        %v5745 = vrot.slane %v5006, %v5744
        %v5746 = vlaneseq
        %v5747 = vshrl.u32 %v5746, 7
        %v5748 = vsub.s32 3, %v5747
        %v5749 = vrot.slane %v5006, %v5748
        %v5750 = vlaneseq
        %v5751 = vshrl.u32 %v5750, 7
        %v5752 = vsub.s32 4, %v5751
        %v5753 = vrot.slane %v5006, %v5752
        %v5754 = vlaneseq
        %v5755 = vshrl.u32 %v5754, 7
        %v5756 = vsub.s32 0, %v5755
        %v5757 = vrot.slane %v5010, %v5756
        %v5758 = vlaneseq
        %v5759 = vshrl.u32 %v5758, 7
        %v5760 = vsub.s32 1, %v5759
        %v5761 = vrot.slane %v5010, %v5760
        %v5762 = vlaneseq
        %v5763 = vshrl.u32 %v5762, 7
        %v5764 = vsub.s32 2, %v5763
        %v5765 = vrot.slane %v5010, %v5764
        %v5766 = vlaneseq
        %v5767 = vshrl.u32 %v5766, 7
        %v5768 = vsub.s32 3, %v5767
        %v5769 = vrot.slane %v5010, %v5768
        %v5770 = vlaneseq
        %v5771 = vshrl.u32 %v5770, 7
        %v5772 = vsub.s32 4, %v5771
        %v5773 = vrot.slane %v5010, %v5772
        %v5774 = vlaneseq
        %v5775 = vshrl.u32 %v5774, 7
        %v5776 = vsub.s32 0, %v5775
        %v5777 = vrot.slane %v5007, %v5776
        %v5778 = vlaneseq
        %v5779 = vshrl.u32 %v5778, 7
        %v5780 = vsub.s32 1, %v5779
        %v5781 = vrot.slane %v5007, %v5780
        %v5782 = vlaneseq
        %v5783 = vshrl.u32 %v5782, 7
        %v5784 = vsub.s32 2, %v5783
        %v5785 = vrot.slane %v5007, %v5784
        %v5786 = vlaneseq
        %v5787 = vshrl.u32 %v5786, 7
        %v5788 = vsub.s32 3, %v5787
        %v5789 = vrot.slane %v5007, %v5788
        %v5790 = vlaneseq
        %v5791 = vshrl.u32 %v5790, 7
        %v5792 = vsub.s32 4, %v5791
        %v5793 = vrot.slane %v5007, %v5792
        %v5794 = vlaneseq
        %v5795 = vshrl.u32 %v5794, 7
        %v5796 = vsub.s32 0, %v5795
        %v5797 = vrot.slane %v5011, %v5796
        %v5798 = vlaneseq
        %v5799 = vshrl.u32 %v5798, 7
        %v5800 = vsub.s32 1, %v5799
        %v5801 = vrot.slane %v5011, %v5800
        %v5802 = vlaneseq
        %v5803 = vshrl.u32 %v5802, 7
        %v5804 = vsub.s32 2, %v5803
        %v5805 = vrot.slane %v5011, %v5804
        %v5806 = vlaneseq
        %v5807 = vshrl.u32 %v5806, 7
        %v5808 = vsub.s32 3, %v5807
        %v5809 = vrot.slane %v5011, %v5808
        %v5810 = vlaneseq
        %v5811 = vshrl.u32 %v5810, 7
        %v5812 = vsub.s32 4, %v5811
        %v5813 = vrot.slane %v5011, %v5812
        %v5814 = vlaneseq
        %v5815 = vshrl.u32 %v5814, 7
        %v5816 = vsub.s32 0, %v5815
        %v5817 = vrot.slane %v5008, %v5816
        %v5818 = vlaneseq
        %v5819 = vshrl.u32 %v5818, 7
        %v5820 = vsub.s32 1, %v5819
        %v5821 = vrot.slane %v5008, %v5820
        %v5822 = vlaneseq
        %v5823 = vshrl.u32 %v5822, 7
        %v5824 = vsub.s32 2, %v5823
        %v5825 = vrot.slane %v5008, %v5824
        %v5826 = vlaneseq
        %v5827 = vshrl.u32 %v5826, 7
        %v5828 = vsub.s32 3, %v5827
        %v5829 = vrot.slane %v5008, %v5828
        %v5830 = vlaneseq
        %v5831 = vshrl.u32 %v5830, 7
        %v5832 = vsub.s32 4, %v5831
        %v5833 = vrot.slane %v5008, %v5832
        %v5834 = vlaneseq
        %v5835 = vshrl.u32 %v5834, 7
        %v5836 = vsub.s32 0, %v5835
        %v5837 = vrot.slane %v5012, %v5836
        %v5838 = vlaneseq
        %v5839 = vshrl.u32 %v5838, 7
        %v5840 = vsub.s32 1, %v5839
        %v5841 = vrot.slane %v5012, %v5840
        %v5842 = vlaneseq
        %v5843 = vshrl.u32 %v5842, 7
        %v5844 = vsub.s32 2, %v5843
        %v5845 = vrot.slane %v5012, %v5844
        %v5846 = vlaneseq
        %v5847 = vshrl.u32 %v5846, 7
        %v5848 = vsub.s32 3, %v5847
        %v5849 = vrot.slane %v5012, %v5848
        %v5850 = vlaneseq
        %v5851 = vshrl.u32 %v5850, 7
        %v5852 = vsub.s32 4, %v5851
        %v5853 = vrot.slane %v5012, %v5852
        %v5854 = vlaneseq
        %v5855 = vshrl.u32 %v5854, 7
        %v5856 = vsub.s32 0, %v5855
        %v5857 = vrot.slane %v5009, %v5856
        %v5858 = vlaneseq
        %v5859 = vshrl.u32 %v5858, 7
        %v5860 = vsub.s32 1, %v5859
        %v5861 = vrot.slane %v5009, %v5860
        %v5862 = vlaneseq
        %v5863 = vshrl.u32 %v5862, 7
        %v5864 = vsub.s32 2, %v5863
        %v5865 = vrot.slane %v5009, %v5864
        %v5866 = vlaneseq
        %v5867 = vshrl.u32 %v5866, 7
        %v5868 = vsub.s32 3, %v5867
        %v5869 = vrot.slane %v5009, %v5868
        %v5870 = vlaneseq
        %v5871 = vshrl.u32 %v5870, 7
        %v5872 = vsub.s32 4, %v5871
        %v5873 = vrot.slane %v5009, %v5872
        %v5874 = vlaneseq
        %v5875 = vshrl.u32 %v5874, 7
        %v5876 = vsub.s32 0, %v5875
        %v5877 = vrot.slane %v5013, %v5876
        %v5878 = vlaneseq
        %v5879 = vshrl.u32 %v5878, 7
        %v5880 = vsub.s32 1, %v5879
        %v5881 = vrot.slane %v5013, %v5880
        %v5882 = vlaneseq
        %v5883 = vshrl.u32 %v5882, 7
        %v5884 = vsub.s32 2, %v5883
        %v5885 = vrot.slane %v5013, %v5884
        %v5886 = vlaneseq
        %v5887 = vshrl.u32 %v5886, 7
        %v5888 = vsub.s32 3, %v5887
        %v5889 = vrot.slane %v5013, %v5888
        %v5890 = vlaneseq
        %v5891 = vshrl.u32 %v5890, 7
        %v5892 = vsub.s32 4, %v5891
        %v5893 = vrot.slane %v5013, %v5892
        %v5974 = vmul.f32 %v5577, %v3589
        %v5975 = vmul.f32 %v5581, %v3693
        %v5976 = vmul.f32 %v5585, %v3797
        %v5977 = vmul.f32 %v5589, %v3901
        %v5978 = vmul.f32 %v5593, %v4005
        %v5979 = vmul.f32 %v5577, %v4109
        %v5980 = vmul.f32 %v5581, %v4213
        %v5981 = vmul.f32 %v5585, %v4317
        %v5982 = vmul.f32 %v5589, %v4421
        %v5983 = vmul.f32 %v5593, %v4525
        %v5984 = vmul.f32 %v5597, %v3589
        %v5985 = vmul.f32 %v5601, %v3693
        %v5986 = vmul.f32 %v5605, %v3797
        %v5987 = vmul.f32 %v5609, %v3901
        %v5988 = vmul.f32 %v5613, %v4005
        %v5989 = vmul.f32 %v5597, %v4109
        %v5990 = vmul.f32 %v5601, %v4213
        %v5991 = vmul.f32 %v5605, %v4317
        %v5992 = vmul.f32 %v5609, %v4421
        %v5993 = vmul.f32 %v5613, %v4525
        %v5994 = vmul.f32 %v5617, %v3589
        %v5995 = vmul.f32 %v5621, %v3693
        %v5996 = vmul.f32 %v5625, %v3797
        %v5997 = vmul.f32 %v5629, %v3901
        %v5998 = vmul.f32 %v5633, %v4005
        %v5999 = vmul.f32 %v5617, %v4109
        %v6000 = vmul.f32 %v5621, %v4213
        %v6001 = vmul.f32 %v5625, %v4317
        %v6002 = vmul.f32 %v5629, %v4421
        %v6003 = vmul.f32 %v5633, %v4525
        %v6004 = vmul.f32 %v5637, %v3589
        %v6005 = vmul.f32 %v5641, %v3693
        %v6006 = vmul.f32 %v5645, %v3797
        %v6007 = vmul.f32 %v5649, %v3901
        %v6008 = vmul.f32 %v5653, %v4005
        %v6009 = vmul.f32 %v5637, %v4109
        %v6010 = vmul.f32 %v5641, %v4213
        %v6011 = vmul.f32 %v5645, %v4317
        %v6012 = vmul.f32 %v5649, %v4421
        %v6013 = vmul.f32 %v5653, %v4525
        %v6014 = vmul.f32 %v5657, %v3589
        %v6015 = vmul.f32 %v5661, %v3693
        %v6016 = vmul.f32 %v5665, %v3797
        %v6017 = vmul.f32 %v5669, %v3901
        %v6018 = vmul.f32 %v5673, %v4005
        %v6019 = vmul.f32 %v5657, %v4109
        %v6020 = vmul.f32 %v5661, %v4213
        %v6021 = vmul.f32 %v5665, %v4317
        %v6022 = vmul.f32 %v5669, %v4421
        %v6023 = vmul.f32 %v5673, %v4525
        %v6024 = vmul.f32 %v5677, %v3589
        %v6025 = vmul.f32 %v5681, %v3693
        %v6026 = vmul.f32 %v5685, %v3797
        %v6027 = vmul.f32 %v5689, %v3901
        %v6028 = vmul.f32 %v5693, %v4005
        %v6029 = vmul.f32 %v5677, %v4109
        %v6030 = vmul.f32 %v5681, %v4213
        %v6031 = vmul.f32 %v5685, %v4317
        %v6032 = vmul.f32 %v5689, %v4421
        %v6033 = vmul.f32 %v5693, %v4525
        %v6034 = vmul.f32 %v5697, %v3589
        %v6035 = vmul.f32 %v5701, %v3693
        %v6036 = vmul.f32 %v5705, %v3797
        %v6037 = vmul.f32 %v5709, %v3901
        %v6038 = vmul.f32 %v5713, %v4005
        %v6039 = vmul.f32 %v5697, %v4109
        %v6040 = vmul.f32 %v5701, %v4213
        %v6041 = vmul.f32 %v5705, %v4317
        %v6042 = vmul.f32 %v5709, %v4421
        %v6043 = vmul.f32 %v5713, %v4525
        %v6044 = vmul.f32 %v5717, %v3589
        %v6045 = vmul.f32 %v5721, %v3693
        %v6046 = vmul.f32 %v5725, %v3797
        %v6047 = vmul.f32 %v5729, %v3901
        %v6048 = vmul.f32 %v5733, %v4005
        %v6049 = vmul.f32 %v5717, %v4109
        %v6050 = vmul.f32 %v5721, %v4213
        %v6051 = vmul.f32 %v5725, %v4317
        %v6052 = vmul.f32 %v5729, %v4421
        %v6053 = vmul.f32 %v5733, %v4525
        %v6054 = vmul.f32 %v5737, %v3589
        %v6055 = vmul.f32 %v5741, %v3693
        %v6056 = vmul.f32 %v5745, %v3797
        %v6057 = vmul.f32 %v5749, %v3901
        %v6058 = vmul.f32 %v5753, %v4005
        %v6059 = vmul.f32 %v5737, %v4109
        %v6060 = vmul.f32 %v5741, %v4213
        %v6061 = vmul.f32 %v5745, %v4317
        %v6062 = vmul.f32 %v5749, %v4421
        %v6063 = vmul.f32 %v5753, %v4525
        %v6064 = vmul.f32 %v5757, %v3589
        %v6065 = vmul.f32 %v5761, %v3693
        %v6066 = vmul.f32 %v5765, %v3797
        %v6067 = vmul.f32 %v5769, %v3901
        %v6068 = vmul.f32 %v5773, %v4005
        %v6069 = vmul.f32 %v5757, %v4109
        %v6070 = vmul.f32 %v5761, %v4213
        %v6071 = vmul.f32 %v5765, %v4317
        %v6072 = vmul.f32 %v5769, %v4421
        %v6073 = vmul.f32 %v5773, %v4525
        %v6074 = vmul.f32 %v5777, %v3589
        %v6075 = vmul.f32 %v5781, %v3693
        %v6076 = vmul.f32 %v5785, %v3797
        %v6077 = vmul.f32 %v5789, %v3901
        %v6078 = vmul.f32 %v5793, %v4005
        %v6079 = vmul.f32 %v5777, %v4109
        %v6080 = vmul.f32 %v5781, %v4213
        %v6081 = vmul.f32 %v5785, %v4317
        %v6082 = vmul.f32 %v5789, %v4421
        %v6083 = vmul.f32 %v5793, %v4525
        %v6084 = vmul.f32 %v5797, %v3589
        %v6085 = vmul.f32 %v5801, %v3693
        %v6086 = vmul.f32 %v5805, %v3797
        %v6087 = vmul.f32 %v5809, %v3901
        %v6088 = vmul.f32 %v5813, %v4005
        %v6089 = vmul.f32 %v5797, %v4109
        %v6090 = vmul.f32 %v5801, %v4213
        %v6091 = vmul.f32 %v5805, %v4317
        %v6092 = vmul.f32 %v5809, %v4421
        %v6093 = vmul.f32 %v5813, %v4525
        %v6094 = vmul.f32 %v5817, %v3589
        %v6095 = vmul.f32 %v5821, %v3693
        %v6096 = vmul.f32 %v5825, %v3797
        %v6097 = vmul.f32 %v5829, %v3901
        %v6098 = vmul.f32 %v5833, %v4005
        %v6099 = vmul.f32 %v5817, %v4109
        %v6100 = vmul.f32 %v5821, %v4213
        %v6101 = vmul.f32 %v5825, %v4317
        %v6102 = vmul.f32 %v5829, %v4421
        %v6103 = vmul.f32 %v5833, %v4525
        %v6104 = vmul.f32 %v5837, %v3589
        %v6105 = vmul.f32 %v5841, %v3693
        %v6106 = vmul.f32 %v5845, %v3797
        %v6107 = vmul.f32 %v5849, %v3901
        %v6108 = vmul.f32 %v5853, %v4005
        %v6109 = vmul.f32 %v5837, %v4109
        %v6110 = vmul.f32 %v5841, %v4213
        %v6111 = vmul.f32 %v5845, %v4317
        %v6112 = vmul.f32 %v5849, %v4421
        %v6113 = vmul.f32 %v5853, %v4525
        %v6114 = vmul.f32 %v5857, %v3589
        %v6115 = vmul.f32 %v5861, %v3693
        %v6116 = vmul.f32 %v5865, %v3797
        %v6117 = vmul.f32 %v5869, %v3901
        %v6118 = vmul.f32 %v5873, %v4005
        %v6119 = vmul.f32 %v5857, %v4109
        %v6120 = vmul.f32 %v5861, %v4213
        %v6121 = vmul.f32 %v5865, %v4317
        %v6122 = vmul.f32 %v5869, %v4421
        %v6123 = vmul.f32 %v5873, %v4525
        %v6124 = vmul.f32 %v5877, %v3589
        %v6125 = vmul.f32 %v5881, %v3693
        %v6126 = vmul.f32 %v5885, %v3797
        %v6127 = vmul.f32 %v5889, %v3901
        %v6128 = vmul.f32 %v5893, %v4005
        %v6129 = vmul.f32 %v5877, %v4109
        %v6130 = vmul.f32 %v5881, %v4213
        %v6131 = vmul.f32 %v5885, %v4317
        %v6132 = vmul.f32 %v5889, %v4421
        %v6133 = vmul.f32 %v5893, %v4525
        %v6134 = vsub.f32 %v5414, %v5974
        %v6135 = vsub.f32 %v5415, %v5975
        %v6136 = vsub.f32 %v5416, %v5976
        %v6137 = vsub.f32 %v5417, %v5977
        %v6138 = vsub.f32 %v5418, %v5978
        %v6139 = vsub.f32 %v5419, %v5979
        %v6140 = vsub.f32 %v5420, %v5980
        %v6141 = vsub.f32 %v5421, %v5981
        %v6142 = vsub.f32 %v5422, %v5982
        %v6143 = vsub.f32 %v5423, %v5983
        %v6144 = vsub.f32 %v5424, %v5984
        %v6145 = vsub.f32 %v5425, %v5985
        %v6146 = vsub.f32 %v5426, %v5986
        %v6147 = vsub.f32 %v5427, %v5987
        %v6148 = vsub.f32 %v5428, %v5988
        %v6149 = vsub.f32 %v5429, %v5989
        %v6150 = vsub.f32 %v5430, %v5990
        %v6151 = vsub.f32 %v5431, %v5991
        %v6152 = vsub.f32 %v5432, %v5992
        %v6153 = vsub.f32 %v5433, %v5993
        %v6154 = vsub.f32 %v5434, %v5994
        %v6155 = vsub.f32 %v5435, %v5995
        %v6156 = vsub.f32 %v5436, %v5996
        %v6157 = vsub.f32 %v5437, %v5997
        %v6158 = vsub.f32 %v5438, %v5998
        %v6159 = vsub.f32 %v5439, %v5999
        %v6160 = vsub.f32 %v5440, %v6000
        %v6161 = vsub.f32 %v5441, %v6001
        %v6162 = vsub.f32 %v5442, %v6002
        %v6163 = vsub.f32 %v5443, %v6003
        %v6164 = vsub.f32 %v5444, %v6004
        %v6165 = vsub.f32 %v5445, %v6005
        %v6166 = vsub.f32 %v5446, %v6006
        %v6167 = vsub.f32 %v5447, %v6007
        %v6168 = vsub.f32 %v5448, %v6008
        %v6169 = vsub.f32 %v5449, %v6009
        %v6170 = vsub.f32 %v5450, %v6010
        %v6171 = vsub.f32 %v5451, %v6011
        %v6172 = vsub.f32 %v5452, %v6012
        %v6173 = vsub.f32 %v5453, %v6013
        %v6174 = vsub.f32 %v5454, %v6014
        %v6175 = vsub.f32 %v5455, %v6015
        %v6176 = vsub.f32 %v5456, %v6016
        %v6177 = vsub.f32 %v5457, %v6017
        %v6178 = vsub.f32 %v5458, %v6018
        %v6179 = vsub.f32 %v5459, %v6019
        %v6180 = vsub.f32 %v5460, %v6020
        %v6181 = vsub.f32 %v5461, %v6021
        %v6182 = vsub.f32 %v5462, %v6022
        %v6183 = vsub.f32 %v5463, %v6023
        %v6184 = vsub.f32 %v5464, %v6024
        %v6185 = vsub.f32 %v5465, %v6025
        %v6186 = vsub.f32 %v5466, %v6026
        %v6187 = vsub.f32 %v5467, %v6027
        %v6188 = vsub.f32 %v5468, %v6028
        %v6189 = vsub.f32 %v5469, %v6029
        %v6190 = vsub.f32 %v5470, %v6030
        %v6191 = vsub.f32 %v5471, %v6031
        %v6192 = vsub.f32 %v5472, %v6032
        %v6193 = vsub.f32 %v5473, %v6033
        %v6194 = vsub.f32 %v5474, %v6034
        %v6195 = vsub.f32 %v5475, %v6035
        %v6196 = vsub.f32 %v5476, %v6036
        %v6197 = vsub.f32 %v5477, %v6037
        %v6198 = vsub.f32 %v5478, %v6038
        %v6199 = vsub.f32 %v5479, %v6039
        %v6200 = vsub.f32 %v5480, %v6040
        %v6201 = vsub.f32 %v5481, %v6041
        %v6202 = vsub.f32 %v5482, %v6042
        %v6203 = vsub.f32 %v5483, %v6043
        %v6204 = vsub.f32 %v5484, %v6044
        %v6205 = vsub.f32 %v5485, %v6045
        %v6206 = vsub.f32 %v5486, %v6046
        %v6207 = vsub.f32 %v5487, %v6047
        %v6208 = vsub.f32 %v5488, %v6048
        %v6209 = vsub.f32 %v5489, %v6049
        %v6210 = vsub.f32 %v5490, %v6050
        %v6211 = vsub.f32 %v5491, %v6051
        %v6212 = vsub.f32 %v5492, %v6052
        %v6213 = vsub.f32 %v5493, %v6053
        %v6214 = vsub.f32 %v5494, %v6054
        %v6215 = vsub.f32 %v5495, %v6055
        %v6216 = vsub.f32 %v5496, %v6056
        %v6217 = vsub.f32 %v5497, %v6057
        %v6218 = vsub.f32 %v5498, %v6058
        %v6219 = vsub.f32 %v5499, %v6059
        %v6220 = vsub.f32 %v5500, %v6060
        %v6221 = vsub.f32 %v5501, %v6061
        %v6222 = vsub.f32 %v5502, %v6062
        %v6223 = vsub.f32 %v5503, %v6063
        %v6224 = vsub.f32 %v5504, %v6064
        %v6225 = vsub.f32 %v5505, %v6065
        %v6226 = vsub.f32 %v5506, %v6066
        %v6227 = vsub.f32 %v5507, %v6067
        %v6228 = vsub.f32 %v5508, %v6068
        %v6229 = vsub.f32 %v5509, %v6069
        %v6230 = vsub.f32 %v5510, %v6070
        %v6231 = vsub.f32 %v5511, %v6071
        %v6232 = vsub.f32 %v5512, %v6072
        %v6233 = vsub.f32 %v5513, %v6073
        %v6234 = vsub.f32 %v5514, %v6074
        %v6235 = vsub.f32 %v5515, %v6075
        %v6236 = vsub.f32 %v5516, %v6076
        %v6237 = vsub.f32 %v5517, %v6077
        %v6238 = vsub.f32 %v5518, %v6078
        %v6239 = vsub.f32 %v5519, %v6079
        %v6240 = vsub.f32 %v5520, %v6080
        %v6241 = vsub.f32 %v5521, %v6081
        %v6242 = vsub.f32 %v5522, %v6082
        %v6243 = vsub.f32 %v5523, %v6083
        %v6244 = vsub.f32 %v5524, %v6084
        %v6245 = vsub.f32 %v5525, %v6085
        %v6246 = vsub.f32 %v5526, %v6086
        %v6247 = vsub.f32 %v5527, %v6087
        %v6248 = vsub.f32 %v5528, %v6088
        %v6249 = vsub.f32 %v5529, %v6089
        %v6250 = vsub.f32 %v5530, %v6090
        %v6251 = vsub.f32 %v5531, %v6091
        %v6252 = vsub.f32 %v5532, %v6092
        %v6253 = vsub.f32 %v5533, %v6093
        %v6254 = vsub.f32 %v5534, %v6094
        %v6255 = vsub.f32 %v5535, %v6095
        %v6256 = vsub.f32 %v5536, %v6096
        %v6257 = vsub.f32 %v5537, %v6097
        %v6258 = vsub.f32 %v5538, %v6098
        %v6259 = vsub.f32 %v5539, %v6099
        %v6260 = vsub.f32 %v5540, %v6100
        %v6261 = vsub.f32 %v5541, %v6101
        %v6262 = vsub.f32 %v5542, %v6102
        %v6263 = vsub.f32 %v5543, %v6103
        %v6264 = vsub.f32 %v5544, %v6104
        %v6265 = vsub.f32 %v5545, %v6105
        %v6266 = vsub.f32 %v5546, %v6106
        %v6267 = vsub.f32 %v5547, %v6107
        %v6268 = vsub.f32 %v5548, %v6108
        %v6269 = vsub.f32 %v5549, %v6109
        %v6270 = vsub.f32 %v5550, %v6110
        %v6271 = vsub.f32 %v5551, %v6111
        %v6272 = vsub.f32 %v5552, %v6112
        %v6273 = vsub.f32 %v5553, %v6113
        %v6274 = vsub.f32 %v5554, %v6114
        %v6275 = vsub.f32 %v5555, %v6115
        %v6276 = vsub.f32 %v5556, %v6116
        %v6277 = vsub.f32 %v5557, %v6117
        %v6278 = vsub.f32 %v5558, %v6118
        %v6279 = vsub.f32 %v5559, %v6119
        %v6280 = vsub.f32 %v5560, %v6120
        %v6281 = vsub.f32 %v5561, %v6121
        %v6282 = vsub.f32 %v5562, %v6122
        %v6283 = vsub.f32 %v5563, %v6123
        %v6284 = vsub.f32 %v5564, %v6124
        %v6285 = vsub.f32 %v5565, %v6125
        %v6286 = vsub.f32 %v5566, %v6126
        %v6287 = vsub.f32 %v5567, %v6127
        %v6288 = vsub.f32 %v5568, %v6128
        %v6289 = vsub.f32 %v5569, %v6129
        %v6290 = vsub.f32 %v5570, %v6130
        %v6291 = vsub.f32 %v5571, %v6131
        %v6292 = vsub.f32 %v5572, %v6132
        %v6293 = vsub.f32 %v5573, %v6133
        %v6294 = vmul.f32 %v5577, %v2558
        %v6295 = vmul.f32 %v5581, %v2661
        %v6296 = vmul.f32 %v5585, %v2764
        %v6297 = vmul.f32 %v5589, %v2867
        %v6298 = vmul.f32 %v5593, %v2970
        %v6299 = vmul.f32 %v5577, %v3073
        %v6300 = vmul.f32 %v5581, %v3176
        %v6301 = vmul.f32 %v5585, %v3279
        %v6302 = vmul.f32 %v5589, %v3382
        %v6303 = vmul.f32 %v5593, %v3485
        %v6304 = vmul.f32 %v5597, %v2558
        %v6305 = vmul.f32 %v5601, %v2661
        %v6306 = vmul.f32 %v5605, %v2764
        %v6307 = vmul.f32 %v5609, %v2867
        %v6308 = vmul.f32 %v5613, %v2970
        %v6309 = vmul.f32 %v5597, %v3073
        %v6310 = vmul.f32 %v5601, %v3176
        %v6311 = vmul.f32 %v5605, %v3279
        %v6312 = vmul.f32 %v5609, %v3382
        %v6313 = vmul.f32 %v5613, %v3485
        %v6314 = vmul.f32 %v5617, %v2558
        %v6315 = vmul.f32 %v5621, %v2661
        %v6316 = vmul.f32 %v5625, %v2764
        %v6317 = vmul.f32 %v5629, %v2867
        %v6318 = vmul.f32 %v5633, %v2970
        %v6319 = vmul.f32 %v5617, %v3073
        %v6320 = vmul.f32 %v5621, %v3176
        %v6321 = vmul.f32 %v5625, %v3279
        %v6322 = vmul.f32 %v5629, %v3382
        %v6323 = vmul.f32 %v5633, %v3485
        %v6324 = vmul.f32 %v5637, %v2558
        %v6325 = vmul.f32 %v5641, %v2661
        %v6326 = vmul.f32 %v5645, %v2764
        %v6327 = vmul.f32 %v5649, %v2867
        %v6328 = vmul.f32 %v5653, %v2970
        %v6329 = vmul.f32 %v5637, %v3073
        %v6330 = vmul.f32 %v5641, %v3176
        %v6331 = vmul.f32 %v5645, %v3279
        %v6332 = vmul.f32 %v5649, %v3382
        %v6333 = vmul.f32 %v5653, %v3485
        %v6334 = vmul.f32 %v5657, %v2558
        %v6335 = vmul.f32 %v5661, %v2661
        %v6336 = vmul.f32 %v5665, %v2764
        %v6337 = vmul.f32 %v5669, %v2867
        %v6338 = vmul.f32 %v5673, %v2970
        %v6339 = vmul.f32 %v5657, %v3073
        %v6340 = vmul.f32 %v5661, %v3176
        %v6341 = vmul.f32 %v5665, %v3279
        %v6342 = vmul.f32 %v5669, %v3382
        %v6343 = vmul.f32 %v5673, %v3485
        %v6344 = vmul.f32 %v5677, %v2558
        %v6345 = vmul.f32 %v5681, %v2661
        %v6346 = vmul.f32 %v5685, %v2764
        %v6347 = vmul.f32 %v5689, %v2867
        %v6348 = vmul.f32 %v5693, %v2970
        %v6349 = vmul.f32 %v5677, %v3073
        %v6350 = vmul.f32 %v5681, %v3176
        %v6351 = vmul.f32 %v5685, %v3279
        %v6352 = vmul.f32 %v5689, %v3382
        %v6353 = vmul.f32 %v5693, %v3485
        %v6354 = vmul.f32 %v5697, %v2558
        %v6355 = vmul.f32 %v5701, %v2661
        %v6356 = vmul.f32 %v5705, %v2764
        %v6357 = vmul.f32 %v5709, %v2867
        %v6358 = vmul.f32 %v5713, %v2970
        %v6359 = vmul.f32 %v5697, %v3073
        %v6360 = vmul.f32 %v5701, %v3176
        %v6361 = vmul.f32 %v5705, %v3279
        %v6362 = vmul.f32 %v5709, %v3382
        %v6363 = vmul.f32 %v5713, %v3485
        %v6364 = vmul.f32 %v5717, %v2558
        %v6365 = vmul.f32 %v5721, %v2661
        %v6366 = vmul.f32 %v5725, %v2764
        %v6367 = vmul.f32 %v5729, %v2867
        %v6368 = vmul.f32 %v5733, %v2970
        %v6369 = vmul.f32 %v5717, %v3073
        %v6370 = vmul.f32 %v5721, %v3176
        %v6371 = vmul.f32 %v5725, %v3279
        %v6372 = vmul.f32 %v5729, %v3382
        %v6373 = vmul.f32 %v5733, %v3485
        %v6374 = vmul.f32 %v5737, %v2558
        %v6375 = vmul.f32 %v5741, %v2661
        %v6376 = vmul.f32 %v5745, %v2764
        %v6377 = vmul.f32 %v5749, %v2867
        %v6378 = vmul.f32 %v5753, %v2970
        %v6379 = vmul.f32 %v5737, %v3073
        %v6380 = vmul.f32 %v5741, %v3176
        %v6381 = vmul.f32 %v5745, %v3279
        %v6382 = vmul.f32 %v5749, %v3382
        %v6383 = vmul.f32 %v5753, %v3485
        %v6384 = vmul.f32 %v5757, %v2558
        %v6385 = vmul.f32 %v5761, %v2661
        %v6386 = vmul.f32 %v5765, %v2764
        %v6387 = vmul.f32 %v5769, %v2867
        %v6388 = vmul.f32 %v5773, %v2970
        %v6389 = vmul.f32 %v5757, %v3073
        %v6390 = vmul.f32 %v5761, %v3176
        %v6391 = vmul.f32 %v5765, %v3279
        %v6392 = vmul.f32 %v5769, %v3382
        %v6393 = vmul.f32 %v5773, %v3485
        %v6394 = vmul.f32 %v5777, %v2558
        %v6395 = vmul.f32 %v5781, %v2661
        %v6396 = vmul.f32 %v5785, %v2764
        %v6397 = vmul.f32 %v5789, %v2867
        %v6398 = vmul.f32 %v5793, %v2970
        %v6399 = vmul.f32 %v5777, %v3073
        %v6400 = vmul.f32 %v5781, %v3176
        %v6401 = vmul.f32 %v5785, %v3279
        %v6402 = vmul.f32 %v5789, %v3382
        %v6403 = vmul.f32 %v5793, %v3485
        %v6404 = vmul.f32 %v5797, %v2558
        %v6405 = vmul.f32 %v5801, %v2661
        %v6406 = vmul.f32 %v5805, %v2764
        %v6407 = vmul.f32 %v5809, %v2867
        %v6408 = vmul.f32 %v5813, %v2970
        %v6409 = vmul.f32 %v5797, %v3073
        %v6410 = vmul.f32 %v5801, %v3176
        %v6411 = vmul.f32 %v5805, %v3279
        %v6412 = vmul.f32 %v5809, %v3382
        %v6413 = vmul.f32 %v5813, %v3485
        %v6414 = vmul.f32 %v5817, %v2558
        %v6415 = vmul.f32 %v5821, %v2661
        %v6416 = vmul.f32 %v5825, %v2764
        %v6417 = vmul.f32 %v5829, %v2867
        %v6418 = vmul.f32 %v5833, %v2970
        %v6419 = vmul.f32 %v5817, %v3073
        %v6420 = vmul.f32 %v5821, %v3176
        %v6421 = vmul.f32 %v5825, %v3279
        %v6422 = vmul.f32 %v5829, %v3382
        %v6423 = vmul.f32 %v5833, %v3485
        %v6424 = vmul.f32 %v5837, %v2558
        %v6425 = vmul.f32 %v5841, %v2661
        %v6426 = vmul.f32 %v5845, %v2764
        %v6427 = vmul.f32 %v5849, %v2867
        %v6428 = vmul.f32 %v5853, %v2970
        %v6429 = vmul.f32 %v5837, %v3073
        %v6430 = vmul.f32 %v5841, %v3176
        %v6431 = vmul.f32 %v5845, %v3279
        %v6432 = vmul.f32 %v5849, %v3382
        %v6433 = vmul.f32 %v5853, %v3485
        %v6434 = vmul.f32 %v5857, %v2558
        %v6435 = vmul.f32 %v5861, %v2661
        %v6436 = vmul.f32 %v5865, %v2764
        %v6437 = vmul.f32 %v5869, %v2867
        %v6438 = vmul.f32 %v5873, %v2970
        %v6439 = vmul.f32 %v5857, %v3073
        %v6440 = vmul.f32 %v5861, %v3176
        %v6441 = vmul.f32 %v5865, %v3279
        %v6442 = vmul.f32 %v5869, %v3382
        %v6443 = vmul.f32 %v5873, %v3485
        %v6444 = vmul.f32 %v5877, %v2558
        %v6445 = vmul.f32 %v5881, %v2661
        %v6446 = vmul.f32 %v5885, %v2764
        %v6447 = vmul.f32 %v5889, %v2867
        %v6448 = vmul.f32 %v5893, %v2970
        %v6449 = vmul.f32 %v5877, %v3073
        %v6450 = vmul.f32 %v5881, %v3176
        %v6451 = vmul.f32 %v5885, %v3279
        %v6452 = vmul.f32 %v5889, %v3382
        %v6453 = vmul.f32 %v5893, %v3485
        %v6454 = vmul.f32 %v5017, %v3589
        %v6455 = vmul.f32 %v5021, %v3693
        %v6456 = vmul.f32 %v5025, %v3797
        %v6457 = vmul.f32 %v5029, %v3901
        %v6458 = vmul.f32 %v5033, %v4005
        %v6459 = vmul.f32 %v5017, %v4109
        %v6460 = vmul.f32 %v5021, %v4213
        %v6461 = vmul.f32 %v5025, %v4317
        %v6462 = vmul.f32 %v5029, %v4421
        %v6463 = vmul.f32 %v5033, %v4525
        %v6464 = vmul.f32 %v5037, %v3589
        %v6465 = vmul.f32 %v5041, %v3693
        %v6466 = vmul.f32 %v5045, %v3797
        %v6467 = vmul.f32 %v5049, %v3901
        %v6468 = vmul.f32 %v5053, %v4005
        %v6469 = vmul.f32 %v5037, %v4109
        %v6470 = vmul.f32 %v5041, %v4213
        %v6471 = vmul.f32 %v5045, %v4317
        %v6472 = vmul.f32 %v5049, %v4421
        %v6473 = vmul.f32 %v5053, %v4525
        %v6474 = vmul.f32 %v5057, %v3589
        %v6475 = vmul.f32 %v5061, %v3693
        %v6476 = vmul.f32 %v5065, %v3797
        %v6477 = vmul.f32 %v5069, %v3901
        %v6478 = vmul.f32 %v5073, %v4005
        %v6479 = vmul.f32 %v5057, %v4109
        %v6480 = vmul.f32 %v5061, %v4213
        %v6481 = vmul.f32 %v5065, %v4317
        %v6482 = vmul.f32 %v5069, %v4421
        %v6483 = vmul.f32 %v5073, %v4525
        %v6484 = vmul.f32 %v5077, %v3589
        %v6485 = vmul.f32 %v5081, %v3693
        %v6486 = vmul.f32 %v5085, %v3797
        %v6487 = vmul.f32 %v5089, %v3901
        %v6488 = vmul.f32 %v5093, %v4005
        %v6489 = vmul.f32 %v5077, %v4109
        %v6490 = vmul.f32 %v5081, %v4213
        %v6491 = vmul.f32 %v5085, %v4317
        %v6492 = vmul.f32 %v5089, %v4421
        %v6493 = vmul.f32 %v5093, %v4525
        %v6494 = vmul.f32 %v5097, %v3589
        %v6495 = vmul.f32 %v5101, %v3693
        %v6496 = vmul.f32 %v5105, %v3797
        %v6497 = vmul.f32 %v5109, %v3901
        %v6498 = vmul.f32 %v5113, %v4005
        %v6499 = vmul.f32 %v5097, %v4109
        %v6500 = vmul.f32 %v5101, %v4213
        %v6501 = vmul.f32 %v5105, %v4317
        %v6502 = vmul.f32 %v5109, %v4421
        %v6503 = vmul.f32 %v5113, %v4525
        %v6504 = vmul.f32 %v5117, %v3589
        %v6505 = vmul.f32 %v5121, %v3693
        %v6506 = vmul.f32 %v5125, %v3797
        %v6507 = vmul.f32 %v5129, %v3901
        %v6508 = vmul.f32 %v5133, %v4005
        %v6509 = vmul.f32 %v5117, %v4109
        %v6510 = vmul.f32 %v5121, %v4213
        %v6511 = vmul.f32 %v5125, %v4317
        %v6512 = vmul.f32 %v5129, %v4421
        %v6513 = vmul.f32 %v5133, %v4525
        %v6514 = vmul.f32 %v5137, %v3589
        %v6515 = vmul.f32 %v5141, %v3693
        %v6516 = vmul.f32 %v5145, %v3797
        %v6517 = vmul.f32 %v5149, %v3901
        %v6518 = vmul.f32 %v5153, %v4005
        %v6519 = vmul.f32 %v5137, %v4109
        %v6520 = vmul.f32 %v5141, %v4213
        %v6521 = vmul.f32 %v5145, %v4317
        %v6522 = vmul.f32 %v5149, %v4421
        %v6523 = vmul.f32 %v5153, %v4525
        %v6524 = vmul.f32 %v5157, %v3589
        %v6525 = vmul.f32 %v5161, %v3693
        %v6526 = vmul.f32 %v5165, %v3797
        %v6527 = vmul.f32 %v5169, %v3901
        %v6528 = vmul.f32 %v5173, %v4005
        %v6529 = vmul.f32 %v5157, %v4109
        %v6530 = vmul.f32 %v5161, %v4213
        %v6531 = vmul.f32 %v5165, %v4317
        %v6532 = vmul.f32 %v5169, %v4421
        %v6533 = vmul.f32 %v5173, %v4525
        %v6534 = vmul.f32 %v5177, %v3589
        %v6535 = vmul.f32 %v5181, %v3693
        %v6536 = vmul.f32 %v5185, %v3797
        %v6537 = vmul.f32 %v5189, %v3901
        %v6538 = vmul.f32 %v5193, %v4005
        %v6539 = vmul.f32 %v5177, %v4109
        %v6540 = vmul.f32 %v5181, %v4213
        %v6541 = vmul.f32 %v5185, %v4317
        %v6542 = vmul.f32 %v5189, %v4421
        %v6543 = vmul.f32 %v5193, %v4525
        %v6544 = vmul.f32 %v5197, %v3589
        %v6545 = vmul.f32 %v5201, %v3693
        %v6546 = vmul.f32 %v5205, %v3797
        %v6547 = vmul.f32 %v5209, %v3901
        %v6548 = vmul.f32 %v5213, %v4005
        %v6549 = vmul.f32 %v5197, %v4109
        %v6550 = vmul.f32 %v5201, %v4213
        %v6551 = vmul.f32 %v5205, %v4317
        %v6552 = vmul.f32 %v5209, %v4421
        %v6553 = vmul.f32 %v5213, %v4525
        %v6554 = vmul.f32 %v5217, %v3589
        %v6555 = vmul.f32 %v5221, %v3693
        %v6556 = vmul.f32 %v5225, %v3797
        %v6557 = vmul.f32 %v5229, %v3901
        %v6558 = vmul.f32 %v5233, %v4005
        %v6559 = vmul.f32 %v5217, %v4109
        %v6560 = vmul.f32 %v5221, %v4213
        %v6561 = vmul.f32 %v5225, %v4317
        %v6562 = vmul.f32 %v5229, %v4421
        %v6563 = vmul.f32 %v5233, %v4525
        %v6564 = vmul.f32 %v5237, %v3589
        %v6565 = vmul.f32 %v5241, %v3693
        %v6566 = vmul.f32 %v5245, %v3797
        %v6567 = vmul.f32 %v5249, %v3901
        %v6568 = vmul.f32 %v5253, %v4005
        %v6569 = vmul.f32 %v5237, %v4109
        %v6570 = vmul.f32 %v5241, %v4213
        %v6571 = vmul.f32 %v5245, %v4317
        %v6572 = vmul.f32 %v5249, %v4421
        %v6573 = vmul.f32 %v5253, %v4525
        %v6574 = vmul.f32 %v5257, %v3589
        %v6575 = vmul.f32 %v5261, %v3693
        %v6576 = vmul.f32 %v5265, %v3797
        %v6577 = vmul.f32 %v5269, %v3901
        %v6578 = vmul.f32 %v5273, %v4005
        %v6579 = vmul.f32 %v5257, %v4109
        %v6580 = vmul.f32 %v5261, %v4213
        %v6581 = vmul.f32 %v5265, %v4317
        %v6582 = vmul.f32 %v5269, %v4421
        %v6583 = vmul.f32 %v5273, %v4525
        %v6584 = vmul.f32 %v5277, %v3589
        %v6585 = vmul.f32 %v5281, %v3693
        %v6586 = vmul.f32 %v5285, %v3797
        %v6587 = vmul.f32 %v5289, %v3901
        %v6588 = vmul.f32 %v5293, %v4005
        %v6589 = vmul.f32 %v5277, %v4109
        %v6590 = vmul.f32 %v5281, %v4213
        %v6591 = vmul.f32 %v5285, %v4317
        %v6592 = vmul.f32 %v5289, %v4421
        %v6593 = vmul.f32 %v5293, %v4525
        %v6594 = vmul.f32 %v5297, %v3589
        %v6595 = vmul.f32 %v5301, %v3693
        %v6596 = vmul.f32 %v5305, %v3797
        %v6597 = vmul.f32 %v5309, %v3901
        %v6598 = vmul.f32 %v5313, %v4005
        %v6599 = vmul.f32 %v5297, %v4109
        %v6600 = vmul.f32 %v5301, %v4213
        %v6601 = vmul.f32 %v5305, %v4317
        %v6602 = vmul.f32 %v5309, %v4421
        %v6603 = vmul.f32 %v5313, %v4525
        %v6604 = vmul.f32 %v5317, %v3589
        %v6605 = vmul.f32 %v5321, %v3693
        %v6606 = vmul.f32 %v5325, %v3797
        %v6607 = vmul.f32 %v5329, %v3901
        %v6608 = vmul.f32 %v5333, %v4005
        %v6609 = vmul.f32 %v5317, %v4109
        %v6610 = vmul.f32 %v5321, %v4213
        %v6611 = vmul.f32 %v5325, %v4317
        %v6612 = vmul.f32 %v5329, %v4421
        %v6613 = vmul.f32 %v5333, %v4525
        %v6614 = vadd.f32 %v6294, %v6454
        %v6615 = vadd.f32 %v6295, %v6455
        %v6616 = vadd.f32 %v6296, %v6456
        %v6617 = vadd.f32 %v6297, %v6457
        %v6618 = vadd.f32 %v6298, %v6458
        %v6619 = vadd.f32 %v6299, %v6459
        %v6620 = vadd.f32 %v6300, %v6460
        %v6621 = vadd.f32 %v6301, %v6461
        %v6622 = vadd.f32 %v6302, %v6462
        %v6623 = vadd.f32 %v6303, %v6463
        %v6624 = vadd.f32 %v6304, %v6464
        %v6625 = vadd.f32 %v6305, %v6465
        %v6626 = vadd.f32 %v6306, %v6466
        %v6627 = vadd.f32 %v6307, %v6467
        %v6628 = vadd.f32 %v6308, %v6468
        %v6629 = vadd.f32 %v6309, %v6469
        %v6630 = vadd.f32 %v6310, %v6470
        %v6631 = vadd.f32 %v6311, %v6471
        %v6632 = vadd.f32 %v6312, %v6472
        %v6633 = vadd.f32 %v6313, %v6473
        %v6634 = vadd.f32 %v6314, %v6474
        %v6635 = vadd.f32 %v6315, %v6475
        %v6636 = vadd.f32 %v6316, %v6476
        %v6637 = vadd.f32 %v6317, %v6477
        %v6638 = vadd.f32 %v6318, %v6478
        %v6639 = vadd.f32 %v6319, %v6479
        %v6640 = vadd.f32 %v6320, %v6480
        %v6641 = vadd.f32 %v6321, %v6481
        %v6642 = vadd.f32 %v6322, %v6482
        %v6643 = vadd.f32 %v6323, %v6483
        %v6644 = vadd.f32 %v6324, %v6484
        %v6645 = vadd.f32 %v6325, %v6485
        %v6646 = vadd.f32 %v6326, %v6486
        %v6647 = vadd.f32 %v6327, %v6487
        %v6648 = vadd.f32 %v6328, %v6488
        %v6649 = vadd.f32 %v6329, %v6489
        %v6650 = vadd.f32 %v6330, %v6490
        %v6651 = vadd.f32 %v6331, %v6491
        %v6652 = vadd.f32 %v6332, %v6492
        %v6653 = vadd.f32 %v6333, %v6493
        %v6654 = vadd.f32 %v6334, %v6494
        %v6655 = vadd.f32 %v6335, %v6495
        %v6656 = vadd.f32 %v6336, %v6496
        %v6657 = vadd.f32 %v6337, %v6497
        %v6658 = vadd.f32 %v6338, %v6498
        %v6659 = vadd.f32 %v6339, %v6499
        %v6660 = vadd.f32 %v6340, %v6500
        %v6661 = vadd.f32 %v6341, %v6501
        %v6662 = vadd.f32 %v6342, %v6502
        %v6663 = vadd.f32 %v6343, %v6503
        %v6664 = vadd.f32 %v6344, %v6504
        %v6665 = vadd.f32 %v6345, %v6505
        %v6666 = vadd.f32 %v6346, %v6506
        %v6667 = vadd.f32 %v6347, %v6507
        %v6668 = vadd.f32 %v6348, %v6508
        %v6669 = vadd.f32 %v6349, %v6509
        %v6670 = vadd.f32 %v6350, %v6510
        %v6671 = vadd.f32 %v6351, %v6511
        %v6672 = vadd.f32 %v6352, %v6512
        %v6673 = vadd.f32 %v6353, %v6513
        %v6674 = vadd.f32 %v6354, %v6514
        %v6675 = vadd.f32 %v6355, %v6515
        %v6676 = vadd.f32 %v6356, %v6516
        %v6677 = vadd.f32 %v6357, %v6517
        %v6678 = vadd.f32 %v6358, %v6518
        %v6679 = vadd.f32 %v6359, %v6519
        %v6680 = vadd.f32 %v6360, %v6520
        %v6681 = vadd.f32 %v6361, %v6521
        %v6682 = vadd.f32 %v6362, %v6522
        %v6683 = vadd.f32 %v6363, %v6523
        %v6684 = vadd.f32 %v6364, %v6524
        %v6685 = vadd.f32 %v6365, %v6525
        %v6686 = vadd.f32 %v6366, %v6526
        %v6687 = vadd.f32 %v6367, %v6527
        %v6688 = vadd.f32 %v6368, %v6528
        %v6689 = vadd.f32 %v6369, %v6529
        %v6690 = vadd.f32 %v6370, %v6530
        %v6691 = vadd.f32 %v6371, %v6531
        %v6692 = vadd.f32 %v6372, %v6532
        %v6693 = vadd.f32 %v6373, %v6533
        %v6694 = vadd.f32 %v6374, %v6534
        %v6695 = vadd.f32 %v6375, %v6535
        %v6696 = vadd.f32 %v6376, %v6536
        %v6697 = vadd.f32 %v6377, %v6537
        %v6698 = vadd.f32 %v6378, %v6538
        %v6699 = vadd.f32 %v6379, %v6539
        %v6700 = vadd.f32 %v6380, %v6540
        %v6701 = vadd.f32 %v6381, %v6541
        %v6702 = vadd.f32 %v6382, %v6542
        %v6703 = vadd.f32 %v6383, %v6543
        %v6704 = vadd.f32 %v6384, %v6544
        %v6705 = vadd.f32 %v6385, %v6545
        %v6706 = vadd.f32 %v6386, %v6546
        %v6707 = vadd.f32 %v6387, %v6547
        %v6708 = vadd.f32 %v6388, %v6548
        %v6709 = vadd.f32 %v6389, %v6549
        %v6710 = vadd.f32 %v6390, %v6550
        %v6711 = vadd.f32 %v6391, %v6551
        %v6712 = vadd.f32 %v6392, %v6552
        %v6713 = vadd.f32 %v6393, %v6553
        %v6714 = vadd.f32 %v6394, %v6554
        %v6715 = vadd.f32 %v6395, %v6555
        %v6716 = vadd.f32 %v6396, %v6556
        %v6717 = vadd.f32 %v6397, %v6557
        %v6718 = vadd.f32 %v6398, %v6558
        %v6719 = vadd.f32 %v6399, %v6559
        %v6720 = vadd.f32 %v6400, %v6560
        %v6721 = vadd.f32 %v6401, %v6561
        %v6722 = vadd.f32 %v6402, %v6562
        %v6723 = vadd.f32 %v6403, %v6563
        %v6724 = vadd.f32 %v6404, %v6564
        %v6725 = vadd.f32 %v6405, %v6565
        %v6726 = vadd.f32 %v6406, %v6566
        %v6727 = vadd.f32 %v6407, %v6567
        %v6728 = vadd.f32 %v6408, %v6568
        %v6729 = vadd.f32 %v6409, %v6569
        %v6730 = vadd.f32 %v6410, %v6570
        %v6731 = vadd.f32 %v6411, %v6571
        %v6732 = vadd.f32 %v6412, %v6572
        %v6733 = vadd.f32 %v6413, %v6573
        %v6734 = vadd.f32 %v6414, %v6574
        %v6735 = vadd.f32 %v6415, %v6575
        %v6736 = vadd.f32 %v6416, %v6576
        %v6737 = vadd.f32 %v6417, %v6577
        %v6738 = vadd.f32 %v6418, %v6578
        %v6739 = vadd.f32 %v6419, %v6579
        %v6740 = vadd.f32 %v6420, %v6580
        %v6741 = vadd.f32 %v6421, %v6581
        %v6742 = vadd.f32 %v6422, %v6582
        %v6743 = vadd.f32 %v6423, %v6583
        %v6744 = vadd.f32 %v6424, %v6584
        %v6745 = vadd.f32 %v6425, %v6585
        %v6746 = vadd.f32 %v6426, %v6586
        %v6747 = vadd.f32 %v6427, %v6587
        %v6748 = vadd.f32 %v6428, %v6588
        %v6749 = vadd.f32 %v6429, %v6589
        %v6750 = vadd.f32 %v6430, %v6590
        %v6751 = vadd.f32 %v6431, %v6591
        %v6752 = vadd.f32 %v6432, %v6592
        %v6753 = vadd.f32 %v6433, %v6593
        %v6754 = vadd.f32 %v6434, %v6594
        %v6755 = vadd.f32 %v6435, %v6595
        %v6756 = vadd.f32 %v6436, %v6596
        %v6757 = vadd.f32 %v6437, %v6597
        %v6758 = vadd.f32 %v6438, %v6598
        %v6759 = vadd.f32 %v6439, %v6599
        %v6760 = vadd.f32 %v6440, %v6600
        %v6761 = vadd.f32 %v6441, %v6601
        %v6762 = vadd.f32 %v6442, %v6602
        %v6763 = vadd.f32 %v6443, %v6603
        %v6764 = vadd.f32 %v6444, %v6604
        %v6765 = vadd.f32 %v6445, %v6605
        %v6766 = vadd.f32 %v6446, %v6606
        %v6767 = vadd.f32 %v6447, %v6607
        %v6768 = vadd.f32 %v6448, %v6608
        %v6769 = vadd.f32 %v6449, %v6609
        %v6770 = vadd.f32 %v6450, %v6610
        %v6771 = vadd.f32 %v6451, %v6611
        %v6772 = vadd.f32 %v6452, %v6612
        %v6773 = vadd.f32 %v6453, %v6613
        %6774 = vst [vmem:[#allocation2] sm:$0xff] %v6134
        %6775 = vst [vmem:[#allocation2 + $0x8] sm:$0xff] %v6135
        %6776 = vst [vmem:[#allocation2 + $0x10] sm:$0xff] %v6136
        %6777 = vst [vmem:[#allocation2 + $0x18] sm:$0xff] %v6137
        %6778 = vst [vmem:[#allocation2 + $0x20] sm:$0xff] %v6138
        %6779 = vst [vmem:[#allocation2 + $0x28] sm:$0xff] %v6139
        %6780 = vst [vmem:[#allocation2 + $0x30] sm:$0xff] %v6140
        %6781 = vst [vmem:[#allocation2 + $0x38] sm:$0xff] %v6141
        %6782 = vst [vmem:[#allocation2 + $0x40] sm:$0xff] %v6142
        %6783 = vst [vmem:[#allocation2 + $0x48] sm:$0xff] %v6143
        %6784 = vst [vmem:[#allocation2 + $0x50] sm:$0xff] %v6144
        %6785 = vst [vmem:[#allocation2 + $0x58] sm:$0xff] %v6145
        %6786 = vst [vmem:[#allocation2 + $0x60] sm:$0xff] %v6146
        %6787 = vst [vmem:[#allocation2 + $0x68] sm:$0xff] %v6147
        %6788 = vst [vmem:[#allocation2 + $0x70] sm:$0xff] %v6148
        %6789 = vst [vmem:[#allocation2 + $0x78] sm:$0xff] %v6149
        %6790 = vst [vmem:[#allocation2 + $0x80] sm:$0xff] %v6150
        %6791 = vst [vmem:[#allocation2 + $0x88] sm:$0xff] %v6151
        %6792 = vst [vmem:[#allocation2 + $0x90] sm:$0xff] %v6152
        %6793 = vst [vmem:[#allocation2 + $0x98] sm:$0xff] %v6153
        %6794 = vst [vmem:[#allocation2 + $0xa0] sm:$0xff] %v6154
        %6795 = vst [vmem:[#allocation2 + $0xa8] sm:$0xff] %v6155
        %6796 = vst [vmem:[#allocation2 + $0xb0] sm:$0xff] %v6156
        %6797 = vst [vmem:[#allocation2 + $0xb8] sm:$0xff] %v6157
        %6798 = vst [vmem:[#allocation2 + $0xc0] sm:$0xff] %v6158
        %6799 = vst [vmem:[#allocation2 + $0xc8] sm:$0xff] %v6159
        %6800 = vst [vmem:[#allocation2 + $0xd0] sm:$0xff] %v6160
        %6801 = vst [vmem:[#allocation2 + $0xd8] sm:$0xff] %v6161
        %6802 = vst [vmem:[#allocation2 + $0xe0] sm:$0xff] %v6162
        %6803 = vst [vmem:[#allocation2 + $0xe8] sm:$0xff] %v6163
        %6804 = vst [vmem:[#allocation2 + $0xf0] sm:$0xff] %v6164
        %6805 = vst [vmem:[#allocation2 + $0xf8] sm:$0xff] %v6165
        %6806 = vst [vmem:[#allocation2 + $0x100] sm:$0xff] %v6166
        %6807 = vst [vmem:[#allocation2 + $0x108] sm:$0xff] %v6167
        %6808 = vst [vmem:[#allocation2 + $0x110] sm:$0xff] %v6168
        %6809 = vst [vmem:[#allocation2 + $0x118] sm:$0xff] %v6169
        %6810 = vst [vmem:[#allocation2 + $0x120] sm:$0xff] %v6170
        %6811 = vst [vmem:[#allocation2 + $0x128] sm:$0xff] %v6171
        %6812 = vst [vmem:[#allocation2 + $0x130] sm:$0xff] %v6172
        %6813 = vst [vmem:[#allocation2 + $0x138] sm:$0xff] %v6173
        %6814 = vst [vmem:[#allocation2 + $0x140] sm:$0xff] %v6174
        %6815 = vst [vmem:[#allocation2 + $0x148] sm:$0xff] %v6175
        %6816 = vst [vmem:[#allocation2 + $0x150] sm:$0xff] %v6176
        %6817 = vst [vmem:[#allocation2 + $0x158] sm:$0xff] %v6177
        %6818 = vst [vmem:[#allocation2 + $0x160] sm:$0xff] %v6178
        %6819 = vst [vmem:[#allocation2 + $0x168] sm:$0xff] %v6179
        %6820 = vst [vmem:[#allocation2 + $0x170] sm:$0xff] %v6180
        %6821 = vst [vmem:[#allocation2 + $0x178] sm:$0xff] %v6181
        %6822 = vst [vmem:[#allocation2 + $0x180] sm:$0xff] %v6182
        %6823 = vst [vmem:[#allocation2 + $0x188] sm:$0xff] %v6183
        %6824 = vst [vmem:[#allocation2 + $0x190] sm:$0xff] %v6184
        %6825 = vst [vmem:[#allocation2 + $0x198] sm:$0xff] %v6185
        %6826 = vst [vmem:[#allocation2 + $0x1a0] sm:$0xff] %v6186
        %6827 = vst [vmem:[#allocation2 + $0x1a8] sm:$0xff] %v6187
        %6828 = vst [vmem:[#allocation2 + $0x1b0] sm:$0xff] %v6188
        %6829 = vst [vmem:[#allocation2 + $0x1b8] sm:$0xff] %v6189
        %6830 = vst [vmem:[#allocation2 + $0x1c0] sm:$0xff] %v6190
        %6831 = vst [vmem:[#allocation2 + $0x1c8] sm:$0xff] %v6191
        %6832 = vst [vmem:[#allocation2 + $0x1d0] sm:$0xff] %v6192
        %6833 = vst [vmem:[#allocation2 + $0x1d8] sm:$0xff] %v6193
        %6834 = vst [vmem:[#allocation2 + $0x1e0] sm:$0xff] %v6194
        %6835 = vst [vmem:[#allocation2 + $0x1e8] sm:$0xff] %v6195
        %6836 = vst [vmem:[#allocation2 + $0x1f0] sm:$0xff] %v6196
        %6837 = vst [vmem:[#allocation2 + $0x1f8] sm:$0xff] %v6197
        %6838 = vst [vmem:[#allocation2 + $0x200] sm:$0xff] %v6198
        %6839 = vst [vmem:[#allocation2 + $0x208] sm:$0xff] %v6199
        %6840 = vst [vmem:[#allocation2 + $0x210] sm:$0xff] %v6200
        %6841 = vst [vmem:[#allocation2 + $0x218] sm:$0xff] %v6201
        %6842 = vst [vmem:[#allocation2 + $0x220] sm:$0xff] %v6202
        %6843 = vst [vmem:[#allocation2 + $0x228] sm:$0xff] %v6203
        %6844 = vst [vmem:[#allocation2 + $0x230] sm:$0xff] %v6204
        %6845 = vst [vmem:[#allocation2 + $0x238] sm:$0xff] %v6205
        %6846 = vst [vmem:[#allocation2 + $0x240] sm:$0xff] %v6206
        %6847 = vst [vmem:[#allocation2 + $0x248] sm:$0xff] %v6207
        %6848 = vst [vmem:[#allocation2 + $0x250] sm:$0xff] %v6208
        %6849 = vst [vmem:[#allocation2 + $0x258] sm:$0xff] %v6209
        %6850 = vst [vmem:[#allocation2 + $0x260] sm:$0xff] %v6210
        %6851 = vst [vmem:[#allocation2 + $0x268] sm:$0xff] %v6211
        %6852 = vst [vmem:[#allocation2 + $0x270] sm:$0xff] %v6212
        %6853 = vst [vmem:[#allocation2 + $0x278] sm:$0xff] %v6213
        %6854 = vst [vmem:[#allocation2 + $0x280] sm:$0xff] %v6214
        %6855 = vst [vmem:[#allocation2 + $0x288] sm:$0xff] %v6215
        %6856 = vst [vmem:[#allocation2 + $0x290] sm:$0xff] %v6216
        %6857 = vst [vmem:[#allocation2 + $0x298] sm:$0xff] %v6217
        %6858 = vst [vmem:[#allocation2 + $0x2a0] sm:$0xff] %v6218
        %6859 = vst [vmem:[#allocation2 + $0x2a8] sm:$0xff] %v6219
        %6860 = vst [vmem:[#allocation2 + $0x2b0] sm:$0xff] %v6220
        %6861 = vst [vmem:[#allocation2 + $0x2b8] sm:$0xff] %v6221
        %6862 = vst [vmem:[#allocation2 + $0x2c0] sm:$0xff] %v6222
        %6863 = vst [vmem:[#allocation2 + $0x2c8] sm:$0xff] %v6223
        %6864 = vst [vmem:[#allocation2 + $0x2d0] sm:$0xff] %v6224
        %6865 = vst [vmem:[#allocation2 + $0x2d8] sm:$0xff] %v6225
        %6866 = vst [vmem:[#allocation2 + $0x2e0] sm:$0xff] %v6226
        %6867 = vst [vmem:[#allocation2 + $0x2e8] sm:$0xff] %v6227
        %6868 = vst [vmem:[#allocation2 + $0x2f0] sm:$0xff] %v6228
        %6869 = vst [vmem:[#allocation2 + $0x2f8] sm:$0xff] %v6229
        %6870 = vst [vmem:[#allocation2 + $0x300] sm:$0xff] %v6230
        %6871 = vst [vmem:[#allocation2 + $0x308] sm:$0xff] %v6231
        %6872 = vst [vmem:[#allocation2 + $0x310] sm:$0xff] %v6232
        %6873 = vst [vmem:[#allocation2 + $0x318] sm:$0xff] %v6233
        %6874 = vst [vmem:[#allocation2 + $0x320] sm:$0xff] %v6234
        %6875 = vst [vmem:[#allocation2 + $0x328] sm:$0xff] %v6235
        %6876 = vst [vmem:[#allocation2 + $0x330] sm:$0xff] %v6236
        %6877 = vst [vmem:[#allocation2 + $0x338] sm:$0xff] %v6237
        %6878 = vst [vmem:[#allocation2 + $0x340] sm:$0xff] %v6238
        %6879 = vst [vmem:[#allocation2 + $0x348] sm:$0xff] %v6239
        %6880 = vst [vmem:[#allocation2 + $0x350] sm:$0xff] %v6240
        %6881 = vst [vmem:[#allocation2 + $0x358] sm:$0xff] %v6241
        %6882 = vst [vmem:[#allocation2 + $0x360] sm:$0xff] %v6242
        %6883 = vst [vmem:[#allocation2 + $0x368] sm:$0xff] %v6243
        %6884 = vst [vmem:[#allocation2 + $0x370] sm:$0xff] %v6244
        %6885 = vst [vmem:[#allocation2 + $0x378] sm:$0xff] %v6245
        %6886 = vst [vmem:[#allocation2 + $0x380] sm:$0xff] %v6246
        %6887 = vst [vmem:[#allocation2 + $0x388] sm:$0xff] %v6247
        %6888 = vst [vmem:[#allocation2 + $0x390] sm:$0xff] %v6248
        %6889 = vst [vmem:[#allocation2 + $0x398] sm:$0xff] %v6249
        %6890 = vst [vmem:[#allocation2 + $0x3a0] sm:$0xff] %v6250
        %6891 = vst [vmem:[#allocation2 + $0x3a8] sm:$0xff] %v6251
        %6892 = vst [vmem:[#allocation2 + $0x3b0] sm:$0xff] %v6252
        %6893 = vst [vmem:[#allocation2 + $0x3b8] sm:$0xff] %v6253
        %6894 = vst [vmem:[#allocation2 + $0x3c0] sm:$0xff] %v6254
        %6895 = vst [vmem:[#allocation2 + $0x3c8] sm:$0xff] %v6255
        %6896 = vst [vmem:[#allocation2 + $0x3d0] sm:$0xff] %v6256
        %6897 = vst [vmem:[#allocation2 + $0x3d8] sm:$0xff] %v6257
        %6898 = vst [vmem:[#allocation2 + $0x3e0] sm:$0xff] %v6258
        %6899 = vst [vmem:[#allocation2 + $0x3e8] sm:$0xff] %v6259
        %6900 = vst [vmem:[#allocation2 + $0x3f0] sm:$0xff] %v6260
        %6901 = vst [vmem:[#allocation2 + $0x3f8] sm:$0xff] %v6261
        %6902 = vst [vmem:[#allocation2 + $0x400] sm:$0xff] %v6262
        %6903 = vst [vmem:[#allocation2 + $0x408] sm:$0xff] %v6263
        %6904 = vst [vmem:[#allocation2 + $0x410] sm:$0xff] %v6264
        %6905 = vst [vmem:[#allocation2 + $0x418] sm:$0xff] %v6265
        %6906 = vst [vmem:[#allocation2 + $0x420] sm:$0xff] %v6266
        %6907 = vst [vmem:[#allocation2 + $0x428] sm:$0xff] %v6267
        %6908 = vst [vmem:[#allocation2 + $0x430] sm:$0xff] %v6268
        %6909 = vst [vmem:[#allocation2 + $0x438] sm:$0xff] %v6269
        %6910 = vst [vmem:[#allocation2 + $0x440] sm:$0xff] %v6270
        %6911 = vst [vmem:[#allocation2 + $0x448] sm:$0xff] %v6271
        %6912 = vst [vmem:[#allocation2 + $0x450] sm:$0xff] %v6272
        %6913 = vst [vmem:[#allocation2 + $0x458] sm:$0xff] %v6273
        %6914 = vst [vmem:[#allocation2 + $0x460] sm:$0xff] %v6274
        %6915 = vst [vmem:[#allocation2 + $0x468] sm:$0xff] %v6275
        %6916 = vst [vmem:[#allocation2 + $0x470] sm:$0xff] %v6276
        %6917 = vst [vmem:[#allocation2 + $0x478] sm:$0xff] %v6277
        %6918 = vst [vmem:[#allocation2 + $0x480] sm:$0xff] %v6278
        %6919 = vst [vmem:[#allocation2 + $0x488] sm:$0xff] %v6279
        %6920 = vst [vmem:[#allocation2 + $0x490] sm:$0xff] %v6280
        %6921 = vst [vmem:[#allocation2 + $0x498] sm:$0xff] %v6281
        %6922 = vst [vmem:[#allocation2 + $0x4a0] sm:$0xff] %v6282
        %6923 = vst [vmem:[#allocation2 + $0x4a8] sm:$0xff] %v6283
        %6924 = vst [vmem:[#allocation2 + $0x4b0] sm:$0xff] %v6284
        %6925 = vst [vmem:[#allocation2 + $0x4b8] sm:$0xff] %v6285
        %6926 = vst [vmem:[#allocation2 + $0x4c0] sm:$0xff] %v6286
        %6927 = vst [vmem:[#allocation2 + $0x4c8] sm:$0xff] %v6287
        %6928 = vst [vmem:[#allocation2 + $0x4d0] sm:$0xff] %v6288
        %6929 = vst [vmem:[#allocation2 + $0x4d8] sm:$0xff] %v6289
        %6930 = vst [vmem:[#allocation2 + $0x4e0] sm:$0xff] %v6290
        %6931 = vst [vmem:[#allocation2 + $0x4e8] sm:$0xff] %v6291
        %6932 = vst [vmem:[#allocation2 + $0x4f0] sm:$0xff] %v6292
        %6933 = vst [vmem:[#allocation2 + $0x4f8] sm:$0xff] %v6293
        %6934 = vst [vmem:[#allocation3] sm:$0xff] %v6614
        %6935 = vst [vmem:[#allocation3 + $0x8] sm:$0xff] %v6615
        %6936 = vst [vmem:[#allocation3 + $0x10] sm:$0xff] %v6616
        %6937 = vst [vmem:[#allocation3 + $0x18] sm:$0xff] %v6617
        %6938 = vst [vmem:[#allocation3 + $0x20] sm:$0xff] %v6618
        %6939 = vst [vmem:[#allocation3 + $0x28] sm:$0xff] %v6619
        %6940 = vst [vmem:[#allocation3 + $0x30] sm:$0xff] %v6620
        %6941 = vst [vmem:[#allocation3 + $0x38] sm:$0xff] %v6621
        %6942 = vst [vmem:[#allocation3 + $0x40] sm:$0xff] %v6622
        %6943 = vst [vmem:[#allocation3 + $0x48] sm:$0xff] %v6623
        %6944 = vst [vmem:[#allocation3 + $0x50] sm:$0xff] %v6624
        %6945 = vst [vmem:[#allocation3 + $0x58] sm:$0xff] %v6625
        %6946 = vst [vmem:[#allocation3 + $0x60] sm:$0xff] %v6626
        %6947 = vst [vmem:[#allocation3 + $0x68] sm:$0xff] %v6627
        %6948 = vst [vmem:[#allocation3 + $0x70] sm:$0xff] %v6628
        %6949 = vst [vmem:[#allocation3 + $0x78] sm:$0xff] %v6629
        %6950 = vst [vmem:[#allocation3 + $0x80] sm:$0xff] %v6630
        %6951 = vst [vmem:[#allocation3 + $0x88] sm:$0xff] %v6631
        %6952 = vst [vmem:[#allocation3 + $0x90] sm:$0xff] %v6632
        %6953 = vst [vmem:[#allocation3 + $0x98] sm:$0xff] %v6633
        %6954 = vst [vmem:[#allocation3 + $0xa0] sm:$0xff] %v6634
        %6955 = vst [vmem:[#allocation3 + $0xa8] sm:$0xff] %v6635
        %6956 = vst [vmem:[#allocation3 + $0xb0] sm:$0xff] %v6636
        %6957 = vst [vmem:[#allocation3 + $0xb8] sm:$0xff] %v6637
        %6958 = vst [vmem:[#allocation3 + $0xc0] sm:$0xff] %v6638
        %6959 = vst [vmem:[#allocation3 + $0xc8] sm:$0xff] %v6639
        %6960 = vst [vmem:[#allocation3 + $0xd0] sm:$0xff] %v6640
        %6961 = vst [vmem:[#allocation3 + $0xd8] sm:$0xff] %v6641
        %6962 = vst [vmem:[#allocation3 + $0xe0] sm:$0xff] %v6642
        %6963 = vst [vmem:[#allocation3 + $0xe8] sm:$0xff] %v6643
        %6964 = vst [vmem:[#allocation3 + $0xf0] sm:$0xff] %v6644
        %6965 = vst [vmem:[#allocation3 + $0xf8] sm:$0xff] %v6645
        %6966 = vst [vmem:[#allocation3 + $0x100] sm:$0xff] %v6646
        %6967 = vst [vmem:[#allocation3 + $0x108] sm:$0xff] %v6647
        %6968 = vst [vmem:[#allocation3 + $0x110] sm:$0xff] %v6648
        %6969 = vst [vmem:[#allocation3 + $0x118] sm:$0xff] %v6649
        %6970 = vst [vmem:[#allocation3 + $0x120] sm:$0xff] %v6650
        %6971 = vst [vmem:[#allocation3 + $0x128] sm:$0xff] %v6651
        %6972 = vst [vmem:[#allocation3 + $0x130] sm:$0xff] %v6652
        %6973 = vst [vmem:[#allocation3 + $0x138] sm:$0xff] %v6653
        %6974 = vst [vmem:[#allocation3 + $0x140] sm:$0xff] %v6654
        %6975 = vst [vmem:[#allocation3 + $0x148] sm:$0xff] %v6655
        %6976 = vst [vmem:[#allocation3 + $0x150] sm:$0xff] %v6656
        %6977 = vst [vmem:[#allocation3 + $0x158] sm:$0xff] %v6657
        %6978 = vst [vmem:[#allocation3 + $0x160] sm:$0xff] %v6658
        %6979 = vst [vmem:[#allocation3 + $0x168] sm:$0xff] %v6659
        %6980 = vst [vmem:[#allocation3 + $0x170] sm:$0xff] %v6660
        %6981 = vst [vmem:[#allocation3 + $0x178] sm:$0xff] %v6661
        %6982 = vst [vmem:[#allocation3 + $0x180] sm:$0xff] %v6662
        %6983 = vst [vmem:[#allocation3 + $0x188] sm:$0xff] %v6663
        %6984 = vst [vmem:[#allocation3 + $0x190] sm:$0xff] %v6664
        %6985 = vst [vmem:[#allocation3 + $0x198] sm:$0xff] %v6665
        %6986 = vst [vmem:[#allocation3 + $0x1a0] sm:$0xff] %v6666
        %6987 = vst [vmem:[#allocation3 + $0x1a8] sm:$0xff] %v6667
        %6988 = vst [vmem:[#allocation3 + $0x1b0] sm:$0xff] %v6668
        %6989 = vst [vmem:[#allocation3 + $0x1b8] sm:$0xff] %v6669
        %6990 = vst [vmem:[#allocation3 + $0x1c0] sm:$0xff] %v6670
        %6991 = vst [vmem:[#allocation3 + $0x1c8] sm:$0xff] %v6671
        %6992 = vst [vmem:[#allocation3 + $0x1d0] sm:$0xff] %v6672
        %6993 = vst [vmem:[#allocation3 + $0x1d8] sm:$0xff] %v6673
        %6994 = vst [vmem:[#allocation3 + $0x1e0] sm:$0xff] %v6674
        %6995 = vst [vmem:[#allocation3 + $0x1e8] sm:$0xff] %v6675
        %6996 = vst [vmem:[#allocation3 + $0x1f0] sm:$0xff] %v6676
        %6997 = vst [vmem:[#allocation3 + $0x1f8] sm:$0xff] %v6677
        %6998 = vst [vmem:[#allocation3 + $0x200] sm:$0xff] %v6678
        %6999 = vst [vmem:[#allocation3 + $0x208] sm:$0xff] %v6679
        %7000 = vst [vmem:[#allocation3 + $0x210] sm:$0xff] %v6680
        %7001 = vst [vmem:[#allocation3 + $0x218] sm:$0xff] %v6681
        %7002 = vst [vmem:[#allocation3 + $0x220] sm:$0xff] %v6682
        %7003 = vst [vmem:[#allocation3 + $0x228] sm:$0xff] %v6683
        %7004 = vst [vmem:[#allocation3 + $0x230] sm:$0xff] %v6684
        %7005 = vst [vmem:[#allocation3 + $0x238] sm:$0xff] %v6685
        %7006 = vst [vmem:[#allocation3 + $0x240] sm:$0xff] %v6686
        %7007 = vst [vmem:[#allocation3 + $0x248] sm:$0xff] %v6687
        %7008 = vst [vmem:[#allocation3 + $0x250] sm:$0xff] %v6688
        %7009 = vst [vmem:[#allocation3 + $0x258] sm:$0xff] %v6689
        %7010 = vst [vmem:[#allocation3 + $0x260] sm:$0xff] %v6690
        %7011 = vst [vmem:[#allocation3 + $0x268] sm:$0xff] %v6691
        %7012 = vst [vmem:[#allocation3 + $0x270] sm:$0xff] %v6692
        %7013 = vst [vmem:[#allocation3 + $0x278] sm:$0xff] %v6693
        %7014 = vst [vmem:[#allocation3 + $0x280] sm:$0xff] %v6694
        %7015 = vst [vmem:[#allocation3 + $0x288] sm:$0xff] %v6695
        %7016 = vst [vmem:[#allocation3 + $0x290] sm:$0xff] %v6696
        %7017 = vst [vmem:[#allocation3 + $0x298] sm:$0xff] %v6697
        %7018 = vst [vmem:[#allocation3 + $0x2a0] sm:$0xff] %v6698
        %7019 = vst [vmem:[#allocation3 + $0x2a8] sm:$0xff] %v6699
        %7020 = vst [vmem:[#allocation3 + $0x2b0] sm:$0xff] %v6700
        %7021 = vst [vmem:[#allocation3 + $0x2b8] sm:$0xff] %v6701
        %7022 = vst [vmem:[#allocation3 + $0x2c0] sm:$0xff] %v6702
        %7023 = vst [vmem:[#allocation3 + $0x2c8] sm:$0xff] %v6703
        %7024 = vst [vmem:[#allocation3 + $0x2d0] sm:$0xff] %v6704
        %7025 = vst [vmem:[#allocation3 + $0x2d8] sm:$0xff] %v6705
        %7026 = vst [vmem:[#allocation3 + $0x2e0] sm:$0xff] %v6706
        %7027 = vst [vmem:[#allocation3 + $0x2e8] sm:$0xff] %v6707
        %7028 = vst [vmem:[#allocation3 + $0x2f0] sm:$0xff] %v6708
        %7029 = vst [vmem:[#allocation3 + $0x2f8] sm:$0xff] %v6709
        %7030 = vst [vmem:[#allocation3 + $0x300] sm:$0xff] %v6710
        %7031 = vst [vmem:[#allocation3 + $0x308] sm:$0xff] %v6711
        %7032 = vst [vmem:[#allocation3 + $0x310] sm:$0xff] %v6712
        %7033 = vst [vmem:[#allocation3 + $0x318] sm:$0xff] %v6713
        %7034 = vst [vmem:[#allocation3 + $0x320] sm:$0xff] %v6714
        %7035 = vst [vmem:[#allocation3 + $0x328] sm:$0xff] %v6715
        %7036 = vst [vmem:[#allocation3 + $0x330] sm:$0xff] %v6716
        %7037 = vst [vmem:[#allocation3 + $0x338] sm:$0xff] %v6717
        %7038 = vst [vmem:[#allocation3 + $0x340] sm:$0xff] %v6718
        %7039 = vst [vmem:[#allocation3 + $0x348] sm:$0xff] %v6719
        %7040 = vst [vmem:[#allocation3 + $0x350] sm:$0xff] %v6720
        %7041 = vst [vmem:[#allocation3 + $0x358] sm:$0xff] %v6721
        %7042 = vst [vmem:[#allocation3 + $0x360] sm:$0xff] %v6722
        %7043 = vst [vmem:[#allocation3 + $0x368] sm:$0xff] %v6723
        %7044 = vst [vmem:[#allocation3 + $0x370] sm:$0xff] %v6724
        %7045 = vst [vmem:[#allocation3 + $0x378] sm:$0xff] %v6725
        %7046 = vst [vmem:[#allocation3 + $0x380] sm:$0xff] %v6726
        %7047 = vst [vmem:[#allocation3 + $0x388] sm:$0xff] %v6727
        %7048 = vst [vmem:[#allocation3 + $0x390] sm:$0xff] %v6728
        %7049 = vst [vmem:[#allocation3 + $0x398] sm:$0xff] %v6729
        %7050 = vst [vmem:[#allocation3 + $0x3a0] sm:$0xff] %v6730
        %7051 = vst [vmem:[#allocation3 + $0x3a8] sm:$0xff] %v6731
        %7052 = vst [vmem:[#allocation3 + $0x3b0] sm:$0xff] %v6732
        %7053 = vst [vmem:[#allocation3 + $0x3b8] sm:$0xff] %v6733
        %7054 = vst [vmem:[#allocation3 + $0x3c0] sm:$0xff] %v6734
        %7055 = vst [vmem:[#allocation3 + $0x3c8] sm:$0xff] %v6735
        %7056 = vst [vmem:[#allocation3 + $0x3d0] sm:$0xff] %v6736
        %7057 = vst [vmem:[#allocation3 + $0x3d8] sm:$0xff] %v6737
        %7058 = vst [vmem:[#allocation3 + $0x3e0] sm:$0xff] %v6738
        %7059 = vst [vmem:[#allocation3 + $0x3e8] sm:$0xff] %v6739
        %7060 = vst [vmem:[#allocation3 + $0x3f0] sm:$0xff] %v6740
        %7061 = vst [vmem:[#allocation3 + $0x3f8] sm:$0xff] %v6741
        %7062 = vst [vmem:[#allocation3 + $0x400] sm:$0xff] %v6742
        %7063 = vst [vmem:[#allocation3 + $0x408] sm:$0xff] %v6743
        %7064 = vst [vmem:[#allocation3 + $0x410] sm:$0xff] %v6744
        %7065 = vst [vmem:[#allocation3 + $0x418] sm:$0xff] %v6745
        %7066 = vst [vmem:[#allocation3 + $0x420] sm:$0xff] %v6746
        %7067 = vst [vmem:[#allocation3 + $0x428] sm:$0xff] %v6747
        %7068 = vst [vmem:[#allocation3 + $0x430] sm:$0xff] %v6748
        %7069 = vst [vmem:[#allocation3 + $0x438] sm:$0xff] %v6749
        %7070 = vst [vmem:[#allocation3 + $0x440] sm:$0xff] %v6750
        %7071 = vst [vmem:[#allocation3 + $0x448] sm:$0xff] %v6751
        %7072 = vst [vmem:[#allocation3 + $0x450] sm:$0xff] %v6752
        %7073 = vst [vmem:[#allocation3 + $0x458] sm:$0xff] %v6753
        %7074 = vst [vmem:[#allocation3 + $0x460] sm:$0xff] %v6754
        %7075 = vst [vmem:[#allocation3 + $0x468] sm:$0xff] %v6755
        %7076 = vst [vmem:[#allocation3 + $0x470] sm:$0xff] %v6756
        %7077 = vst [vmem:[#allocation3 + $0x478] sm:$0xff] %v6757
        %7078 = vst [vmem:[#allocation3 + $0x480] sm:$0xff] %v6758
        %7079 = vst [vmem:[#allocation3 + $0x488] sm:$0xff] %v6759
        %7080 = vst [vmem:[#allocation3 + $0x490] sm:$0xff] %v6760
        %7081 = vst [vmem:[#allocation3 + $0x498] sm:$0xff] %v6761
        %7082 = vst [vmem:[#allocation3 + $0x4a0] sm:$0xff] %v6762
        %7083 = vst [vmem:[#allocation3 + $0x4a8] sm:$0xff] %v6763
        %7084 = vst [vmem:[#allocation3 + $0x4b0] sm:$0xff] %v6764
        %7085 = vst [vmem:[#allocation3 + $0x4b8] sm:$0xff] %v6765
        %7086 = vst [vmem:[#allocation3 + $0x4c0] sm:$0xff] %v6766
        %7087 = vst [vmem:[#allocation3 + $0x4c8] sm:$0xff] %v6767
        %7088 = vst [vmem:[#allocation3 + $0x4d0] sm:$0xff] %v6768
        %7089 = vst [vmem:[#allocation3 + $0x4d8] sm:$0xff] %v6769
        %7090 = vst [vmem:[#allocation3 + $0x4e0] sm:$0xff] %v6770
        %7091 = vst [vmem:[#allocation3 + $0x4e8] sm:$0xff] %v6771
        %7092 = vst [vmem:[#allocation3 + $0x4f0] sm:$0xff] %v6772
        %7093 = vst [vmem:[#allocation3 + $0x4f8] sm:$0xff] %v6773
      $region32: #{mr_forward_model_static.1} parent=27 // pred_fallthru
        _
      %v7094 = vld [vmem:[%s260] sm:$0xff]
      %v7095 = vld [vmem:[%s260 + $0x8] sm:$0xff]
      %v7096 = vld [vmem:[%s260 + $0x10] sm:$0xff]
      %v7097 = vld [vmem:[%s260 + $0x18] sm:$0xff]
      %v7098 = vld [vmem:[#allocation2] sm:$0xff]
      %v7099 = vld [vmem:[#allocation2 + $0x8] sm:$0xff]
      %v7100 = vld [vmem:[#allocation2 + $0x10] sm:$0xff]
      %v7101 = vld [vmem:[#allocation2 + $0x18] sm:$0xff]
      %v7102 = vld [vmem:[#allocation2 + $0x20] sm:$0xff]
      %v7103 = vld [vmem:[#allocation2 + $0x28] sm:$0xff]
      %v7104 = vld [vmem:[#allocation2 + $0x30] sm:$0xff]
      %v7105 = vld [vmem:[#allocation2 + $0x38] sm:$0xff]
      %v7106 = vld [vmem:[#allocation2 + $0x40] sm:$0xff]
      %v7107 = vld [vmem:[#allocation2 + $0x48] sm:$0xff]
      %v7108 = vld [vmem:[#allocation2 + $0x50] sm:$0xff]
      %v7109 = vld [vmem:[#allocation2 + $0x58] sm:$0xff]
      %v7110 = vld [vmem:[#allocation2 + $0x60] sm:$0xff]
      %v7111 = vld [vmem:[#allocation2 + $0x68] sm:$0xff]
      %v7112 = vld [vmem:[#allocation2 + $0x70] sm:$0xff]
      %v7113 = vld [vmem:[#allocation2 + $0x78] sm:$0xff]
      %v7114 = vld [vmem:[#allocation2 + $0x80] sm:$0xff]
      %v7115 = vld [vmem:[#allocation2 + $0x88] sm:$0xff]
      %v7116 = vld [vmem:[#allocation2 + $0x90] sm:$0xff]
      %v7117 = vld [vmem:[#allocation2 + $0x98] sm:$0xff]
      %v7118 = vld [vmem:[#allocation2 + $0xa0] sm:$0xff]
      %v7119 = vld [vmem:[#allocation2 + $0xa8] sm:$0xff]
      %v7120 = vld [vmem:[#allocation2 + $0xb0] sm:$0xff]
      %v7121 = vld [vmem:[#allocation2 + $0xb8] sm:$0xff]
      %v7122 = vld [vmem:[#allocation2 + $0xc0] sm:$0xff]
      %v7123 = vld [vmem:[#allocation2 + $0xc8] sm:$0xff]
      %v7124 = vld [vmem:[#allocation2 + $0xd0] sm:$0xff]
      %v7125 = vld [vmem:[#allocation2 + $0xd8] sm:$0xff]
      %v7126 = vld [vmem:[#allocation2 + $0xe0] sm:$0xff]
      %v7127 = vld [vmem:[#allocation2 + $0xe8] sm:$0xff]
      %v7128 = vld [vmem:[#allocation2 + $0xf0] sm:$0xff]
      %v7129 = vld [vmem:[#allocation2 + $0xf8] sm:$0xff]
      %v7130 = vld [vmem:[#allocation2 + $0x100] sm:$0xff]
      %v7131 = vld [vmem:[#allocation2 + $0x108] sm:$0xff]
      %v7132 = vld [vmem:[#allocation2 + $0x110] sm:$0xff]
      %v7133 = vld [vmem:[#allocation2 + $0x118] sm:$0xff]
      %v7134 = vld [vmem:[#allocation2 + $0x120] sm:$0xff]
      %v7135 = vld [vmem:[#allocation2 + $0x128] sm:$0xff]
      %v7136 = vld [vmem:[#allocation2 + $0x130] sm:$0xff]
      %v7137 = vld [vmem:[#allocation2 + $0x138] sm:$0xff]
      %v7138 = vld [vmem:[#allocation2 + $0x140] sm:$0xff]
      %v7139 = vld [vmem:[#allocation2 + $0x148] sm:$0xff]
      %v7140 = vld [vmem:[#allocation2 + $0x150] sm:$0xff]
      %v7141 = vld [vmem:[#allocation2 + $0x158] sm:$0xff]
      %v7142 = vld [vmem:[#allocation2 + $0x160] sm:$0xff]
      %v7143 = vld [vmem:[#allocation2 + $0x168] sm:$0xff]
      %v7144 = vld [vmem:[#allocation2 + $0x170] sm:$0xff]
      %v7145 = vld [vmem:[#allocation2 + $0x178] sm:$0xff]
      %v7146 = vld [vmem:[#allocation2 + $0x180] sm:$0xff]
      %v7147 = vld [vmem:[#allocation2 + $0x188] sm:$0xff]
      %v7148 = vld [vmem:[#allocation2 + $0x190] sm:$0xff]
      %v7149 = vld [vmem:[#allocation2 + $0x198] sm:$0xff]
      %v7150 = vld [vmem:[#allocation2 + $0x1a0] sm:$0xff]
      %v7151 = vld [vmem:[#allocation2 + $0x1a8] sm:$0xff]
      %v7152 = vld [vmem:[#allocation2 + $0x1b0] sm:$0xff]
      %v7153 = vld [vmem:[#allocation2 + $0x1b8] sm:$0xff]
      %v7154 = vld [vmem:[#allocation2 + $0x1c0] sm:$0xff]
      %v7155 = vld [vmem:[#allocation2 + $0x1c8] sm:$0xff]
      %v7156 = vld [vmem:[#allocation2 + $0x1d0] sm:$0xff]
      %v7157 = vld [vmem:[#allocation2 + $0x1d8] sm:$0xff]
      %v7158 = vld [vmem:[#allocation2 + $0x1e0] sm:$0xff]
      %v7159 = vld [vmem:[#allocation2 + $0x1e8] sm:$0xff]
      %v7160 = vld [vmem:[#allocation2 + $0x1f0] sm:$0xff]
      %v7161 = vld [vmem:[#allocation2 + $0x1f8] sm:$0xff]
      %v7162 = vld [vmem:[#allocation2 + $0x200] sm:$0xff]
      %v7163 = vld [vmem:[#allocation2 + $0x208] sm:$0xff]
      %v7164 = vld [vmem:[#allocation2 + $0x210] sm:$0xff]
      %v7165 = vld [vmem:[#allocation2 + $0x218] sm:$0xff]
      %v7166 = vld [vmem:[#allocation2 + $0x220] sm:$0xff]
      %v7167 = vld [vmem:[#allocation2 + $0x228] sm:$0xff]
      %v7168 = vld [vmem:[#allocation2 + $0x230] sm:$0xff]
      %v7169 = vld [vmem:[#allocation2 + $0x238] sm:$0xff]
      %v7170 = vld [vmem:[#allocation2 + $0x240] sm:$0xff]
      %v7171 = vld [vmem:[#allocation2 + $0x248] sm:$0xff]
      %v7172 = vld [vmem:[#allocation2 + $0x250] sm:$0xff]
      %v7173 = vld [vmem:[#allocation2 + $0x258] sm:$0xff]
      %v7174 = vld [vmem:[#allocation2 + $0x260] sm:$0xff]
      %v7175 = vld [vmem:[#allocation2 + $0x268] sm:$0xff]
      %v7176 = vld [vmem:[#allocation2 + $0x270] sm:$0xff]
      %v7177 = vld [vmem:[#allocation2 + $0x278] sm:$0xff]
      %v7178 = vld [vmem:[#allocation2 + $0x280] sm:$0xff]
      %v7179 = vld [vmem:[#allocation2 + $0x288] sm:$0xff]
      %v7180 = vld [vmem:[#allocation2 + $0x290] sm:$0xff]
      %v7181 = vld [vmem:[#allocation2 + $0x298] sm:$0xff]
      %v7182 = vld [vmem:[#allocation2 + $0x2a0] sm:$0xff]
      %v7183 = vld [vmem:[#allocation2 + $0x2a8] sm:$0xff]
      %v7184 = vld [vmem:[#allocation2 + $0x2b0] sm:$0xff]
      %v7185 = vld [vmem:[#allocation2 + $0x2b8] sm:$0xff]
      %v7186 = vld [vmem:[#allocation2 + $0x2c0] sm:$0xff]
      %v7187 = vld [vmem:[#allocation2 + $0x2c8] sm:$0xff]
      %v7188 = vld [vmem:[#allocation2 + $0x2d0] sm:$0xff]
      %v7189 = vld [vmem:[#allocation2 + $0x2d8] sm:$0xff]
      %v7190 = vld [vmem:[#allocation2 + $0x2e0] sm:$0xff]
      %v7191 = vld [vmem:[#allocation2 + $0x2e8] sm:$0xff]
      %v7192 = vld [vmem:[#allocation2 + $0x2f0] sm:$0xff]
      %v7193 = vld [vmem:[#allocation2 + $0x2f8] sm:$0xff]
      %v7194 = vld [vmem:[#allocation2 + $0x300] sm:$0xff]
      %v7195 = vld [vmem:[#allocation2 + $0x308] sm:$0xff]
      %v7196 = vld [vmem:[#allocation2 + $0x310] sm:$0xff]
      %v7197 = vld [vmem:[#allocation2 + $0x318] sm:$0xff]
      %v7198 = vld [vmem:[#allocation2 + $0x320] sm:$0xff]
      %v7199 = vld [vmem:[#allocation2 + $0x328] sm:$0xff]
      %v7200 = vld [vmem:[#allocation2 + $0x330] sm:$0xff]
      %v7201 = vld [vmem:[#allocation2 + $0x338] sm:$0xff]
      %v7202 = vld [vmem:[#allocation2 + $0x340] sm:$0xff]
      %v7203 = vld [vmem:[#allocation2 + $0x348] sm:$0xff]
      %v7204 = vld [vmem:[#allocation2 + $0x350] sm:$0xff]
      %v7205 = vld [vmem:[#allocation2 + $0x358] sm:$0xff]
      %v7206 = vld [vmem:[#allocation2 + $0x360] sm:$0xff]
      %v7207 = vld [vmem:[#allocation2 + $0x368] sm:$0xff]
      %v7208 = vld [vmem:[#allocation2 + $0x370] sm:$0xff]
      %v7209 = vld [vmem:[#allocation2 + $0x378] sm:$0xff]
      %v7210 = vld [vmem:[#allocation2 + $0x380] sm:$0xff]
      %v7211 = vld [vmem:[#allocation2 + $0x388] sm:$0xff]
      %v7212 = vld [vmem:[#allocation2 + $0x390] sm:$0xff]
      %v7213 = vld [vmem:[#allocation2 + $0x398] sm:$0xff]
      %v7214 = vld [vmem:[#allocation2 + $0x3a0] sm:$0xff]
      %v7215 = vld [vmem:[#allocation2 + $0x3a8] sm:$0xff]
      %v7216 = vld [vmem:[#allocation2 + $0x3b0] sm:$0xff]
      %v7217 = vld [vmem:[#allocation2 + $0x3b8] sm:$0xff]
      %v7218 = vld [vmem:[#allocation2 + $0x3c0] sm:$0xff]
      %v7219 = vld [vmem:[#allocation2 + $0x3c8] sm:$0xff]
      %v7220 = vld [vmem:[#allocation2 + $0x3d0] sm:$0xff]
      %v7221 = vld [vmem:[#allocation2 + $0x3d8] sm:$0xff]
      %v7222 = vld [vmem:[#allocation2 + $0x3e0] sm:$0xff]
      %v7223 = vld [vmem:[#allocation2 + $0x3e8] sm:$0xff]
      %v7224 = vld [vmem:[#allocation2 + $0x3f0] sm:$0xff]
      %v7225 = vld [vmem:[#allocation2 + $0x3f8] sm:$0xff]
      %v7226 = vld [vmem:[#allocation2 + $0x400] sm:$0xff]
      %v7227 = vld [vmem:[#allocation2 + $0x408] sm:$0xff]
      %v7228 = vld [vmem:[#allocation2 + $0x410] sm:$0xff]
      %v7229 = vld [vmem:[#allocation2 + $0x418] sm:$0xff]
      %v7230 = vld [vmem:[#allocation2 + $0x420] sm:$0xff]
      %v7231 = vld [vmem:[#allocation2 + $0x428] sm:$0xff]
      %v7232 = vld [vmem:[#allocation2 + $0x430] sm:$0xff]
      %v7233 = vld [vmem:[#allocation2 + $0x438] sm:$0xff]
      %v7234 = vld [vmem:[#allocation2 + $0x440] sm:$0xff]
      %v7235 = vld [vmem:[#allocation2 + $0x448] sm:$0xff]
      %v7236 = vld [vmem:[#allocation2 + $0x450] sm:$0xff]
      %v7237 = vld [vmem:[#allocation2 + $0x458] sm:$0xff]
      %v7238 = vld [vmem:[#allocation2 + $0x460] sm:$0xff]
      %v7239 = vld [vmem:[#allocation2 + $0x468] sm:$0xff]
      %v7240 = vld [vmem:[#allocation2 + $0x470] sm:$0xff]
      %v7241 = vld [vmem:[#allocation2 + $0x478] sm:$0xff]
      %v7242 = vld [vmem:[#allocation2 + $0x480] sm:$0xff]
      %v7243 = vld [vmem:[#allocation2 + $0x488] sm:$0xff]
      %v7244 = vld [vmem:[#allocation2 + $0x490] sm:$0xff]
      %v7245 = vld [vmem:[#allocation2 + $0x498] sm:$0xff]
      %v7246 = vld [vmem:[#allocation2 + $0x4a0] sm:$0xff]
      %v7247 = vld [vmem:[#allocation2 + $0x4a8] sm:$0xff]
      %v7248 = vld [vmem:[#allocation2 + $0x4b0] sm:$0xff]
      %v7249 = vld [vmem:[#allocation2 + $0x4b8] sm:$0xff]
      %v7250 = vld [vmem:[#allocation2 + $0x4c0] sm:$0xff]
      %v7251 = vld [vmem:[#allocation2 + $0x4c8] sm:$0xff]
      %v7252 = vld [vmem:[#allocation2 + $0x4d0] sm:$0xff]
      %v7253 = vld [vmem:[#allocation2 + $0x4d8] sm:$0xff]
      %v7254 = vld [vmem:[#allocation2 + $0x4e0] sm:$0xff]
      %v7255 = vld [vmem:[#allocation2 + $0x4e8] sm:$0xff]
      %v7256 = vld [vmem:[#allocation2 + $0x4f0] sm:$0xff]
      %v7257 = vld [vmem:[#allocation2 + $0x4f8] sm:$0xff]
      %7258 = vmatprep.subr.mxu0 %v7174
      %7259 = vmatpush1.msra.mxu0 %v7173
      %7260 = vmatprep.subr.mxu0 %v7169
      %7261 = vmatpush1.msra.mxu0 %v7168
      %7262 = vmatprep.subr.mxu0 %v7164
      %7263 = vmatpush1.msra.mxu0 %v7163
      %7264 = vmatprep.subr.mxu0 %v7159
      %7265 = vmatpush1.msra.mxu0 %v7158
      %7266 = vmatprep.subr.mxu0 %v7154
      %7267 = vmatpush1.msra.mxu0 %v7153
      %7268 = vmatprep.subr.mxu0 %v7149
      %7269 = vmatpush1.msra.mxu0 %v7148
      %7270 = vmatprep.subr.mxu0 %v7144
      %7271 = vmatpush1.msra.mxu0 %v7143
      %7272 = vmatprep.subr.mxu0 %v7139
      %7273 = vmatpush1.msra.mxu0 %v7138
      %7274 = vmatprep.subr.mxu0 %v7134
      %7275 = vmatpush1.msra.mxu0 %v7133
      %7276 = vmatprep.subr.mxu0 %v7129
      %7277 = vmatpush1.msra.mxu0 %v7128
      %7278 = vmatprep.subr.mxu0 %v7124
      %7279 = vmatpush1.msra.mxu0 %v7123
      %7280 = vmatprep.subr.mxu0 %v7119
      %7281 = vmatpush1.msra.mxu0 %v7118
      %7282 = vmatprep.subr.mxu0 %v7114
      %7283 = vmatpush1.msra.mxu0 %v7113
      %7284 = vmatprep.subr.mxu0 %v7109
      %7285 = vmatpush1.msra.mxu0 %v7108
      %7286 = vmatprep.subr.mxu0 %v7104
      %7287 = vmatpush1.msra.mxu0 %v7103
      %7288 = vmatprep.subr.mxu0 %v7099
      %7289 = vmatpush1.msra.mxu0 %v7098
      %7290 = vmatprep.subr.mxu0 %v7254
      %7291 = vmatpush2.msra.mxu0 %v7253
      %7292 = vmatprep.subr.mxu0 %v7249
      %7293 = vmatpush2.msra.mxu0 %v7248
      %7294 = vmatprep.subr.mxu0 %v7244
      %7295 = vmatpush2.msra.mxu0 %v7243
      %7296 = vmatprep.subr.mxu0 %v7239
      %7297 = vmatpush2.msra.mxu0 %v7238
      %7298 = vmatprep.subr.mxu0 %v7234
      %7299 = vmatpush2.msra.mxu0 %v7233
      %7300 = vmatprep.subr.mxu0 %v7229
      %7301 = vmatpush2.msra.mxu0 %v7228
      %7302 = vmatprep.subr.mxu0 %v7224
      %7303 = vmatpush2.msra.mxu0 %v7223
      %7304 = vmatprep.subr.mxu0 %v7219
      %7305 = vmatpush2.msra.mxu0 %v7218
      %7306 = vmatprep.subr.mxu0 %v7214
      %7307 = vmatpush2.msra.mxu0 %v7213
      %7308 = vmatprep.subr.mxu0 %v7209
      %7309 = vmatpush2.msra.mxu0 %v7208
      %7310 = vmatprep.subr.mxu0 %v7204
      %7311 = vmatpush2.msra.mxu0 %v7203
      %7312 = vmatprep.subr.mxu0 %v7199
      %7313 = vmatpush2.msra.mxu0 %v7198
      %7314 = vmatprep.subr.mxu0 %v7194
      %7315 = vmatpush2.msra.mxu0 %v7193
      %7316 = vmatprep.subr.mxu0 %v7189
      %7317 = vmatpush2.msra.mxu0 %v7188
      %7318 = vmatprep.subr.mxu0 %v7184
      %7319 = vmatpush2.msra.mxu0 %v7183
      %7320 = vmatprep.subr.mxu0 %v7179
      %7321 = vmatpush2.msra.mxu0 %v7178
      %7322 = vmatprep.mubr.f32.mxu0 %v7095
      %7323 = vmatmul.mubr.f32.gmra.mxu0 %v7094
      %v7324 = vpop.f32.mrf.mxu0
      %v7325 = vadd.f32 0.0, %v7324
      %v7326 = vpop.f32.mrf.mxu0
      %v7327 = vadd.f32 0.0, %v7326
      %7328 = vmatprep.mubr.f32.mxu0 %v7097
      %7329 = vmatmul.mubr.f32.gmra.mxu0 %v7096
      %v7330 = vpop.f32.mrf.mxu0
      %v7331 = vadd.f32 0.0, %v7330
      %v7332 = vpop.f32.mrf.mxu0
      %v7333 = vadd.f32 0.0, %v7332
      %7334 = vdwg.mxu0
      %7335 = vmatprep.subr.mxu0 %v7176
      %7336 = vmatpush1.msra.mxu0 %v7175
      %7337 = vmatprep.subr.mxu0 %v7171
      %7338 = vmatpush1.msra.mxu0 %v7170
      %7339 = vmatprep.subr.mxu0 %v7166
      %7340 = vmatpush1.msra.mxu0 %v7165
      %7341 = vmatprep.subr.mxu0 %v7161
      %7342 = vmatpush1.msra.mxu0 %v7160
      %7343 = vmatprep.subr.mxu0 %v7156
      %7344 = vmatpush1.msra.mxu0 %v7155
      %7345 = vmatprep.subr.mxu0 %v7151
      %7346 = vmatpush1.msra.mxu0 %v7150
      %7347 = vmatprep.subr.mxu0 %v7146
      %7348 = vmatpush1.msra.mxu0 %v7145
      %7349 = vmatprep.subr.mxu0 %v7141
      %7350 = vmatpush1.msra.mxu0 %v7140
      %7351 = vmatprep.subr.mxu0 %v7136
      %7352 = vmatpush1.msra.mxu0 %v7135
      %7353 = vmatprep.subr.mxu0 %v7131
      %7354 = vmatpush1.msra.mxu0 %v7130
      %7355 = vmatprep.subr.mxu0 %v7126
      %7356 = vmatpush1.msra.mxu0 %v7125
      %7357 = vmatprep.subr.mxu0 %v7121
      %7358 = vmatpush1.msra.mxu0 %v7120
      %7359 = vmatprep.subr.mxu0 %v7116
      %7360 = vmatpush1.msra.mxu0 %v7115
      %7361 = vmatprep.subr.mxu0 %v7111
      %7362 = vmatpush1.msra.mxu0 %v7110
      %7363 = vmatprep.subr.mxu0 %v7106
      %7364 = vmatpush1.msra.mxu0 %v7105
      %7365 = vmatprep.subr.mxu0 %v7101
      %7366 = vmatpush1.msra.mxu0 %v7100
      %7367 = vmatprep.subr.mxu0 %v7256
      %7368 = vmatpush2.msra.mxu0 %v7255
      %7369 = vmatprep.subr.mxu0 %v7251
      %7370 = vmatpush2.msra.mxu0 %v7250
      %7371 = vmatprep.subr.mxu0 %v7246
      %7372 = vmatpush2.msra.mxu0 %v7245
      %7373 = vmatprep.subr.mxu0 %v7241
      %7374 = vmatpush2.msra.mxu0 %v7240
      %7375 = vmatprep.subr.mxu0 %v7236
      %7376 = vmatpush2.msra.mxu0 %v7235
      %7377 = vmatprep.subr.mxu0 %v7231
      %7378 = vmatpush2.msra.mxu0 %v7230
      %7379 = vmatprep.subr.mxu0 %v7226
      %7380 = vmatpush2.msra.mxu0 %v7225
      %7381 = vmatprep.subr.mxu0 %v7221
      %7382 = vmatpush2.msra.mxu0 %v7220
      %7383 = vmatprep.subr.mxu0 %v7216
      %7384 = vmatpush2.msra.mxu0 %v7215
      %7385 = vmatprep.subr.mxu0 %v7211
      %7386 = vmatpush2.msra.mxu0 %v7210
      %7387 = vmatprep.subr.mxu0 %v7206
      %7388 = vmatpush2.msra.mxu0 %v7205
      %7389 = vmatprep.subr.mxu0 %v7201
      %7390 = vmatpush2.msra.mxu0 %v7200
      %7391 = vmatprep.subr.mxu0 %v7196
      %7392 = vmatpush2.msra.mxu0 %v7195
      %7393 = vmatprep.subr.mxu0 %v7191
      %7394 = vmatpush2.msra.mxu0 %v7190
      %7395 = vmatprep.subr.mxu0 %v7186
      %7396 = vmatpush2.msra.mxu0 %v7185
      %7397 = vmatprep.subr.mxu0 %v7181
      %7398 = vmatpush2.msra.mxu0 %v7180
      %7399 = vmatprep.mubr.f32.mxu0 %v7095
      %7400 = vmatmul.mubr.f32.gmra.mxu0 %v7094
      %v7401 = vpop.f32.mrf.mxu0
      %v7402 = vadd.f32 0.0, %v7401
      %v7403 = vpop.f32.mrf.mxu0
      %v7404 = vadd.f32 0.0, %v7403
      %7405 = vmatprep.mubr.f32.mxu0 %v7097
      %7406 = vmatmul.mubr.f32.gmra.mxu0 %v7096
      %v7407 = vpop.f32.mrf.mxu0
      %v7408 = vadd.f32 0.0, %v7407
      %v7409 = vpop.f32.mrf.mxu0
      %v7410 = vadd.f32 0.0, %v7409
      %7411 = vdwg.mxu0
      %7412 = vmatprep.subr.mxu0 0.0
      %7413 = vmatpush1.msra.mxu0 %v7177
      %7414 = vmatprep.subr.mxu0 0.0
      %7415 = vmatpush1.msra.mxu0 %v7172
      %7416 = vmatprep.subr.mxu0 0.0
      %7417 = vmatpush1.msra.mxu0 %v7167
      %7418 = vmatprep.subr.mxu0 0.0
      %7419 = vmatpush1.msra.mxu0 %v7162
      %7420 = vmatprep.subr.mxu0 0.0
      %7421 = vmatpush1.msra.mxu0 %v7157
      %7422 = vmatprep.subr.mxu0 0.0
      %7423 = vmatpush1.msra.mxu0 %v7152
      %7424 = vmatprep.subr.mxu0 0.0
      %7425 = vmatpush1.msra.mxu0 %v7147
      %7426 = vmatprep.subr.mxu0 0.0
      %7427 = vmatpush1.msra.mxu0 %v7142
      %7428 = vmatprep.subr.mxu0 0.0
      %7429 = vmatpush1.msra.mxu0 %v7137
      %7430 = vmatprep.subr.mxu0 0.0
      %7431 = vmatpush1.msra.mxu0 %v7132
      %7432 = vmatprep.subr.mxu0 0.0
      %7433 = vmatpush1.msra.mxu0 %v7127
      %7434 = vmatprep.subr.mxu0 0.0
      %7435 = vmatpush1.msra.mxu0 %v7122
      %7436 = vmatprep.subr.mxu0 0.0
      %7437 = vmatpush1.msra.mxu0 %v7117
      %7438 = vmatprep.subr.mxu0 0.0
      %7439 = vmatpush1.msra.mxu0 %v7112
      %7440 = vmatprep.subr.mxu0 0.0
      %7441 = vmatpush1.msra.mxu0 %v7107
      %7442 = vmatprep.subr.mxu0 0.0
      %7443 = vmatpush1.msra.mxu0 %v7102
      %7444 = vmatprep.subr.mxu0 0.0
      %7445 = vmatpush2.msra.mxu0 %v7257
      %7446 = vmatprep.subr.mxu0 0.0
      %7447 = vmatpush2.msra.mxu0 %v7252
      %7448 = vmatprep.subr.mxu0 0.0
      %7449 = vmatpush2.msra.mxu0 %v7247
      %7450 = vmatprep.subr.mxu0 0.0
      %7451 = vmatpush2.msra.mxu0 %v7242
      %7452 = vmatprep.subr.mxu0 0.0
      %7453 = vmatpush2.msra.mxu0 %v7237
      %7454 = vmatprep.subr.mxu0 0.0
      %7455 = vmatpush2.msra.mxu0 %v7232
      %7456 = vmatprep.subr.mxu0 0.0
      %7457 = vmatpush2.msra.mxu0 %v7227
      %7458 = vmatprep.subr.mxu0 0.0
      %7459 = vmatpush2.msra.mxu0 %v7222
      %7460 = vmatprep.subr.mxu0 0.0
      %7461 = vmatpush2.msra.mxu0 %v7217
      %7462 = vmatprep.subr.mxu0 0.0
      %7463 = vmatpush2.msra.mxu0 %v7212
      %7464 = vmatprep.subr.mxu0 0.0
      %7465 = vmatpush2.msra.mxu0 %v7207
      %7466 = vmatprep.subr.mxu0 0.0
      %7467 = vmatpush2.msra.mxu0 %v7202
      %7468 = vmatprep.subr.mxu0 0.0
      %7469 = vmatpush2.msra.mxu0 %v7197
      %7470 = vmatprep.subr.mxu0 0.0
      %7471 = vmatpush2.msra.mxu0 %v7192
      %7472 = vmatprep.subr.mxu0 0.0
      %7473 = vmatpush2.msra.mxu0 %v7187
      %7474 = vmatprep.subr.mxu0 0.0
      %7475 = vmatpush2.msra.mxu0 %v7182
      %7476 = vmatprep.mubr.f32.mxu0 %v7095
      %7477 = vmatmul.mubr.f32.gmra.mxu0 %v7094
      %v7478 = vpop.f32.mrf.mxu0
      %v7479 = vadd.f32 0.0, %v7478
      %v7480 = vpop.f32.mrf.mxu0
      %7481 = vmatprep.mubr.f32.mxu0 %v7097
      %7482 = vmatmul.mubr.f32.gmra.mxu0 %v7096
      %v7483 = vpop.f32.mrf.mxu0
      %v7484 = vadd.f32 0.0, %v7483
      %v7485 = vpop.f32.mrf.mxu0
      %7486 = vdwg.mxu0
      %v7487 = vld [vmem:[#allocation3] sm:$0xff]
      %v7488 = vld [vmem:[#allocation3 + $0x8] sm:$0xff]
      %v7489 = vld [vmem:[#allocation3 + $0x10] sm:$0xff]
      %v7490 = vld [vmem:[#allocation3 + $0x18] sm:$0xff]
      %v7491 = vld [vmem:[#allocation3 + $0x20] sm:$0xff]
      %v7492 = vld [vmem:[#allocation3 + $0x28] sm:$0xff]
      %v7493 = vld [vmem:[#allocation3 + $0x30] sm:$0xff]
      %v7494 = vld [vmem:[#allocation3 + $0x38] sm:$0xff]
      %v7495 = vld [vmem:[#allocation3 + $0x40] sm:$0xff]
      %v7496 = vld [vmem:[#allocation3 + $0x48] sm:$0xff]
      %v7497 = vld [vmem:[#allocation3 + $0x50] sm:$0xff]
      %v7498 = vld [vmem:[#allocation3 + $0x58] sm:$0xff]
      %v7499 = vld [vmem:[#allocation3 + $0x60] sm:$0xff]
      %v7500 = vld [vmem:[#allocation3 + $0x68] sm:$0xff]
      %v7501 = vld [vmem:[#allocation3 + $0x70] sm:$0xff]
      %v7502 = vld [vmem:[#allocation3 + $0x78] sm:$0xff]
      %v7503 = vld [vmem:[#allocation3 + $0x80] sm:$0xff]
      %v7504 = vld [vmem:[#allocation3 + $0x88] sm:$0xff]
      %v7505 = vld [vmem:[#allocation3 + $0x90] sm:$0xff]
      %v7506 = vld [vmem:[#allocation3 + $0x98] sm:$0xff]
      %v7507 = vld [vmem:[#allocation3 + $0xa0] sm:$0xff]
      %v7508 = vld [vmem:[#allocation3 + $0xa8] sm:$0xff]
      %v7509 = vld [vmem:[#allocation3 + $0xb0] sm:$0xff]
      %v7510 = vld [vmem:[#allocation3 + $0xb8] sm:$0xff]
      %v7511 = vld [vmem:[#allocation3 + $0xc0] sm:$0xff]
      %v7512 = vld [vmem:[#allocation3 + $0xc8] sm:$0xff]
      %v7513 = vld [vmem:[#allocation3 + $0xd0] sm:$0xff]
      %v7514 = vld [vmem:[#allocation3 + $0xd8] sm:$0xff]
      %v7515 = vld [vmem:[#allocation3 + $0xe0] sm:$0xff]
      %v7516 = vld [vmem:[#allocation3 + $0xe8] sm:$0xff]
      %v7517 = vld [vmem:[#allocation3 + $0xf0] sm:$0xff]
      %v7518 = vld [vmem:[#allocation3 + $0xf8] sm:$0xff]
      %v7519 = vld [vmem:[#allocation3 + $0x100] sm:$0xff]
      %v7520 = vld [vmem:[#allocation3 + $0x108] sm:$0xff]
      %v7521 = vld [vmem:[#allocation3 + $0x110] sm:$0xff]
      %v7522 = vld [vmem:[#allocation3 + $0x118] sm:$0xff]
      %v7523 = vld [vmem:[#allocation3 + $0x120] sm:$0xff]
      %v7524 = vld [vmem:[#allocation3 + $0x128] sm:$0xff]
      %v7525 = vld [vmem:[#allocation3 + $0x130] sm:$0xff]
      %v7526 = vld [vmem:[#allocation3 + $0x138] sm:$0xff]
      %v7527 = vld [vmem:[#allocation3 + $0x140] sm:$0xff]
      %v7528 = vld [vmem:[#allocation3 + $0x148] sm:$0xff]
      %v7529 = vld [vmem:[#allocation3 + $0x150] sm:$0xff]
      %v7530 = vld [vmem:[#allocation3 + $0x158] sm:$0xff]
      %v7531 = vld [vmem:[#allocation3 + $0x160] sm:$0xff]
      %v7532 = vld [vmem:[#allocation3 + $0x168] sm:$0xff]
      %v7533 = vld [vmem:[#allocation3 + $0x170] sm:$0xff]
      %v7534 = vld [vmem:[#allocation3 + $0x178] sm:$0xff]
      %v7535 = vld [vmem:[#allocation3 + $0x180] sm:$0xff]
      %v7536 = vld [vmem:[#allocation3 + $0x188] sm:$0xff]
      %v7537 = vld [vmem:[#allocation3 + $0x190] sm:$0xff]
      %v7538 = vld [vmem:[#allocation3 + $0x198] sm:$0xff]
      %v7539 = vld [vmem:[#allocation3 + $0x1a0] sm:$0xff]
      %v7540 = vld [vmem:[#allocation3 + $0x1a8] sm:$0xff]
      %v7541 = vld [vmem:[#allocation3 + $0x1b0] sm:$0xff]
      %v7542 = vld [vmem:[#allocation3 + $0x1b8] sm:$0xff]
      %v7543 = vld [vmem:[#allocation3 + $0x1c0] sm:$0xff]
      %v7544 = vld [vmem:[#allocation3 + $0x1c8] sm:$0xff]
      %v7545 = vld [vmem:[#allocation3 + $0x1d0] sm:$0xff]
      %v7546 = vld [vmem:[#allocation3 + $0x1d8] sm:$0xff]
      %v7547 = vld [vmem:[#allocation3 + $0x1e0] sm:$0xff]
      %v7548 = vld [vmem:[#allocation3 + $0x1e8] sm:$0xff]
      %v7549 = vld [vmem:[#allocation3 + $0x1f0] sm:$0xff]
      %v7550 = vld [vmem:[#allocation3 + $0x1f8] sm:$0xff]
      %v7551 = vld [vmem:[#allocation3 + $0x200] sm:$0xff]
      %v7552 = vld [vmem:[#allocation3 + $0x208] sm:$0xff]
      %v7553 = vld [vmem:[#allocation3 + $0x210] sm:$0xff]
      %v7554 = vld [vmem:[#allocation3 + $0x218] sm:$0xff]
      %v7555 = vld [vmem:[#allocation3 + $0x220] sm:$0xff]
      %v7556 = vld [vmem:[#allocation3 + $0x228] sm:$0xff]
      %v7557 = vld [vmem:[#allocation3 + $0x230] sm:$0xff]
      %v7558 = vld [vmem:[#allocation3 + $0x238] sm:$0xff]
      %v7559 = vld [vmem:[#allocation3 + $0x240] sm:$0xff]
      %v7560 = vld [vmem:[#allocation3 + $0x248] sm:$0xff]
      %v7561 = vld [vmem:[#allocation3 + $0x250] sm:$0xff]
      %v7562 = vld [vmem:[#allocation3 + $0x258] sm:$0xff]
      %v7563 = vld [vmem:[#allocation3 + $0x260] sm:$0xff]
      %v7564 = vld [vmem:[#allocation3 + $0x268] sm:$0xff]
      %v7565 = vld [vmem:[#allocation3 + $0x270] sm:$0xff]
      %v7566 = vld [vmem:[#allocation3 + $0x278] sm:$0xff]
      %v7567 = vld [vmem:[#allocation3 + $0x280] sm:$0xff]
      %v7568 = vld [vmem:[#allocation3 + $0x288] sm:$0xff]
      %v7569 = vld [vmem:[#allocation3 + $0x290] sm:$0xff]
      %v7570 = vld [vmem:[#allocation3 + $0x298] sm:$0xff]
      %v7571 = vld [vmem:[#allocation3 + $0x2a0] sm:$0xff]
      %v7572 = vld [vmem:[#allocation3 + $0x2a8] sm:$0xff]
      %v7573 = vld [vmem:[#allocation3 + $0x2b0] sm:$0xff]
      %v7574 = vld [vmem:[#allocation3 + $0x2b8] sm:$0xff]
      %v7575 = vld [vmem:[#allocation3 + $0x2c0] sm:$0xff]
      %v7576 = vld [vmem:[#allocation3 + $0x2c8] sm:$0xff]
      %v7577 = vld [vmem:[#allocation3 + $0x2d0] sm:$0xff]
      %v7578 = vld [vmem:[#allocation3 + $0x2d8] sm:$0xff]
      %v7579 = vld [vmem:[#allocation3 + $0x2e0] sm:$0xff]
      %v7580 = vld [vmem:[#allocation3 + $0x2e8] sm:$0xff]
      %v7581 = vld [vmem:[#allocation3 + $0x2f0] sm:$0xff]
      %v7582 = vld [vmem:[#allocation3 + $0x2f8] sm:$0xff]
      %v7583 = vld [vmem:[#allocation3 + $0x300] sm:$0xff]
      %v7584 = vld [vmem:[#allocation3 + $0x308] sm:$0xff]
      %v7585 = vld [vmem:[#allocation3 + $0x310] sm:$0xff]
      %v7586 = vld [vmem:[#allocation3 + $0x318] sm:$0xff]
      %v7587 = vld [vmem:[#allocation3 + $0x320] sm:$0xff]
      %v7588 = vld [vmem:[#allocation3 + $0x328] sm:$0xff]
      %v7589 = vld [vmem:[#allocation3 + $0x330] sm:$0xff]
      %v7590 = vld [vmem:[#allocation3 + $0x338] sm:$0xff]
      %v7591 = vld [vmem:[#allocation3 + $0x340] sm:$0xff]
      %v7592 = vld [vmem:[#allocation3 + $0x348] sm:$0xff]
      %v7593 = vld [vmem:[#allocation3 + $0x350] sm:$0xff]
      %v7594 = vld [vmem:[#allocation3 + $0x358] sm:$0xff]
      %v7595 = vld [vmem:[#allocation3 + $0x360] sm:$0xff]
      %v7596 = vld [vmem:[#allocation3 + $0x368] sm:$0xff]
      %v7597 = vld [vmem:[#allocation3 + $0x370] sm:$0xff]
      %v7598 = vld [vmem:[#allocation3 + $0x378] sm:$0xff]
      %v7599 = vld [vmem:[#allocation3 + $0x380] sm:$0xff]
      %v7600 = vld [vmem:[#allocation3 + $0x388] sm:$0xff]
      %v7601 = vld [vmem:[#allocation3 + $0x390] sm:$0xff]
      %v7602 = vld [vmem:[#allocation3 + $0x398] sm:$0xff]
      %v7603 = vld [vmem:[#allocation3 + $0x3a0] sm:$0xff]
      %v7604 = vld [vmem:[#allocation3 + $0x3a8] sm:$0xff]
      %v7605 = vld [vmem:[#allocation3 + $0x3b0] sm:$0xff]
      %v7606 = vld [vmem:[#allocation3 + $0x3b8] sm:$0xff]
      %v7607 = vld [vmem:[#allocation3 + $0x3c0] sm:$0xff]
      %v7608 = vld [vmem:[#allocation3 + $0x3c8] sm:$0xff]
      %v7609 = vld [vmem:[#allocation3 + $0x3d0] sm:$0xff]
      %v7610 = vld [vmem:[#allocation3 + $0x3d8] sm:$0xff]
      %v7611 = vld [vmem:[#allocation3 + $0x3e0] sm:$0xff]
      %v7612 = vld [vmem:[#allocation3 + $0x3e8] sm:$0xff]
      %v7613 = vld [vmem:[#allocation3 + $0x3f0] sm:$0xff]
      %v7614 = vld [vmem:[#allocation3 + $0x3f8] sm:$0xff]
      %v7615 = vld [vmem:[#allocation3 + $0x400] sm:$0xff]
      %v7616 = vld [vmem:[#allocation3 + $0x408] sm:$0xff]
      %v7617 = vld [vmem:[#allocation3 + $0x410] sm:$0xff]
      %v7618 = vld [vmem:[#allocation3 + $0x418] sm:$0xff]
      %v7619 = vld [vmem:[#allocation3 + $0x420] sm:$0xff]
      %v7620 = vld [vmem:[#allocation3 + $0x428] sm:$0xff]
      %v7621 = vld [vmem:[#allocation3 + $0x430] sm:$0xff]
      %v7622 = vld [vmem:[#allocation3 + $0x438] sm:$0xff]
      %v7623 = vld [vmem:[#allocation3 + $0x440] sm:$0xff]
      %v7624 = vld [vmem:[#allocation3 + $0x448] sm:$0xff]
      %v7625 = vld [vmem:[#allocation3 + $0x450] sm:$0xff]
      %v7626 = vld [vmem:[#allocation3 + $0x458] sm:$0xff]
      %v7627 = vld [vmem:[#allocation3 + $0x460] sm:$0xff]
      %v7628 = vld [vmem:[#allocation3 + $0x468] sm:$0xff]
      %v7629 = vld [vmem:[#allocation3 + $0x470] sm:$0xff]
      %v7630 = vld [vmem:[#allocation3 + $0x478] sm:$0xff]
      %v7631 = vld [vmem:[#allocation3 + $0x480] sm:$0xff]
      %v7632 = vld [vmem:[#allocation3 + $0x488] sm:$0xff]
      %v7633 = vld [vmem:[#allocation3 + $0x490] sm:$0xff]
      %v7634 = vld [vmem:[#allocation3 + $0x498] sm:$0xff]
      %v7635 = vld [vmem:[#allocation3 + $0x4a0] sm:$0xff]
      %v7636 = vld [vmem:[#allocation3 + $0x4a8] sm:$0xff]
      %v7637 = vld [vmem:[#allocation3 + $0x4b0] sm:$0xff]
      %v7638 = vld [vmem:[#allocation3 + $0x4b8] sm:$0xff]
      %v7639 = vld [vmem:[#allocation3 + $0x4c0] sm:$0xff]
      %v7640 = vld [vmem:[#allocation3 + $0x4c8] sm:$0xff]
      %v7641 = vld [vmem:[#allocation3 + $0x4d0] sm:$0xff]
      %v7642 = vld [vmem:[#allocation3 + $0x4d8] sm:$0xff]
      %v7643 = vld [vmem:[#allocation3 + $0x4e0] sm:$0xff]
      %v7644 = vld [vmem:[#allocation3 + $0x4e8] sm:$0xff]
      %v7645 = vld [vmem:[#allocation3 + $0x4f0] sm:$0xff]
      %v7646 = vld [vmem:[#allocation3 + $0x4f8] sm:$0xff]
      %7647 = vmatprep.subr.mxu0 %v7563
      %7648 = vmatpush1.msra.mxu0 %v7562
      %7649 = vmatprep.subr.mxu0 %v7558
      %7650 = vmatpush1.msra.mxu0 %v7557
      %7651 = vmatprep.subr.mxu0 %v7553
      %7652 = vmatpush1.msra.mxu0 %v7552
      %7653 = vmatprep.subr.mxu0 %v7548
      %7654 = vmatpush1.msra.mxu0 %v7547
      %7655 = vmatprep.subr.mxu0 %v7543
      %7656 = vmatpush1.msra.mxu0 %v7542
      %7657 = vmatprep.subr.mxu0 %v7538
      %7658 = vmatpush1.msra.mxu0 %v7537
      %7659 = vmatprep.subr.mxu0 %v7533
      %7660 = vmatpush1.msra.mxu0 %v7532
      %7661 = vmatprep.subr.mxu0 %v7528
      %7662 = vmatpush1.msra.mxu0 %v7527
      %7663 = vmatprep.subr.mxu0 %v7523
      %7664 = vmatpush1.msra.mxu0 %v7522
      %7665 = vmatprep.subr.mxu0 %v7518
      %7666 = vmatpush1.msra.mxu0 %v7517
      %7667 = vmatprep.subr.mxu0 %v7513
      %7668 = vmatpush1.msra.mxu0 %v7512
      %7669 = vmatprep.subr.mxu0 %v7508
      %7670 = vmatpush1.msra.mxu0 %v7507
      %7671 = vmatprep.subr.mxu0 %v7503
      %7672 = vmatpush1.msra.mxu0 %v7502
      %7673 = vmatprep.subr.mxu0 %v7498
      %7674 = vmatpush1.msra.mxu0 %v7497
      %7675 = vmatprep.subr.mxu0 %v7493
      %7676 = vmatpush1.msra.mxu0 %v7492
      %7677 = vmatprep.subr.mxu0 %v7488
      %7678 = vmatpush1.msra.mxu0 %v7487
      %7679 = vmatprep.subr.mxu0 %v7643
      %7680 = vmatpush2.msra.mxu0 %v7642
      %7681 = vmatprep.subr.mxu0 %v7638
      %7682 = vmatpush2.msra.mxu0 %v7637
      %7683 = vmatprep.subr.mxu0 %v7633
      %7684 = vmatpush2.msra.mxu0 %v7632
      %7685 = vmatprep.subr.mxu0 %v7628
      %7686 = vmatpush2.msra.mxu0 %v7627
      %7687 = vmatprep.subr.mxu0 %v7623
      %7688 = vmatpush2.msra.mxu0 %v7622
      %7689 = vmatprep.subr.mxu0 %v7618
      %7690 = vmatpush2.msra.mxu0 %v7617
      %7691 = vmatprep.subr.mxu0 %v7613
      %7692 = vmatpush2.msra.mxu0 %v7612
      %7693 = vmatprep.subr.mxu0 %v7608
      %7694 = vmatpush2.msra.mxu0 %v7607
      %7695 = vmatprep.subr.mxu0 %v7603
      %7696 = vmatpush2.msra.mxu0 %v7602
      %7697 = vmatprep.subr.mxu0 %v7598
      %7698 = vmatpush2.msra.mxu0 %v7597
      %7699 = vmatprep.subr.mxu0 %v7593
      %7700 = vmatpush2.msra.mxu0 %v7592
      %7701 = vmatprep.subr.mxu0 %v7588
      %7702 = vmatpush2.msra.mxu0 %v7587
      %7703 = vmatprep.subr.mxu0 %v7583
      %7704 = vmatpush2.msra.mxu0 %v7582
      %7705 = vmatprep.subr.mxu0 %v7578
      %7706 = vmatpush2.msra.mxu0 %v7577
      %7707 = vmatprep.subr.mxu0 %v7573
      %7708 = vmatpush2.msra.mxu0 %v7572
      %7709 = vmatprep.subr.mxu0 %v7568
      %7710 = vmatpush2.msra.mxu0 %v7567
      %7711 = vmatprep.mubr.f32.mxu0 %v7095
      %7712 = vmatmul.mubr.f32.gmra.mxu0 %v7094
      %v7713 = vpop.f32.mrf.mxu0
      %v7714 = vadd.f32 0.0, %v7713
      %v7715 = vpop.f32.mrf.mxu0
      %v7716 = vadd.f32 0.0, %v7715
      %7717 = vmatprep.mubr.f32.mxu0 %v7097
      %7718 = vmatmul.mubr.f32.gmra.mxu0 %v7096
      %v7719 = vpop.f32.mrf.mxu0
      %v7720 = vadd.f32 0.0, %v7719
      %v7721 = vpop.f32.mrf.mxu0
      %v7722 = vadd.f32 0.0, %v7721
      %7723 = vdwg.mxu0
      %7724 = vmatprep.subr.mxu0 %v7565
      %7725 = vmatpush1.msra.mxu0 %v7564
      %7726 = vmatprep.subr.mxu0 %v7560
      %7727 = vmatpush1.msra.mxu0 %v7559
      %7728 = vmatprep.subr.mxu0 %v7555
      %7729 = vmatpush1.msra.mxu0 %v7554
      %7730 = vmatprep.subr.mxu0 %v7550
      %7731 = vmatpush1.msra.mxu0 %v7549
      %7732 = vmatprep.subr.mxu0 %v7545
      %7733 = vmatpush1.msra.mxu0 %v7544
      %7734 = vmatprep.subr.mxu0 %v7540
      %7735 = vmatpush1.msra.mxu0 %v7539
      %7736 = vmatprep.subr.mxu0 %v7535
      %7737 = vmatpush1.msra.mxu0 %v7534
      %7738 = vmatprep.subr.mxu0 %v7530
      %7739 = vmatpush1.msra.mxu0 %v7529
      %7740 = vmatprep.subr.mxu0 %v7525
      %7741 = vmatpush1.msra.mxu0 %v7524
      %7742 = vmatprep.subr.mxu0 %v7520
      %7743 = vmatpush1.msra.mxu0 %v7519
      %7744 = vmatprep.subr.mxu0 %v7515
      %7745 = vmatpush1.msra.mxu0 %v7514
      %7746 = vmatprep.subr.mxu0 %v7510
      %7747 = vmatpush1.msra.mxu0 %v7509
      %7748 = vmatprep.subr.mxu0 %v7505
      %7749 = vmatpush1.msra.mxu0 %v7504
      %7750 = vmatprep.subr.mxu0 %v7500
      %7751 = vmatpush1.msra.mxu0 %v7499
      %7752 = vmatprep.subr.mxu0 %v7495
      %7753 = vmatpush1.msra.mxu0 %v7494
      %7754 = vmatprep.subr.mxu0 %v7490
      %7755 = vmatpush1.msra.mxu0 %v7489
      %7756 = vmatprep.subr.mxu0 %v7645
      %7757 = vmatpush2.msra.mxu0 %v7644
      %7758 = vmatprep.subr.mxu0 %v7640
      %7759 = vmatpush2.msra.mxu0 %v7639
      %7760 = vmatprep.subr.mxu0 %v7635
      %7761 = vmatpush2.msra.mxu0 %v7634
      %7762 = vmatprep.subr.mxu0 %v7630
      %7763 = vmatpush2.msra.mxu0 %v7629
      %7764 = vmatprep.subr.mxu0 %v7625
      %7765 = vmatpush2.msra.mxu0 %v7624
      %7766 = vmatprep.subr.mxu0 %v7620
      %7767 = vmatpush2.msra.mxu0 %v7619
      %7768 = vmatprep.subr.mxu0 %v7615
      %7769 = vmatpush2.msra.mxu0 %v7614
      %7770 = vmatprep.subr.mxu0 %v7610
      %7771 = vmatpush2.msra.mxu0 %v7609
      %7772 = vmatprep.subr.mxu0 %v7605
      %7773 = vmatpush2.msra.mxu0 %v7604
      %7774 = vmatprep.subr.mxu0 %v7600
      %7775 = vmatpush2.msra.mxu0 %v7599
      %7776 = vmatprep.subr.mxu0 %v7595
      %7777 = vmatpush2.msra.mxu0 %v7594
      %7778 = vmatprep.subr.mxu0 %v7590
      %7779 = vmatpush2.msra.mxu0 %v7589
      %7780 = vmatprep.subr.mxu0 %v7585
      %7781 = vmatpush2.msra.mxu0 %v7584
      %7782 = vmatprep.subr.mxu0 %v7580
      %7783 = vmatpush2.msra.mxu0 %v7579
      %7784 = vmatprep.subr.mxu0 %v7575
      %7785 = vmatpush2.msra.mxu0 %v7574
      %7786 = vmatprep.subr.mxu0 %v7570
      %7787 = vmatpush2.msra.mxu0 %v7569
      %7788 = vmatprep.mubr.f32.mxu0 %v7095
      %7789 = vmatmul.mubr.f32.gmra.mxu0 %v7094
      %v7790 = vpop.f32.mrf.mxu0
      %v7791 = vadd.f32 0.0, %v7790
      %v7792 = vpop.f32.mrf.mxu0
      %v7793 = vadd.f32 0.0, %v7792
      %7794 = vmatprep.mubr.f32.mxu0 %v7097
      %7795 = vmatmul.mubr.f32.gmra.mxu0 %v7096
      %v7796 = vpop.f32.mrf.mxu0
      %v7797 = vadd.f32 0.0, %v7796
      %v7798 = vpop.f32.mrf.mxu0
      %v7799 = vadd.f32 0.0, %v7798
      %7800 = vdwg.mxu0
      %7801 = vmatprep.subr.mxu0 0.0
      %7802 = vmatpush1.msra.mxu0 %v7566
      %7803 = vmatprep.subr.mxu0 0.0
      %7804 = vmatpush1.msra.mxu0 %v7561
      %7805 = vmatprep.subr.mxu0 0.0
      %7806 = vmatpush1.msra.mxu0 %v7556
      %7807 = vmatprep.subr.mxu0 0.0
      %7808 = vmatpush1.msra.mxu0 %v7551
      %7809 = vmatprep.subr.mxu0 0.0
      %7810 = vmatpush1.msra.mxu0 %v7546
      %7811 = vmatprep.subr.mxu0 0.0
      %7812 = vmatpush1.msra.mxu0 %v7541
      %7813 = vmatprep.subr.mxu0 0.0
      %7814 = vmatpush1.msra.mxu0 %v7536
      %7815 = vmatprep.subr.mxu0 0.0
      %7816 = vmatpush1.msra.mxu0 %v7531
      %7817 = vmatprep.subr.mxu0 0.0
      %7818 = vmatpush1.msra.mxu0 %v7526
      %7819 = vmatprep.subr.mxu0 0.0
      %7820 = vmatpush1.msra.mxu0 %v7521
      %7821 = vmatprep.subr.mxu0 0.0
      %7822 = vmatpush1.msra.mxu0 %v7516
      %7823 = vmatprep.subr.mxu0 0.0
      %7824 = vmatpush1.msra.mxu0 %v7511
      %7825 = vmatprep.subr.mxu0 0.0
      %7826 = vmatpush1.msra.mxu0 %v7506
      %7827 = vmatprep.subr.mxu0 0.0
      %7828 = vmatpush1.msra.mxu0 %v7501
      %7829 = vmatprep.subr.mxu0 0.0
      %7830 = vmatpush1.msra.mxu0 %v7496
      %7831 = vmatprep.subr.mxu0 0.0
      %7832 = vmatpush1.msra.mxu0 %v7491
      %7833 = vmatprep.subr.mxu0 0.0
      %7834 = vmatpush2.msra.mxu0 %v7646
      %7835 = vmatprep.subr.mxu0 0.0
      %7836 = vmatpush2.msra.mxu0 %v7641
      %7837 = vmatprep.subr.mxu0 0.0
      %7838 = vmatpush2.msra.mxu0 %v7636
      %7839 = vmatprep.subr.mxu0 0.0
      %7840 = vmatpush2.msra.mxu0 %v7631
      %7841 = vmatprep.subr.mxu0 0.0
      %7842 = vmatpush2.msra.mxu0 %v7626
      %7843 = vmatprep.subr.mxu0 0.0
      %7844 = vmatpush2.msra.mxu0 %v7621
      %7845 = vmatprep.subr.mxu0 0.0
      %7846 = vmatpush2.msra.mxu0 %v7616
      %7847 = vmatprep.subr.mxu0 0.0
      %7848 = vmatpush2.msra.mxu0 %v7611
      %7849 = vmatprep.subr.mxu0 0.0
      %7850 = vmatpush2.msra.mxu0 %v7606
      %7851 = vmatprep.subr.mxu0 0.0
      %7852 = vmatpush2.msra.mxu0 %v7601
      %7853 = vmatprep.subr.mxu0 0.0
      %7854 = vmatpush2.msra.mxu0 %v7596
      %7855 = vmatprep.subr.mxu0 0.0
      %7856 = vmatpush2.msra.mxu0 %v7591
      %7857 = vmatprep.subr.mxu0 0.0
      %7858 = vmatpush2.msra.mxu0 %v7586
      %7859 = vmatprep.subr.mxu0 0.0
      %7860 = vmatpush2.msra.mxu0 %v7581
      %7861 = vmatprep.subr.mxu0 0.0
      %7862 = vmatpush2.msra.mxu0 %v7576
      %7863 = vmatprep.subr.mxu0 0.0
      %7864 = vmatpush2.msra.mxu0 %v7571
      %7865 = vmatprep.mubr.f32.mxu0 %v7095
      %7866 = vmatmul.mubr.f32.gmra.mxu0 %v7094
      %v7867 = vpop.f32.mrf.mxu0
      %v7868 = vadd.f32 0.0, %v7867
      %v7869 = vpop.f32.mrf.mxu0
      %7870 = vmatprep.mubr.f32.mxu0 %v7097
      %7871 = vmatmul.mubr.f32.gmra.mxu0 %v7096
      %v7872 = vpop.f32.mrf.mxu0
      %v7873 = vadd.f32 0.0, %v7872
      %v7874 = vpop.f32.mrf.mxu0
      %7875 = vdwg.mxu0
      %v7876 = vadd.f32 %v7325, %v7720
      %v7877 = vadd.f32 %v7327, %v7722
      %v7878 = vadd.f32 %v7402, %v7797
      %v7879 = vadd.f32 %v7404, %v7799
      %v7880 = vadd.f32 %v7479, %v7873
      %7881 = vst [vmem:[%s284] sm:$0xff] %v7876
      %7882 = vst [vmem:[%s284 + $0x8] sm:$0xff] %v7877
      %7883 = vst [vmem:[%s284 + $0x10] sm:$0xff] %v7878
      %7884 = vst [vmem:[%s284 + $0x18] sm:$0xff] %v7879
      %7885 = vst [vmem:[%s284 + $0x20] sm:$0xff] %v7880
      %v7886 = vsub.f32 %v7331, %v7714
      %v7887 = vsub.f32 %v7333, %v7716
      %v7888 = vsub.f32 %v7408, %v7791
      %v7889 = vsub.f32 %v7410, %v7793
      %v7890 = vsub.f32 %v7484, %v7868
      %7891 = vst [vmem:[%s298] sm:$0xff] %v7886
      %7892 = vst [vmem:[%s298 + $0x8] sm:$0xff] %v7887
      %7893 = vst [vmem:[%s298 + $0x10] sm:$0xff] %v7888
      %7894 = vst [vmem:[%s298 + $0x18] sm:$0xff] %v7889
      %7895 = vst [vmem:[%s298 + $0x20] sm:$0xff] %v7890
      %s7896 = smul.u32 5, %s21
      %p7897 = scmp.lt.s32.totalorder %s20, 1
      %s7898 = scalar_select %p7897, %s20, 1
      %p7899 = scmp.lt.s32.totalorder %s22, 0
      %s7900 = scalar_select %p7899, %s22, 0
      %p7901 = scmp.lt.s32.totalorder %s7896, 4
      %s7902 = scalar_select %p7901, %s7896, 4
      %s7903 = smul.addr %s7900, 5
      %s7904 = sadd.s32 %s7902, %s7903
      %s7905 = smul.addr %s7898, 5
      %s7906 = sadd.s32 %s7904, %s7905
      %s7907 = smul.addr %s7906, 8
      %s7908 = scalar_lea.vmem %s2, %s7907
      %s7909 = smul.u32 5, %s21
      %p7910 = scmp.lt.s32.totalorder %s20, 1
      %s7911 = scalar_select %p7910, %s20, 1
      %p7912 = scmp.lt.s32.totalorder %s22, 0
      %s7913 = scalar_select %p7912, %s22, 0
      %p7914 = scmp.lt.s32.totalorder %s7909, 4
      %s7915 = scalar_select %p7914, %s7909, 4
      %s7916 = smul.addr %s7913, 5
      %s7917 = sadd.s32 %s7915, %s7916
      %s7918 = smul.addr %s7911, 5
      %s7919 = sadd.s32 %s7917, %s7918
      %s7920 = smul.addr %s7919, 8
      %s7921 = scalar_lea.vmem %s3, %s7920
      // Predicated region
      $region33: #{mr_forward_model_static.1} parent=27 // pred_check
        %p7922 = pneg %p112
      $region34: #{mr_forward_model_static.1} parent=27 // pred_check_branch
        %7924 = sbr.rel (%p7922) target = $region36
      $region35: #{mr_forward_model_static.1} parent=27 // pred_region
        %s7925 = smul.u32 5, %s21
      $region36: #{mr_forward_model_static.1} parent=27 // pred_fallthru
        _
      // Predicated region
      $region37: #{mr_forward_model_static.1} parent=27 // pred_check
        %p7926 = pneg %p142
      $region38: #{mr_forward_model_static.1} parent=27 // pred_check_branch
        %7928 = sbr.rel (%p7926) target = $region40
      $region39: #{mr_forward_model_static.1} parent=27 // pred_region
        %s7929 = smul.u32 5, %s21
      $region40: #{mr_forward_model_static.1} parent=27 // pred_fallthru
        _
    $region28: #{mr_forward_model_static.1} parent=5 // pred_fallthru
      _
    %p7930 = scmp.le.s32.totalorder 2, %s10
    // Predicated region
    $region41: #{mr_forward_model_static.1} parent=5 // pred_check
      %p7931 = pneg %p7930
    $region42: #{mr_forward_model_static.1} parent=5 // pred_check_branch
      %7933 = sbr.rel (%p7931) target = $region44
    $region43: #{mr_forward_model_static.1} parent=5 // pred_region
      %s7934 = ssub.s32 %s10, 2
      // Predicated region
      $region45: #{mr_forward_model_static.1} parent=43 // pred_check
        %p7935 = pneg %p118
      $region46: #{mr_forward_model_static.1} parent=43 // pred_check_branch
        %7937 = sbr.rel (%p7935) target = $region48
      $region47: #{mr_forward_model_static.1} parent=43 // pred_region
        %s7938 = smul.u32 5, %s24
        %p7939 = scmp.lt.s32.totalorder %s23, 1
        %s7940 = scalar_select %p7939, %s23, 1
        %p7941 = scmp.lt.s32.totalorder %s25, 0
        %s7942 = scalar_select %p7941, %s25, 0
        %p7943 = scmp.lt.s32.totalorder %s7938, 4
        %s7944 = scalar_select %p7943, %s7938, 4
        %s7945 = smul.addr %s7942, 5
        %s7946 = sadd.s32 %s7944, %s7945
        %s7947 = smul.addr %s7940, 5
        %s7948 = sadd.s32 %s7946, %s7947
        %s7949 = smul.addr %s7948, 8
        %s7950 = scalar_lea.vmem %s2, %s7949
      $region48: #{mr_forward_model_static.1} parent=43 // pred_fallthru
        _
      // Predicated region
      $region49: #{mr_forward_model_static.1} parent=43 // pred_check
        %p7951 = pneg %p148
      $region50: #{mr_forward_model_static.1} parent=43 // pred_check_branch
        %7953 = sbr.rel (%p7951) target = $region52
      $region51: #{mr_forward_model_static.1} parent=43 // pred_region
        %s7954 = smul.u32 5, %s24
        %p7955 = scmp.lt.s32.totalorder %s23, 1
        %s7956 = scalar_select %p7955, %s23, 1
        %p7957 = scmp.lt.s32.totalorder %s25, 0
        %s7958 = scalar_select %p7957, %s25, 0
        %p7959 = scmp.lt.s32.totalorder %s7954, 4
        %s7960 = scalar_select %p7959, %s7954, 4
        %s7961 = smul.addr %s7958, 5
        %s7962 = sadd.s32 %s7960, %s7961
        %s7963 = smul.addr %s7956, 5
        %s7964 = sadd.s32 %s7962, %s7963
        %s7965 = smul.addr %s7964, 8
        %s7966 = scalar_lea.vmem %s3, %s7965
      $region52: #{mr_forward_model_static.1} parent=43 // pred_fallthru
        _
    $region44: #{mr_forward_model_static.1} parent=5 // pred_fallthru
      _
  $region6: #{mr_forward_model_static.1} parent=0 // loop_footer
    %s14 = sadd.s32 1, %s10
  $region7: #{mr_forward_model_static.1} parent=0 // loop_footer_branch
    %9 = sbr.rel target = $region3
  $region8: #{mr_forward_model_static.1} parent=0 // loop_exit
    _

</llo_original>
